<compile_context>
chip_gen: v7x
topology: tpu7x:2x2x1
jax: 0.10.0
libtpu: 0.0.40
codegen_flags: <defaults>
</compile_context>

<pallas_src>
import numpy as np
import jax
import jax.numpy as jnp
from jax.experimental import pallas as pl
from jax.experimental.pallas import tpu as pltpu

H = 180 * 8 + 1     # 1441 latitude rows
W = 360 * 8         # 2880 longitude cols (lane-dense: full last dim per tile)
ROW_TILE = 728      # 2 grid steps (728*2 >= 1441); 728 % 8 == 0; ~8.4 MB/tile


def map_kernel(row_ref, col_ref, val_ref, out_ref):
    """Scatter star values into one row-tile of the map.

    row_ref/col_ref: int32[N] in SMEM (already flipped row index, col index)
    val_ref:         float32[N] in SMEM (magnitude * 255)
    out_ref:         float32[ROW_TILE, W] tile of the output map in VMEM
    """
    tile_rows, tile_cols = out_ref.shape
    row0 = pl.program_id(0) * tile_rows

    # The single full-tile pass: zero fill (HBM-writeback floor).
    out_ref[...] = jnp.zeros_like(out_ref)

    # Small (1, W) column iota, hoisted out of the star loop.
    col_iota = jax.lax.broadcasted_iota(jnp.int32, (1, tile_cols), 1)

    n_stars = row_ref.shape[0]

    def scatter_one(ix, carry):
        r = row_ref[ix]
        c = col_ref[ix]
        v = val_ref[ix]

        # Scalar gate: does this star land inside the current row tile?
        in_tile = (r >= row0) & (r < row0 + tile_rows)

        @pl.when(in_tile)
        def _():
            r_local = r - row0
            # Masked store over the affected (1, W) row: one vst.msk pass, no
            # row load, no select. Only the target lane is written, so the
            # sequential order of the unrolled loop preserves last-write-wins
            # exactly like the PyTorch per-star assignment loop.
            pltpu.store(
                out_ref.at[pl.ds(r_local, 1), :],
                jnp.full((1, tile_cols), v, dtype=out_ref.dtype),
                mask=(col_iota == c),
            )

        return carry

    # Short static trip count -> unroll for scheduler visibility.
    jax.lax.fori_loop(0, n_stars, scatter_one, 0, unroll=True)


def star_map(ra_hours, dec_radians, raw_magnitude):
    """JAX wrapper reproducing Map.forward() -> float32[1441, 2880]."""
    ra_hours = ra_hours.astype(jnp.float32)
    dec_radians = dec_radians.astype(jnp.float32)
    raw_magnitude = raw_magnitude.astype(jnp.float32)

    magnitude = (8.0 - raw_magnitude) / 10.0          # self.magnitude
    lng = ra_hours * 15.0                             # self.lng  (degrees)
    lat = dec_radians * (180.0 / np.pi) + 90.0        # self.lat  (degrees)

    # .long() truncation (all values are non-negative here)
    ilat = (lat * 8.0).astype(jnp.int32)
    ilng = (lng * 8.0).astype(jnp.int32)

    # forward() flips rows: out[r] = background[H-1-r]  =>  scatter flipped
    row_flipped = (H - 1) - ilat
    values = magnitude * 255.0

    grid = (pl.cdiv(H, ROW_TILE),)

    return pl.pallas_call(
        map_kernel,
        out_shape=jax.ShapeDtypeStruct((H, W), jnp.float32),
        grid_spec=pltpu.PrefetchScalarGridSpec(
            num_scalar_prefetch=3,          # row, col, val -> SMEM
            grid=grid,
            in_specs=[],
            out_specs=pl.BlockSpec((ROW_TILE, W), lambda i, *_: (i, 0)),
        ),
        compiler_params=pltpu.CompilerParams(
            dimension_semantics=("parallel",),
            # 2 x ~8.4 MB double-buffered output tiles; raise the scoped VMEM
            # limit explicitly so v5e (16 MiB default) also fits comfortably.
            vmem_limit_bytes=32 * 1024 * 1024,
        ),
        cost_estimate=pl.CostEstimate(
            flops=0, transcendentals=0, bytes_accessed=H * W * 4),
    )(row_flipped, ilng, values)


if __name__ == "__main__":
    # Deterministic synthetic "bright star catalog" (no external data).
    bright_stars_count = 32
    key = jax.random.PRNGKey(0)
    k_mag, k_ra, k_dec = jax.random.split(key, 3)

    raw_magnitude = jax.random.uniform(
        k_mag, (bright_stars_count,), minval=0.0, maxval=7.0)
    ra_hours = jax.random.uniform(
        k_ra, (bright_stars_count,), minval=0.0, maxval=24.0)
    dec_radians = jax.random.uniform(
        k_dec, (bright_stars_count,), minval=-1.4, maxval=1.4)

    out = star_map(ra_hours, dec_radians, raw_magnitude)
    out = jax.block_until_ready(out)

    # Pure-numpy reference of the PyTorch forward, to validate the kernel.
    mags = (8.0 - np.asarray(raw_magnitude)) / 10.0
    lng = np.asarray(ra_hours) * 15.0
    lat = np.asarray(dec_radians) * 180.0 / np.pi + 90.0
    bg = np.zeros((H, W), dtype=np.float32)
    for ix in range(bright_stars_count):
        ilat = int(np.float32(lat[ix]) * np.float32(8.0))
        ilng = int(np.float32(lng[ix]) * np.float32(8.0))
        bg[ilat, ilng] = mags[ix]
    ref = (bg * 255.0)[::-1, :]

    assert out.shape == (H, W) and out.dtype == jnp.float32
    np.testing.assert_allclose(np.asarray(out), ref, rtol=1e-6, atol=1e-6)

    print("KERNEL_OK")
</pallas_src>

<mosaic_0001>
module attributes {stable_mosaic.version = 11 : i64} {
  func.func @map_kernel(%arg0: i32, %arg1: memref<32xi32, #tpu.memory_space<smem>>, %arg2: memref<32xi32, #tpu.memory_space<smem>>, %arg3: memref<32xf32, #tpu.memory_space<smem>>, %arg4: memref<728x2880xf32, #tpu.memory_space<vmem>>) attributes {dimension_semantics = [#tpu.dimension_semantics<parallel>], iteration_bounds = array<i64: 2>, scalar_prefetch = 3 : i64, scratch_operands = 0 : i64, tpu.core_type = #tpu.core_type<tc>, window_params = [{transform_indices = @transform_0, window_bounds = array<i64: 728, 2880>}]} {
    %c728_i32 = arith.constant 728 : i32
    %0 = arith.muli %arg0, %c728_i32 : i32
    %cst = arith.constant 0.000000e+00 : f32
    %1 = vector.broadcast %cst : f32 to vector<728x2880xf32>
    %c0 = arith.constant 0 : index
    %c0_0 = arith.constant 0 : index
    %2 = vector.load %arg4[%c0, %c0_0] : memref<728x2880xf32, #tpu.memory_space<vmem>>, vector<728x2880xf32>
    tpu.vector_store %arg4[%c0, %c0_0], %1 {strides = array<i32>} : memref<728x2880xf32, #tpu.memory_space<vmem>>, vector<728x2880xf32>,
    %3 = tpu.iota {dimensions = array<i32: 1>} : vector<1x2880xi32>
    %c0_i32 = arith.constant 0 : i32
    %4 = arith.index_cast %c0_i32 : i32 to index
    %5 = memref.load %arg1[%4] : memref<32xi32, #tpu.memory_space<smem>>
    %6 = arith.index_cast %c0_i32 : i32 to index
    %7 = memref.load %arg2[%6] : memref<32xi32, #tpu.memory_space<smem>>
    %8 = arith.index_cast %c0_i32 : i32 to index
    %9 = memref.load %arg3[%8] : memref<32xf32, #tpu.memory_space<smem>>
    %10 = arith.cmpi sge, %5, %0 : i32
    %c728_i32_1 = arith.constant 728 : i32
    %11 = arith.addi %0, %c728_i32_1 : i32
    %12 = arith.cmpi slt, %5, %11 : i32
    %13 = arith.andi %10, %12 : i1
    %14 = arith.extui %13 : i1 to i32
    %c0_i32_2 = arith.constant 0 : i32
    %15 = arith.cmpi ne, %14, %c0_i32_2 : i32
    scf.if %15 {
      %388 = arith.subi %5, %0 : i32
      %389 = vector.broadcast %9 : f32 to vector<1x2880xf32>
      %390 = vector.broadcast %7 : i32 to vector<1x2880xi32>
      %391 = arith.cmpi eq, %3, %390 : vector<1x2880xi32>
      %392 = arith.index_cast %388 : i32 to index
      %c0_65 = arith.constant 0 : index
      %393 = vector.load %arg4[%392, %c0_65] : memref<728x2880xf32, #tpu.memory_space<vmem>>, vector<1x2880xf32>
      tpu.vector_store %arg4[%392, %c0_65], %389 masked %391 {strides = array<i32>} : memref<728x2880xf32, #tpu.memory_space<vmem>>, vector<1x2880xf32>, vector<1x2880xi1>
    } else {
    }
    %c1_i32 = arith.constant 1 : i32
    %16 = arith.index_cast %c1_i32 : i32 to index
    %17 = memref.load %arg1[%16] : memref<32xi32, #tpu.memory_space<smem>>
    %18 = arith.index_cast %c1_i32 : i32 to index
    %19 = memref.load %arg2[%18] : memref<32xi32, #tpu.memory_space<smem>>
    %20 = arith.index_cast %c1_i32 : i32 to index
    %21 = memref.load %arg3[%20] : memref<32xf32, #tpu.memory_space<smem>>
    %22 = arith.cmpi sge, %17, %0 : i32
    %c728_i32_3 = arith.constant 728 : i32
    %23 = arith.addi %0, %c728_i32_3 : i32
    %24 = arith.cmpi slt, %17, %23 : i32
    %25 = arith.andi %22, %24 : i1
    %26 = arith.extui %25 : i1 to i32
    %c0_i32_4 = arith.constant 0 : i32
    %27 = arith.cmpi ne, %26, %c0_i32_4 : i32
    scf.if %27 {
      %388 = arith.subi %17, %0 : i32
      %389 = vector.broadcast %21 : f32 to vector<1x2880xf32>
      %390 = vector.broadcast %19 : i32 to vector<1x2880xi32>
      %391 = arith.cmpi eq, %3, %390 : vector<1x2880xi32>
      %392 = arith.index_cast %388 : i32 to index
      %c0_65 = arith.constant 0 : index
      %393 = vector.load %arg4[%392, %c0_65] : memref<728x2880xf32, #tpu.memory_space<vmem>>, vector<1x2880xf32>
      tpu.vector_store %arg4[%392, %c0_65], %389 masked %391 {strides = array<i32>} : memref<728x2880xf32, #tpu.memory_space<vmem>>, vector<1x2880xf32>, vector<1x2880xi1>
    } else {
    }
    %c2_i32 = arith.constant 2 : i32
    %28 = arith.index_cast %c2_i32 : i32 to index
    %29 = memref.load %arg1[%28] : memref<32xi32, #tpu.memory_space<smem>>
    %30 = arith.index_cast %c2_i32 : i32 to index
    %31 = memref.load %arg2[%30] : memref<32xi32, #tpu.memory_space<smem>>
    %32 = arith.index_cast %c2_i32 : i32 to index
    %33 = memref.load %arg3[%32] : memref<32xf32, #tpu.memory_space<smem>>
    %34 = arith.cmpi sge, %29, %0 : i32
    %c728_i32_5 = arith.constant 728 : i32
    %35 = arith.addi %0, %c728_i32_5 : i32
    %36 = arith.cmpi slt, %29, %35 : i32
    %37 = arith.andi %34, %36 : i1
    %38 = arith.extui %37 : i1 to i32
    %c0_i32_6 = arith.constant 0 : i32
    %39 = arith.cmpi ne, %38, %c0_i32_6 : i32
    scf.if %39 {
      %388 = arith.subi %29, %0 : i32
      %389 = vector.broadcast %33 : f32 to vector<1x2880xf32>
      %390 = vector.broadcast %31 : i32 to vector<1x2880xi32>
      %391 = arith.cmpi eq, %3, %390 : vector<1x2880xi32>
      %392 = arith.index_cast %388 : i32 to index
      %c0_65 = arith.constant 0 : index
      %393 = vector.load %arg4[%392, %c0_65] : memref<728x2880xf32, #tpu.memory_space<vmem>>, vector<1x2880xf32>
      tpu.vector_store %arg4[%392, %c0_65], %389 masked %391 {strides = array<i32>} : memref<728x2880xf32, #tpu.memory_space<vmem>>, vector<1x2880xf32>, vector<1x2880xi1>
    } else {
    }
    %c3_i32 = arith.constant 3 : i32
    %40 = arith.index_cast %c3_i32 : i32 to index
    %41 = memref.load %arg1[%40] : memref<32xi32, #tpu.memory_space<smem>>
    %42 = arith.index_cast %c3_i32 : i32 to index
    %43 = memref.load %arg2[%42] : memref<32xi32, #tpu.memory_space<smem>>
    %44 = arith.index_cast %c3_i32 : i32 to index
    %45 = memref.load %arg3[%44] : memref<32xf32, #tpu.memory_space<smem>>
    %46 = arith.cmpi sge, %41, %0 : i32
    %c728_i32_7 = arith.constant 728 : i32
    %47 = arith.addi %0, %c728_i32_7 : i32
    %48 = arith.cmpi slt, %41, %47 : i32
    %49 = arith.andi %46, %48 : i1
    %50 = arith.extui %49 : i1 to i32
    %c0_i32_8 = arith.constant 0 : i32
    %51 = arith.cmpi ne, %50, %c0_i32_8 : i32
    scf.if %51 {
      %388 = arith.subi %41, %0 : i32
      %389 = vector.broadcast %45 : f32 to vector<1x2880xf32>
      %390 = vector.broadcast %43 : i32 to vector<1x2880xi32>
      %391 = arith.cmpi eq, %3, %390 : vector<1x2880xi32>
      %392 = arith.index_cast %388 : i32 to index
      %c0_65 = arith.constant 0 : index
      %393 = vector.load %arg4[%392, %c0_65] : memref<728x2880xf32, #tpu.memory_space<vmem>>, vector<1x2880xf32>
      tpu.vector_store %arg4[%392, %c0_65], %389 masked %391 {strides = array<i32>} : memref<728x2880xf32, #tpu.memory_space<vmem>>, vector<1x2880xf32>, vector<1x2880xi1>
    } else {
    }
    %c4_i32 = arith.constant 4 : i32
    %52 = arith.index_cast %c4_i32 : i32 to index
    %53 = memref.load %arg1[%52] : memref<32xi32, #tpu.memory_space<smem>>
    %54 = arith.index_cast %c4_i32 : i32 to index
    %55 = memref.load %arg2[%54] : memref<32xi32, #tpu.memory_space<smem>>
    %56 = arith.index_cast %c4_i32 : i32 to index
    %57 = memref.load %arg3[%56] : memref<32xf32, #tpu.memory_space<smem>>
    %58 = arith.cmpi sge, %53, %0 : i32
    %c728_i32_9 = arith.constant 728 : i32
    %59 = arith.addi %0, %c728_i32_9 : i32
    %60 = arith.cmpi slt, %53, %59 : i32
    %61 = arith.andi %58, %60 : i1
    %62 = arith.extui %61 : i1 to i32
    %c0_i32_10 = arith.constant 0 : i32
    %63 = arith.cmpi ne, %62, %c0_i32_10 : i32
    scf.if %63 {
      %388 = arith.subi %53, %0 : i32
      %389 = vector.broadcast %57 : f32 to vector<1x2880xf32>
      %390 = vector.broadcast %55 : i32 to vector<1x2880xi32>
      %391 = arith.cmpi eq, %3, %390 : vector<1x2880xi32>
      %392 = arith.index_cast %388 : i32 to index
      %c0_65 = arith.constant 0 : index
      %393 = vector.load %arg4[%392, %c0_65] : memref<728x2880xf32, #tpu.memory_space<vmem>>, vector<1x2880xf32>
      tpu.vector_store %arg4[%392, %c0_65], %389 masked %391 {strides = array<i32>} : memref<728x2880xf32, #tpu.memory_space<vmem>>, vector<1x2880xf32>, vector<1x2880xi1>
    } else {
    }
    %c5_i32 = arith.constant 5 : i32
    %64 = arith.index_cast %c5_i32 : i32 to index
    %65 = memref.load %arg1[%64] : memref<32xi32, #tpu.memory_space<smem>>
    %66 = arith.index_cast %c5_i32 : i32 to index
    %67 = memref.load %arg2[%66] : memref<32xi32, #tpu.memory_space<smem>>
    %68 = arith.index_cast %c5_i32 : i32 to index
    %69 = memref.load %arg3[%68] : memref<32xf32, #tpu.memory_space<smem>>
    %70 = arith.cmpi sge, %65, %0 : i32
    %c728_i32_11 = arith.constant 728 : i32
    %71 = arith.addi %0, %c728_i32_11 : i32
    %72 = arith.cmpi slt, %65, %71 : i32
    %73 = arith.andi %70, %72 : i1
    %74 = arith.extui %73 : i1 to i32
    %c0_i32_12 = arith.constant 0 : i32
    %75 = arith.cmpi ne, %74, %c0_i32_12 : i32
    scf.if %75 {
      %388 = arith.subi %65, %0 : i32
      %389 = vector.broadcast %69 : f32 to vector<1x2880xf32>
      %390 = vector.broadcast %67 : i32 to vector<1x2880xi32>
      %391 = arith.cmpi eq, %3, %390 : vector<1x2880xi32>
      %392 = arith.index_cast %388 : i32 to index
      %c0_65 = arith.constant 0 : index
      %393 = vector.load %arg4[%392, %c0_65] : memref<728x2880xf32, #tpu.memory_space<vmem>>, vector<1x2880xf32>
      tpu.vector_store %arg4[%392, %c0_65], %389 masked %391 {strides = array<i32>} : memref<728x2880xf32, #tpu.memory_space<vmem>>, vector<1x2880xf32>, vector<1x2880xi1>
    } else {
    }
    %c6_i32 = arith.constant 6 : i32
    %76 = arith.index_cast %c6_i32 : i32 to index
    %77 = memref.load %arg1[%76] : memref<32xi32, #tpu.memory_space<smem>>
    %78 = arith.index_cast %c6_i32 : i32 to index
    %79 = memref.load %arg2[%78] : memref<32xi32, #tpu.memory_space<smem>>
    %80 = arith.index_cast %c6_i32 : i32 to index
    %81 = memref.load %arg3[%80] : memref<32xf32, #tpu.memory_space<smem>>
    %82 = arith.cmpi sge, %77, %0 : i32
    %c728_i32_13 = arith.constant 728 : i32
    %83 = arith.addi %0, %c728_i32_13 : i32
    %84 = arith.cmpi slt, %77, %83 : i32
    %85 = arith.andi %82, %84 : i1
    %86 = arith.extui %85 : i1 to i32
    %c0_i32_14 = arith.constant 0 : i32
    %87 = arith.cmpi ne, %86, %c0_i32_14 : i32
    scf.if %87 {
      %388 = arith.subi %77, %0 : i32
      %389 = vector.broadcast %81 : f32 to vector<1x2880xf32>
      %390 = vector.broadcast %79 : i32 to vector<1x2880xi32>
      %391 = arith.cmpi eq, %3, %390 : vector<1x2880xi32>
      %392 = arith.index_cast %388 : i32 to index
      %c0_65 = arith.constant 0 : index
      %393 = vector.load %arg4[%392, %c0_65] : memref<728x2880xf32, #tpu.memory_space<vmem>>, vector<1x2880xf32>
      tpu.vector_store %arg4[%392, %c0_65], %389 masked %391 {strides = array<i32>} : memref<728x2880xf32, #tpu.memory_space<vmem>>, vector<1x2880xf32>, vector<1x2880xi1>
    } else {
    }
    %c7_i32 = arith.constant 7 : i32
    %88 = arith.index_cast %c7_i32 : i32 to index
    %89 = memref.load %arg1[%88] : memref<32xi32, #tpu.memory_space<smem>>
    %90 = arith.index_cast %c7_i32 : i32 to index
    %91 = memref.load %arg2[%90] : memref<32xi32, #tpu.memory_space<smem>>
    %92 = arith.index_cast %c7_i32 : i32 to index
    %93 = memref.load %arg3[%92] : memref<32xf32, #tpu.memory_space<smem>>
    %94 = arith.cmpi sge, %89, %0 : i32
    %c728_i32_15 = arith.constant 728 : i32
    %95 = arith.addi %0, %c728_i32_15 : i32
    %96 = arith.cmpi slt, %89, %95 : i32
    %97 = arith.andi %94, %96 : i1
    %98 = arith.extui %97 : i1 to i32
    %c0_i32_16 = arith.constant 0 : i32
    %99 = arith.cmpi ne, %98, %c0_i32_16 : i32
    scf.if %99 {
      %388 = arith.subi %89, %0 : i32
      %389 = vector.broadcast %93 : f32 to vector<1x2880xf32>
      %390 = vector.broadcast %91 : i32 to vector<1x2880xi32>
      %391 = arith.cmpi eq, %3, %390 : vector<1x2880xi32>
      %392 = arith.index_cast %388 : i32 to index
      %c0_65 = arith.constant 0 : index
      %393 = vector.load %arg4[%392, %c0_65] : memref<728x2880xf32, #tpu.memory_space<vmem>>, vector<1x2880xf32>
      tpu.vector_store %arg4[%392, %c0_65], %389 masked %391 {strides = array<i32>} : memref<728x2880xf32, #tpu.memory_space<vmem>>, vector<1x2880xf32>, vector<1x2880xi1>
    } else {
    }
    %c8_i32 = arith.constant 8 : i32
    %100 = arith.index_cast %c8_i32 : i32 to index
    %101 = memref.load %arg1[%100] : memref<32xi32, #tpu.memory_space<smem>>
    %102 = arith.index_cast %c8_i32 : i32 to index
    %103 = memref.load %arg2[%102] : memref<32xi32, #tpu.memory_space<smem>>
    %104 = arith.index_cast %c8_i32 : i32 to index
    %105 = memref.load %arg3[%104] : memref<32xf32, #tpu.memory_space<smem>>
    %106 = arith.cmpi sge, %101, %0 : i32
    %c728_i32_17 = arith.constant 728 : i32
    %107 = arith.addi %0, %c728_i32_17 : i32
    %108 = arith.cmpi slt, %101, %107 : i32
    %109 = arith.andi %106, %108 : i1
    %110 = arith.extui %109 : i1 to i32
    %c0_i32_18 = arith.constant 0 : i32
    %111 = arith.cmpi ne, %110, %c0_i32_18 : i32
    scf.if %111 {
      %388 = arith.subi %101, %0 : i32
      %389 = vector.broadcast %105 : f32 to vector<1x2880xf32>
      %390 = vector.broadcast %103 : i32 to vector<1x2880xi32>
      %391 = arith.cmpi eq, %3, %390 : vector<1x2880xi32>
      %392 = arith.index_cast %388 : i32 to index
      %c0_65 = arith.constant 0 : index
      %393 = vector.load %arg4[%392, %c0_65] : memref<728x2880xf32, #tpu.memory_space<vmem>>, vector<1x2880xf32>
      tpu.vector_store %arg4[%392, %c0_65], %389 masked %391 {strides = array<i32>} : memref<728x2880xf32, #tpu.memory_space<vmem>>, vector<1x2880xf32>, vector<1x2880xi1>
    } else {
    }
    %c9_i32 = arith.constant 9 : i32
    %112 = arith.index_cast %c9_i32 : i32 to index
    %113 = memref.load %arg1[%112] : memref<32xi32, #tpu.memory_space<smem>>
    %114 = arith.index_cast %c9_i32 : i32 to index
    %115 = memref.load %arg2[%114] : memref<32xi32, #tpu.memory_space<smem>>
    %116 = arith.index_cast %c9_i32 : i32 to index
    %117 = memref.load %arg3[%116] : memref<32xf32, #tpu.memory_space<smem>>
    %118 = arith.cmpi sge, %113, %0 : i32
    %c728_i32_19 = arith.constant 728 : i32
    %119 = arith.addi %0, %c728_i32_19 : i32
    %120 = arith.cmpi slt, %113, %119 : i32
    %121 = arith.andi %118, %120 : i1
    %122 = arith.extui %121 : i1 to i32
    %c0_i32_20 = arith.constant 0 : i32
    %123 = arith.cmpi ne, %122, %c0_i32_20 : i32
    scf.if %123 {
      %388 = arith.subi %113, %0 : i32
      %389 = vector.broadcast %117 : f32 to vector<1x2880xf32>
      %390 = vector.broadcast %115 : i32 to vector<1x2880xi32>
      %391 = arith.cmpi eq, %3, %390 : vector<1x2880xi32>
      %392 = arith.index_cast %388 : i32 to index
      %c0_65 = arith.constant 0 : index
      %393 = vector.load %arg4[%392, %c0_65] : memref<728x2880xf32, #tpu.memory_space<vmem>>, vector<1x2880xf32>
      tpu.vector_store %arg4[%392, %c0_65], %389 masked %391 {strides = array<i32>} : memref<728x2880xf32, #tpu.memory_space<vmem>>, vector<1x2880xf32>, vector<1x2880xi1>
    } else {
    }
    %c10_i32 = arith.constant 10 : i32
    %124 = arith.index_cast %c10_i32 : i32 to index
    %125 = memref.load %arg1[%124] : memref<32xi32, #tpu.memory_space<smem>>
    %126 = arith.index_cast %c10_i32 : i32 to index
    %127 = memref.load %arg2[%126] : memref<32xi32, #tpu.memory_space<smem>>
    %128 = arith.index_cast %c10_i32 : i32 to index
    %129 = memref.load %arg3[%128] : memref<32xf32, #tpu.memory_space<smem>>
    %130 = arith.cmpi sge, %125, %0 : i32
    %c728_i32_21 = arith.constant 728 : i32
    %131 = arith.addi %0, %c728_i32_21 : i32
    %132 = arith.cmpi slt, %125, %131 : i32
    %133 = arith.andi %130, %132 : i1
    %134 = arith.extui %133 : i1 to i32
    %c0_i32_22 = arith.constant 0 : i32
    %135 = arith.cmpi ne, %134, %c0_i32_22 : i32
    scf.if %135 {
      %388 = arith.subi %125, %0 : i32
      %389 = vector.broadcast %129 : f32 to vector<1x2880xf32>
      %390 = vector.broadcast %127 : i32 to vector<1x2880xi32>
      %391 = arith.cmpi eq, %3, %390 : vector<1x2880xi32>
      %392 = arith.index_cast %388 : i32 to index
      %c0_65 = arith.constant 0 : index
      %393 = vector.load %arg4[%392, %c0_65] : memref<728x2880xf32, #tpu.memory_space<vmem>>, vector<1x2880xf32>
      tpu.vector_store %arg4[%392, %c0_65], %389 masked %391 {strides = array<i32>} : memref<728x2880xf32, #tpu.memory_space<vmem>>, vector<1x2880xf32>, vector<1x2880xi1>
    } else {
    }
    %c11_i32 = arith.constant 11 : i32
    %136 = arith.index_cast %c11_i32 : i32 to index
    %137 = memref.load %arg1[%136] : memref<32xi32, #tpu.memory_space<smem>>
    %138 = arith.index_cast %c11_i32 : i32 to index
    %139 = memref.load %arg2[%138] : memref<32xi32, #tpu.memory_space<smem>>
    %140 = arith.index_cast %c11_i32 : i32 to index
    %141 = memref.load %arg3[%140] : memref<32xf32, #tpu.memory_space<smem>>
    %142 = arith.cmpi sge, %137, %0 : i32
    %c728_i32_23 = arith.constant 728 : i32
    %143 = arith.addi %0, %c728_i32_23 : i32
    %144 = arith.cmpi slt, %137, %143 : i32
    %145 = arith.andi %142, %144 : i1
    %146 = arith.extui %145 : i1 to i32
    %c0_i32_24 = arith.constant 0 : i32
    %147 = arith.cmpi ne, %146, %c0_i32_24 : i32
    scf.if %147 {
      %388 = arith.subi %137, %0 : i32
      %389 = vector.broadcast %141 : f32 to vector<1x2880xf32>
      %390 = vector.broadcast %139 : i32 to vector<1x2880xi32>
      %391 = arith.cmpi eq, %3, %390 : vector<1x2880xi32>
      %392 = arith.index_cast %388 : i32 to index
      %c0_65 = arith.constant 0 : index
      %393 = vector.load %arg4[%392, %c0_65] : memref<728x2880xf32, #tpu.memory_space<vmem>>, vector<1x2880xf32>
      tpu.vector_store %arg4[%392, %c0_65], %389 masked %391 {strides = array<i32>} : memref<728x2880xf32, #tpu.memory_space<vmem>>, vector<1x2880xf32>, vector<1x2880xi1>
    } else {
    }
    %c12_i32 = arith.constant 12 : i32
    %148 = arith.index_cast %c12_i32 : i32 to index
    %149 = memref.load %arg1[%148] : memref<32xi32, #tpu.memory_space<smem>>
    %150 = arith.index_cast %c12_i32 : i32 to index
    %151 = memref.load %arg2[%150] : memref<32xi32, #tpu.memory_space<smem>>
    %152 = arith.index_cast %c12_i32 : i32 to index
    %153 = memref.load %arg3[%152] : memref<32xf32, #tpu.memory_space<smem>>
    %154 = arith.cmpi sge, %149, %0 : i32
    %c728_i32_25 = arith.constant 728 : i32
    %155 = arith.addi %0, %c728_i32_25 : i32
    %156 = arith.cmpi slt, %149, %155 : i32
    %157 = arith.andi %154, %156 : i1
    %158 = arith.extui %157 : i1 to i32
    %c0_i32_26 = arith.constant 0 : i32
    %159 = arith.cmpi ne, %158, %c0_i32_26 : i32
    scf.if %159 {
      %388 = arith.subi %149, %0 : i32
      %389 = vector.broadcast %153 : f32 to vector<1x2880xf32>
      %390 = vector.broadcast %151 : i32 to vector<1x2880xi32>
      %391 = arith.cmpi eq, %3, %390 : vector<1x2880xi32>
      %392 = arith.index_cast %388 : i32 to index
      %c0_65 = arith.constant 0 : index
      %393 = vector.load %arg4[%392, %c0_65] : memref<728x2880xf32, #tpu.memory_space<vmem>>, vector<1x2880xf32>
      tpu.vector_store %arg4[%392, %c0_65], %389 masked %391 {strides = array<i32>} : memref<728x2880xf32, #tpu.memory_space<vmem>>, vector<1x2880xf32>, vector<1x2880xi1>
    } else {
    }
    %c13_i32 = arith.constant 13 : i32
    %160 = arith.index_cast %c13_i32 : i32 to index
    %161 = memref.load %arg1[%160] : memref<32xi32, #tpu.memory_space<smem>>
    %162 = arith.index_cast %c13_i32 : i32 to index
    %163 = memref.load %arg2[%162] : memref<32xi32, #tpu.memory_space<smem>>
    %164 = arith.index_cast %c13_i32 : i32 to index
    %165 = memref.load %arg3[%164] : memref<32xf32, #tpu.memory_space<smem>>
    %166 = arith.cmpi sge, %161, %0 : i32
    %c728_i32_27 = arith.constant 728 : i32
    %167 = arith.addi %0, %c728_i32_27 : i32
    %168 = arith.cmpi slt, %161, %167 : i32
    %169 = arith.andi %166, %168 : i1
    %170 = arith.extui %169 : i1 to i32
    %c0_i32_28 = arith.constant 0 : i32
    %171 = arith.cmpi ne, %170, %c0_i32_28 : i32
    scf.if %171 {
      %388 = arith.subi %161, %0 : i32
      %389 = vector.broadcast %165 : f32 to vector<1x2880xf32>
      %390 = vector.broadcast %163 : i32 to vector<1x2880xi32>
      %391 = arith.cmpi eq, %3, %390 : vector<1x2880xi32>
      %392 = arith.index_cast %388 : i32 to index
      %c0_65 = arith.constant 0 : index
      %393 = vector.load %arg4[%392, %c0_65] : memref<728x2880xf32, #tpu.memory_space<vmem>>, vector<1x2880xf32>
      tpu.vector_store %arg4[%392, %c0_65], %389 masked %391 {strides = array<i32>} : memref<728x2880xf32, #tpu.memory_space<vmem>>, vector<1x2880xf32>, vector<1x2880xi1>
    } else {
    }
    %c14_i32 = arith.constant 14 : i32
    %172 = arith.index_cast %c14_i32 : i32 to index
    %173 = memref.load %arg1[%172] : memref<32xi32, #tpu.memory_space<smem>>
    %174 = arith.index_cast %c14_i32 : i32 to index
    %175 = memref.load %arg2[%174] : memref<32xi32, #tpu.memory_space<smem>>
    %176 = arith.index_cast %c14_i32 : i32 to index
    %177 = memref.load %arg3[%176] : memref<32xf32, #tpu.memory_space<smem>>
    %178 = arith.cmpi sge, %173, %0 : i32
    %c728_i32_29 = arith.constant 728 : i32
    %179 = arith.addi %0, %c728_i32_29 : i32
    %180 = arith.cmpi slt, %173, %179 : i32
    %181 = arith.andi %178, %180 : i1
    %182 = arith.extui %181 : i1 to i32
    %c0_i32_30 = arith.constant 0 : i32
    %183 = arith.cmpi ne, %182, %c0_i32_30 : i32
    scf.if %183 {
      %388 = arith.subi %173, %0 : i32
      %389 = vector.broadcast %177 : f32 to vector<1x2880xf32>
      %390 = vector.broadcast %175 : i32 to vector<1x2880xi32>
      %391 = arith.cmpi eq, %3, %390 : vector<1x2880xi32>
      %392 = arith.index_cast %388 : i32 to index
      %c0_65 = arith.constant 0 : index
      %393 = vector.load %arg4[%392, %c0_65] : memref<728x2880xf32, #tpu.memory_space<vmem>>, vector<1x2880xf32>
      tpu.vector_store %arg4[%392, %c0_65], %389 masked %391 {strides = array<i32>} : memref<728x2880xf32, #tpu.memory_space<vmem>>, vector<1x2880xf32>, vector<1x2880xi1>
    } else {
    }
    %c15_i32 = arith.constant 15 : i32
    %184 = arith.index_cast %c15_i32 : i32 to index
    %185 = memref.load %arg1[%184] : memref<32xi32, #tpu.memory_space<smem>>
    %186 = arith.index_cast %c15_i32 : i32 to index
    %187 = memref.load %arg2[%186] : memref<32xi32, #tpu.memory_space<smem>>
    %188 = arith.index_cast %c15_i32 : i32 to index
    %189 = memref.load %arg3[%188] : memref<32xf32, #tpu.memory_space<smem>>
    %190 = arith.cmpi sge, %185, %0 : i32
    %c728_i32_31 = arith.constant 728 : i32
    %191 = arith.addi %0, %c728_i32_31 : i32
    %192 = arith.cmpi slt, %185, %191 : i32
    %193 = arith.andi %190, %192 : i1
    %194 = arith.extui %193 : i1 to i32
    %c0_i32_32 = arith.constant 0 : i32
    %195 = arith.cmpi ne, %194, %c0_i32_32 : i32
    scf.if %195 {
      %388 = arith.subi %185, %0 : i32
      %389 = vector.broadcast %189 : f32 to vector<1x2880xf32>
      %390 = vector.broadcast %187 : i32 to vector<1x2880xi32>
      %391 = arith.cmpi eq, %3, %390 : vector<1x2880xi32>
      %392 = arith.index_cast %388 : i32 to index
      %c0_65 = arith.constant 0 : index
      %393 = vector.load %arg4[%392, %c0_65] : memref<728x2880xf32, #tpu.memory_space<vmem>>, vector<1x2880xf32>
      tpu.vector_store %arg4[%392, %c0_65], %389 masked %391 {strides = array<i32>} : memref<728x2880xf32, #tpu.memory_space<vmem>>, vector<1x2880xf32>, vector<1x2880xi1>
    } else {
    }
    %c16_i32 = arith.constant 16 : i32
    %196 = arith.index_cast %c16_i32 : i32 to index
    %197 = memref.load %arg1[%196] : memref<32xi32, #tpu.memory_space<smem>>
    %198 = arith.index_cast %c16_i32 : i32 to index
    %199 = memref.load %arg2[%198] : memref<32xi32, #tpu.memory_space<smem>>
    %200 = arith.index_cast %c16_i32 : i32 to index
    %201 = memref.load %arg3[%200] : memref<32xf32, #tpu.memory_space<smem>>
    %202 = arith.cmpi sge, %197, %0 : i32
    %c728_i32_33 = arith.constant 728 : i32
    %203 = arith.addi %0, %c728_i32_33 : i32
    %204 = arith.cmpi slt, %197, %203 : i32
    %205 = arith.andi %202, %204 : i1
    %206 = arith.extui %205 : i1 to i32
    %c0_i32_34 = arith.constant 0 : i32
    %207 = arith.cmpi ne, %206, %c0_i32_34 : i32
    scf.if %207 {
      %388 = arith.subi %197, %0 : i32
      %389 = vector.broadcast %201 : f32 to vector<1x2880xf32>
      %390 = vector.broadcast %199 : i32 to vector<1x2880xi32>
      %391 = arith.cmpi eq, %3, %390 : vector<1x2880xi32>
      %392 = arith.index_cast %388 : i32 to index
      %c0_65 = arith.constant 0 : index
      %393 = vector.load %arg4[%392, %c0_65] : memref<728x2880xf32, #tpu.memory_space<vmem>>, vector<1x2880xf32>
      tpu.vector_store %arg4[%392, %c0_65], %389 masked %391 {strides = array<i32>} : memref<728x2880xf32, #tpu.memory_space<vmem>>, vector<1x2880xf32>, vector<1x2880xi1>
    } else {
    }
    %c17_i32 = arith.constant 17 : i32
    %208 = arith.index_cast %c17_i32 : i32 to index
    %209 = memref.load %arg1[%208] : memref<32xi32, #tpu.memory_space<smem>>
    %210 = arith.index_cast %c17_i32 : i32 to index
    %211 = memref.load %arg2[%210] : memref<32xi32, #tpu.memory_space<smem>>
    %212 = arith.index_cast %c17_i32 : i32 to index
    %213 = memref.load %arg3[%212] : memref<32xf32, #tpu.memory_space<smem>>
    %214 = arith.cmpi sge, %209, %0 : i32
    %c728_i32_35 = arith.constant 728 : i32
    %215 = arith.addi %0, %c728_i32_35 : i32
    %216 = arith.cmpi slt, %209, %215 : i32
    %217 = arith.andi %214, %216 : i1
    %218 = arith.extui %217 : i1 to i32
    %c0_i32_36 = arith.constant 0 : i32
    %219 = arith.cmpi ne, %218, %c0_i32_36 : i32
    scf.if %219 {
      %388 = arith.subi %209, %0 : i32
      %389 = vector.broadcast %213 : f32 to vector<1x2880xf32>
      %390 = vector.broadcast %211 : i32 to vector<1x2880xi32>
      %391 = arith.cmpi eq, %3, %390 : vector<1x2880xi32>
      %392 = arith.index_cast %388 : i32 to index
      %c0_65 = arith.constant 0 : index
      %393 = vector.load %arg4[%392, %c0_65] : memref<728x2880xf32, #tpu.memory_space<vmem>>, vector<1x2880xf32>
      tpu.vector_store %arg4[%392, %c0_65], %389 masked %391 {strides = array<i32>} : memref<728x2880xf32, #tpu.memory_space<vmem>>, vector<1x2880xf32>, vector<1x2880xi1>
    } else {
    }
    %c18_i32 = arith.constant 18 : i32
    %220 = arith.index_cast %c18_i32 : i32 to index
    %221 = memref.load %arg1[%220] : memref<32xi32, #tpu.memory_space<smem>>
    %222 = arith.index_cast %c18_i32 : i32 to index
    %223 = memref.load %arg2[%222] : memref<32xi32, #tpu.memory_space<smem>>
    %224 = arith.index_cast %c18_i32 : i32 to index
    %225 = memref.load %arg3[%224] : memref<32xf32, #tpu.memory_space<smem>>
    %226 = arith.cmpi sge, %221, %0 : i32
    %c728_i32_37 = arith.constant 728 : i32
    %227 = arith.addi %0, %c728_i32_37 : i32
    %228 = arith.cmpi slt, %221, %227 : i32
    %229 = arith.andi %226, %228 : i1
    %230 = arith.extui %229 : i1 to i32
    %c0_i32_38 = arith.constant 0 : i32
    %231 = arith.cmpi ne, %230, %c0_i32_38 : i32
    scf.if %231 {
      %388 = arith.subi %221, %0 : i32
      %389 = vector.broadcast %225 : f32 to vector<1x2880xf32>
      %390 = vector.broadcast %223 : i32 to vector<1x2880xi32>
      %391 = arith.cmpi eq, %3, %390 : vector<1x2880xi32>
      %392 = arith.index_cast %388 : i32 to index
      %c0_65 = arith.constant 0 : index
      %393 = vector.load %arg4[%392, %c0_65] : memref<728x2880xf32, #tpu.memory_space<vmem>>, vector<1x2880xf32>
      tpu.vector_store %arg4[%392, %c0_65], %389 masked %391 {strides = array<i32>} : memref<728x2880xf32, #tpu.memory_space<vmem>>, vector<1x2880xf32>, vector<1x2880xi1>
    } else {
    }
    %c19_i32 = arith.constant 19 : i32
    %232 = arith.index_cast %c19_i32 : i32 to index
    %233 = memref.load %arg1[%232] : memref<32xi32, #tpu.memory_space<smem>>
    %234 = arith.index_cast %c19_i32 : i32 to index
    %235 = memref.load %arg2[%234] : memref<32xi32, #tpu.memory_space<smem>>
    %236 = arith.index_cast %c19_i32 : i32 to index
    %237 = memref.load %arg3[%236] : memref<32xf32, #tpu.memory_space<smem>>
    %238 = arith.cmpi sge, %233, %0 : i32
    %c728_i32_39 = arith.constant 728 : i32
    %239 = arith.addi %0, %c728_i32_39 : i32
    %240 = arith.cmpi slt, %233, %239 : i32
    %241 = arith.andi %238, %240 : i1
    %242 = arith.extui %241 : i1 to i32
    %c0_i32_40 = arith.constant 0 : i32
    %243 = arith.cmpi ne, %242, %c0_i32_40 : i32
    scf.if %243 {
      %388 = arith.subi %233, %0 : i32
      %389 = vector.broadcast %237 : f32 to vector<1x2880xf32>
      %390 = vector.broadcast %235 : i32 to vector<1x2880xi32>
      %391 = arith.cmpi eq, %3, %390 : vector<1x2880xi32>
      %392 = arith.index_cast %388 : i32 to index
      %c0_65 = arith.constant 0 : index
      %393 = vector.load %arg4[%392, %c0_65] : memref<728x2880xf32, #tpu.memory_space<vmem>>, vector<1x2880xf32>
      tpu.vector_store %arg4[%392, %c0_65], %389 masked %391 {strides = array<i32>} : memref<728x2880xf32, #tpu.memory_space<vmem>>, vector<1x2880xf32>, vector<1x2880xi1>
    } else {
    }
    %c20_i32 = arith.constant 20 : i32
    %244 = arith.index_cast %c20_i32 : i32 to index
    %245 = memref.load %arg1[%244] : memref<32xi32, #tpu.memory_space<smem>>
    %246 = arith.index_cast %c20_i32 : i32 to index
    %247 = memref.load %arg2[%246] : memref<32xi32, #tpu.memory_space<smem>>
    %248 = arith.index_cast %c20_i32 : i32 to index
    %249 = memref.load %arg3[%248] : memref<32xf32, #tpu.memory_space<smem>>
    %250 = arith.cmpi sge, %245, %0 : i32
    %c728_i32_41 = arith.constant 728 : i32
    %251 = arith.addi %0, %c728_i32_41 : i32
    %252 = arith.cmpi slt, %245, %251 : i32
    %253 = arith.andi %250, %252 : i1
    %254 = arith.extui %253 : i1 to i32
    %c0_i32_42 = arith.constant 0 : i32
    %255 = arith.cmpi ne, %254, %c0_i32_42 : i32
    scf.if %255 {
      %388 = arith.subi %245, %0 : i32
      %389 = vector.broadcast %249 : f32 to vector<1x2880xf32>
      %390 = vector.broadcast %247 : i32 to vector<1x2880xi32>
      %391 = arith.cmpi eq, %3, %390 : vector<1x2880xi32>
      %392 = arith.index_cast %388 : i32 to index
      %c0_65 = arith.constant 0 : index
      %393 = vector.load %arg4[%392, %c0_65] : memref<728x2880xf32, #tpu.memory_space<vmem>>, vector<1x2880xf32>
      tpu.vector_store %arg4[%392, %c0_65], %389 masked %391 {strides = array<i32>} : memref<728x2880xf32, #tpu.memory_space<vmem>>, vector<1x2880xf32>, vector<1x2880xi1>
    } else {
    }
    %c21_i32 = arith.constant 21 : i32
    %256 = arith.index_cast %c21_i32 : i32 to index
    %257 = memref.load %arg1[%256] : memref<32xi32, #tpu.memory_space<smem>>
    %258 = arith.index_cast %c21_i32 : i32 to index
    %259 = memref.load %arg2[%258] : memref<32xi32, #tpu.memory_space<smem>>
    %260 = arith.index_cast %c21_i32 : i32 to index
    %261 = memref.load %arg3[%260] : memref<32xf32, #tpu.memory_space<smem>>
    %262 = arith.cmpi sge, %257, %0 : i32
    %c728_i32_43 = arith.constant 728 : i32
    %263 = arith.addi %0, %c728_i32_43 : i32
    %264 = arith.cmpi slt, %257, %263 : i32
    %265 = arith.andi %262, %264 : i1
    %266 = arith.extui %265 : i1 to i32
    %c0_i32_44 = arith.constant 0 : i32
    %267 = arith.cmpi ne, %266, %c0_i32_44 : i32
    scf.if %267 {
      %388 = arith.subi %257, %0 : i32
      %389 = vector.broadcast %261 : f32 to vector<1x2880xf32>
      %390 = vector.broadcast %259 : i32 to vector<1x2880xi32>
      %391 = arith.cmpi eq, %3, %390 : vector<1x2880xi32>
      %392 = arith.index_cast %388 : i32 to index
      %c0_65 = arith.constant 0 : index
      %393 = vector.load %arg4[%392, %c0_65] : memref<728x2880xf32, #tpu.memory_space<vmem>>, vector<1x2880xf32>
      tpu.vector_store %arg4[%392, %c0_65], %389 masked %391 {strides = array<i32>} : memref<728x2880xf32, #tpu.memory_space<vmem>>, vector<1x2880xf32>, vector<1x2880xi1>
    } else {
    }
    %c22_i32 = arith.constant 22 : i32
    %268 = arith.index_cast %c22_i32 : i32 to index
    %269 = memref.load %arg1[%268] : memref<32xi32, #tpu.memory_space<smem>>
    %270 = arith.index_cast %c22_i32 : i32 to index
    %271 = memref.load %arg2[%270] : memref<32xi32, #tpu.memory_space<smem>>
    %272 = arith.index_cast %c22_i32 : i32 to index
    %273 = memref.load %arg3[%272] : memref<32xf32, #tpu.memory_space<smem>>
    %274 = arith.cmpi sge, %269, %0 : i32
    %c728_i32_45 = arith.constant 728 : i32
    %275 = arith.addi %0, %c728_i32_45 : i32
    %276 = arith.cmpi slt, %269, %275 : i32
    %277 = arith.andi %274, %276 : i1
    %278 = arith.extui %277 : i1 to i32
    %c0_i32_46 = arith.constant 0 : i32
    %279 = arith.cmpi ne, %278, %c0_i32_46 : i32
    scf.if %279 {
      %388 = arith.subi %269, %0 : i32
      %389 = vector.broadcast %273 : f32 to vector<1x2880xf32>
      %390 = vector.broadcast %271 : i32 to vector<1x2880xi32>
      %391 = arith.cmpi eq, %3, %390 : vector<1x2880xi32>
      %392 = arith.index_cast %388 : i32 to index
      %c0_65 = arith.constant 0 : index
      %393 = vector.load %arg4[%392, %c0_65] : memref<728x2880xf32, #tpu.memory_space<vmem>>, vector<1x2880xf32>
      tpu.vector_store %arg4[%392, %c0_65], %389 masked %391 {strides = array<i32>} : memref<728x2880xf32, #tpu.memory_space<vmem>>, vector<1x2880xf32>, vector<1x2880xi1>
    } else {
    }
    %c23_i32 = arith.constant 23 : i32
    %280 = arith.index_cast %c23_i32 : i32 to index
    %281 = memref.load %arg1[%280] : memref<32xi32, #tpu.memory_space<smem>>
    %282 = arith.index_cast %c23_i32 : i32 to index
    %283 = memref.load %arg2[%282] : memref<32xi32, #tpu.memory_space<smem>>
    %284 = arith.index_cast %c23_i32 : i32 to index
    %285 = memref.load %arg3[%284] : memref<32xf32, #tpu.memory_space<smem>>
    %286 = arith.cmpi sge, %281, %0 : i32
    %c728_i32_47 = arith.constant 728 : i32
    %287 = arith.addi %0, %c728_i32_47 : i32
    %288 = arith.cmpi slt, %281, %287 : i32
    %289 = arith.andi %286, %288 : i1
    %290 = arith.extui %289 : i1 to i32
    %c0_i32_48 = arith.constant 0 : i32
    %291 = arith.cmpi ne, %290, %c0_i32_48 : i32
    scf.if %291 {
      %388 = arith.subi %281, %0 : i32
      %389 = vector.broadcast %285 : f32 to vector<1x2880xf32>
      %390 = vector.broadcast %283 : i32 to vector<1x2880xi32>
      %391 = arith.cmpi eq, %3, %390 : vector<1x2880xi32>
      %392 = arith.index_cast %388 : i32 to index
      %c0_65 = arith.constant 0 : index
      %393 = vector.load %arg4[%392, %c0_65] : memref<728x2880xf32, #tpu.memory_space<vmem>>, vector<1x2880xf32>
      tpu.vector_store %arg4[%392, %c0_65], %389 masked %391 {strides = array<i32>} : memref<728x2880xf32, #tpu.memory_space<vmem>>, vector<1x2880xf32>, vector<1x2880xi1>
    } else {
    }
    %c24_i32 = arith.constant 24 : i32
    %292 = arith.index_cast %c24_i32 : i32 to index
    %293 = memref.load %arg1[%292] : memref<32xi32, #tpu.memory_space<smem>>
    %294 = arith.index_cast %c24_i32 : i32 to index
    %295 = memref.load %arg2[%294] : memref<32xi32, #tpu.memory_space<smem>>
    %296 = arith.index_cast %c24_i32 : i32 to index
    %297 = memref.load %arg3[%296] : memref<32xf32, #tpu.memory_space<smem>>
    %298 = arith.cmpi sge, %293, %0 : i32
    %c728_i32_49 = arith.constant 728 : i32
    %299 = arith.addi %0, %c728_i32_49 : i32
    %300 = arith.cmpi slt, %293, %299 : i32
    %301 = arith.andi %298, %300 : i1
    %302 = arith.extui %301 : i1 to i32
    %c0_i32_50 = arith.constant 0 : i32
    %303 = arith.cmpi ne, %302, %c0_i32_50 : i32
    scf.if %303 {
      %388 = arith.subi %293, %0 : i32
      %389 = vector.broadcast %297 : f32 to vector<1x2880xf32>
      %390 = vector.broadcast %295 : i32 to vector<1x2880xi32>
      %391 = arith.cmpi eq, %3, %390 : vector<1x2880xi32>
      %392 = arith.index_cast %388 : i32 to index
      %c0_65 = arith.constant 0 : index
      %393 = vector.load %arg4[%392, %c0_65] : memref<728x2880xf32, #tpu.memory_space<vmem>>, vector<1x2880xf32>
      tpu.vector_store %arg4[%392, %c0_65], %389 masked %391 {strides = array<i32>} : memref<728x2880xf32, #tpu.memory_space<vmem>>, vector<1x2880xf32>, vector<1x2880xi1>
    } else {
    }
    %c25_i32 = arith.constant 25 : i32
    %304 = arith.index_cast %c25_i32 : i32 to index
    %305 = memref.load %arg1[%304] : memref<32xi32, #tpu.memory_space<smem>>
    %306 = arith.index_cast %c25_i32 : i32 to index
    %307 = memref.load %arg2[%306] : memref<32xi32, #tpu.memory_space<smem>>
    %308 = arith.index_cast %c25_i32 : i32 to index
    %309 = memref.load %arg3[%308] : memref<32xf32, #tpu.memory_space<smem>>
    %310 = arith.cmpi sge, %305, %0 : i32
    %c728_i32_51 = arith.constant 728 : i32
    %311 = arith.addi %0, %c728_i32_51 : i32
    %312 = arith.cmpi slt, %305, %311 : i32
    %313 = arith.andi %310, %312 : i1
    %314 = arith.extui %313 : i1 to i32
    %c0_i32_52 = arith.constant 0 : i32
    %315 = arith.cmpi ne, %314, %c0_i32_52 : i32
    scf.if %315 {
      %388 = arith.subi %305, %0 : i32
      %389 = vector.broadcast %309 : f32 to vector<1x2880xf32>
      %390 = vector.broadcast %307 : i32 to vector<1x2880xi32>
      %391 = arith.cmpi eq, %3, %390 : vector<1x2880xi32>
      %392 = arith.index_cast %388 : i32 to index
      %c0_65 = arith.constant 0 : index
      %393 = vector.load %arg4[%392, %c0_65] : memref<728x2880xf32, #tpu.memory_space<vmem>>, vector<1x2880xf32>
      tpu.vector_store %arg4[%392, %c0_65], %389 masked %391 {strides = array<i32>} : memref<728x2880xf32, #tpu.memory_space<vmem>>, vector<1x2880xf32>, vector<1x2880xi1>
    } else {
    }
    %c26_i32 = arith.constant 26 : i32
    %316 = arith.index_cast %c26_i32 : i32 to index
    %317 = memref.load %arg1[%316] : memref<32xi32, #tpu.memory_space<smem>>
    %318 = arith.index_cast %c26_i32 : i32 to index
    %319 = memref.load %arg2[%318] : memref<32xi32, #tpu.memory_space<smem>>
    %320 = arith.index_cast %c26_i32 : i32 to index
    %321 = memref.load %arg3[%320] : memref<32xf32, #tpu.memory_space<smem>>
    %322 = arith.cmpi sge, %317, %0 : i32
    %c728_i32_53 = arith.constant 728 : i32
    %323 = arith.addi %0, %c728_i32_53 : i32
    %324 = arith.cmpi slt, %317, %323 : i32
    %325 = arith.andi %322, %324 : i1
    %326 = arith.extui %325 : i1 to i32
    %c0_i32_54 = arith.constant 0 : i32
    %327 = arith.cmpi ne, %326, %c0_i32_54 : i32
    scf.if %327 {
      %388 = arith.subi %317, %0 : i32
      %389 = vector.broadcast %321 : f32 to vector<1x2880xf32>
      %390 = vector.broadcast %319 : i32 to vector<1x2880xi32>
      %391 = arith.cmpi eq, %3, %390 : vector<1x2880xi32>
      %392 = arith.index_cast %388 : i32 to index
      %c0_65 = arith.constant 0 : index
      %393 = vector.load %arg4[%392, %c0_65] : memref<728x2880xf32, #tpu.memory_space<vmem>>, vector<1x2880xf32>
      tpu.vector_store %arg4[%392, %c0_65], %389 masked %391 {strides = array<i32>} : memref<728x2880xf32, #tpu.memory_space<vmem>>, vector<1x2880xf32>, vector<1x2880xi1>
    } else {
    }
    %c27_i32 = arith.constant 27 : i32
    %328 = arith.index_cast %c27_i32 : i32 to index
    %329 = memref.load %arg1[%328] : memref<32xi32, #tpu.memory_space<smem>>
    %330 = arith.index_cast %c27_i32 : i32 to index
    %331 = memref.load %arg2[%330] : memref<32xi32, #tpu.memory_space<smem>>
    %332 = arith.index_cast %c27_i32 : i32 to index
    %333 = memref.load %arg3[%332] : memref<32xf32, #tpu.memory_space<smem>>
    %334 = arith.cmpi sge, %329, %0 : i32
    %c728_i32_55 = arith.constant 728 : i32
    %335 = arith.addi %0, %c728_i32_55 : i32
    %336 = arith.cmpi slt, %329, %335 : i32
    %337 = arith.andi %334, %336 : i1
    %338 = arith.extui %337 : i1 to i32
    %c0_i32_56 = arith.constant 0 : i32
    %339 = arith.cmpi ne, %338, %c0_i32_56 : i32
    scf.if %339 {
      %388 = arith.subi %329, %0 : i32
      %389 = vector.broadcast %333 : f32 to vector<1x2880xf32>
      %390 = vector.broadcast %331 : i32 to vector<1x2880xi32>
      %391 = arith.cmpi eq, %3, %390 : vector<1x2880xi32>
      %392 = arith.index_cast %388 : i32 to index
      %c0_65 = arith.constant 0 : index
      %393 = vector.load %arg4[%392, %c0_65] : memref<728x2880xf32, #tpu.memory_space<vmem>>, vector<1x2880xf32>
      tpu.vector_store %arg4[%392, %c0_65], %389 masked %391 {strides = array<i32>} : memref<728x2880xf32, #tpu.memory_space<vmem>>, vector<1x2880xf32>, vector<1x2880xi1>
    } else {
    }
    %c28_i32 = arith.constant 28 : i32
    %340 = arith.index_cast %c28_i32 : i32 to index
    %341 = memref.load %arg1[%340] : memref<32xi32, #tpu.memory_space<smem>>
    %342 = arith.index_cast %c28_i32 : i32 to index
    %343 = memref.load %arg2[%342] : memref<32xi32, #tpu.memory_space<smem>>
    %344 = arith.index_cast %c28_i32 : i32 to index
    %345 = memref.load %arg3[%344] : memref<32xf32, #tpu.memory_space<smem>>
    %346 = arith.cmpi sge, %341, %0 : i32
    %c728_i32_57 = arith.constant 728 : i32
    %347 = arith.addi %0, %c728_i32_57 : i32
    %348 = arith.cmpi slt, %341, %347 : i32
    %349 = arith.andi %346, %348 : i1
    %350 = arith.extui %349 : i1 to i32
    %c0_i32_58 = arith.constant 0 : i32
    %351 = arith.cmpi ne, %350, %c0_i32_58 : i32
    scf.if %351 {
      %388 = arith.subi %341, %0 : i32
      %389 = vector.broadcast %345 : f32 to vector<1x2880xf32>
      %390 = vector.broadcast %343 : i32 to vector<1x2880xi32>
      %391 = arith.cmpi eq, %3, %390 : vector<1x2880xi32>
      %392 = arith.index_cast %388 : i32 to index
      %c0_65 = arith.constant 0 : index
      %393 = vector.load %arg4[%392, %c0_65] : memref<728x2880xf32, #tpu.memory_space<vmem>>, vector<1x2880xf32>
      tpu.vector_store %arg4[%392, %c0_65], %389 masked %391 {strides = array<i32>} : memref<728x2880xf32, #tpu.memory_space<vmem>>, vector<1x2880xf32>, vector<1x2880xi1>
    } else {
    }
    %c29_i32 = arith.constant 29 : i32
    %352 = arith.index_cast %c29_i32 : i32 to index
    %353 = memref.load %arg1[%352] : memref<32xi32, #tpu.memory_space<smem>>
    %354 = arith.index_cast %c29_i32 : i32 to index
    %355 = memref.load %arg2[%354] : memref<32xi32, #tpu.memory_space<smem>>
    %356 = arith.index_cast %c29_i32 : i32 to index
    %357 = memref.load %arg3[%356] : memref<32xf32, #tpu.memory_space<smem>>
    %358 = arith.cmpi sge, %353, %0 : i32
    %c728_i32_59 = arith.constant 728 : i32
    %359 = arith.addi %0, %c728_i32_59 : i32
    %360 = arith.cmpi slt, %353, %359 : i32
    %361 = arith.andi %358, %360 : i1
    %362 = arith.extui %361 : i1 to i32
    %c0_i32_60 = arith.constant 0 : i32
    %363 = arith.cmpi ne, %362, %c0_i32_60 : i32
    scf.if %363 {
      %388 = arith.subi %353, %0 : i32
      %389 = vector.broadcast %357 : f32 to vector<1x2880xf32>
      %390 = vector.broadcast %355 : i32 to vector<1x2880xi32>
      %391 = arith.cmpi eq, %3, %390 : vector<1x2880xi32>
      %392 = arith.index_cast %388 : i32 to index
      %c0_65 = arith.constant 0 : index
      %393 = vector.load %arg4[%392, %c0_65] : memref<728x2880xf32, #tpu.memory_space<vmem>>, vector<1x2880xf32>
      tpu.vector_store %arg4[%392, %c0_65], %389 masked %391 {strides = array<i32>} : memref<728x2880xf32, #tpu.memory_space<vmem>>, vector<1x2880xf32>, vector<1x2880xi1>
    } else {
    }
    %c30_i32 = arith.constant 30 : i32
    %364 = arith.index_cast %c30_i32 : i32 to index
    %365 = memref.load %arg1[%364] : memref<32xi32, #tpu.memory_space<smem>>
    %366 = arith.index_cast %c30_i32 : i32 to index
    %367 = memref.load %arg2[%366] : memref<32xi32, #tpu.memory_space<smem>>
    %368 = arith.index_cast %c30_i32 : i32 to index
    %369 = memref.load %arg3[%368] : memref<32xf32, #tpu.memory_space<smem>>
    %370 = arith.cmpi sge, %365, %0 : i32
    %c728_i32_61 = arith.constant 728 : i32
    %371 = arith.addi %0, %c728_i32_61 : i32
    %372 = arith.cmpi slt, %365, %371 : i32
    %373 = arith.andi %370, %372 : i1
    %374 = arith.extui %373 : i1 to i32
    %c0_i32_62 = arith.constant 0 : i32
    %375 = arith.cmpi ne, %374, %c0_i32_62 : i32
    scf.if %375 {
      %388 = arith.subi %365, %0 : i32
      %389 = vector.broadcast %369 : f32 to vector<1x2880xf32>
      %390 = vector.broadcast %367 : i32 to vector<1x2880xi32>
      %391 = arith.cmpi eq, %3, %390 : vector<1x2880xi32>
      %392 = arith.index_cast %388 : i32 to index
      %c0_65 = arith.constant 0 : index
      %393 = vector.load %arg4[%392, %c0_65] : memref<728x2880xf32, #tpu.memory_space<vmem>>, vector<1x2880xf32>
      tpu.vector_store %arg4[%392, %c0_65], %389 masked %391 {strides = array<i32>} : memref<728x2880xf32, #tpu.memory_space<vmem>>, vector<1x2880xf32>, vector<1x2880xi1>
    } else {
    }
    %c31_i32 = arith.constant 31 : i32
    %376 = arith.index_cast %c31_i32 : i32 to index
    %377 = memref.load %arg1[%376] : memref<32xi32, #tpu.memory_space<smem>>
    %378 = arith.index_cast %c31_i32 : i32 to index
    %379 = memref.load %arg2[%378] : memref<32xi32, #tpu.memory_space<smem>>
    %380 = arith.index_cast %c31_i32 : i32 to index
    %381 = memref.load %arg3[%380] : memref<32xf32, #tpu.memory_space<smem>>
    %382 = arith.cmpi sge, %377, %0 : i32
    %c728_i32_63 = arith.constant 728 : i32
    %383 = arith.addi %0, %c728_i32_63 : i32
    %384 = arith.cmpi slt, %377, %383 : i32
    %385 = arith.andi %382, %384 : i1
    %386 = arith.extui %385 : i1 to i32
    %c0_i32_64 = arith.constant 0 : i32
    %387 = arith.cmpi ne, %386, %c0_i32_64 : i32
    scf.if %387 {
      %388 = arith.subi %377, %0 : i32
      %389 = vector.broadcast %381 : f32 to vector<1x2880xf32>
      %390 = vector.broadcast %379 : i32 to vector<1x2880xi32>
      %391 = arith.cmpi eq, %3, %390 : vector<1x2880xi32>
      %392 = arith.index_cast %388 : i32 to index
      %c0_65 = arith.constant 0 : index
      %393 = vector.load %arg4[%392, %c0_65] : memref<728x2880xf32, #tpu.memory_space<vmem>>, vector<1x2880xf32>
      tpu.vector_store %arg4[%392, %c0_65], %389 masked %391 {strides = array<i32>} : memref<728x2880xf32, #tpu.memory_space<vmem>>, vector<1x2880xf32>, vector<1x2880xi1>
    } else {
    }
    %c32_i32 = arith.constant 32 : i32
    return
  }
  func.func @transform_0(%arg0: i32, %arg1: memref<32xi32, #tpu.memory_space<smem>>, %arg2: memref<32xi32, #tpu.memory_space<smem>>, %arg3: memref<32xf32, #tpu.memory_space<smem>>) -> (i32, i32) {
    %c0_i32 = arith.constant 0 : i32
    %c0_i32_0 = arith.constant 0 : i32
    return %arg0, %c0_i32 : i32, i32
  }
}

</mosaic_0001>

<llo_original>
// kernel: tpu_custom_call.1
$region0: #{tpu_custom_call.1}
  #allocation0 [shape = 'u32[]', space=smem, size = 0x4, offset = 0x4, fixed_abs, tag = 'smem constant byte address 0x4 - core index']
  #allocation1 [shape = 'u32[144,128]{1,0:T(1,128)}', space=vmem, size = 0x12000, scoped, tag = 'internal scratch']
  #allocation2 [shape = 's32[1]{0}', space=sflag, size = 0x4, scoped, tag = 'scoped memory for tpu_custom_call.1']
  #allocation3 [shape = 'u8[512]{0}', space=smem, size = 0x200, scoped, tag = 'prefetched SMEM operand 0']
  #allocation4 [shape = 'u8[512]{0}', space=smem, size = 0x200, scoped, tag = 'prefetched SMEM operand 1']
  #allocation5 [shape = 'u8[512]{0}', space=smem, size = 0x200, scoped, tag = 'prefetched SMEM operand 2']
  %s0 = inlined_call_operand.hbm [shape: s32[32], index: 0, kind: input, shape index: {}]
  %s1 = inlined_call_operand.hbm [shape: s32[32], index: 1, kind: input, shape index: {}]
  %s2 = inlined_call_operand.hbm [shape: f32[32], index: 2, kind: input, shape index: {}]
  %s3 = inlined_call_operand.hbm [shape: f32[1441,2880], index: 3, kind: output, shape index: {}]
  %s4 = sld [smem:[#allocation0]]
  $region153: #{tpu_custom_call.1} parent=0
    _
  %s6 = ssub.s32 1, %s4
  %s7 = scalar_select 0, %s6, %s4
  %9 = dma.hbm_to_smem %s0, 16, [#allocation3], [#allocation2]
  %11 = dma.hbm_to_smem %s1, 16, [#allocation4], [#allocation2]
  %13 = dma.hbm_to_smem %s2, 16, [#allocation5], [#allocation2]
  %14 = dma.done [#allocation2], 48
  %15 = sfence
  $region1: #{tpu_custom_call.1} parent=0
    #allocation6 [shape = 'u8[17145856]{0}', space=vmem, size = 0x105a000, scoped, tag = 'output window, operand 0']
    #allocation7 [shape = 's32[2]{0}', space=sflag, size = 0x8, scoped, tag = 'scoped memory for tpu_custom_call.1']
    %16 = vsyncpa [#allocation7], 0
    %s17 = scalar_lea.sflag [#allocation7], 1
    %18 = vsyncpa %s17, 0
    loop: start=0, step=1, limit=3
    $region2: #{tpu_custom_call.1} parent=1 // loop_pre_header
      _
    $region3: #{tpu_custom_call.1} parent=1 // loop_header
      %s20 = sphi 0, %s24
      %p21 = scmp.ge.s32.totalorder %s20, 3
      %s29 = sphi 0, %s31
      %s32 = sphi 0, %s29
      %s42 = sphi 0, %s32
    $region4: #{tpu_custom_call.1} parent=1 // loop_header_branch
      %23 = sbr.rel (%p21) target = $region8
    $region5: #{tpu_custom_call.1} parent=1 // loop_body
      %s25 = ssub.s32 %s20, 1
      %s26 = sadd.s32 %s20, 1
      %s27 = ssub.s32 %s20, %s26
      %p28 = scmp.eq.s32.totalorder %s27, 0
      %s30 = sadd.s32 %s29, 1
      %s31 = scalar_select %p28, %s29, %s30
      %p33 = pneg %p28
      %p34 = scmp.eq.s32.totalorder %s20, 1
      %p35 = por %p33, %p34
      %p36 = scmp.ne.s32.totalorder %s29, %s32
      %p37 = scmp.eq.s32.totalorder %s20, 0
      %p38 = por %p36, %p37
      %p39 = scmp.ne.s32.totalorder %s29, %s32
      %p40 = scmp.eq.s32.totalorder %s25, 1
      %p41 = por %p39, %p40
      %p43 = scmp.ne.s32.totalorder %s32, %s42
      %p44 = scmp.eq.s32.totalorder %s25, 0
      %p45 = por %p43, %p44
      %p46 = scmp.lt.s32.totalorder %s20, 2
      // Predicated region
      $region9: #{tpu_custom_call.1} parent=5 // pred_check
        %p47 = pneg %p46
      $region10: #{tpu_custom_call.1} parent=5 // pred_check_branch
        %49 = sbr.rel (%p47) target = $region12
      $region11: #{tpu_custom_call.1} parent=5 // pred_region
        %p50 = pneg %p38
        %p51 = pneg %p35
        %s52 = sand.u32 %s29, 1
        %s53 = scalar_lea.sflag [#allocation7], %s52
        %s54 = sand.u32 %s29, 1
        %s55 = smul.addr %s54, 16744
        %s56 = scalar_lea.vmem [#allocation6], %s55
        %s57 = smul.u32 91, %s20
        %s58 = ssub.s32 181, %s57
        %p59 = scmp.lt.s32.totalorder %s58, 91
        %s60 = scalar_select %p59, %s58, 91
        %s61 = smul.u32 128, %s60
        %s62 = smul.u32 %s61, 23
        %s63 = smul.u32 %s20, 728
        %64 = vst [vmem:[%s56] sm:$0xff] 0.0
        %65 = vst [vmem:[%s56 + $0x8] sm:$0xff] 0.0
        %66 = vst [vmem:[%s56 + $0x10] sm:$0xff] 0.0
        %67 = vst [vmem:[%s56 + $0x18] sm:$0xff] 0.0
        %68 = vst [vmem:[%s56 + $0x20] sm:$0xff] 0.0
        %69 = vst [vmem:[%s56 + $0x28] sm:$0xff] 0.0
        %70 = vst [vmem:[%s56 + $0x30] sm:$0xff] 0.0
        %71 = vst [vmem:[%s56 + $0x38] sm:$0xff] 0.0
        %72 = vst [vmem:[%s56 + $0x40] sm:$0xff] 0.0
        %73 = vst [vmem:[%s56 + $0x48] sm:$0xff] 0.0
        %74 = vst [vmem:[%s56 + $0x50] sm:$0xff] 0.0
        %75 = vst [vmem:[%s56 + $0x58] sm:$0xff] 0.0
        %76 = vst [vmem:[%s56 + $0x60] sm:$0xff] 0.0
        %77 = vst [vmem:[%s56 + $0x68] sm:$0xff] 0.0
        %78 = vst [vmem:[%s56 + $0x70] sm:$0xff] 0.0
        %79 = vst [vmem:[%s56 + $0x78] sm:$0xff] 0.0
        %80 = vst [vmem:[%s56 + $0x80] sm:$0xff] 0.0
        %81 = vst [vmem:[%s56 + $0x88] sm:$0xff] 0.0
        %82 = vst [vmem:[%s56 + $0x90] sm:$0xff] 0.0
        %83 = vst [vmem:[%s56 + $0x98] sm:$0xff] 0.0
        %84 = vst [vmem:[%s56 + $0xa0] sm:$0xff] 0.0
        %85 = vst [vmem:[%s56 + $0xa8] sm:$0xff] 0.0
        %vm86 = vcmask 523264
        %87 = vst.msk [vmem:[%s56 + $0xb0] sm:$0xff] %vm86, 0.0
        %88 = vst [vmem:[%s56 + $0xb8] sm:$0xff] 0.0
        %89 = vst [vmem:[%s56 + $0xc0] sm:$0xff] 0.0
        %90 = vst [vmem:[%s56 + $0xc8] sm:$0xff] 0.0
        %91 = vst [vmem:[%s56 + $0xd0] sm:$0xff] 0.0
        %92 = vst [vmem:[%s56 + $0xd8] sm:$0xff] 0.0
        %93 = vst [vmem:[%s56 + $0xe0] sm:$0xff] 0.0
        %94 = vst [vmem:[%s56 + $0xe8] sm:$0xff] 0.0
        %95 = vst [vmem:[%s56 + $0xf0] sm:$0xff] 0.0
        %96 = vst [vmem:[%s56 + $0xf8] sm:$0xff] 0.0
        %97 = vst [vmem:[%s56 + $0x100] sm:$0xff] 0.0
        %98 = vst [vmem:[%s56 + $0x108] sm:$0xff] 0.0
        %99 = vst [vmem:[%s56 + $0x110] sm:$0xff] 0.0
        %100 = vst [vmem:[%s56 + $0x118] sm:$0xff] 0.0
        %101 = vst [vmem:[%s56 + $0x120] sm:$0xff] 0.0
        %102 = vst [vmem:[%s56 + $0x128] sm:$0xff] 0.0
        %103 = vst [vmem:[%s56 + $0x130] sm:$0xff] 0.0
        %104 = vst [vmem:[%s56 + $0x138] sm:$0xff] 0.0
        %105 = vst [vmem:[%s56 + $0x140] sm:$0xff] 0.0
        %106 = vst [vmem:[%s56 + $0x148] sm:$0xff] 0.0
        %107 = vst [vmem:[%s56 + $0x150] sm:$0xff] 0.0
        %108 = vst [vmem:[%s56 + $0x158] sm:$0xff] 0.0
        %109 = vst [vmem:[%s56 + $0x160] sm:$0xff] 0.0
        %110 = vst.msk [vmem:[%s56 + $0x168] sm:$0xff] %vm86, 0.0
        %111 = vst [vmem:[%s56 + $0x170] sm:$0xff] 0.0
        %112 = vst [vmem:[%s56 + $0x178] sm:$0xff] 0.0
        %113 = vst [vmem:[%s56 + $0x180] sm:$0xff] 0.0
        %114 = vst [vmem:[%s56 + $0x188] sm:$0xff] 0.0
        %115 = vst [vmem:[%s56 + $0x190] sm:$0xff] 0.0
        %116 = vst [vmem:[%s56 + $0x198] sm:$0xff] 0.0
        %117 = vst [vmem:[%s56 + $0x1a0] sm:$0xff] 0.0
        %118 = vst [vmem:[%s56 + $0x1a8] sm:$0xff] 0.0
        %119 = vst [vmem:[%s56 + $0x1b0] sm:$0xff] 0.0
        %120 = vst [vmem:[%s56 + $0x1b8] sm:$0xff] 0.0
        %121 = vst [vmem:[%s56 + $0x1c0] sm:$0xff] 0.0
        %122 = vst [vmem:[%s56 + $0x1c8] sm:$0xff] 0.0
        %123 = vst [vmem:[%s56 + $0x1d0] sm:$0xff] 0.0
        %124 = vst [vmem:[%s56 + $0x1d8] sm:$0xff] 0.0
        %125 = vst [vmem:[%s56 + $0x1e0] sm:$0xff] 0.0
        %126 = vst [vmem:[%s56 + $0x1e8] sm:$0xff] 0.0
        %127 = vst [vmem:[%s56 + $0x1f0] sm:$0xff] 0.0
        %128 = vst [vmem:[%s56 + $0x1f8] sm:$0xff] 0.0
        %129 = vst [vmem:[%s56 + $0x200] sm:$0xff] 0.0
        %130 = vst [vmem:[%s56 + $0x208] sm:$0xff] 0.0
        %131 = vst [vmem:[%s56 + $0x210] sm:$0xff] 0.0
        %132 = vst [vmem:[%s56 + $0x218] sm:$0xff] 0.0
        %133 = vst.msk [vmem:[%s56 + $0x220] sm:$0xff] %vm86, 0.0
        %134 = vst [vmem:[%s56 + $0x228] sm:$0xff] 0.0
        %135 = vst [vmem:[%s56 + $0x230] sm:$0xff] 0.0
        %136 = vst [vmem:[%s56 + $0x238] sm:$0xff] 0.0
        %137 = vst [vmem:[%s56 + $0x240] sm:$0xff] 0.0
        %138 = vst [vmem:[%s56 + $0x248] sm:$0xff] 0.0
        %139 = vst [vmem:[%s56 + $0x250] sm:$0xff] 0.0
        %140 = vst [vmem:[%s56 + $0x258] sm:$0xff] 0.0
        %141 = vst [vmem:[%s56 + $0x260] sm:$0xff] 0.0
        %142 = vst [vmem:[%s56 + $0x268] sm:$0xff] 0.0
        %143 = vst [vmem:[%s56 + $0x270] sm:$0xff] 0.0
        %144 = vst [vmem:[%s56 + $0x278] sm:$0xff] 0.0
        %145 = vst [vmem:[%s56 + $0x280] sm:$0xff] 0.0
        %146 = vst [vmem:[%s56 + $0x288] sm:$0xff] 0.0
        %147 = vst [vmem:[%s56 + $0x290] sm:$0xff] 0.0
        %148 = vst [vmem:[%s56 + $0x298] sm:$0xff] 0.0
        %149 = vst [vmem:[%s56 + $0x2a0] sm:$0xff] 0.0
        %150 = vst [vmem:[%s56 + $0x2a8] sm:$0xff] 0.0
        %151 = vst [vmem:[%s56 + $0x2b0] sm:$0xff] 0.0
        %152 = vst [vmem:[%s56 + $0x2b8] sm:$0xff] 0.0
        %153 = vst [vmem:[%s56 + $0x2c0] sm:$0xff] 0.0
        %154 = vst [vmem:[%s56 + $0x2c8] sm:$0xff] 0.0
        %155 = vst [vmem:[%s56 + $0x2d0] sm:$0xff] 0.0
        %156 = vst.msk [vmem:[%s56 + $0x2d8] sm:$0xff] %vm86, 0.0
        %157 = vst [vmem:[%s56 + $0x2e0] sm:$0xff] 0.0
        %158 = vst [vmem:[%s56 + $0x2e8] sm:$0xff] 0.0
        %159 = vst [vmem:[%s56 + $0x2f0] sm:$0xff] 0.0
        %160 = vst [vmem:[%s56 + $0x2f8] sm:$0xff] 0.0
        %161 = vst [vmem:[%s56 + $0x300] sm:$0xff] 0.0
        %162 = vst [vmem:[%s56 + $0x308] sm:$0xff] 0.0
        %163 = vst [vmem:[%s56 + $0x310] sm:$0xff] 0.0
        %164 = vst [vmem:[%s56 + $0x318] sm:$0xff] 0.0
        %165 = vst [vmem:[%s56 + $0x320] sm:$0xff] 0.0
        %166 = vst [vmem:[%s56 + $0x328] sm:$0xff] 0.0
        %167 = vst [vmem:[%s56 + $0x330] sm:$0xff] 0.0
        %168 = vst [vmem:[%s56 + $0x338] sm:$0xff] 0.0
        %169 = vst [vmem:[%s56 + $0x340] sm:$0xff] 0.0
        %170 = vst [vmem:[%s56 + $0x348] sm:$0xff] 0.0
        %171 = vst [vmem:[%s56 + $0x350] sm:$0xff] 0.0
        %172 = vst [vmem:[%s56 + $0x358] sm:$0xff] 0.0
        %173 = vst [vmem:[%s56 + $0x360] sm:$0xff] 0.0
        %174 = vst [vmem:[%s56 + $0x368] sm:$0xff] 0.0
        %175 = vst [vmem:[%s56 + $0x370] sm:$0xff] 0.0
        %176 = vst [vmem:[%s56 + $0x378] sm:$0xff] 0.0
        %177 = vst [vmem:[%s56 + $0x380] sm:$0xff] 0.0
        %178 = vst [vmem:[%s56 + $0x388] sm:$0xff] 0.0
        %179 = vst.msk [vmem:[%s56 + $0x390] sm:$0xff] %vm86, 0.0
        %180 = vst [vmem:[%s56 + $0x398] sm:$0xff] 0.0
        %181 = vst [vmem:[%s56 + $0x3a0] sm:$0xff] 0.0
        %182 = vst [vmem:[%s56 + $0x3a8] sm:$0xff] 0.0
        %183 = vst [vmem:[%s56 + $0x3b0] sm:$0xff] 0.0
        %184 = vst [vmem:[%s56 + $0x3b8] sm:$0xff] 0.0
        %185 = vst [vmem:[%s56 + $0x3c0] sm:$0xff] 0.0
        %186 = vst [vmem:[%s56 + $0x3c8] sm:$0xff] 0.0
        %187 = vst [vmem:[%s56 + $0x3d0] sm:$0xff] 0.0
        %188 = vst [vmem:[%s56 + $0x3d8] sm:$0xff] 0.0
        %189 = vst [vmem:[%s56 + $0x3e0] sm:$0xff] 0.0
        %190 = vst [vmem:[%s56 + $0x3e8] sm:$0xff] 0.0
        %191 = vst [vmem:[%s56 + $0x3f0] sm:$0xff] 0.0
        %192 = vst [vmem:[%s56 + $0x3f8] sm:$0xff] 0.0
        %193 = vst [vmem:[%s56 + $0x400] sm:$0xff] 0.0
        %194 = vst [vmem:[%s56 + $0x408] sm:$0xff] 0.0
        %195 = vst [vmem:[%s56 + $0x410] sm:$0xff] 0.0
        %196 = vst [vmem:[%s56 + $0x418] sm:$0xff] 0.0
        %197 = vst [vmem:[%s56 + $0x420] sm:$0xff] 0.0
        %198 = vst [vmem:[%s56 + $0x428] sm:$0xff] 0.0
        %199 = vst [vmem:[%s56 + $0x430] sm:$0xff] 0.0
        %200 = vst [vmem:[%s56 + $0x438] sm:$0xff] 0.0
        %201 = vst [vmem:[%s56 + $0x440] sm:$0xff] 0.0
        %202 = vst.msk [vmem:[%s56 + $0x448] sm:$0xff] %vm86, 0.0
        %203 = vst [vmem:[%s56 + $0x450] sm:$0xff] 0.0
        %204 = vst [vmem:[%s56 + $0x458] sm:$0xff] 0.0
        %205 = vst [vmem:[%s56 + $0x460] sm:$0xff] 0.0
        %206 = vst [vmem:[%s56 + $0x468] sm:$0xff] 0.0
        %207 = vst [vmem:[%s56 + $0x470] sm:$0xff] 0.0
        %208 = vst [vmem:[%s56 + $0x478] sm:$0xff] 0.0
        %209 = vst [vmem:[%s56 + $0x480] sm:$0xff] 0.0
        %210 = vst [vmem:[%s56 + $0x488] sm:$0xff] 0.0
        %211 = vst [vmem:[%s56 + $0x490] sm:$0xff] 0.0
        %212 = vst [vmem:[%s56 + $0x498] sm:$0xff] 0.0
        %213 = vst [vmem:[%s56 + $0x4a0] sm:$0xff] 0.0
        %214 = vst [vmem:[%s56 + $0x4a8] sm:$0xff] 0.0
        %215 = vst [vmem:[%s56 + $0x4b0] sm:$0xff] 0.0
        %216 = vst [vmem:[%s56 + $0x4b8] sm:$0xff] 0.0
        %217 = vst [vmem:[%s56 + $0x4c0] sm:$0xff] 0.0
        %218 = vst [vmem:[%s56 + $0x4c8] sm:$0xff] 0.0
        %219 = vst [vmem:[%s56 + $0x4d0] sm:$0xff] 0.0
        %220 = vst [vmem:[%s56 + $0x4d8] sm:$0xff] 0.0
        %221 = vst [vmem:[%s56 + $0x4e0] sm:$0xff] 0.0
        %222 = vst [vmem:[%s56 + $0x4e8] sm:$0xff] 0.0
        %223 = vst [vmem:[%s56 + $0x4f0] sm:$0xff] 0.0
        %224 = vst [vmem:[%s56 + $0x4f8] sm:$0xff] 0.0
        %225 = vst.msk [vmem:[%s56 + $0x500] sm:$0xff] %vm86, 0.0
        %226 = vst [vmem:[%s56 + $0x508] sm:$0xff] 0.0
        %227 = vst [vmem:[%s56 + $0x510] sm:$0xff] 0.0
        %228 = vst [vmem:[%s56 + $0x518] sm:$0xff] 0.0
        %229 = vst [vmem:[%s56 + $0x520] sm:$0xff] 0.0
        %230 = vst [vmem:[%s56 + $0x528] sm:$0xff] 0.0
        %231 = vst [vmem:[%s56 + $0x530] sm:$0xff] 0.0
        %232 = vst [vmem:[%s56 + $0x538] sm:$0xff] 0.0
        %233 = vst [vmem:[%s56 + $0x540] sm:$0xff] 0.0
        %234 = vst [vmem:[%s56 + $0x548] sm:$0xff] 0.0
        %235 = vst [vmem:[%s56 + $0x550] sm:$0xff] 0.0
        %236 = vst [vmem:[%s56 + $0x558] sm:$0xff] 0.0
        %237 = vst [vmem:[%s56 + $0x560] sm:$0xff] 0.0
        %238 = vst [vmem:[%s56 + $0x568] sm:$0xff] 0.0
        %239 = vst [vmem:[%s56 + $0x570] sm:$0xff] 0.0
        %240 = vst [vmem:[%s56 + $0x578] sm:$0xff] 0.0
        %241 = vst [vmem:[%s56 + $0x580] sm:$0xff] 0.0
        %242 = vst [vmem:[%s56 + $0x588] sm:$0xff] 0.0
        %243 = vst [vmem:[%s56 + $0x590] sm:$0xff] 0.0
        %244 = vst [vmem:[%s56 + $0x598] sm:$0xff] 0.0
        %245 = vst [vmem:[%s56 + $0x5a0] sm:$0xff] 0.0
        %246 = vst [vmem:[%s56 + $0x5a8] sm:$0xff] 0.0
        %247 = vst [vmem:[%s56 + $0x5b0] sm:$0xff] 0.0
        %248 = vst.msk [vmem:[%s56 + $0x5b8] sm:$0xff] %vm86, 0.0
        %249 = vst [vmem:[%s56 + $0x5c0] sm:$0xff] 0.0
        %250 = vst [vmem:[%s56 + $0x5c8] sm:$0xff] 0.0
        %251 = vst [vmem:[%s56 + $0x5d0] sm:$0xff] 0.0
        %252 = vst [vmem:[%s56 + $0x5d8] sm:$0xff] 0.0
        %253 = vst [vmem:[%s56 + $0x5e0] sm:$0xff] 0.0
        %254 = vst [vmem:[%s56 + $0x5e8] sm:$0xff] 0.0
        %255 = vst [vmem:[%s56 + $0x5f0] sm:$0xff] 0.0
        %256 = vst [vmem:[%s56 + $0x5f8] sm:$0xff] 0.0
        %257 = vst [vmem:[%s56 + $0x600] sm:$0xff] 0.0
        %258 = vst [vmem:[%s56 + $0x608] sm:$0xff] 0.0
        %259 = vst [vmem:[%s56 + $0x610] sm:$0xff] 0.0
        %260 = vst [vmem:[%s56 + $0x618] sm:$0xff] 0.0
        %261 = vst [vmem:[%s56 + $0x620] sm:$0xff] 0.0
        %262 = vst [vmem:[%s56 + $0x628] sm:$0xff] 0.0
        %263 = vst [vmem:[%s56 + $0x630] sm:$0xff] 0.0
        %264 = vst [vmem:[%s56 + $0x638] sm:$0xff] 0.0
        %265 = vst [vmem:[%s56 + $0x640] sm:$0xff] 0.0
        %266 = vst [vmem:[%s56 + $0x648] sm:$0xff] 0.0
        %267 = vst [vmem:[%s56 + $0x650] sm:$0xff] 0.0
        %268 = vst [vmem:[%s56 + $0x658] sm:$0xff] 0.0
        %269 = vst [vmem:[%s56 + $0x660] sm:$0xff] 0.0
        %270 = vst [vmem:[%s56 + $0x668] sm:$0xff] 0.0
        %271 = vst.msk [vmem:[%s56 + $0x670] sm:$0xff] %vm86, 0.0
        %272 = vst [vmem:[%s56 + $0x678] sm:$0xff] 0.0
        %273 = vst [vmem:[%s56 + $0x680] sm:$0xff] 0.0
        %274 = vst [vmem:[%s56 + $0x688] sm:$0xff] 0.0
        %275 = vst [vmem:[%s56 + $0x690] sm:$0xff] 0.0
        %276 = vst [vmem:[%s56 + $0x698] sm:$0xff] 0.0
        %277 = vst [vmem:[%s56 + $0x6a0] sm:$0xff] 0.0
        %278 = vst [vmem:[%s56 + $0x6a8] sm:$0xff] 0.0
        %279 = vst [vmem:[%s56 + $0x6b0] sm:$0xff] 0.0
        %280 = vst [vmem:[%s56 + $0x6b8] sm:$0xff] 0.0
        %281 = vst [vmem:[%s56 + $0x6c0] sm:$0xff] 0.0
        %282 = vst [vmem:[%s56 + $0x6c8] sm:$0xff] 0.0
        %283 = vst [vmem:[%s56 + $0x6d0] sm:$0xff] 0.0
        %284 = vst [vmem:[%s56 + $0x6d8] sm:$0xff] 0.0
        %285 = vst [vmem:[%s56 + $0x6e0] sm:$0xff] 0.0
        %286 = vst [vmem:[%s56 + $0x6e8] sm:$0xff] 0.0
        %287 = vst [vmem:[%s56 + $0x6f0] sm:$0xff] 0.0
        %288 = vst [vmem:[%s56 + $0x6f8] sm:$0xff] 0.0
        %289 = vst [vmem:[%s56 + $0x700] sm:$0xff] 0.0
        %290 = vst [vmem:[%s56 + $0x708] sm:$0xff] 0.0
        %291 = vst [vmem:[%s56 + $0x710] sm:$0xff] 0.0
        %292 = vst [vmem:[%s56 + $0x718] sm:$0xff] 0.0
        %293 = vst [vmem:[%s56 + $0x720] sm:$0xff] 0.0
        %294 = vst.msk [vmem:[%s56 + $0x728] sm:$0xff] %vm86, 0.0
        %295 = vst [vmem:[%s56 + $0x730] sm:$0xff] 0.0
        %296 = vst [vmem:[%s56 + $0x738] sm:$0xff] 0.0
        %297 = vst [vmem:[%s56 + $0x740] sm:$0xff] 0.0
        %298 = vst [vmem:[%s56 + $0x748] sm:$0xff] 0.0
        %299 = vst [vmem:[%s56 + $0x750] sm:$0xff] 0.0
        %300 = vst [vmem:[%s56 + $0x758] sm:$0xff] 0.0
        %301 = vst [vmem:[%s56 + $0x760] sm:$0xff] 0.0
        %302 = vst [vmem:[%s56 + $0x768] sm:$0xff] 0.0
        %303 = vst [vmem:[%s56 + $0x770] sm:$0xff] 0.0
        %304 = vst [vmem:[%s56 + $0x778] sm:$0xff] 0.0
        %305 = vst [vmem:[%s56 + $0x780] sm:$0xff] 0.0
        %306 = vst [vmem:[%s56 + $0x788] sm:$0xff] 0.0
        %307 = vst [vmem:[%s56 + $0x790] sm:$0xff] 0.0
        %308 = vst [vmem:[%s56 + $0x798] sm:$0xff] 0.0
        %309 = vst [vmem:[%s56 + $0x7a0] sm:$0xff] 0.0
        %310 = vst [vmem:[%s56 + $0x7a8] sm:$0xff] 0.0
        %311 = vst [vmem:[%s56 + $0x7b0] sm:$0xff] 0.0
        %312 = vst [vmem:[%s56 + $0x7b8] sm:$0xff] 0.0
        %313 = vst [vmem:[%s56 + $0x7c0] sm:$0xff] 0.0
        %314 = vst [vmem:[%s56 + $0x7c8] sm:$0xff] 0.0
        %315 = vst [vmem:[%s56 + $0x7d0] sm:$0xff] 0.0
        %316 = vst [vmem:[%s56 + $0x7d8] sm:$0xff] 0.0
        %317 = vst.msk [vmem:[%s56 + $0x7e0] sm:$0xff] %vm86, 0.0
        %318 = vst [vmem:[%s56 + $0x7e8] sm:$0xff] 0.0
        %319 = vst [vmem:[%s56 + $0x7f0] sm:$0xff] 0.0
        %320 = vst [vmem:[%s56 + $0x7f8] sm:$0xff] 0.0
        %321 = vst [vmem:[%s56 + $0x800] sm:$0xff] 0.0
        %322 = vst [vmem:[%s56 + $0x808] sm:$0xff] 0.0
        %323 = vst [vmem:[%s56 + $0x810] sm:$0xff] 0.0
        %324 = vst [vmem:[%s56 + $0x818] sm:$0xff] 0.0
        %325 = vst [vmem:[%s56 + $0x820] sm:$0xff] 0.0
        %326 = vst [vmem:[%s56 + $0x828] sm:$0xff] 0.0
        %327 = vst [vmem:[%s56 + $0x830] sm:$0xff] 0.0
        %328 = vst [vmem:[%s56 + $0x838] sm:$0xff] 0.0
        %329 = vst [vmem:[%s56 + $0x840] sm:$0xff] 0.0
        %330 = vst [vmem:[%s56 + $0x848] sm:$0xff] 0.0
        %331 = vst [vmem:[%s56 + $0x850] sm:$0xff] 0.0
        %332 = vst [vmem:[%s56 + $0x858] sm:$0xff] 0.0
        %333 = vst [vmem:[%s56 + $0x860] sm:$0xff] 0.0
        %334 = vst [vmem:[%s56 + $0x868] sm:$0xff] 0.0
        %335 = vst [vmem:[%s56 + $0x870] sm:$0xff] 0.0
        %336 = vst [vmem:[%s56 + $0x878] sm:$0xff] 0.0
        %337 = vst [vmem:[%s56 + $0x880] sm:$0xff] 0.0
        %338 = vst [vmem:[%s56 + $0x888] sm:$0xff] 0.0
        %339 = vst [vmem:[%s56 + $0x890] sm:$0xff] 0.0
        %340 = vst.msk [vmem:[%s56 + $0x898] sm:$0xff] %vm86, 0.0
        %341 = vst [vmem:[%s56 + $0x8a0] sm:$0xff] 0.0
        %342 = vst [vmem:[%s56 + $0x8a8] sm:$0xff] 0.0
        %343 = vst [vmem:[%s56 + $0x8b0] sm:$0xff] 0.0
        %344 = vst [vmem:[%s56 + $0x8b8] sm:$0xff] 0.0
        %345 = vst [vmem:[%s56 + $0x8c0] sm:$0xff] 0.0
        %346 = vst [vmem:[%s56 + $0x8c8] sm:$0xff] 0.0
        %347 = vst [vmem:[%s56 + $0x8d0] sm:$0xff] 0.0
        %348 = vst [vmem:[%s56 + $0x8d8] sm:$0xff] 0.0
        %349 = vst [vmem:[%s56 + $0x8e0] sm:$0xff] 0.0
        %350 = vst [vmem:[%s56 + $0x8e8] sm:$0xff] 0.0
        %351 = vst [vmem:[%s56 + $0x8f0] sm:$0xff] 0.0
        %352 = vst [vmem:[%s56 + $0x8f8] sm:$0xff] 0.0
        %353 = vst [vmem:[%s56 + $0x900] sm:$0xff] 0.0
        %354 = vst [vmem:[%s56 + $0x908] sm:$0xff] 0.0
        %355 = vst [vmem:[%s56 + $0x910] sm:$0xff] 0.0
        %356 = vst [vmem:[%s56 + $0x918] sm:$0xff] 0.0
        %357 = vst [vmem:[%s56 + $0x920] sm:$0xff] 0.0
        %358 = vst [vmem:[%s56 + $0x928] sm:$0xff] 0.0
        %359 = vst [vmem:[%s56 + $0x930] sm:$0xff] 0.0
        %360 = vst [vmem:[%s56 + $0x938] sm:$0xff] 0.0
        %361 = vst [vmem:[%s56 + $0x940] sm:$0xff] 0.0
        %362 = vst [vmem:[%s56 + $0x948] sm:$0xff] 0.0
        %363 = vst.msk [vmem:[%s56 + $0x950] sm:$0xff] %vm86, 0.0
        %364 = vst [vmem:[%s56 + $0x958] sm:$0xff] 0.0
        %365 = vst [vmem:[%s56 + $0x960] sm:$0xff] 0.0
        %366 = vst [vmem:[%s56 + $0x968] sm:$0xff] 0.0
        %367 = vst [vmem:[%s56 + $0x970] sm:$0xff] 0.0
        %368 = vst [vmem:[%s56 + $0x978] sm:$0xff] 0.0
        %369 = vst [vmem:[%s56 + $0x980] sm:$0xff] 0.0
        %370 = vst [vmem:[%s56 + $0x988] sm:$0xff] 0.0
        %371 = vst [vmem:[%s56 + $0x990] sm:$0xff] 0.0
        %372 = vst [vmem:[%s56 + $0x998] sm:$0xff] 0.0
        %373 = vst [vmem:[%s56 + $0x9a0] sm:$0xff] 0.0
        %374 = vst [vmem:[%s56 + $0x9a8] sm:$0xff] 0.0
        %375 = vst [vmem:[%s56 + $0x9b0] sm:$0xff] 0.0
        %376 = vst [vmem:[%s56 + $0x9b8] sm:$0xff] 0.0
        %377 = vst [vmem:[%s56 + $0x9c0] sm:$0xff] 0.0
        %378 = vst [vmem:[%s56 + $0x9c8] sm:$0xff] 0.0
        %379 = vst [vmem:[%s56 + $0x9d0] sm:$0xff] 0.0
        %380 = vst [vmem:[%s56 + $0x9d8] sm:$0xff] 0.0
        %381 = vst [vmem:[%s56 + $0x9e0] sm:$0xff] 0.0
        %382 = vst [vmem:[%s56 + $0x9e8] sm:$0xff] 0.0
        %383 = vst [vmem:[%s56 + $0x9f0] sm:$0xff] 0.0
        %384 = vst [vmem:[%s56 + $0x9f8] sm:$0xff] 0.0
        %385 = vst [vmem:[%s56 + $0xa00] sm:$0xff] 0.0
        %386 = vst.msk [vmem:[%s56 + $0xa08] sm:$0xff] %vm86, 0.0
        %387 = vst [vmem:[%s56 + $0xa10] sm:$0xff] 0.0
        %388 = vst [vmem:[%s56 + $0xa18] sm:$0xff] 0.0
        %389 = vst [vmem:[%s56 + $0xa20] sm:$0xff] 0.0
        %390 = vst [vmem:[%s56 + $0xa28] sm:$0xff] 0.0
        %391 = vst [vmem:[%s56 + $0xa30] sm:$0xff] 0.0
        %392 = vst [vmem:[%s56 + $0xa38] sm:$0xff] 0.0
        %393 = vst [vmem:[%s56 + $0xa40] sm:$0xff] 0.0
        %394 = vst [vmem:[%s56 + $0xa48] sm:$0xff] 0.0
        %395 = vst [vmem:[%s56 + $0xa50] sm:$0xff] 0.0
        %396 = vst [vmem:[%s56 + $0xa58] sm:$0xff] 0.0
        %397 = vst [vmem:[%s56 + $0xa60] sm:$0xff] 0.0
        %398 = vst [vmem:[%s56 + $0xa68] sm:$0xff] 0.0
        %399 = vst [vmem:[%s56 + $0xa70] sm:$0xff] 0.0
        %400 = vst [vmem:[%s56 + $0xa78] sm:$0xff] 0.0
        %401 = vst [vmem:[%s56 + $0xa80] sm:$0xff] 0.0
        %402 = vst [vmem:[%s56 + $0xa88] sm:$0xff] 0.0
        %403 = vst [vmem:[%s56 + $0xa90] sm:$0xff] 0.0
        %404 = vst [vmem:[%s56 + $0xa98] sm:$0xff] 0.0
        %405 = vst [vmem:[%s56 + $0xaa0] sm:$0xff] 0.0
        %406 = vst [vmem:[%s56 + $0xaa8] sm:$0xff] 0.0
        %407 = vst [vmem:[%s56 + $0xab0] sm:$0xff] 0.0
        %408 = vst [vmem:[%s56 + $0xab8] sm:$0xff] 0.0
        %409 = vst.msk [vmem:[%s56 + $0xac0] sm:$0xff] %vm86, 0.0
        %410 = vst [vmem:[%s56 + $0xac8] sm:$0xff] 0.0
        %411 = vst [vmem:[%s56 + $0xad0] sm:$0xff] 0.0
        %412 = vst [vmem:[%s56 + $0xad8] sm:$0xff] 0.0
        %413 = vst [vmem:[%s56 + $0xae0] sm:$0xff] 0.0
        %414 = vst [vmem:[%s56 + $0xae8] sm:$0xff] 0.0
        %415 = vst [vmem:[%s56 + $0xaf0] sm:$0xff] 0.0
        %416 = vst [vmem:[%s56 + $0xaf8] sm:$0xff] 0.0
        %417 = vst [vmem:[%s56 + $0xb00] sm:$0xff] 0.0
        %418 = vst [vmem:[%s56 + $0xb08] sm:$0xff] 0.0
        %419 = vst [vmem:[%s56 + $0xb10] sm:$0xff] 0.0
        %420 = vst [vmem:[%s56 + $0xb18] sm:$0xff] 0.0
        %421 = vst [vmem:[%s56 + $0xb20] sm:$0xff] 0.0
        %422 = vst [vmem:[%s56 + $0xb28] sm:$0xff] 0.0
        %423 = vst [vmem:[%s56 + $0xb30] sm:$0xff] 0.0
        %424 = vst [vmem:[%s56 + $0xb38] sm:$0xff] 0.0
        %425 = vst [vmem:[%s56 + $0xb40] sm:$0xff] 0.0
        %426 = vst [vmem:[%s56 + $0xb48] sm:$0xff] 0.0
        %427 = vst [vmem:[%s56 + $0xb50] sm:$0xff] 0.0
        %428 = vst [vmem:[%s56 + $0xb58] sm:$0xff] 0.0
        %429 = vst [vmem:[%s56 + $0xb60] sm:$0xff] 0.0
        %430 = vst [vmem:[%s56 + $0xb68] sm:$0xff] 0.0
        %431 = vst [vmem:[%s56 + $0xb70] sm:$0xff] 0.0
        %432 = vst.msk [vmem:[%s56 + $0xb78] sm:$0xff] %vm86, 0.0
        %433 = vst [vmem:[%s56 + $0xb80] sm:$0xff] 0.0
        %434 = vst [vmem:[%s56 + $0xb88] sm:$0xff] 0.0
        %435 = vst [vmem:[%s56 + $0xb90] sm:$0xff] 0.0
        %436 = vst [vmem:[%s56 + $0xb98] sm:$0xff] 0.0
        %437 = vst [vmem:[%s56 + $0xba0] sm:$0xff] 0.0
        %438 = vst [vmem:[%s56 + $0xba8] sm:$0xff] 0.0
        %439 = vst [vmem:[%s56 + $0xbb0] sm:$0xff] 0.0
        %440 = vst [vmem:[%s56 + $0xbb8] sm:$0xff] 0.0
        %441 = vst [vmem:[%s56 + $0xbc0] sm:$0xff] 0.0
        %442 = vst [vmem:[%s56 + $0xbc8] sm:$0xff] 0.0
        %443 = vst [vmem:[%s56 + $0xbd0] sm:$0xff] 0.0
        %444 = vst [vmem:[%s56 + $0xbd8] sm:$0xff] 0.0
        %445 = vst [vmem:[%s56 + $0xbe0] sm:$0xff] 0.0
        %446 = vst [vmem:[%s56 + $0xbe8] sm:$0xff] 0.0
        %447 = vst [vmem:[%s56 + $0xbf0] sm:$0xff] 0.0
        %448 = vst [vmem:[%s56 + $0xbf8] sm:$0xff] 0.0
        %449 = vst [vmem:[%s56 + $0xc00] sm:$0xff] 0.0
        %450 = vst [vmem:[%s56 + $0xc08] sm:$0xff] 0.0
        %451 = vst [vmem:[%s56 + $0xc10] sm:$0xff] 0.0
        %452 = vst [vmem:[%s56 + $0xc18] sm:$0xff] 0.0
        %453 = vst [vmem:[%s56 + $0xc20] sm:$0xff] 0.0
        %454 = vst [vmem:[%s56 + $0xc28] sm:$0xff] 0.0
        %455 = vst.msk [vmem:[%s56 + $0xc30] sm:$0xff] %vm86, 0.0
        %456 = vst [vmem:[%s56 + $0xc38] sm:$0xff] 0.0
        %457 = vst [vmem:[%s56 + $0xc40] sm:$0xff] 0.0
        %458 = vst [vmem:[%s56 + $0xc48] sm:$0xff] 0.0
        %459 = vst [vmem:[%s56 + $0xc50] sm:$0xff] 0.0
        %460 = vst [vmem:[%s56 + $0xc58] sm:$0xff] 0.0
        %461 = vst [vmem:[%s56 + $0xc60] sm:$0xff] 0.0
        %462 = vst [vmem:[%s56 + $0xc68] sm:$0xff] 0.0
        %463 = vst [vmem:[%s56 + $0xc70] sm:$0xff] 0.0
        %464 = vst [vmem:[%s56 + $0xc78] sm:$0xff] 0.0
        %465 = vst [vmem:[%s56 + $0xc80] sm:$0xff] 0.0
        %466 = vst [vmem:[%s56 + $0xc88] sm:$0xff] 0.0
        %467 = vst [vmem:[%s56 + $0xc90] sm:$0xff] 0.0
        %468 = vst [vmem:[%s56 + $0xc98] sm:$0xff] 0.0
        %469 = vst [vmem:[%s56 + $0xca0] sm:$0xff] 0.0
        %470 = vst [vmem:[%s56 + $0xca8] sm:$0xff] 0.0
        %471 = vst [vmem:[%s56 + $0xcb0] sm:$0xff] 0.0
        %472 = vst [vmem:[%s56 + $0xcb8] sm:$0xff] 0.0
        %473 = vst [vmem:[%s56 + $0xcc0] sm:$0xff] 0.0
        %474 = vst [vmem:[%s56 + $0xcc8] sm:$0xff] 0.0
        %475 = vst [vmem:[%s56 + $0xcd0] sm:$0xff] 0.0
        %476 = vst [vmem:[%s56 + $0xcd8] sm:$0xff] 0.0
        %477 = vst [vmem:[%s56 + $0xce0] sm:$0xff] 0.0
        %478 = vst.msk [vmem:[%s56 + $0xce8] sm:$0xff] %vm86, 0.0
        %479 = vst [vmem:[%s56 + $0xcf0] sm:$0xff] 0.0
        %480 = vst [vmem:[%s56 + $0xcf8] sm:$0xff] 0.0
        %481 = vst [vmem:[%s56 + $0xd00] sm:$0xff] 0.0
        %482 = vst [vmem:[%s56 + $0xd08] sm:$0xff] 0.0
        %483 = vst [vmem:[%s56 + $0xd10] sm:$0xff] 0.0
        %484 = vst [vmem:[%s56 + $0xd18] sm:$0xff] 0.0
        %485 = vst [vmem:[%s56 + $0xd20] sm:$0xff] 0.0
        %486 = vst [vmem:[%s56 + $0xd28] sm:$0xff] 0.0
        %487 = vst [vmem:[%s56 + $0xd30] sm:$0xff] 0.0
        %488 = vst [vmem:[%s56 + $0xd38] sm:$0xff] 0.0
        %489 = vst [vmem:[%s56 + $0xd40] sm:$0xff] 0.0
        %490 = vst [vmem:[%s56 + $0xd48] sm:$0xff] 0.0
        %491 = vst [vmem:[%s56 + $0xd50] sm:$0xff] 0.0
        %492 = vst [vmem:[%s56 + $0xd58] sm:$0xff] 0.0
        %493 = vst [vmem:[%s56 + $0xd60] sm:$0xff] 0.0
        %494 = vst [vmem:[%s56 + $0xd68] sm:$0xff] 0.0
        %495 = vst [vmem:[%s56 + $0xd70] sm:$0xff] 0.0
        %496 = vst [vmem:[%s56 + $0xd78] sm:$0xff] 0.0
        %497 = vst [vmem:[%s56 + $0xd80] sm:$0xff] 0.0
        %498 = vst [vmem:[%s56 + $0xd88] sm:$0xff] 0.0
        %499 = vst [vmem:[%s56 + $0xd90] sm:$0xff] 0.0
        %500 = vst [vmem:[%s56 + $0xd98] sm:$0xff] 0.0
        %501 = vst.msk [vmem:[%s56 + $0xda0] sm:$0xff] %vm86, 0.0
        %502 = vst [vmem:[%s56 + $0xda8] sm:$0xff] 0.0
        %503 = vst [vmem:[%s56 + $0xdb0] sm:$0xff] 0.0
        %504 = vst [vmem:[%s56 + $0xdb8] sm:$0xff] 0.0
        %505 = vst [vmem:[%s56 + $0xdc0] sm:$0xff] 0.0
        %506 = vst [vmem:[%s56 + $0xdc8] sm:$0xff] 0.0
        %507 = vst [vmem:[%s56 + $0xdd0] sm:$0xff] 0.0
        %508 = vst [vmem:[%s56 + $0xdd8] sm:$0xff] 0.0
        %509 = vst [vmem:[%s56 + $0xde0] sm:$0xff] 0.0
        %510 = vst [vmem:[%s56 + $0xde8] sm:$0xff] 0.0
        %511 = vst [vmem:[%s56 + $0xdf0] sm:$0xff] 0.0
        %512 = vst [vmem:[%s56 + $0xdf8] sm:$0xff] 0.0
        %513 = vst [vmem:[%s56 + $0xe00] sm:$0xff] 0.0
        %514 = vst [vmem:[%s56 + $0xe08] sm:$0xff] 0.0
        %515 = vst [vmem:[%s56 + $0xe10] sm:$0xff] 0.0
        %516 = vst [vmem:[%s56 + $0xe18] sm:$0xff] 0.0
        %517 = vst [vmem:[%s56 + $0xe20] sm:$0xff] 0.0
        %518 = vst [vmem:[%s56 + $0xe28] sm:$0xff] 0.0
        %519 = vst [vmem:[%s56 + $0xe30] sm:$0xff] 0.0
        %520 = vst [vmem:[%s56 + $0xe38] sm:$0xff] 0.0
        %521 = vst [vmem:[%s56 + $0xe40] sm:$0xff] 0.0
        %522 = vst [vmem:[%s56 + $0xe48] sm:$0xff] 0.0
        %523 = vst [vmem:[%s56 + $0xe50] sm:$0xff] 0.0
        %524 = vst.msk [vmem:[%s56 + $0xe58] sm:$0xff] %vm86, 0.0
        %525 = vst [vmem:[%s56 + $0xe60] sm:$0xff] 0.0
        %526 = vst [vmem:[%s56 + $0xe68] sm:$0xff] 0.0
        %527 = vst [vmem:[%s56 + $0xe70] sm:$0xff] 0.0
        %528 = vst [vmem:[%s56 + $0xe78] sm:$0xff] 0.0
        %529 = vst [vmem:[%s56 + $0xe80] sm:$0xff] 0.0
        %530 = vst [vmem:[%s56 + $0xe88] sm:$0xff] 0.0
        %531 = vst [vmem:[%s56 + $0xe90] sm:$0xff] 0.0
        %532 = vst [vmem:[%s56 + $0xe98] sm:$0xff] 0.0
        %533 = vst [vmem:[%s56 + $0xea0] sm:$0xff] 0.0
        %534 = vst [vmem:[%s56 + $0xea8] sm:$0xff] 0.0
        %535 = vst [vmem:[%s56 + $0xeb0] sm:$0xff] 0.0
        %536 = vst [vmem:[%s56 + $0xeb8] sm:$0xff] 0.0
        %537 = vst [vmem:[%s56 + $0xec0] sm:$0xff] 0.0
        %538 = vst [vmem:[%s56 + $0xec8] sm:$0xff] 0.0
        %539 = vst [vmem:[%s56 + $0xed0] sm:$0xff] 0.0
        %540 = vst [vmem:[%s56 + $0xed8] sm:$0xff] 0.0
        %541 = vst [vmem:[%s56 + $0xee0] sm:$0xff] 0.0
        %542 = vst [vmem:[%s56 + $0xee8] sm:$0xff] 0.0
        %543 = vst [vmem:[%s56 + $0xef0] sm:$0xff] 0.0
        %544 = vst [vmem:[%s56 + $0xef8] sm:$0xff] 0.0
        %545 = vst [vmem:[%s56 + $0xf00] sm:$0xff] 0.0
        %546 = vst [vmem:[%s56 + $0xf08] sm:$0xff] 0.0
        %547 = vst.msk [vmem:[%s56 + $0xf10] sm:$0xff] %vm86, 0.0
        %548 = vst [vmem:[%s56 + $0xf18] sm:$0xff] 0.0
        %549 = vst [vmem:[%s56 + $0xf20] sm:$0xff] 0.0
        %550 = vst [vmem:[%s56 + $0xf28] sm:$0xff] 0.0
        %551 = vst [vmem:[%s56 + $0xf30] sm:$0xff] 0.0
        %552 = vst [vmem:[%s56 + $0xf38] sm:$0xff] 0.0
        %553 = vst [vmem:[%s56 + $0xf40] sm:$0xff] 0.0
        %554 = vst [vmem:[%s56 + $0xf48] sm:$0xff] 0.0
        %555 = vst [vmem:[%s56 + $0xf50] sm:$0xff] 0.0
        %556 = vst [vmem:[%s56 + $0xf58] sm:$0xff] 0.0
        %557 = vst [vmem:[%s56 + $0xf60] sm:$0xff] 0.0
        %558 = vst [vmem:[%s56 + $0xf68] sm:$0xff] 0.0
        %559 = vst [vmem:[%s56 + $0xf70] sm:$0xff] 0.0
        %560 = vst [vmem:[%s56 + $0xf78] sm:$0xff] 0.0
        %561 = vst [vmem:[%s56 + $0xf80] sm:$0xff] 0.0
        %562 = vst [vmem:[%s56 + $0xf88] sm:$0xff] 0.0
        %563 = vst [vmem:[%s56 + $0xf90] sm:$0xff] 0.0
        %564 = vst [vmem:[%s56 + $0xf98] sm:$0xff] 0.0
        %565 = vst [vmem:[%s56 + $0xfa0] sm:$0xff] 0.0
        %566 = vst [vmem:[%s56 + $0xfa8] sm:$0xff] 0.0
        %567 = vst [vmem:[%s56 + $0xfb0] sm:$0xff] 0.0
        %568 = vst [vmem:[%s56 + $0xfb8] sm:$0xff] 0.0
        %569 = vst [vmem:[%s56 + $0xfc0] sm:$0xff] 0.0
        %570 = vst.msk [vmem:[%s56 + $0xfc8] sm:$0xff] %vm86, 0.0
        %571 = vst [vmem:[%s56 + $0xfd0] sm:$0xff] 0.0
        %572 = vst [vmem:[%s56 + $0xfd8] sm:$0xff] 0.0
        %573 = vst [vmem:[%s56 + $0xfe0] sm:$0xff] 0.0
        %574 = vst [vmem:[%s56 + $0xfe8] sm:$0xff] 0.0
        %575 = vst [vmem:[%s56 + $0xff0] sm:$0xff] 0.0
        %576 = vst [vmem:[%s56 + $0xff8] sm:$0xff] 0.0
        %577 = vst [vmem:[%s56 + $0x1000] sm:$0xff] 0.0
        %578 = vst [vmem:[%s56 + $0x1008] sm:$0xff] 0.0
        %579 = vst [vmem:[%s56 + $0x1010] sm:$0xff] 0.0
        %580 = vst [vmem:[%s56 + $0x1018] sm:$0xff] 0.0
        %581 = vst [vmem:[%s56 + $0x1020] sm:$0xff] 0.0
        %582 = vst [vmem:[%s56 + $0x1028] sm:$0xff] 0.0
        %583 = vst [vmem:[%s56 + $0x1030] sm:$0xff] 0.0
        %584 = vst [vmem:[%s56 + $0x1038] sm:$0xff] 0.0
        %585 = vst [vmem:[%s56 + $0x1040] sm:$0xff] 0.0
        %586 = vst [vmem:[%s56 + $0x1048] sm:$0xff] 0.0
        %587 = vst [vmem:[%s56 + $0x1050] sm:$0xff] 0.0
        %588 = vst [vmem:[%s56 + $0x1058] sm:$0xff] 0.0
        %589 = vst [vmem:[%s56 + $0x1060] sm:$0xff] 0.0
        %590 = vst [vmem:[%s56 + $0x1068] sm:$0xff] 0.0
        %591 = vst [vmem:[%s56 + $0x1070] sm:$0xff] 0.0
        %592 = vst [vmem:[%s56 + $0x1078] sm:$0xff] 0.0
        %593 = vst.msk [vmem:[%s56 + $0x1080] sm:$0xff] %vm86, 0.0
        %594 = vst [vmem:[%s56 + $0x1088] sm:$0xff] 0.0
        %595 = vst [vmem:[%s56 + $0x1090] sm:$0xff] 0.0
        %596 = vst [vmem:[%s56 + $0x1098] sm:$0xff] 0.0
        %597 = vst [vmem:[%s56 + $0x10a0] sm:$0xff] 0.0
        %598 = vst [vmem:[%s56 + $0x10a8] sm:$0xff] 0.0
        %599 = vst [vmem:[%s56 + $0x10b0] sm:$0xff] 0.0
        %600 = vst [vmem:[%s56 + $0x10b8] sm:$0xff] 0.0
        %601 = vst [vmem:[%s56 + $0x10c0] sm:$0xff] 0.0
        %602 = vst [vmem:[%s56 + $0x10c8] sm:$0xff] 0.0
        %603 = vst [vmem:[%s56 + $0x10d0] sm:$0xff] 0.0
        %604 = vst [vmem:[%s56 + $0x10d8] sm:$0xff] 0.0
        %605 = vst [vmem:[%s56 + $0x10e0] sm:$0xff] 0.0
        %606 = vst [vmem:[%s56 + $0x10e8] sm:$0xff] 0.0
        %607 = vst [vmem:[%s56 + $0x10f0] sm:$0xff] 0.0
        %608 = vst [vmem:[%s56 + $0x10f8] sm:$0xff] 0.0
        %609 = vst [vmem:[%s56 + $0x1100] sm:$0xff] 0.0
        %610 = vst [vmem:[%s56 + $0x1108] sm:$0xff] 0.0
        %611 = vst [vmem:[%s56 + $0x1110] sm:$0xff] 0.0
        %612 = vst [vmem:[%s56 + $0x1118] sm:$0xff] 0.0
        %613 = vst [vmem:[%s56 + $0x1120] sm:$0xff] 0.0
        %614 = vst [vmem:[%s56 + $0x1128] sm:$0xff] 0.0
        %615 = vst [vmem:[%s56 + $0x1130] sm:$0xff] 0.0
        %616 = vst.msk [vmem:[%s56 + $0x1138] sm:$0xff] %vm86, 0.0
        %617 = vst [vmem:[%s56 + $0x1140] sm:$0xff] 0.0
        %618 = vst [vmem:[%s56 + $0x1148] sm:$0xff] 0.0
        %619 = vst [vmem:[%s56 + $0x1150] sm:$0xff] 0.0
        %620 = vst [vmem:[%s56 + $0x1158] sm:$0xff] 0.0
        %621 = vst [vmem:[%s56 + $0x1160] sm:$0xff] 0.0
        %622 = vst [vmem:[%s56 + $0x1168] sm:$0xff] 0.0
        %623 = vst [vmem:[%s56 + $0x1170] sm:$0xff] 0.0
        %624 = vst [vmem:[%s56 + $0x1178] sm:$0xff] 0.0
        %625 = vst [vmem:[%s56 + $0x1180] sm:$0xff] 0.0
        %626 = vst [vmem:[%s56 + $0x1188] sm:$0xff] 0.0
        %627 = vst [vmem:[%s56 + $0x1190] sm:$0xff] 0.0
        %628 = vst [vmem:[%s56 + $0x1198] sm:$0xff] 0.0
        %629 = vst [vmem:[%s56 + $0x11a0] sm:$0xff] 0.0
        %630 = vst [vmem:[%s56 + $0x11a8] sm:$0xff] 0.0
        %631 = vst [vmem:[%s56 + $0x11b0] sm:$0xff] 0.0
        %632 = vst [vmem:[%s56 + $0x11b8] sm:$0xff] 0.0
        %633 = vst [vmem:[%s56 + $0x11c0] sm:$0xff] 0.0
        %634 = vst [vmem:[%s56 + $0x11c8] sm:$0xff] 0.0
        %635 = vst [vmem:[%s56 + $0x11d0] sm:$0xff] 0.0
        %636 = vst [vmem:[%s56 + $0x11d8] sm:$0xff] 0.0
        %637 = vst [vmem:[%s56 + $0x11e0] sm:$0xff] 0.0
        %638 = vst [vmem:[%s56 + $0x11e8] sm:$0xff] 0.0
        %639 = vst.msk [vmem:[%s56 + $0x11f0] sm:$0xff] %vm86, 0.0
        %640 = vst [vmem:[%s56 + $0x11f8] sm:$0xff] 0.0
        %641 = vst [vmem:[%s56 + $0x1200] sm:$0xff] 0.0
        %642 = vst [vmem:[%s56 + $0x1208] sm:$0xff] 0.0
        %643 = vst [vmem:[%s56 + $0x1210] sm:$0xff] 0.0
        %644 = vst [vmem:[%s56 + $0x1218] sm:$0xff] 0.0
        %645 = vst [vmem:[%s56 + $0x1220] sm:$0xff] 0.0
        %646 = vst [vmem:[%s56 + $0x1228] sm:$0xff] 0.0
        %647 = vst [vmem:[%s56 + $0x1230] sm:$0xff] 0.0
        %648 = vst [vmem:[%s56 + $0x1238] sm:$0xff] 0.0
        %649 = vst [vmem:[%s56 + $0x1240] sm:$0xff] 0.0
        %650 = vst [vmem:[%s56 + $0x1248] sm:$0xff] 0.0
        %651 = vst [vmem:[%s56 + $0x1250] sm:$0xff] 0.0
        %652 = vst [vmem:[%s56 + $0x1258] sm:$0xff] 0.0
        %653 = vst [vmem:[%s56 + $0x1260] sm:$0xff] 0.0
        %654 = vst [vmem:[%s56 + $0x1268] sm:$0xff] 0.0
        %655 = vst [vmem:[%s56 + $0x1270] sm:$0xff] 0.0
        %656 = vst [vmem:[%s56 + $0x1278] sm:$0xff] 0.0
        %657 = vst [vmem:[%s56 + $0x1280] sm:$0xff] 0.0
        %658 = vst [vmem:[%s56 + $0x1288] sm:$0xff] 0.0
        %659 = vst [vmem:[%s56 + $0x1290] sm:$0xff] 0.0
        %660 = vst [vmem:[%s56 + $0x1298] sm:$0xff] 0.0
        %661 = vst [vmem:[%s56 + $0x12a0] sm:$0xff] 0.0
        %662 = vst.msk [vmem:[%s56 + $0x12a8] sm:$0xff] %vm86, 0.0
        %663 = vst [vmem:[%s56 + $0x12b0] sm:$0xff] 0.0
        %664 = vst [vmem:[%s56 + $0x12b8] sm:$0xff] 0.0
        %665 = vst [vmem:[%s56 + $0x12c0] sm:$0xff] 0.0
        %666 = vst [vmem:[%s56 + $0x12c8] sm:$0xff] 0.0
        %667 = vst [vmem:[%s56 + $0x12d0] sm:$0xff] 0.0
        %668 = vst [vmem:[%s56 + $0x12d8] sm:$0xff] 0.0
        %669 = vst [vmem:[%s56 + $0x12e0] sm:$0xff] 0.0
        %670 = vst [vmem:[%s56 + $0x12e8] sm:$0xff] 0.0
        %671 = vst [vmem:[%s56 + $0x12f0] sm:$0xff] 0.0
        %672 = vst [vmem:[%s56 + $0x12f8] sm:$0xff] 0.0
        %673 = vst [vmem:[%s56 + $0x1300] sm:$0xff] 0.0
        %674 = vst [vmem:[%s56 + $0x1308] sm:$0xff] 0.0
        %675 = vst [vmem:[%s56 + $0x1310] sm:$0xff] 0.0
        %676 = vst [vmem:[%s56 + $0x1318] sm:$0xff] 0.0
        %677 = vst [vmem:[%s56 + $0x1320] sm:$0xff] 0.0
        %678 = vst [vmem:[%s56 + $0x1328] sm:$0xff] 0.0
        %679 = vst [vmem:[%s56 + $0x1330] sm:$0xff] 0.0
        %680 = vst [vmem:[%s56 + $0x1338] sm:$0xff] 0.0
        %681 = vst [vmem:[%s56 + $0x1340] sm:$0xff] 0.0
        %682 = vst [vmem:[%s56 + $0x1348] sm:$0xff] 0.0
        %683 = vst [vmem:[%s56 + $0x1350] sm:$0xff] 0.0
        %684 = vst [vmem:[%s56 + $0x1358] sm:$0xff] 0.0
        %685 = vst.msk [vmem:[%s56 + $0x1360] sm:$0xff] %vm86, 0.0
        %686 = vst [vmem:[%s56 + $0x1368] sm:$0xff] 0.0
        %687 = vst [vmem:[%s56 + $0x1370] sm:$0xff] 0.0
        %688 = vst [vmem:[%s56 + $0x1378] sm:$0xff] 0.0
        %689 = vst [vmem:[%s56 + $0x1380] sm:$0xff] 0.0
        %690 = vst [vmem:[%s56 + $0x1388] sm:$0xff] 0.0
        %691 = vst [vmem:[%s56 + $0x1390] sm:$0xff] 0.0
        %692 = vst [vmem:[%s56 + $0x1398] sm:$0xff] 0.0
        %693 = vst [vmem:[%s56 + $0x13a0] sm:$0xff] 0.0
        %694 = vst [vmem:[%s56 + $0x13a8] sm:$0xff] 0.0
        %695 = vst [vmem:[%s56 + $0x13b0] sm:$0xff] 0.0
        %696 = vst [vmem:[%s56 + $0x13b8] sm:$0xff] 0.0
        %697 = vst [vmem:[%s56 + $0x13c0] sm:$0xff] 0.0
        %698 = vst [vmem:[%s56 + $0x13c8] sm:$0xff] 0.0
        %699 = vst [vmem:[%s56 + $0x13d0] sm:$0xff] 0.0
        %700 = vst [vmem:[%s56 + $0x13d8] sm:$0xff] 0.0
        %701 = vst [vmem:[%s56 + $0x13e0] sm:$0xff] 0.0
        %702 = vst [vmem:[%s56 + $0x13e8] sm:$0xff] 0.0
        %703 = vst [vmem:[%s56 + $0x13f0] sm:$0xff] 0.0
        %704 = vst [vmem:[%s56 + $0x13f8] sm:$0xff] 0.0
        %705 = vst [vmem:[%s56 + $0x1400] sm:$0xff] 0.0
        %706 = vst [vmem:[%s56 + $0x1408] sm:$0xff] 0.0
        %707 = vst [vmem:[%s56 + $0x1410] sm:$0xff] 0.0
        %708 = vst.msk [vmem:[%s56 + $0x1418] sm:$0xff] %vm86, 0.0
        %709 = vst [vmem:[%s56 + $0x1420] sm:$0xff] 0.0
        %710 = vst [vmem:[%s56 + $0x1428] sm:$0xff] 0.0
        %711 = vst [vmem:[%s56 + $0x1430] sm:$0xff] 0.0
        %712 = vst [vmem:[%s56 + $0x1438] sm:$0xff] 0.0
        %713 = vst [vmem:[%s56 + $0x1440] sm:$0xff] 0.0
        %714 = vst [vmem:[%s56 + $0x1448] sm:$0xff] 0.0
        %715 = vst [vmem:[%s56 + $0x1450] sm:$0xff] 0.0
        %716 = vst [vmem:[%s56 + $0x1458] sm:$0xff] 0.0
        %717 = vst [vmem:[%s56 + $0x1460] sm:$0xff] 0.0
        %718 = vst [vmem:[%s56 + $0x1468] sm:$0xff] 0.0
        %719 = vst [vmem:[%s56 + $0x1470] sm:$0xff] 0.0
        %720 = vst [vmem:[%s56 + $0x1478] sm:$0xff] 0.0
        %721 = vst [vmem:[%s56 + $0x1480] sm:$0xff] 0.0
        %722 = vst [vmem:[%s56 + $0x1488] sm:$0xff] 0.0
        %723 = vst [vmem:[%s56 + $0x1490] sm:$0xff] 0.0
        %724 = vst [vmem:[%s56 + $0x1498] sm:$0xff] 0.0
        %725 = vst [vmem:[%s56 + $0x14a0] sm:$0xff] 0.0
        %726 = vst [vmem:[%s56 + $0x14a8] sm:$0xff] 0.0
        %727 = vst [vmem:[%s56 + $0x14b0] sm:$0xff] 0.0
        %728 = vst [vmem:[%s56 + $0x14b8] sm:$0xff] 0.0
        %729 = vst [vmem:[%s56 + $0x14c0] sm:$0xff] 0.0
        %730 = vst [vmem:[%s56 + $0x14c8] sm:$0xff] 0.0
        %731 = vst.msk [vmem:[%s56 + $0x14d0] sm:$0xff] %vm86, 0.0
        %732 = vst [vmem:[%s56 + $0x14d8] sm:$0xff] 0.0
        %733 = vst [vmem:[%s56 + $0x14e0] sm:$0xff] 0.0
        %734 = vst [vmem:[%s56 + $0x14e8] sm:$0xff] 0.0
        %735 = vst [vmem:[%s56 + $0x14f0] sm:$0xff] 0.0
        %736 = vst [vmem:[%s56 + $0x14f8] sm:$0xff] 0.0
        %737 = vst [vmem:[%s56 + $0x1500] sm:$0xff] 0.0
        %738 = vst [vmem:[%s56 + $0x1508] sm:$0xff] 0.0
        %739 = vst [vmem:[%s56 + $0x1510] sm:$0xff] 0.0
        %740 = vst [vmem:[%s56 + $0x1518] sm:$0xff] 0.0
        %741 = vst [vmem:[%s56 + $0x1520] sm:$0xff] 0.0
        %742 = vst [vmem:[%s56 + $0x1528] sm:$0xff] 0.0
        %743 = vst [vmem:[%s56 + $0x1530] sm:$0xff] 0.0
        %744 = vst [vmem:[%s56 + $0x1538] sm:$0xff] 0.0
        %745 = vst [vmem:[%s56 + $0x1540] sm:$0xff] 0.0
        %746 = vst [vmem:[%s56 + $0x1548] sm:$0xff] 0.0
        %747 = vst [vmem:[%s56 + $0x1550] sm:$0xff] 0.0
        %748 = vst [vmem:[%s56 + $0x1558] sm:$0xff] 0.0
        %749 = vst [vmem:[%s56 + $0x1560] sm:$0xff] 0.0
        %750 = vst [vmem:[%s56 + $0x1568] sm:$0xff] 0.0
        %751 = vst [vmem:[%s56 + $0x1570] sm:$0xff] 0.0
        %752 = vst [vmem:[%s56 + $0x1578] sm:$0xff] 0.0
        %753 = vst [vmem:[%s56 + $0x1580] sm:$0xff] 0.0
        %754 = vst.msk [vmem:[%s56 + $0x1588] sm:$0xff] %vm86, 0.0
        %755 = vst [vmem:[%s56 + $0x1590] sm:$0xff] 0.0
        %756 = vst [vmem:[%s56 + $0x1598] sm:$0xff] 0.0
        %757 = vst [vmem:[%s56 + $0x15a0] sm:$0xff] 0.0
        %758 = vst [vmem:[%s56 + $0x15a8] sm:$0xff] 0.0
        %759 = vst [vmem:[%s56 + $0x15b0] sm:$0xff] 0.0
        %760 = vst [vmem:[%s56 + $0x15b8] sm:$0xff] 0.0
        %761 = vst [vmem:[%s56 + $0x15c0] sm:$0xff] 0.0
        %762 = vst [vmem:[%s56 + $0x15c8] sm:$0xff] 0.0
        %763 = vst [vmem:[%s56 + $0x15d0] sm:$0xff] 0.0
        %764 = vst [vmem:[%s56 + $0x15d8] sm:$0xff] 0.0
        %765 = vst [vmem:[%s56 + $0x15e0] sm:$0xff] 0.0
        %766 = vst [vmem:[%s56 + $0x15e8] sm:$0xff] 0.0
        %767 = vst [vmem:[%s56 + $0x15f0] sm:$0xff] 0.0
        %768 = vst [vmem:[%s56 + $0x15f8] sm:$0xff] 0.0
        %769 = vst [vmem:[%s56 + $0x1600] sm:$0xff] 0.0
        %770 = vst [vmem:[%s56 + $0x1608] sm:$0xff] 0.0
        %771 = vst [vmem:[%s56 + $0x1610] sm:$0xff] 0.0
        %772 = vst [vmem:[%s56 + $0x1618] sm:$0xff] 0.0
        %773 = vst [vmem:[%s56 + $0x1620] sm:$0xff] 0.0
        %774 = vst [vmem:[%s56 + $0x1628] sm:$0xff] 0.0
        %775 = vst [vmem:[%s56 + $0x1630] sm:$0xff] 0.0
        %776 = vst [vmem:[%s56 + $0x1638] sm:$0xff] 0.0
        %777 = vst.msk [vmem:[%s56 + $0x1640] sm:$0xff] %vm86, 0.0
        %778 = vst [vmem:[%s56 + $0x1648] sm:$0xff] 0.0
        %779 = vst [vmem:[%s56 + $0x1650] sm:$0xff] 0.0
        %780 = vst [vmem:[%s56 + $0x1658] sm:$0xff] 0.0
        %781 = vst [vmem:[%s56 + $0x1660] sm:$0xff] 0.0
        %782 = vst [vmem:[%s56 + $0x1668] sm:$0xff] 0.0
        %783 = vst [vmem:[%s56 + $0x1670] sm:$0xff] 0.0
        %784 = vst [vmem:[%s56 + $0x1678] sm:$0xff] 0.0
        %785 = vst [vmem:[%s56 + $0x1680] sm:$0xff] 0.0
        %786 = vst [vmem:[%s56 + $0x1688] sm:$0xff] 0.0
        %787 = vst [vmem:[%s56 + $0x1690] sm:$0xff] 0.0
        %788 = vst [vmem:[%s56 + $0x1698] sm:$0xff] 0.0
        %789 = vst [vmem:[%s56 + $0x16a0] sm:$0xff] 0.0
        %790 = vst [vmem:[%s56 + $0x16a8] sm:$0xff] 0.0
        %791 = vst [vmem:[%s56 + $0x16b0] sm:$0xff] 0.0
        %792 = vst [vmem:[%s56 + $0x16b8] sm:$0xff] 0.0
        %793 = vst [vmem:[%s56 + $0x16c0] sm:$0xff] 0.0
        %794 = vst [vmem:[%s56 + $0x16c8] sm:$0xff] 0.0
        %795 = vst [vmem:[%s56 + $0x16d0] sm:$0xff] 0.0
        %796 = vst [vmem:[%s56 + $0x16d8] sm:$0xff] 0.0
        %797 = vst [vmem:[%s56 + $0x16e0] sm:$0xff] 0.0
        %798 = vst [vmem:[%s56 + $0x16e8] sm:$0xff] 0.0
        %799 = vst [vmem:[%s56 + $0x16f0] sm:$0xff] 0.0
        %800 = vst.msk [vmem:[%s56 + $0x16f8] sm:$0xff] %vm86, 0.0
        %801 = vst [vmem:[%s56 + $0x1700] sm:$0xff] 0.0
        %802 = vst [vmem:[%s56 + $0x1708] sm:$0xff] 0.0
        %803 = vst [vmem:[%s56 + $0x1710] sm:$0xff] 0.0
        %804 = vst [vmem:[%s56 + $0x1718] sm:$0xff] 0.0
        %805 = vst [vmem:[%s56 + $0x1720] sm:$0xff] 0.0
        %806 = vst [vmem:[%s56 + $0x1728] sm:$0xff] 0.0
        %807 = vst [vmem:[%s56 + $0x1730] sm:$0xff] 0.0
        %808 = vst [vmem:[%s56 + $0x1738] sm:$0xff] 0.0
        %809 = vst [vmem:[%s56 + $0x1740] sm:$0xff] 0.0
        %810 = vst [vmem:[%s56 + $0x1748] sm:$0xff] 0.0
        %811 = vst [vmem:[%s56 + $0x1750] sm:$0xff] 0.0
        %812 = vst [vmem:[%s56 + $0x1758] sm:$0xff] 0.0
        %813 = vst [vmem:[%s56 + $0x1760] sm:$0xff] 0.0
        %814 = vst [vmem:[%s56 + $0x1768] sm:$0xff] 0.0
        %815 = vst [vmem:[%s56 + $0x1770] sm:$0xff] 0.0
        %816 = vst [vmem:[%s56 + $0x1778] sm:$0xff] 0.0
        %817 = vst [vmem:[%s56 + $0x1780] sm:$0xff] 0.0
        %818 = vst [vmem:[%s56 + $0x1788] sm:$0xff] 0.0
        %819 = vst [vmem:[%s56 + $0x1790] sm:$0xff] 0.0
        %820 = vst [vmem:[%s56 + $0x1798] sm:$0xff] 0.0
        %821 = vst [vmem:[%s56 + $0x17a0] sm:$0xff] 0.0
        %822 = vst [vmem:[%s56 + $0x17a8] sm:$0xff] 0.0
        %823 = vst.msk [vmem:[%s56 + $0x17b0] sm:$0xff] %vm86, 0.0
        %824 = vst [vmem:[%s56 + $0x17b8] sm:$0xff] 0.0
        %825 = vst [vmem:[%s56 + $0x17c0] sm:$0xff] 0.0
        %826 = vst [vmem:[%s56 + $0x17c8] sm:$0xff] 0.0
        %827 = vst [vmem:[%s56 + $0x17d0] sm:$0xff] 0.0
        %828 = vst [vmem:[%s56 + $0x17d8] sm:$0xff] 0.0
        %829 = vst [vmem:[%s56 + $0x17e0] sm:$0xff] 0.0
        %830 = vst [vmem:[%s56 + $0x17e8] sm:$0xff] 0.0
        %831 = vst [vmem:[%s56 + $0x17f0] sm:$0xff] 0.0
        %832 = vst [vmem:[%s56 + $0x17f8] sm:$0xff] 0.0
        %833 = vst [vmem:[%s56 + $0x1800] sm:$0xff] 0.0
        %834 = vst [vmem:[%s56 + $0x1808] sm:$0xff] 0.0
        %835 = vst [vmem:[%s56 + $0x1810] sm:$0xff] 0.0
        %836 = vst [vmem:[%s56 + $0x1818] sm:$0xff] 0.0
        %837 = vst [vmem:[%s56 + $0x1820] sm:$0xff] 0.0
        %838 = vst [vmem:[%s56 + $0x1828] sm:$0xff] 0.0
        %839 = vst [vmem:[%s56 + $0x1830] sm:$0xff] 0.0
        %840 = vst [vmem:[%s56 + $0x1838] sm:$0xff] 0.0
        %841 = vst [vmem:[%s56 + $0x1840] sm:$0xff] 0.0
        %842 = vst [vmem:[%s56 + $0x1848] sm:$0xff] 0.0
        %843 = vst [vmem:[%s56 + $0x1850] sm:$0xff] 0.0
        %844 = vst [vmem:[%s56 + $0x1858] sm:$0xff] 0.0
        %845 = vst [vmem:[%s56 + $0x1860] sm:$0xff] 0.0
        %846 = vst.msk [vmem:[%s56 + $0x1868] sm:$0xff] %vm86, 0.0
        %847 = vst [vmem:[%s56 + $0x1870] sm:$0xff] 0.0
        %848 = vst [vmem:[%s56 + $0x1878] sm:$0xff] 0.0
        %849 = vst [vmem:[%s56 + $0x1880] sm:$0xff] 0.0
        %850 = vst [vmem:[%s56 + $0x1888] sm:$0xff] 0.0
        %851 = vst [vmem:[%s56 + $0x1890] sm:$0xff] 0.0
        %852 = vst [vmem:[%s56 + $0x1898] sm:$0xff] 0.0
        %853 = vst [vmem:[%s56 + $0x18a0] sm:$0xff] 0.0
        %854 = vst [vmem:[%s56 + $0x18a8] sm:$0xff] 0.0
        %855 = vst [vmem:[%s56 + $0x18b0] sm:$0xff] 0.0
        %856 = vst [vmem:[%s56 + $0x18b8] sm:$0xff] 0.0
        %857 = vst [vmem:[%s56 + $0x18c0] sm:$0xff] 0.0
        %858 = vst [vmem:[%s56 + $0x18c8] sm:$0xff] 0.0
        %859 = vst [vmem:[%s56 + $0x18d0] sm:$0xff] 0.0
        %860 = vst [vmem:[%s56 + $0x18d8] sm:$0xff] 0.0
        %861 = vst [vmem:[%s56 + $0x18e0] sm:$0xff] 0.0
        %862 = vst [vmem:[%s56 + $0x18e8] sm:$0xff] 0.0
        %863 = vst [vmem:[%s56 + $0x18f0] sm:$0xff] 0.0
        %864 = vst [vmem:[%s56 + $0x18f8] sm:$0xff] 0.0
        %865 = vst [vmem:[%s56 + $0x1900] sm:$0xff] 0.0
        %866 = vst [vmem:[%s56 + $0x1908] sm:$0xff] 0.0
        %867 = vst [vmem:[%s56 + $0x1910] sm:$0xff] 0.0
        %868 = vst [vmem:[%s56 + $0x1918] sm:$0xff] 0.0
        %869 = vst.msk [vmem:[%s56 + $0x1920] sm:$0xff] %vm86, 0.0
        %870 = vst [vmem:[%s56 + $0x1928] sm:$0xff] 0.0
        %871 = vst [vmem:[%s56 + $0x1930] sm:$0xff] 0.0
        %872 = vst [vmem:[%s56 + $0x1938] sm:$0xff] 0.0
        %873 = vst [vmem:[%s56 + $0x1940] sm:$0xff] 0.0
        %874 = vst [vmem:[%s56 + $0x1948] sm:$0xff] 0.0
        %875 = vst [vmem:[%s56 + $0x1950] sm:$0xff] 0.0
        %876 = vst [vmem:[%s56 + $0x1958] sm:$0xff] 0.0
        %877 = vst [vmem:[%s56 + $0x1960] sm:$0xff] 0.0
        %878 = vst [vmem:[%s56 + $0x1968] sm:$0xff] 0.0
        %879 = vst [vmem:[%s56 + $0x1970] sm:$0xff] 0.0
        %880 = vst [vmem:[%s56 + $0x1978] sm:$0xff] 0.0
        %881 = vst [vmem:[%s56 + $0x1980] sm:$0xff] 0.0
        %882 = vst [vmem:[%s56 + $0x1988] sm:$0xff] 0.0
        %883 = vst [vmem:[%s56 + $0x1990] sm:$0xff] 0.0
        %884 = vst [vmem:[%s56 + $0x1998] sm:$0xff] 0.0
        %885 = vst [vmem:[%s56 + $0x19a0] sm:$0xff] 0.0
        %886 = vst [vmem:[%s56 + $0x19a8] sm:$0xff] 0.0
        %887 = vst [vmem:[%s56 + $0x19b0] sm:$0xff] 0.0
        %888 = vst [vmem:[%s56 + $0x19b8] sm:$0xff] 0.0
        %889 = vst [vmem:[%s56 + $0x19c0] sm:$0xff] 0.0
        %890 = vst [vmem:[%s56 + $0x19c8] sm:$0xff] 0.0
        %891 = vst [vmem:[%s56 + $0x19d0] sm:$0xff] 0.0
        %892 = vst.msk [vmem:[%s56 + $0x19d8] sm:$0xff] %vm86, 0.0
        %893 = vst [vmem:[%s56 + $0x19e0] sm:$0xff] 0.0
        %894 = vst [vmem:[%s56 + $0x19e8] sm:$0xff] 0.0
        %895 = vst [vmem:[%s56 + $0x19f0] sm:$0xff] 0.0
        %896 = vst [vmem:[%s56 + $0x19f8] sm:$0xff] 0.0
        %897 = vst [vmem:[%s56 + $0x1a00] sm:$0xff] 0.0
        %898 = vst [vmem:[%s56 + $0x1a08] sm:$0xff] 0.0
        %899 = vst [vmem:[%s56 + $0x1a10] sm:$0xff] 0.0
        %900 = vst [vmem:[%s56 + $0x1a18] sm:$0xff] 0.0
        %901 = vst [vmem:[%s56 + $0x1a20] sm:$0xff] 0.0
        %902 = vst [vmem:[%s56 + $0x1a28] sm:$0xff] 0.0
        %903 = vst [vmem:[%s56 + $0x1a30] sm:$0xff] 0.0
        %904 = vst [vmem:[%s56 + $0x1a38] sm:$0xff] 0.0
        %905 = vst [vmem:[%s56 + $0x1a40] sm:$0xff] 0.0
        %906 = vst [vmem:[%s56 + $0x1a48] sm:$0xff] 0.0
        %907 = vst [vmem:[%s56 + $0x1a50] sm:$0xff] 0.0
        %908 = vst [vmem:[%s56 + $0x1a58] sm:$0xff] 0.0
        %909 = vst [vmem:[%s56 + $0x1a60] sm:$0xff] 0.0
        %910 = vst [vmem:[%s56 + $0x1a68] sm:$0xff] 0.0
        %911 = vst [vmem:[%s56 + $0x1a70] sm:$0xff] 0.0
        %912 = vst [vmem:[%s56 + $0x1a78] sm:$0xff] 0.0
        %913 = vst [vmem:[%s56 + $0x1a80] sm:$0xff] 0.0
        %914 = vst [vmem:[%s56 + $0x1a88] sm:$0xff] 0.0
        %915 = vst.msk [vmem:[%s56 + $0x1a90] sm:$0xff] %vm86, 0.0
        %916 = vst [vmem:[%s56 + $0x1a98] sm:$0xff] 0.0
        %917 = vst [vmem:[%s56 + $0x1aa0] sm:$0xff] 0.0
        %918 = vst [vmem:[%s56 + $0x1aa8] sm:$0xff] 0.0
        %919 = vst [vmem:[%s56 + $0x1ab0] sm:$0xff] 0.0
        %920 = vst [vmem:[%s56 + $0x1ab8] sm:$0xff] 0.0
        %921 = vst [vmem:[%s56 + $0x1ac0] sm:$0xff] 0.0
        %922 = vst [vmem:[%s56 + $0x1ac8] sm:$0xff] 0.0
        %923 = vst [vmem:[%s56 + $0x1ad0] sm:$0xff] 0.0
        %924 = vst [vmem:[%s56 + $0x1ad8] sm:$0xff] 0.0
        %925 = vst [vmem:[%s56 + $0x1ae0] sm:$0xff] 0.0
        %926 = vst [vmem:[%s56 + $0x1ae8] sm:$0xff] 0.0
        %927 = vst [vmem:[%s56 + $0x1af0] sm:$0xff] 0.0
        %928 = vst [vmem:[%s56 + $0x1af8] sm:$0xff] 0.0
        %929 = vst [vmem:[%s56 + $0x1b00] sm:$0xff] 0.0
        %930 = vst [vmem:[%s56 + $0x1b08] sm:$0xff] 0.0
        %931 = vst [vmem:[%s56 + $0x1b10] sm:$0xff] 0.0
        %932 = vst [vmem:[%s56 + $0x1b18] sm:$0xff] 0.0
        %933 = vst [vmem:[%s56 + $0x1b20] sm:$0xff] 0.0
        %934 = vst [vmem:[%s56 + $0x1b28] sm:$0xff] 0.0
        %935 = vst [vmem:[%s56 + $0x1b30] sm:$0xff] 0.0
        %936 = vst [vmem:[%s56 + $0x1b38] sm:$0xff] 0.0
        %937 = vst [vmem:[%s56 + $0x1b40] sm:$0xff] 0.0
        %938 = vst.msk [vmem:[%s56 + $0x1b48] sm:$0xff] %vm86, 0.0
        %939 = vst [vmem:[%s56 + $0x1b50] sm:$0xff] 0.0
        %940 = vst [vmem:[%s56 + $0x1b58] sm:$0xff] 0.0
        %941 = vst [vmem:[%s56 + $0x1b60] sm:$0xff] 0.0
        %942 = vst [vmem:[%s56 + $0x1b68] sm:$0xff] 0.0
        %943 = vst [vmem:[%s56 + $0x1b70] sm:$0xff] 0.0
        %944 = vst [vmem:[%s56 + $0x1b78] sm:$0xff] 0.0
        %945 = vst [vmem:[%s56 + $0x1b80] sm:$0xff] 0.0
        %946 = vst [vmem:[%s56 + $0x1b88] sm:$0xff] 0.0
        %947 = vst [vmem:[%s56 + $0x1b90] sm:$0xff] 0.0
        %948 = vst [vmem:[%s56 + $0x1b98] sm:$0xff] 0.0
        %949 = vst [vmem:[%s56 + $0x1ba0] sm:$0xff] 0.0
        %950 = vst [vmem:[%s56 + $0x1ba8] sm:$0xff] 0.0
        %951 = vst [vmem:[%s56 + $0x1bb0] sm:$0xff] 0.0
        %952 = vst [vmem:[%s56 + $0x1bb8] sm:$0xff] 0.0
        %953 = vst [vmem:[%s56 + $0x1bc0] sm:$0xff] 0.0
        %954 = vst [vmem:[%s56 + $0x1bc8] sm:$0xff] 0.0
        %955 = vst [vmem:[%s56 + $0x1bd0] sm:$0xff] 0.0
        %956 = vst [vmem:[%s56 + $0x1bd8] sm:$0xff] 0.0
        %957 = vst [vmem:[%s56 + $0x1be0] sm:$0xff] 0.0
        %958 = vst [vmem:[%s56 + $0x1be8] sm:$0xff] 0.0
        %959 = vst [vmem:[%s56 + $0x1bf0] sm:$0xff] 0.0
        %960 = vst [vmem:[%s56 + $0x1bf8] sm:$0xff] 0.0
        %961 = vst.msk [vmem:[%s56 + $0x1c00] sm:$0xff] %vm86, 0.0
        %962 = vst [vmem:[%s56 + $0x1c08] sm:$0xff] 0.0
        %963 = vst [vmem:[%s56 + $0x1c10] sm:$0xff] 0.0
        %964 = vst [vmem:[%s56 + $0x1c18] sm:$0xff] 0.0
        %965 = vst [vmem:[%s56 + $0x1c20] sm:$0xff] 0.0
        %966 = vst [vmem:[%s56 + $0x1c28] sm:$0xff] 0.0
        %967 = vst [vmem:[%s56 + $0x1c30] sm:$0xff] 0.0
        %968 = vst [vmem:[%s56 + $0x1c38] sm:$0xff] 0.0
        %969 = vst [vmem:[%s56 + $0x1c40] sm:$0xff] 0.0
        %970 = vst [vmem:[%s56 + $0x1c48] sm:$0xff] 0.0
        %971 = vst [vmem:[%s56 + $0x1c50] sm:$0xff] 0.0
        %972 = vst [vmem:[%s56 + $0x1c58] sm:$0xff] 0.0
        %973 = vst [vmem:[%s56 + $0x1c60] sm:$0xff] 0.0
        %974 = vst [vmem:[%s56 + $0x1c68] sm:$0xff] 0.0
        %975 = vst [vmem:[%s56 + $0x1c70] sm:$0xff] 0.0
        %976 = vst [vmem:[%s56 + $0x1c78] sm:$0xff] 0.0
        %977 = vst [vmem:[%s56 + $0x1c80] sm:$0xff] 0.0
        %978 = vst [vmem:[%s56 + $0x1c88] sm:$0xff] 0.0
        %979 = vst [vmem:[%s56 + $0x1c90] sm:$0xff] 0.0
        %980 = vst [vmem:[%s56 + $0x1c98] sm:$0xff] 0.0
        %981 = vst [vmem:[%s56 + $0x1ca0] sm:$0xff] 0.0
        %982 = vst [vmem:[%s56 + $0x1ca8] sm:$0xff] 0.0
        %983 = vst [vmem:[%s56 + $0x1cb0] sm:$0xff] 0.0
        %984 = vst.msk [vmem:[%s56 + $0x1cb8] sm:$0xff] %vm86, 0.0
        %985 = vst [vmem:[%s56 + $0x1cc0] sm:$0xff] 0.0
        %986 = vst [vmem:[%s56 + $0x1cc8] sm:$0xff] 0.0
        %987 = vst [vmem:[%s56 + $0x1cd0] sm:$0xff] 0.0
        %988 = vst [vmem:[%s56 + $0x1cd8] sm:$0xff] 0.0
        %989 = vst [vmem:[%s56 + $0x1ce0] sm:$0xff] 0.0
        %990 = vst [vmem:[%s56 + $0x1ce8] sm:$0xff] 0.0
        %991 = vst [vmem:[%s56 + $0x1cf0] sm:$0xff] 0.0
        %992 = vst [vmem:[%s56 + $0x1cf8] sm:$0xff] 0.0
        %993 = vst [vmem:[%s56 + $0x1d00] sm:$0xff] 0.0
        %994 = vst [vmem:[%s56 + $0x1d08] sm:$0xff] 0.0
        %995 = vst [vmem:[%s56 + $0x1d10] sm:$0xff] 0.0
        %996 = vst [vmem:[%s56 + $0x1d18] sm:$0xff] 0.0
        %997 = vst [vmem:[%s56 + $0x1d20] sm:$0xff] 0.0
        %998 = vst [vmem:[%s56 + $0x1d28] sm:$0xff] 0.0
        %999 = vst [vmem:[%s56 + $0x1d30] sm:$0xff] 0.0
        %1000 = vst [vmem:[%s56 + $0x1d38] sm:$0xff] 0.0
        %1001 = vst [vmem:[%s56 + $0x1d40] sm:$0xff] 0.0
        %1002 = vst [vmem:[%s56 + $0x1d48] sm:$0xff] 0.0
        %1003 = vst [vmem:[%s56 + $0x1d50] sm:$0xff] 0.0
        %1004 = vst [vmem:[%s56 + $0x1d58] sm:$0xff] 0.0
        %1005 = vst [vmem:[%s56 + $0x1d60] sm:$0xff] 0.0
        %1006 = vst [vmem:[%s56 + $0x1d68] sm:$0xff] 0.0
        %1007 = vst.msk [vmem:[%s56 + $0x1d70] sm:$0xff] %vm86, 0.0
        %1008 = vst [vmem:[%s56 + $0x1d78] sm:$0xff] 0.0
        %1009 = vst [vmem:[%s56 + $0x1d80] sm:$0xff] 0.0
        %1010 = vst [vmem:[%s56 + $0x1d88] sm:$0xff] 0.0
        %1011 = vst [vmem:[%s56 + $0x1d90] sm:$0xff] 0.0
        %1012 = vst [vmem:[%s56 + $0x1d98] sm:$0xff] 0.0
        %1013 = vst [vmem:[%s56 + $0x1da0] sm:$0xff] 0.0
        %1014 = vst [vmem:[%s56 + $0x1da8] sm:$0xff] 0.0
        %1015 = vst [vmem:[%s56 + $0x1db0] sm:$0xff] 0.0
        %1016 = vst [vmem:[%s56 + $0x1db8] sm:$0xff] 0.0
        %1017 = vst [vmem:[%s56 + $0x1dc0] sm:$0xff] 0.0
        %1018 = vst [vmem:[%s56 + $0x1dc8] sm:$0xff] 0.0
        %1019 = vst [vmem:[%s56 + $0x1dd0] sm:$0xff] 0.0
        %1020 = vst [vmem:[%s56 + $0x1dd8] sm:$0xff] 0.0
        %1021 = vst [vmem:[%s56 + $0x1de0] sm:$0xff] 0.0
        %1022 = vst [vmem:[%s56 + $0x1de8] sm:$0xff] 0.0
        %1023 = vst [vmem:[%s56 + $0x1df0] sm:$0xff] 0.0
        %1024 = vst [vmem:[%s56 + $0x1df8] sm:$0xff] 0.0
        %1025 = vst [vmem:[%s56 + $0x1e00] sm:$0xff] 0.0
        %1026 = vst [vmem:[%s56 + $0x1e08] sm:$0xff] 0.0
        %1027 = vst [vmem:[%s56 + $0x1e10] sm:$0xff] 0.0
        %1028 = vst [vmem:[%s56 + $0x1e18] sm:$0xff] 0.0
        %1029 = vst [vmem:[%s56 + $0x1e20] sm:$0xff] 0.0
        %1030 = vst.msk [vmem:[%s56 + $0x1e28] sm:$0xff] %vm86, 0.0
        %1031 = vst [vmem:[%s56 + $0x1e30] sm:$0xff] 0.0
        %1032 = vst [vmem:[%s56 + $0x1e38] sm:$0xff] 0.0
        %1033 = vst [vmem:[%s56 + $0x1e40] sm:$0xff] 0.0
        %1034 = vst [vmem:[%s56 + $0x1e48] sm:$0xff] 0.0
        %1035 = vst [vmem:[%s56 + $0x1e50] sm:$0xff] 0.0
        %1036 = vst [vmem:[%s56 + $0x1e58] sm:$0xff] 0.0
        %1037 = vst [vmem:[%s56 + $0x1e60] sm:$0xff] 0.0
        %1038 = vst [vmem:[%s56 + $0x1e68] sm:$0xff] 0.0
        %1039 = vst [vmem:[%s56 + $0x1e70] sm:$0xff] 0.0
        %1040 = vst [vmem:[%s56 + $0x1e78] sm:$0xff] 0.0
        %1041 = vst [vmem:[%s56 + $0x1e80] sm:$0xff] 0.0
        %1042 = vst [vmem:[%s56 + $0x1e88] sm:$0xff] 0.0
        %1043 = vst [vmem:[%s56 + $0x1e90] sm:$0xff] 0.0
        %1044 = vst [vmem:[%s56 + $0x1e98] sm:$0xff] 0.0
        %1045 = vst [vmem:[%s56 + $0x1ea0] sm:$0xff] 0.0
        %1046 = vst [vmem:[%s56 + $0x1ea8] sm:$0xff] 0.0
        %1047 = vst [vmem:[%s56 + $0x1eb0] sm:$0xff] 0.0
        %1048 = vst [vmem:[%s56 + $0x1eb8] sm:$0xff] 0.0
        %1049 = vst [vmem:[%s56 + $0x1ec0] sm:$0xff] 0.0
        %1050 = vst [vmem:[%s56 + $0x1ec8] sm:$0xff] 0.0
        %1051 = vst [vmem:[%s56 + $0x1ed0] sm:$0xff] 0.0
        %1052 = vst [vmem:[%s56 + $0x1ed8] sm:$0xff] 0.0
        %1053 = vst.msk [vmem:[%s56 + $0x1ee0] sm:$0xff] %vm86, 0.0
        %1054 = vst [vmem:[%s56 + $0x1ee8] sm:$0xff] 0.0
        %1055 = vst [vmem:[%s56 + $0x1ef0] sm:$0xff] 0.0
        %1056 = vst [vmem:[%s56 + $0x1ef8] sm:$0xff] 0.0
        %1057 = vst [vmem:[%s56 + $0x1f00] sm:$0xff] 0.0
        %1058 = vst [vmem:[%s56 + $0x1f08] sm:$0xff] 0.0
        %1059 = vst [vmem:[%s56 + $0x1f10] sm:$0xff] 0.0
        %1060 = vst [vmem:[%s56 + $0x1f18] sm:$0xff] 0.0
        %1061 = vst [vmem:[%s56 + $0x1f20] sm:$0xff] 0.0
        %1062 = vst [vmem:[%s56 + $0x1f28] sm:$0xff] 0.0
        %1063 = vst [vmem:[%s56 + $0x1f30] sm:$0xff] 0.0
        %1064 = vst [vmem:[%s56 + $0x1f38] sm:$0xff] 0.0
        %1065 = vst [vmem:[%s56 + $0x1f40] sm:$0xff] 0.0
        %1066 = vst [vmem:[%s56 + $0x1f48] sm:$0xff] 0.0
        %1067 = vst [vmem:[%s56 + $0x1f50] sm:$0xff] 0.0
        %1068 = vst [vmem:[%s56 + $0x1f58] sm:$0xff] 0.0
        %1069 = vst [vmem:[%s56 + $0x1f60] sm:$0xff] 0.0
        %1070 = vst [vmem:[%s56 + $0x1f68] sm:$0xff] 0.0
        %1071 = vst [vmem:[%s56 + $0x1f70] sm:$0xff] 0.0
        %1072 = vst [vmem:[%s56 + $0x1f78] sm:$0xff] 0.0
        %1073 = vst [vmem:[%s56 + $0x1f80] sm:$0xff] 0.0
        %1074 = vst [vmem:[%s56 + $0x1f88] sm:$0xff] 0.0
        %1075 = vst [vmem:[%s56 + $0x1f90] sm:$0xff] 0.0
        %1076 = vst.msk [vmem:[%s56 + $0x1f98] sm:$0xff] %vm86, 0.0
        %1077 = vst [vmem:[%s56 + $0x1fa0] sm:$0xff] 0.0
        %1078 = vst [vmem:[%s56 + $0x1fa8] sm:$0xff] 0.0
        %1079 = vst [vmem:[%s56 + $0x1fb0] sm:$0xff] 0.0
        %1080 = vst [vmem:[%s56 + $0x1fb8] sm:$0xff] 0.0
        %1081 = vst [vmem:[%s56 + $0x1fc0] sm:$0xff] 0.0
        %1082 = vst [vmem:[%s56 + $0x1fc8] sm:$0xff] 0.0
        %1083 = vst [vmem:[%s56 + $0x1fd0] sm:$0xff] 0.0
        %1084 = vst [vmem:[%s56 + $0x1fd8] sm:$0xff] 0.0
        %1085 = vst [vmem:[%s56 + $0x1fe0] sm:$0xff] 0.0
        %1086 = vst [vmem:[%s56 + $0x1fe8] sm:$0xff] 0.0
        %1087 = vst [vmem:[%s56 + $0x1ff0] sm:$0xff] 0.0
        %1088 = vst [vmem:[%s56 + $0x1ff8] sm:$0xff] 0.0
        %1089 = vst [vmem:[%s56 + $0x2000] sm:$0xff] 0.0
        %1090 = vst [vmem:[%s56 + $0x2008] sm:$0xff] 0.0
        %1091 = vst [vmem:[%s56 + $0x2010] sm:$0xff] 0.0
        %1092 = vst [vmem:[%s56 + $0x2018] sm:$0xff] 0.0
        %1093 = vst [vmem:[%s56 + $0x2020] sm:$0xff] 0.0
        %1094 = vst [vmem:[%s56 + $0x2028] sm:$0xff] 0.0
        %1095 = vst [vmem:[%s56 + $0x2030] sm:$0xff] 0.0
        %1096 = vst [vmem:[%s56 + $0x2038] sm:$0xff] 0.0
        %1097 = vst [vmem:[%s56 + $0x2040] sm:$0xff] 0.0
        %1098 = vst [vmem:[%s56 + $0x2048] sm:$0xff] 0.0
        %1099 = vst.msk [vmem:[%s56 + $0x2050] sm:$0xff] %vm86, 0.0
        %1100 = vst [vmem:[%s56 + $0x2058] sm:$0xff] 0.0
        %1101 = vst [vmem:[%s56 + $0x2060] sm:$0xff] 0.0
        %1102 = vst [vmem:[%s56 + $0x2068] sm:$0xff] 0.0
        %1103 = vst [vmem:[%s56 + $0x2070] sm:$0xff] 0.0
        %1104 = vst [vmem:[%s56 + $0x2078] sm:$0xff] 0.0
        %1105 = vst [vmem:[%s56 + $0x2080] sm:$0xff] 0.0
        %1106 = vst [vmem:[%s56 + $0x2088] sm:$0xff] 0.0
        %1107 = vst [vmem:[%s56 + $0x2090] sm:$0xff] 0.0
        %1108 = vst [vmem:[%s56 + $0x2098] sm:$0xff] 0.0
        %1109 = vst [vmem:[%s56 + $0x20a0] sm:$0xff] 0.0
        %1110 = vst [vmem:[%s56 + $0x20a8] sm:$0xff] 0.0
        %1111 = vst [vmem:[%s56 + $0x20b0] sm:$0xff] 0.0
        %1112 = vst [vmem:[%s56 + $0x20b8] sm:$0xff] 0.0
        %1113 = vst [vmem:[%s56 + $0x20c0] sm:$0xff] 0.0
        %1114 = vst [vmem:[%s56 + $0x20c8] sm:$0xff] 0.0
        %1115 = vst [vmem:[%s56 + $0x20d0] sm:$0xff] 0.0
        %1116 = vst [vmem:[%s56 + $0x20d8] sm:$0xff] 0.0
        %1117 = vst [vmem:[%s56 + $0x20e0] sm:$0xff] 0.0
        %1118 = vst [vmem:[%s56 + $0x20e8] sm:$0xff] 0.0
        %1119 = vst [vmem:[%s56 + $0x20f0] sm:$0xff] 0.0
        %1120 = vst [vmem:[%s56 + $0x20f8] sm:$0xff] 0.0
        %1121 = vst [vmem:[%s56 + $0x2100] sm:$0xff] 0.0
        %1122 = vst.msk [vmem:[%s56 + $0x2108] sm:$0xff] %vm86, 0.0
        %1123 = vst [vmem:[%s56 + $0x2110] sm:$0xff] 0.0
        %1124 = vst [vmem:[%s56 + $0x2118] sm:$0xff] 0.0
        %1125 = vst [vmem:[%s56 + $0x2120] sm:$0xff] 0.0
        %1126 = vst [vmem:[%s56 + $0x2128] sm:$0xff] 0.0
        %1127 = vst [vmem:[%s56 + $0x2130] sm:$0xff] 0.0
        %1128 = vst [vmem:[%s56 + $0x2138] sm:$0xff] 0.0
        %1129 = vst [vmem:[%s56 + $0x2140] sm:$0xff] 0.0
        %1130 = vst [vmem:[%s56 + $0x2148] sm:$0xff] 0.0
        %1131 = vst [vmem:[%s56 + $0x2150] sm:$0xff] 0.0
        %1132 = vst [vmem:[%s56 + $0x2158] sm:$0xff] 0.0
        %1133 = vst [vmem:[%s56 + $0x2160] sm:$0xff] 0.0
        %1134 = vst [vmem:[%s56 + $0x2168] sm:$0xff] 0.0
        %1135 = vst [vmem:[%s56 + $0x2170] sm:$0xff] 0.0
        %1136 = vst [vmem:[%s56 + $0x2178] sm:$0xff] 0.0
        %1137 = vst [vmem:[%s56 + $0x2180] sm:$0xff] 0.0
        %1138 = vst [vmem:[%s56 + $0x2188] sm:$0xff] 0.0
        %1139 = vst [vmem:[%s56 + $0x2190] sm:$0xff] 0.0
        %1140 = vst [vmem:[%s56 + $0x2198] sm:$0xff] 0.0
        %1141 = vst [vmem:[%s56 + $0x21a0] sm:$0xff] 0.0
        %1142 = vst [vmem:[%s56 + $0x21a8] sm:$0xff] 0.0
        %1143 = vst [vmem:[%s56 + $0x21b0] sm:$0xff] 0.0
        %1144 = vst [vmem:[%s56 + $0x21b8] sm:$0xff] 0.0
        %1145 = vst.msk [vmem:[%s56 + $0x21c0] sm:$0xff] %vm86, 0.0
        %1146 = vst [vmem:[%s56 + $0x21c8] sm:$0xff] 0.0
        %1147 = vst [vmem:[%s56 + $0x21d0] sm:$0xff] 0.0
        %1148 = vst [vmem:[%s56 + $0x21d8] sm:$0xff] 0.0
        %1149 = vst [vmem:[%s56 + $0x21e0] sm:$0xff] 0.0
        %1150 = vst [vmem:[%s56 + $0x21e8] sm:$0xff] 0.0
        %1151 = vst [vmem:[%s56 + $0x21f0] sm:$0xff] 0.0
        %1152 = vst [vmem:[%s56 + $0x21f8] sm:$0xff] 0.0
        %1153 = vst [vmem:[%s56 + $0x2200] sm:$0xff] 0.0
        %1154 = vst [vmem:[%s56 + $0x2208] sm:$0xff] 0.0
        %1155 = vst [vmem:[%s56 + $0x2210] sm:$0xff] 0.0
        %1156 = vst [vmem:[%s56 + $0x2218] sm:$0xff] 0.0
        %1157 = vst [vmem:[%s56 + $0x2220] sm:$0xff] 0.0
        %1158 = vst [vmem:[%s56 + $0x2228] sm:$0xff] 0.0
        %1159 = vst [vmem:[%s56 + $0x2230] sm:$0xff] 0.0
        %1160 = vst [vmem:[%s56 + $0x2238] sm:$0xff] 0.0
        %1161 = vst [vmem:[%s56 + $0x2240] sm:$0xff] 0.0
        %1162 = vst [vmem:[%s56 + $0x2248] sm:$0xff] 0.0
        %1163 = vst [vmem:[%s56 + $0x2250] sm:$0xff] 0.0
        %1164 = vst [vmem:[%s56 + $0x2258] sm:$0xff] 0.0
        %1165 = vst [vmem:[%s56 + $0x2260] sm:$0xff] 0.0
        %1166 = vst [vmem:[%s56 + $0x2268] sm:$0xff] 0.0
        %1167 = vst [vmem:[%s56 + $0x2270] sm:$0xff] 0.0
        %1168 = vst.msk [vmem:[%s56 + $0x2278] sm:$0xff] %vm86, 0.0
        %1169 = vst [vmem:[%s56 + $0x2280] sm:$0xff] 0.0
        %1170 = vst [vmem:[%s56 + $0x2288] sm:$0xff] 0.0
        %1171 = vst [vmem:[%s56 + $0x2290] sm:$0xff] 0.0
        %1172 = vst [vmem:[%s56 + $0x2298] sm:$0xff] 0.0
        %1173 = vst [vmem:[%s56 + $0x22a0] sm:$0xff] 0.0
        %1174 = vst [vmem:[%s56 + $0x22a8] sm:$0xff] 0.0
        %1175 = vst [vmem:[%s56 + $0x22b0] sm:$0xff] 0.0
        %1176 = vst [vmem:[%s56 + $0x22b8] sm:$0xff] 0.0
        %1177 = vst [vmem:[%s56 + $0x22c0] sm:$0xff] 0.0
        %1178 = vst [vmem:[%s56 + $0x22c8] sm:$0xff] 0.0
        %1179 = vst [vmem:[%s56 + $0x22d0] sm:$0xff] 0.0
        %1180 = vst [vmem:[%s56 + $0x22d8] sm:$0xff] 0.0
        %1181 = vst [vmem:[%s56 + $0x22e0] sm:$0xff] 0.0
        %1182 = vst [vmem:[%s56 + $0x22e8] sm:$0xff] 0.0
        %1183 = vst [vmem:[%s56 + $0x22f0] sm:$0xff] 0.0
        %1184 = vst [vmem:[%s56 + $0x22f8] sm:$0xff] 0.0
        %1185 = vst [vmem:[%s56 + $0x2300] sm:$0xff] 0.0
        %1186 = vst [vmem:[%s56 + $0x2308] sm:$0xff] 0.0
        %1187 = vst [vmem:[%s56 + $0x2310] sm:$0xff] 0.0
        %1188 = vst [vmem:[%s56 + $0x2318] sm:$0xff] 0.0
        %1189 = vst [vmem:[%s56 + $0x2320] sm:$0xff] 0.0
        %1190 = vst [vmem:[%s56 + $0x2328] sm:$0xff] 0.0
        %1191 = vst.msk [vmem:[%s56 + $0x2330] sm:$0xff] %vm86, 0.0
        %1192 = vst [vmem:[%s56 + $0x2338] sm:$0xff] 0.0
        %1193 = vst [vmem:[%s56 + $0x2340] sm:$0xff] 0.0
        %1194 = vst [vmem:[%s56 + $0x2348] sm:$0xff] 0.0
        %1195 = vst [vmem:[%s56 + $0x2350] sm:$0xff] 0.0
        %1196 = vst [vmem:[%s56 + $0x2358] sm:$0xff] 0.0
        %1197 = vst [vmem:[%s56 + $0x2360] sm:$0xff] 0.0
        %1198 = vst [vmem:[%s56 + $0x2368] sm:$0xff] 0.0
        %1199 = vst [vmem:[%s56 + $0x2370] sm:$0xff] 0.0
        %1200 = vst [vmem:[%s56 + $0x2378] sm:$0xff] 0.0
        %1201 = vst [vmem:[%s56 + $0x2380] sm:$0xff] 0.0
        %1202 = vst [vmem:[%s56 + $0x2388] sm:$0xff] 0.0
        %1203 = vst [vmem:[%s56 + $0x2390] sm:$0xff] 0.0
        %1204 = vst [vmem:[%s56 + $0x2398] sm:$0xff] 0.0
        %1205 = vst [vmem:[%s56 + $0x23a0] sm:$0xff] 0.0
        %1206 = vst [vmem:[%s56 + $0x23a8] sm:$0xff] 0.0
        %1207 = vst [vmem:[%s56 + $0x23b0] sm:$0xff] 0.0
        %1208 = vst [vmem:[%s56 + $0x23b8] sm:$0xff] 0.0
        %1209 = vst [vmem:[%s56 + $0x23c0] sm:$0xff] 0.0
        %1210 = vst [vmem:[%s56 + $0x23c8] sm:$0xff] 0.0
        %1211 = vst [vmem:[%s56 + $0x23d0] sm:$0xff] 0.0
        %1212 = vst [vmem:[%s56 + $0x23d8] sm:$0xff] 0.0
        %1213 = vst [vmem:[%s56 + $0x23e0] sm:$0xff] 0.0
        %1214 = vst.msk [vmem:[%s56 + $0x23e8] sm:$0xff] %vm86, 0.0
        %1215 = vst [vmem:[%s56 + $0x23f0] sm:$0xff] 0.0
        %1216 = vst [vmem:[%s56 + $0x23f8] sm:$0xff] 0.0
        %1217 = vst [vmem:[%s56 + $0x2400] sm:$0xff] 0.0
        %1218 = vst [vmem:[%s56 + $0x2408] sm:$0xff] 0.0
        %1219 = vst [vmem:[%s56 + $0x2410] sm:$0xff] 0.0
        %1220 = vst [vmem:[%s56 + $0x2418] sm:$0xff] 0.0
        %1221 = vst [vmem:[%s56 + $0x2420] sm:$0xff] 0.0
        %1222 = vst [vmem:[%s56 + $0x2428] sm:$0xff] 0.0
        %1223 = vst [vmem:[%s56 + $0x2430] sm:$0xff] 0.0
        %1224 = vst [vmem:[%s56 + $0x2438] sm:$0xff] 0.0
        %1225 = vst [vmem:[%s56 + $0x2440] sm:$0xff] 0.0
        %1226 = vst [vmem:[%s56 + $0x2448] sm:$0xff] 0.0
        %1227 = vst [vmem:[%s56 + $0x2450] sm:$0xff] 0.0
        %1228 = vst [vmem:[%s56 + $0x2458] sm:$0xff] 0.0
        %1229 = vst [vmem:[%s56 + $0x2460] sm:$0xff] 0.0
        %1230 = vst [vmem:[%s56 + $0x2468] sm:$0xff] 0.0
        %1231 = vst [vmem:[%s56 + $0x2470] sm:$0xff] 0.0
        %1232 = vst [vmem:[%s56 + $0x2478] sm:$0xff] 0.0
        %1233 = vst [vmem:[%s56 + $0x2480] sm:$0xff] 0.0
        %1234 = vst [vmem:[%s56 + $0x2488] sm:$0xff] 0.0
        %1235 = vst [vmem:[%s56 + $0x2490] sm:$0xff] 0.0
        %1236 = vst [vmem:[%s56 + $0x2498] sm:$0xff] 0.0
        %1237 = vst.msk [vmem:[%s56 + $0x24a0] sm:$0xff] %vm86, 0.0
        %1238 = vst [vmem:[%s56 + $0x24a8] sm:$0xff] 0.0
        %1239 = vst [vmem:[%s56 + $0x24b0] sm:$0xff] 0.0
        %1240 = vst [vmem:[%s56 + $0x24b8] sm:$0xff] 0.0
        %1241 = vst [vmem:[%s56 + $0x24c0] sm:$0xff] 0.0
        %1242 = vst [vmem:[%s56 + $0x24c8] sm:$0xff] 0.0
        %1243 = vst [vmem:[%s56 + $0x24d0] sm:$0xff] 0.0
        %1244 = vst [vmem:[%s56 + $0x24d8] sm:$0xff] 0.0
        %1245 = vst [vmem:[%s56 + $0x24e0] sm:$0xff] 0.0
        %1246 = vst [vmem:[%s56 + $0x24e8] sm:$0xff] 0.0
        %1247 = vst [vmem:[%s56 + $0x24f0] sm:$0xff] 0.0
        %1248 = vst [vmem:[%s56 + $0x24f8] sm:$0xff] 0.0
        %1249 = vst [vmem:[%s56 + $0x2500] sm:$0xff] 0.0
        %1250 = vst [vmem:[%s56 + $0x2508] sm:$0xff] 0.0
        %1251 = vst [vmem:[%s56 + $0x2510] sm:$0xff] 0.0
        %1252 = vst [vmem:[%s56 + $0x2518] sm:$0xff] 0.0
        %1253 = vst [vmem:[%s56 + $0x2520] sm:$0xff] 0.0
        %1254 = vst [vmem:[%s56 + $0x2528] sm:$0xff] 0.0
        %1255 = vst [vmem:[%s56 + $0x2530] sm:$0xff] 0.0
        %1256 = vst [vmem:[%s56 + $0x2538] sm:$0xff] 0.0
        %1257 = vst [vmem:[%s56 + $0x2540] sm:$0xff] 0.0
        %1258 = vst [vmem:[%s56 + $0x2548] sm:$0xff] 0.0
        %1259 = vst [vmem:[%s56 + $0x2550] sm:$0xff] 0.0
        %1260 = vst.msk [vmem:[%s56 + $0x2558] sm:$0xff] %vm86, 0.0
        %1261 = vst [vmem:[%s56 + $0x2560] sm:$0xff] 0.0
        %1262 = vst [vmem:[%s56 + $0x2568] sm:$0xff] 0.0
        %1263 = vst [vmem:[%s56 + $0x2570] sm:$0xff] 0.0
        %1264 = vst [vmem:[%s56 + $0x2578] sm:$0xff] 0.0
        %1265 = vst [vmem:[%s56 + $0x2580] sm:$0xff] 0.0
        %1266 = vst [vmem:[%s56 + $0x2588] sm:$0xff] 0.0
        %1267 = vst [vmem:[%s56 + $0x2590] sm:$0xff] 0.0
        %1268 = vst [vmem:[%s56 + $0x2598] sm:$0xff] 0.0
        %1269 = vst [vmem:[%s56 + $0x25a0] sm:$0xff] 0.0
        %1270 = vst [vmem:[%s56 + $0x25a8] sm:$0xff] 0.0
        %1271 = vst [vmem:[%s56 + $0x25b0] sm:$0xff] 0.0
        %1272 = vst [vmem:[%s56 + $0x25b8] sm:$0xff] 0.0
        %1273 = vst [vmem:[%s56 + $0x25c0] sm:$0xff] 0.0
        %1274 = vst [vmem:[%s56 + $0x25c8] sm:$0xff] 0.0
        %1275 = vst [vmem:[%s56 + $0x25d0] sm:$0xff] 0.0
        %1276 = vst [vmem:[%s56 + $0x25d8] sm:$0xff] 0.0
        %1277 = vst [vmem:[%s56 + $0x25e0] sm:$0xff] 0.0
        %1278 = vst [vmem:[%s56 + $0x25e8] sm:$0xff] 0.0
        %1279 = vst [vmem:[%s56 + $0x25f0] sm:$0xff] 0.0
        %1280 = vst [vmem:[%s56 + $0x25f8] sm:$0xff] 0.0
        %1281 = vst [vmem:[%s56 + $0x2600] sm:$0xff] 0.0
        %1282 = vst [vmem:[%s56 + $0x2608] sm:$0xff] 0.0
        %1283 = vst.msk [vmem:[%s56 + $0x2610] sm:$0xff] %vm86, 0.0
        %1284 = vst [vmem:[%s56 + $0x2618] sm:$0xff] 0.0
        %1285 = vst [vmem:[%s56 + $0x2620] sm:$0xff] 0.0
        %1286 = vst [vmem:[%s56 + $0x2628] sm:$0xff] 0.0
        %1287 = vst [vmem:[%s56 + $0x2630] sm:$0xff] 0.0
        %1288 = vst [vmem:[%s56 + $0x2638] sm:$0xff] 0.0
        %1289 = vst [vmem:[%s56 + $0x2640] sm:$0xff] 0.0
        %1290 = vst [vmem:[%s56 + $0x2648] sm:$0xff] 0.0
        %1291 = vst [vmem:[%s56 + $0x2650] sm:$0xff] 0.0
        %1292 = vst [vmem:[%s56 + $0x2658] sm:$0xff] 0.0
        %1293 = vst [vmem:[%s56 + $0x2660] sm:$0xff] 0.0
        %1294 = vst [vmem:[%s56 + $0x2668] sm:$0xff] 0.0
        %1295 = vst [vmem:[%s56 + $0x2670] sm:$0xff] 0.0
        %1296 = vst [vmem:[%s56 + $0x2678] sm:$0xff] 0.0
        %1297 = vst [vmem:[%s56 + $0x2680] sm:$0xff] 0.0
        %1298 = vst [vmem:[%s56 + $0x2688] sm:$0xff] 0.0
        %1299 = vst [vmem:[%s56 + $0x2690] sm:$0xff] 0.0
        %1300 = vst [vmem:[%s56 + $0x2698] sm:$0xff] 0.0
        %1301 = vst [vmem:[%s56 + $0x26a0] sm:$0xff] 0.0
        %1302 = vst [vmem:[%s56 + $0x26a8] sm:$0xff] 0.0
        %1303 = vst [vmem:[%s56 + $0x26b0] sm:$0xff] 0.0
        %1304 = vst [vmem:[%s56 + $0x26b8] sm:$0xff] 0.0
        %1305 = vst [vmem:[%s56 + $0x26c0] sm:$0xff] 0.0
        %1306 = vst.msk [vmem:[%s56 + $0x26c8] sm:$0xff] %vm86, 0.0
        %1307 = vst [vmem:[%s56 + $0x26d0] sm:$0xff] 0.0
        %1308 = vst [vmem:[%s56 + $0x26d8] sm:$0xff] 0.0
        %1309 = vst [vmem:[%s56 + $0x26e0] sm:$0xff] 0.0
        %1310 = vst [vmem:[%s56 + $0x26e8] sm:$0xff] 0.0
        %1311 = vst [vmem:[%s56 + $0x26f0] sm:$0xff] 0.0
        %1312 = vst [vmem:[%s56 + $0x26f8] sm:$0xff] 0.0
        %1313 = vst [vmem:[%s56 + $0x2700] sm:$0xff] 0.0
        %1314 = vst [vmem:[%s56 + $0x2708] sm:$0xff] 0.0
        %1315 = vst [vmem:[%s56 + $0x2710] sm:$0xff] 0.0
        %1316 = vst [vmem:[%s56 + $0x2718] sm:$0xff] 0.0
        %1317 = vst [vmem:[%s56 + $0x2720] sm:$0xff] 0.0
        %1318 = vst [vmem:[%s56 + $0x2728] sm:$0xff] 0.0
        %1319 = vst [vmem:[%s56 + $0x2730] sm:$0xff] 0.0
        %1320 = vst [vmem:[%s56 + $0x2738] sm:$0xff] 0.0
        %1321 = vst [vmem:[%s56 + $0x2740] sm:$0xff] 0.0
        %1322 = vst [vmem:[%s56 + $0x2748] sm:$0xff] 0.0
        %1323 = vst [vmem:[%s56 + $0x2750] sm:$0xff] 0.0
        %1324 = vst [vmem:[%s56 + $0x2758] sm:$0xff] 0.0
        %1325 = vst [vmem:[%s56 + $0x2760] sm:$0xff] 0.0
        %1326 = vst [vmem:[%s56 + $0x2768] sm:$0xff] 0.0
        %1327 = vst [vmem:[%s56 + $0x2770] sm:$0xff] 0.0
        %1328 = vst [vmem:[%s56 + $0x2778] sm:$0xff] 0.0
        %1329 = vst.msk [vmem:[%s56 + $0x2780] sm:$0xff] %vm86, 0.0
        %1330 = vst [vmem:[%s56 + $0x2788] sm:$0xff] 0.0
        %1331 = vst [vmem:[%s56 + $0x2790] sm:$0xff] 0.0
        %1332 = vst [vmem:[%s56 + $0x2798] sm:$0xff] 0.0
        %1333 = vst [vmem:[%s56 + $0x27a0] sm:$0xff] 0.0
        %1334 = vst [vmem:[%s56 + $0x27a8] sm:$0xff] 0.0
        %1335 = vst [vmem:[%s56 + $0x27b0] sm:$0xff] 0.0
        %1336 = vst [vmem:[%s56 + $0x27b8] sm:$0xff] 0.0
        %1337 = vst [vmem:[%s56 + $0x27c0] sm:$0xff] 0.0
        %1338 = vst [vmem:[%s56 + $0x27c8] sm:$0xff] 0.0
        %1339 = vst [vmem:[%s56 + $0x27d0] sm:$0xff] 0.0
        %1340 = vst [vmem:[%s56 + $0x27d8] sm:$0xff] 0.0
        %1341 = vst [vmem:[%s56 + $0x27e0] sm:$0xff] 0.0
        %1342 = vst [vmem:[%s56 + $0x27e8] sm:$0xff] 0.0
        %1343 = vst [vmem:[%s56 + $0x27f0] sm:$0xff] 0.0
        %1344 = vst [vmem:[%s56 + $0x27f8] sm:$0xff] 0.0
        %1345 = vst [vmem:[%s56 + $0x2800] sm:$0xff] 0.0
        %1346 = vst [vmem:[%s56 + $0x2808] sm:$0xff] 0.0
        %1347 = vst [vmem:[%s56 + $0x2810] sm:$0xff] 0.0
        %1348 = vst [vmem:[%s56 + $0x2818] sm:$0xff] 0.0
        %1349 = vst [vmem:[%s56 + $0x2820] sm:$0xff] 0.0
        %1350 = vst [vmem:[%s56 + $0x2828] sm:$0xff] 0.0
        %1351 = vst [vmem:[%s56 + $0x2830] sm:$0xff] 0.0
        %1352 = vst.msk [vmem:[%s56 + $0x2838] sm:$0xff] %vm86, 0.0
        %1353 = vst [vmem:[%s56 + $0x2840] sm:$0xff] 0.0
        %1354 = vst [vmem:[%s56 + $0x2848] sm:$0xff] 0.0
        %1355 = vst [vmem:[%s56 + $0x2850] sm:$0xff] 0.0
        %1356 = vst [vmem:[%s56 + $0x2858] sm:$0xff] 0.0
        %1357 = vst [vmem:[%s56 + $0x2860] sm:$0xff] 0.0
        %1358 = vst [vmem:[%s56 + $0x2868] sm:$0xff] 0.0
        %1359 = vst [vmem:[%s56 + $0x2870] sm:$0xff] 0.0
        %1360 = vst [vmem:[%s56 + $0x2878] sm:$0xff] 0.0
        %1361 = vst [vmem:[%s56 + $0x2880] sm:$0xff] 0.0
        %1362 = vst [vmem:[%s56 + $0x2888] sm:$0xff] 0.0
        %1363 = vst [vmem:[%s56 + $0x2890] sm:$0xff] 0.0
        %1364 = vst [vmem:[%s56 + $0x2898] sm:$0xff] 0.0
        %1365 = vst [vmem:[%s56 + $0x28a0] sm:$0xff] 0.0
        %1366 = vst [vmem:[%s56 + $0x28a8] sm:$0xff] 0.0
        %1367 = vst [vmem:[%s56 + $0x28b0] sm:$0xff] 0.0
        %1368 = vst [vmem:[%s56 + $0x28b8] sm:$0xff] 0.0
        %1369 = vst [vmem:[%s56 + $0x28c0] sm:$0xff] 0.0
        %1370 = vst [vmem:[%s56 + $0x28c8] sm:$0xff] 0.0
        %1371 = vst [vmem:[%s56 + $0x28d0] sm:$0xff] 0.0
        %1372 = vst [vmem:[%s56 + $0x28d8] sm:$0xff] 0.0
        %1373 = vst [vmem:[%s56 + $0x28e0] sm:$0xff] 0.0
        %1374 = vst [vmem:[%s56 + $0x28e8] sm:$0xff] 0.0
        %1375 = vst.msk [vmem:[%s56 + $0x28f0] sm:$0xff] %vm86, 0.0
        %1376 = vst [vmem:[%s56 + $0x28f8] sm:$0xff] 0.0
        %1377 = vst [vmem:[%s56 + $0x2900] sm:$0xff] 0.0
        %1378 = vst [vmem:[%s56 + $0x2908] sm:$0xff] 0.0
        %1379 = vst [vmem:[%s56 + $0x2910] sm:$0xff] 0.0
        %1380 = vst [vmem:[%s56 + $0x2918] sm:$0xff] 0.0
        %1381 = vst [vmem:[%s56 + $0x2920] sm:$0xff] 0.0
        %1382 = vst [vmem:[%s56 + $0x2928] sm:$0xff] 0.0
        %1383 = vst [vmem:[%s56 + $0x2930] sm:$0xff] 0.0
        %1384 = vst [vmem:[%s56 + $0x2938] sm:$0xff] 0.0
        %1385 = vst [vmem:[%s56 + $0x2940] sm:$0xff] 0.0
        %1386 = vst [vmem:[%s56 + $0x2948] sm:$0xff] 0.0
        %1387 = vst [vmem:[%s56 + $0x2950] sm:$0xff] 0.0
        %1388 = vst [vmem:[%s56 + $0x2958] sm:$0xff] 0.0
        %1389 = vst [vmem:[%s56 + $0x2960] sm:$0xff] 0.0
        %1390 = vst [vmem:[%s56 + $0x2968] sm:$0xff] 0.0
        %1391 = vst [vmem:[%s56 + $0x2970] sm:$0xff] 0.0
        %1392 = vst [vmem:[%s56 + $0x2978] sm:$0xff] 0.0
        %1393 = vst [vmem:[%s56 + $0x2980] sm:$0xff] 0.0
        %1394 = vst [vmem:[%s56 + $0x2988] sm:$0xff] 0.0
        %1395 = vst [vmem:[%s56 + $0x2990] sm:$0xff] 0.0
        %1396 = vst [vmem:[%s56 + $0x2998] sm:$0xff] 0.0
        %1397 = vst [vmem:[%s56 + $0x29a0] sm:$0xff] 0.0
        %1398 = vst.msk [vmem:[%s56 + $0x29a8] sm:$0xff] %vm86, 0.0
        %1399 = vst [vmem:[%s56 + $0x29b0] sm:$0xff] 0.0
        %1400 = vst [vmem:[%s56 + $0x29b8] sm:$0xff] 0.0
        %1401 = vst [vmem:[%s56 + $0x29c0] sm:$0xff] 0.0
        %1402 = vst [vmem:[%s56 + $0x29c8] sm:$0xff] 0.0
        %1403 = vst [vmem:[%s56 + $0x29d0] sm:$0xff] 0.0
        %1404 = vst [vmem:[%s56 + $0x29d8] sm:$0xff] 0.0
        %1405 = vst [vmem:[%s56 + $0x29e0] sm:$0xff] 0.0
        %1406 = vst [vmem:[%s56 + $0x29e8] sm:$0xff] 0.0
        %1407 = vst [vmem:[%s56 + $0x29f0] sm:$0xff] 0.0
        %1408 = vst [vmem:[%s56 + $0x29f8] sm:$0xff] 0.0
        %1409 = vst [vmem:[%s56 + $0x2a00] sm:$0xff] 0.0
        %1410 = vst [vmem:[%s56 + $0x2a08] sm:$0xff] 0.0
        %1411 = vst [vmem:[%s56 + $0x2a10] sm:$0xff] 0.0
        %1412 = vst [vmem:[%s56 + $0x2a18] sm:$0xff] 0.0
        %1413 = vst [vmem:[%s56 + $0x2a20] sm:$0xff] 0.0
        %1414 = vst [vmem:[%s56 + $0x2a28] sm:$0xff] 0.0
        %1415 = vst [vmem:[%s56 + $0x2a30] sm:$0xff] 0.0
        %1416 = vst [vmem:[%s56 + $0x2a38] sm:$0xff] 0.0
        %1417 = vst [vmem:[%s56 + $0x2a40] sm:$0xff] 0.0
        %1418 = vst [vmem:[%s56 + $0x2a48] sm:$0xff] 0.0
        %1419 = vst [vmem:[%s56 + $0x2a50] sm:$0xff] 0.0
        %1420 = vst [vmem:[%s56 + $0x2a58] sm:$0xff] 0.0
        %1421 = vst.msk [vmem:[%s56 + $0x2a60] sm:$0xff] %vm86, 0.0
        %1422 = vst [vmem:[%s56 + $0x2a68] sm:$0xff] 0.0
        %1423 = vst [vmem:[%s56 + $0x2a70] sm:$0xff] 0.0
        %1424 = vst [vmem:[%s56 + $0x2a78] sm:$0xff] 0.0
        %1425 = vst [vmem:[%s56 + $0x2a80] sm:$0xff] 0.0
        %1426 = vst [vmem:[%s56 + $0x2a88] sm:$0xff] 0.0
        %1427 = vst [vmem:[%s56 + $0x2a90] sm:$0xff] 0.0
        %1428 = vst [vmem:[%s56 + $0x2a98] sm:$0xff] 0.0
        %1429 = vst [vmem:[%s56 + $0x2aa0] sm:$0xff] 0.0
        %1430 = vst [vmem:[%s56 + $0x2aa8] sm:$0xff] 0.0
        %1431 = vst [vmem:[%s56 + $0x2ab0] sm:$0xff] 0.0
        %1432 = vst [vmem:[%s56 + $0x2ab8] sm:$0xff] 0.0
        %1433 = vst [vmem:[%s56 + $0x2ac0] sm:$0xff] 0.0
        %1434 = vst [vmem:[%s56 + $0x2ac8] sm:$0xff] 0.0
        %1435 = vst [vmem:[%s56 + $0x2ad0] sm:$0xff] 0.0
        %1436 = vst [vmem:[%s56 + $0x2ad8] sm:$0xff] 0.0
        %1437 = vst [vmem:[%s56 + $0x2ae0] sm:$0xff] 0.0
        %1438 = vst [vmem:[%s56 + $0x2ae8] sm:$0xff] 0.0
        %1439 = vst [vmem:[%s56 + $0x2af0] sm:$0xff] 0.0
        %1440 = vst [vmem:[%s56 + $0x2af8] sm:$0xff] 0.0
        %1441 = vst [vmem:[%s56 + $0x2b00] sm:$0xff] 0.0
        %1442 = vst [vmem:[%s56 + $0x2b08] sm:$0xff] 0.0
        %1443 = vst [vmem:[%s56 + $0x2b10] sm:$0xff] 0.0
        %1444 = vst.msk [vmem:[%s56 + $0x2b18] sm:$0xff] %vm86, 0.0
        %1445 = vst [vmem:[%s56 + $0x2b20] sm:$0xff] 0.0
        %1446 = vst [vmem:[%s56 + $0x2b28] sm:$0xff] 0.0
        %1447 = vst [vmem:[%s56 + $0x2b30] sm:$0xff] 0.0
        %1448 = vst [vmem:[%s56 + $0x2b38] sm:$0xff] 0.0
        %1449 = vst [vmem:[%s56 + $0x2b40] sm:$0xff] 0.0
        %1450 = vst [vmem:[%s56 + $0x2b48] sm:$0xff] 0.0
        %1451 = vst [vmem:[%s56 + $0x2b50] sm:$0xff] 0.0
        %1452 = vst [vmem:[%s56 + $0x2b58] sm:$0xff] 0.0
        %1453 = vst [vmem:[%s56 + $0x2b60] sm:$0xff] 0.0
        %1454 = vst [vmem:[%s56 + $0x2b68] sm:$0xff] 0.0
        %1455 = vst [vmem:[%s56 + $0x2b70] sm:$0xff] 0.0
        %1456 = vst [vmem:[%s56 + $0x2b78] sm:$0xff] 0.0
        %1457 = vst [vmem:[%s56 + $0x2b80] sm:$0xff] 0.0
        %1458 = vst [vmem:[%s56 + $0x2b88] sm:$0xff] 0.0
        %1459 = vst [vmem:[%s56 + $0x2b90] sm:$0xff] 0.0
        %1460 = vst [vmem:[%s56 + $0x2b98] sm:$0xff] 0.0
        %1461 = vst [vmem:[%s56 + $0x2ba0] sm:$0xff] 0.0
        %1462 = vst [vmem:[%s56 + $0x2ba8] sm:$0xff] 0.0
        %1463 = vst [vmem:[%s56 + $0x2bb0] sm:$0xff] 0.0
        %1464 = vst [vmem:[%s56 + $0x2bb8] sm:$0xff] 0.0
        %1465 = vst [vmem:[%s56 + $0x2bc0] sm:$0xff] 0.0
        %1466 = vst [vmem:[%s56 + $0x2bc8] sm:$0xff] 0.0
        %1467 = vst.msk [vmem:[%s56 + $0x2bd0] sm:$0xff] %vm86, 0.0
        %1468 = vst [vmem:[%s56 + $0x2bd8] sm:$0xff] 0.0
        %1469 = vst [vmem:[%s56 + $0x2be0] sm:$0xff] 0.0
        %1470 = vst [vmem:[%s56 + $0x2be8] sm:$0xff] 0.0
        %1471 = vst [vmem:[%s56 + $0x2bf0] sm:$0xff] 0.0
        %1472 = vst [vmem:[%s56 + $0x2bf8] sm:$0xff] 0.0
        %1473 = vst [vmem:[%s56 + $0x2c00] sm:$0xff] 0.0
        %1474 = vst [vmem:[%s56 + $0x2c08] sm:$0xff] 0.0
        %1475 = vst [vmem:[%s56 + $0x2c10] sm:$0xff] 0.0
        %1476 = vst [vmem:[%s56 + $0x2c18] sm:$0xff] 0.0
        %1477 = vst [vmem:[%s56 + $0x2c20] sm:$0xff] 0.0
        %1478 = vst [vmem:[%s56 + $0x2c28] sm:$0xff] 0.0
        %1479 = vst [vmem:[%s56 + $0x2c30] sm:$0xff] 0.0
        %1480 = vst [vmem:[%s56 + $0x2c38] sm:$0xff] 0.0
        %1481 = vst [vmem:[%s56 + $0x2c40] sm:$0xff] 0.0
        %1482 = vst [vmem:[%s56 + $0x2c48] sm:$0xff] 0.0
        %1483 = vst [vmem:[%s56 + $0x2c50] sm:$0xff] 0.0
        %1484 = vst [vmem:[%s56 + $0x2c58] sm:$0xff] 0.0
        %1485 = vst [vmem:[%s56 + $0x2c60] sm:$0xff] 0.0
        %1486 = vst [vmem:[%s56 + $0x2c68] sm:$0xff] 0.0
        %1487 = vst [vmem:[%s56 + $0x2c70] sm:$0xff] 0.0
        %1488 = vst [vmem:[%s56 + $0x2c78] sm:$0xff] 0.0
        %1489 = vst [vmem:[%s56 + $0x2c80] sm:$0xff] 0.0
        %1490 = vst.msk [vmem:[%s56 + $0x2c88] sm:$0xff] %vm86, 0.0
        %1491 = vst [vmem:[%s56 + $0x2c90] sm:$0xff] 0.0
        %1492 = vst [vmem:[%s56 + $0x2c98] sm:$0xff] 0.0
        %1493 = vst [vmem:[%s56 + $0x2ca0] sm:$0xff] 0.0
        %1494 = vst [vmem:[%s56 + $0x2ca8] sm:$0xff] 0.0
        %1495 = vst [vmem:[%s56 + $0x2cb0] sm:$0xff] 0.0
        %1496 = vst [vmem:[%s56 + $0x2cb8] sm:$0xff] 0.0
        %1497 = vst [vmem:[%s56 + $0x2cc0] sm:$0xff] 0.0
        %1498 = vst [vmem:[%s56 + $0x2cc8] sm:$0xff] 0.0
        %1499 = vst [vmem:[%s56 + $0x2cd0] sm:$0xff] 0.0
        %1500 = vst [vmem:[%s56 + $0x2cd8] sm:$0xff] 0.0
        %1501 = vst [vmem:[%s56 + $0x2ce0] sm:$0xff] 0.0
        %1502 = vst [vmem:[%s56 + $0x2ce8] sm:$0xff] 0.0
        %1503 = vst [vmem:[%s56 + $0x2cf0] sm:$0xff] 0.0
        %1504 = vst [vmem:[%s56 + $0x2cf8] sm:$0xff] 0.0
        %1505 = vst [vmem:[%s56 + $0x2d00] sm:$0xff] 0.0
        %1506 = vst [vmem:[%s56 + $0x2d08] sm:$0xff] 0.0
        %1507 = vst [vmem:[%s56 + $0x2d10] sm:$0xff] 0.0
        %1508 = vst [vmem:[%s56 + $0x2d18] sm:$0xff] 0.0
        %1509 = vst [vmem:[%s56 + $0x2d20] sm:$0xff] 0.0
        %1510 = vst [vmem:[%s56 + $0x2d28] sm:$0xff] 0.0
        %1511 = vst [vmem:[%s56 + $0x2d30] sm:$0xff] 0.0
        %1512 = vst [vmem:[%s56 + $0x2d38] sm:$0xff] 0.0
        %1513 = vst.msk [vmem:[%s56 + $0x2d40] sm:$0xff] %vm86, 0.0
        %1514 = vst [vmem:[%s56 + $0x2d48] sm:$0xff] 0.0
        %1515 = vst [vmem:[%s56 + $0x2d50] sm:$0xff] 0.0
        %1516 = vst [vmem:[%s56 + $0x2d58] sm:$0xff] 0.0
        %1517 = vst [vmem:[%s56 + $0x2d60] sm:$0xff] 0.0
        %1518 = vst [vmem:[%s56 + $0x2d68] sm:$0xff] 0.0
        %1519 = vst [vmem:[%s56 + $0x2d70] sm:$0xff] 0.0
        %1520 = vst [vmem:[%s56 + $0x2d78] sm:$0xff] 0.0
        %1521 = vst [vmem:[%s56 + $0x2d80] sm:$0xff] 0.0
        %1522 = vst [vmem:[%s56 + $0x2d88] sm:$0xff] 0.0
        %1523 = vst [vmem:[%s56 + $0x2d90] sm:$0xff] 0.0
        %1524 = vst [vmem:[%s56 + $0x2d98] sm:$0xff] 0.0
        %1525 = vst [vmem:[%s56 + $0x2da0] sm:$0xff] 0.0
        %1526 = vst [vmem:[%s56 + $0x2da8] sm:$0xff] 0.0
        %1527 = vst [vmem:[%s56 + $0x2db0] sm:$0xff] 0.0
        %1528 = vst [vmem:[%s56 + $0x2db8] sm:$0xff] 0.0
        %1529 = vst [vmem:[%s56 + $0x2dc0] sm:$0xff] 0.0
        %1530 = vst [vmem:[%s56 + $0x2dc8] sm:$0xff] 0.0
        %1531 = vst [vmem:[%s56 + $0x2dd0] sm:$0xff] 0.0
        %1532 = vst [vmem:[%s56 + $0x2dd8] sm:$0xff] 0.0
        %1533 = vst [vmem:[%s56 + $0x2de0] sm:$0xff] 0.0
        %1534 = vst [vmem:[%s56 + $0x2de8] sm:$0xff] 0.0
        %1535 = vst [vmem:[%s56 + $0x2df0] sm:$0xff] 0.0
        %1536 = vst.msk [vmem:[%s56 + $0x2df8] sm:$0xff] %vm86, 0.0
        %1537 = vst [vmem:[%s56 + $0x2e00] sm:$0xff] 0.0
        %1538 = vst [vmem:[%s56 + $0x2e08] sm:$0xff] 0.0
        %1539 = vst [vmem:[%s56 + $0x2e10] sm:$0xff] 0.0
        %1540 = vst [vmem:[%s56 + $0x2e18] sm:$0xff] 0.0
        %1541 = vst [vmem:[%s56 + $0x2e20] sm:$0xff] 0.0
        %1542 = vst [vmem:[%s56 + $0x2e28] sm:$0xff] 0.0
        %1543 = vst [vmem:[%s56 + $0x2e30] sm:$0xff] 0.0
        %1544 = vst [vmem:[%s56 + $0x2e38] sm:$0xff] 0.0
        %1545 = vst [vmem:[%s56 + $0x2e40] sm:$0xff] 0.0
        %1546 = vst [vmem:[%s56 + $0x2e48] sm:$0xff] 0.0
        %1547 = vst [vmem:[%s56 + $0x2e50] sm:$0xff] 0.0
        %1548 = vst [vmem:[%s56 + $0x2e58] sm:$0xff] 0.0
        %1549 = vst [vmem:[%s56 + $0x2e60] sm:$0xff] 0.0
        %1550 = vst [vmem:[%s56 + $0x2e68] sm:$0xff] 0.0
        %1551 = vst [vmem:[%s56 + $0x2e70] sm:$0xff] 0.0
        %1552 = vst [vmem:[%s56 + $0x2e78] sm:$0xff] 0.0
        %1553 = vst [vmem:[%s56 + $0x2e80] sm:$0xff] 0.0
        %1554 = vst [vmem:[%s56 + $0x2e88] sm:$0xff] 0.0
        %1555 = vst [vmem:[%s56 + $0x2e90] sm:$0xff] 0.0
        %1556 = vst [vmem:[%s56 + $0x2e98] sm:$0xff] 0.0
        %1557 = vst [vmem:[%s56 + $0x2ea0] sm:$0xff] 0.0
        %1558 = vst [vmem:[%s56 + $0x2ea8] sm:$0xff] 0.0
        %1559 = vst.msk [vmem:[%s56 + $0x2eb0] sm:$0xff] %vm86, 0.0
        %1560 = vst [vmem:[%s56 + $0x2eb8] sm:$0xff] 0.0
        %1561 = vst [vmem:[%s56 + $0x2ec0] sm:$0xff] 0.0
        %1562 = vst [vmem:[%s56 + $0x2ec8] sm:$0xff] 0.0
        %1563 = vst [vmem:[%s56 + $0x2ed0] sm:$0xff] 0.0
        %1564 = vst [vmem:[%s56 + $0x2ed8] sm:$0xff] 0.0
        %1565 = vst [vmem:[%s56 + $0x2ee0] sm:$0xff] 0.0
        %1566 = vst [vmem:[%s56 + $0x2ee8] sm:$0xff] 0.0
        %1567 = vst [vmem:[%s56 + $0x2ef0] sm:$0xff] 0.0
        %1568 = vst [vmem:[%s56 + $0x2ef8] sm:$0xff] 0.0
        %1569 = vst [vmem:[%s56 + $0x2f00] sm:$0xff] 0.0
        %1570 = vst [vmem:[%s56 + $0x2f08] sm:$0xff] 0.0
        %1571 = vst [vmem:[%s56 + $0x2f10] sm:$0xff] 0.0
        %1572 = vst [vmem:[%s56 + $0x2f18] sm:$0xff] 0.0
        %1573 = vst [vmem:[%s56 + $0x2f20] sm:$0xff] 0.0
        %1574 = vst [vmem:[%s56 + $0x2f28] sm:$0xff] 0.0
        %1575 = vst [vmem:[%s56 + $0x2f30] sm:$0xff] 0.0
        %1576 = vst [vmem:[%s56 + $0x2f38] sm:$0xff] 0.0
        %1577 = vst [vmem:[%s56 + $0x2f40] sm:$0xff] 0.0
        %1578 = vst [vmem:[%s56 + $0x2f48] sm:$0xff] 0.0
        %1579 = vst [vmem:[%s56 + $0x2f50] sm:$0xff] 0.0
        %1580 = vst [vmem:[%s56 + $0x2f58] sm:$0xff] 0.0
        %1581 = vst [vmem:[%s56 + $0x2f60] sm:$0xff] 0.0
        %1582 = vst.msk [vmem:[%s56 + $0x2f68] sm:$0xff] %vm86, 0.0
        %1583 = vst [vmem:[%s56 + $0x2f70] sm:$0xff] 0.0
        %1584 = vst [vmem:[%s56 + $0x2f78] sm:$0xff] 0.0
        %1585 = vst [vmem:[%s56 + $0x2f80] sm:$0xff] 0.0
        %1586 = vst [vmem:[%s56 + $0x2f88] sm:$0xff] 0.0
        %1587 = vst [vmem:[%s56 + $0x2f90] sm:$0xff] 0.0
        %1588 = vst [vmem:[%s56 + $0x2f98] sm:$0xff] 0.0
        %1589 = vst [vmem:[%s56 + $0x2fa0] sm:$0xff] 0.0
        %1590 = vst [vmem:[%s56 + $0x2fa8] sm:$0xff] 0.0
        %1591 = vst [vmem:[%s56 + $0x2fb0] sm:$0xff] 0.0
        %1592 = vst [vmem:[%s56 + $0x2fb8] sm:$0xff] 0.0
        %1593 = vst [vmem:[%s56 + $0x2fc0] sm:$0xff] 0.0
        %1594 = vst [vmem:[%s56 + $0x2fc8] sm:$0xff] 0.0
        %1595 = vst [vmem:[%s56 + $0x2fd0] sm:$0xff] 0.0
        %1596 = vst [vmem:[%s56 + $0x2fd8] sm:$0xff] 0.0
        %1597 = vst [vmem:[%s56 + $0x2fe0] sm:$0xff] 0.0
        %1598 = vst [vmem:[%s56 + $0x2fe8] sm:$0xff] 0.0
        %1599 = vst [vmem:[%s56 + $0x2ff0] sm:$0xff] 0.0
        %1600 = vst [vmem:[%s56 + $0x2ff8] sm:$0xff] 0.0
        %1601 = vst [vmem:[%s56 + $0x3000] sm:$0xff] 0.0
        %1602 = vst [vmem:[%s56 + $0x3008] sm:$0xff] 0.0
        %1603 = vst [vmem:[%s56 + $0x3010] sm:$0xff] 0.0
        %1604 = vst [vmem:[%s56 + $0x3018] sm:$0xff] 0.0
        %1605 = vst.msk [vmem:[%s56 + $0x3020] sm:$0xff] %vm86, 0.0
        %1606 = vst [vmem:[%s56 + $0x3028] sm:$0xff] 0.0
        %1607 = vst [vmem:[%s56 + $0x3030] sm:$0xff] 0.0
        %1608 = vst [vmem:[%s56 + $0x3038] sm:$0xff] 0.0
        %1609 = vst [vmem:[%s56 + $0x3040] sm:$0xff] 0.0
        %1610 = vst [vmem:[%s56 + $0x3048] sm:$0xff] 0.0
        %1611 = vst [vmem:[%s56 + $0x3050] sm:$0xff] 0.0
        %1612 = vst [vmem:[%s56 + $0x3058] sm:$0xff] 0.0
        %1613 = vst [vmem:[%s56 + $0x3060] sm:$0xff] 0.0
        %1614 = vst [vmem:[%s56 + $0x3068] sm:$0xff] 0.0
        %1615 = vst [vmem:[%s56 + $0x3070] sm:$0xff] 0.0
        %1616 = vst [vmem:[%s56 + $0x3078] sm:$0xff] 0.0
        %1617 = vst [vmem:[%s56 + $0x3080] sm:$0xff] 0.0
        %1618 = vst [vmem:[%s56 + $0x3088] sm:$0xff] 0.0
        %1619 = vst [vmem:[%s56 + $0x3090] sm:$0xff] 0.0
        %1620 = vst [vmem:[%s56 + $0x3098] sm:$0xff] 0.0
        %1621 = vst [vmem:[%s56 + $0x30a0] sm:$0xff] 0.0
        %1622 = vst [vmem:[%s56 + $0x30a8] sm:$0xff] 0.0
        %1623 = vst [vmem:[%s56 + $0x30b0] sm:$0xff] 0.0
        %1624 = vst [vmem:[%s56 + $0x30b8] sm:$0xff] 0.0
        %1625 = vst [vmem:[%s56 + $0x30c0] sm:$0xff] 0.0
        %1626 = vst [vmem:[%s56 + $0x30c8] sm:$0xff] 0.0
        %1627 = vst [vmem:[%s56 + $0x30d0] sm:$0xff] 0.0
        %1628 = vst.msk [vmem:[%s56 + $0x30d8] sm:$0xff] %vm86, 0.0
        %1629 = vst [vmem:[%s56 + $0x30e0] sm:$0xff] 0.0
        %1630 = vst [vmem:[%s56 + $0x30e8] sm:$0xff] 0.0
        %1631 = vst [vmem:[%s56 + $0x30f0] sm:$0xff] 0.0
        %1632 = vst [vmem:[%s56 + $0x30f8] sm:$0xff] 0.0
        %1633 = vst [vmem:[%s56 + $0x3100] sm:$0xff] 0.0
        %1634 = vst [vmem:[%s56 + $0x3108] sm:$0xff] 0.0
        %1635 = vst [vmem:[%s56 + $0x3110] sm:$0xff] 0.0
        %1636 = vst [vmem:[%s56 + $0x3118] sm:$0xff] 0.0
        %1637 = vst [vmem:[%s56 + $0x3120] sm:$0xff] 0.0
        %1638 = vst [vmem:[%s56 + $0x3128] sm:$0xff] 0.0
        %1639 = vst [vmem:[%s56 + $0x3130] sm:$0xff] 0.0
        %1640 = vst [vmem:[%s56 + $0x3138] sm:$0xff] 0.0
        %1641 = vst [vmem:[%s56 + $0x3140] sm:$0xff] 0.0
        %1642 = vst [vmem:[%s56 + $0x3148] sm:$0xff] 0.0
        %1643 = vst [vmem:[%s56 + $0x3150] sm:$0xff] 0.0
        %1644 = vst [vmem:[%s56 + $0x3158] sm:$0xff] 0.0
        %1645 = vst [vmem:[%s56 + $0x3160] sm:$0xff] 0.0
        %1646 = vst [vmem:[%s56 + $0x3168] sm:$0xff] 0.0
        %1647 = vst [vmem:[%s56 + $0x3170] sm:$0xff] 0.0
        %1648 = vst [vmem:[%s56 + $0x3178] sm:$0xff] 0.0
        %1649 = vst [vmem:[%s56 + $0x3180] sm:$0xff] 0.0
        %1650 = vst [vmem:[%s56 + $0x3188] sm:$0xff] 0.0
        %1651 = vst.msk [vmem:[%s56 + $0x3190] sm:$0xff] %vm86, 0.0
        %1652 = vst [vmem:[%s56 + $0x3198] sm:$0xff] 0.0
        %1653 = vst [vmem:[%s56 + $0x31a0] sm:$0xff] 0.0
        %1654 = vst [vmem:[%s56 + $0x31a8] sm:$0xff] 0.0
        %1655 = vst [vmem:[%s56 + $0x31b0] sm:$0xff] 0.0
        %1656 = vst [vmem:[%s56 + $0x31b8] sm:$0xff] 0.0
        %1657 = vst [vmem:[%s56 + $0x31c0] sm:$0xff] 0.0
        %1658 = vst [vmem:[%s56 + $0x31c8] sm:$0xff] 0.0
        %1659 = vst [vmem:[%s56 + $0x31d0] sm:$0xff] 0.0
        %1660 = vst [vmem:[%s56 + $0x31d8] sm:$0xff] 0.0
        %1661 = vst [vmem:[%s56 + $0x31e0] sm:$0xff] 0.0
        %1662 = vst [vmem:[%s56 + $0x31e8] sm:$0xff] 0.0
        %1663 = vst [vmem:[%s56 + $0x31f0] sm:$0xff] 0.0
        %1664 = vst [vmem:[%s56 + $0x31f8] sm:$0xff] 0.0
        %1665 = vst [vmem:[%s56 + $0x3200] sm:$0xff] 0.0
        %1666 = vst [vmem:[%s56 + $0x3208] sm:$0xff] 0.0
        %1667 = vst [vmem:[%s56 + $0x3210] sm:$0xff] 0.0
        %1668 = vst [vmem:[%s56 + $0x3218] sm:$0xff] 0.0
        %1669 = vst [vmem:[%s56 + $0x3220] sm:$0xff] 0.0
        %1670 = vst [vmem:[%s56 + $0x3228] sm:$0xff] 0.0
        %1671 = vst [vmem:[%s56 + $0x3230] sm:$0xff] 0.0
        %1672 = vst [vmem:[%s56 + $0x3238] sm:$0xff] 0.0
        %1673 = vst [vmem:[%s56 + $0x3240] sm:$0xff] 0.0
        %1674 = vst.msk [vmem:[%s56 + $0x3248] sm:$0xff] %vm86, 0.0
        %1675 = vst [vmem:[%s56 + $0x3250] sm:$0xff] 0.0
        %1676 = vst [vmem:[%s56 + $0x3258] sm:$0xff] 0.0
        %1677 = vst [vmem:[%s56 + $0x3260] sm:$0xff] 0.0
        %1678 = vst [vmem:[%s56 + $0x3268] sm:$0xff] 0.0
        %1679 = vst [vmem:[%s56 + $0x3270] sm:$0xff] 0.0
        %1680 = vst [vmem:[%s56 + $0x3278] sm:$0xff] 0.0
        %1681 = vst [vmem:[%s56 + $0x3280] sm:$0xff] 0.0
        %1682 = vst [vmem:[%s56 + $0x3288] sm:$0xff] 0.0
        %1683 = vst [vmem:[%s56 + $0x3290] sm:$0xff] 0.0
        %1684 = vst [vmem:[%s56 + $0x3298] sm:$0xff] 0.0
        %1685 = vst [vmem:[%s56 + $0x32a0] sm:$0xff] 0.0
        %1686 = vst [vmem:[%s56 + $0x32a8] sm:$0xff] 0.0
        %1687 = vst [vmem:[%s56 + $0x32b0] sm:$0xff] 0.0
        %1688 = vst [vmem:[%s56 + $0x32b8] sm:$0xff] 0.0
        %1689 = vst [vmem:[%s56 + $0x32c0] sm:$0xff] 0.0
        %1690 = vst [vmem:[%s56 + $0x32c8] sm:$0xff] 0.0
        %1691 = vst [vmem:[%s56 + $0x32d0] sm:$0xff] 0.0
        %1692 = vst [vmem:[%s56 + $0x32d8] sm:$0xff] 0.0
        %1693 = vst [vmem:[%s56 + $0x32e0] sm:$0xff] 0.0
        %1694 = vst [vmem:[%s56 + $0x32e8] sm:$0xff] 0.0
        %1695 = vst [vmem:[%s56 + $0x32f0] sm:$0xff] 0.0
        %1696 = vst [vmem:[%s56 + $0x32f8] sm:$0xff] 0.0
        %1697 = vst.msk [vmem:[%s56 + $0x3300] sm:$0xff] %vm86, 0.0
        %1698 = vst [vmem:[%s56 + $0x3308] sm:$0xff] 0.0
        %1699 = vst [vmem:[%s56 + $0x3310] sm:$0xff] 0.0
        %1700 = vst [vmem:[%s56 + $0x3318] sm:$0xff] 0.0
        %1701 = vst [vmem:[%s56 + $0x3320] sm:$0xff] 0.0
        %1702 = vst [vmem:[%s56 + $0x3328] sm:$0xff] 0.0
        %1703 = vst [vmem:[%s56 + $0x3330] sm:$0xff] 0.0
        %1704 = vst [vmem:[%s56 + $0x3338] sm:$0xff] 0.0
        %1705 = vst [vmem:[%s56 + $0x3340] sm:$0xff] 0.0
        %1706 = vst [vmem:[%s56 + $0x3348] sm:$0xff] 0.0
        %1707 = vst [vmem:[%s56 + $0x3350] sm:$0xff] 0.0
        %1708 = vst [vmem:[%s56 + $0x3358] sm:$0xff] 0.0
        %1709 = vst [vmem:[%s56 + $0x3360] sm:$0xff] 0.0
        %1710 = vst [vmem:[%s56 + $0x3368] sm:$0xff] 0.0
        %1711 = vst [vmem:[%s56 + $0x3370] sm:$0xff] 0.0
        %1712 = vst [vmem:[%s56 + $0x3378] sm:$0xff] 0.0
        %1713 = vst [vmem:[%s56 + $0x3380] sm:$0xff] 0.0
        %1714 = vst [vmem:[%s56 + $0x3388] sm:$0xff] 0.0
        %1715 = vst [vmem:[%s56 + $0x3390] sm:$0xff] 0.0
        %1716 = vst [vmem:[%s56 + $0x3398] sm:$0xff] 0.0
        %1717 = vst [vmem:[%s56 + $0x33a0] sm:$0xff] 0.0
        %1718 = vst [vmem:[%s56 + $0x33a8] sm:$0xff] 0.0
        %1719 = vst [vmem:[%s56 + $0x33b0] sm:$0xff] 0.0
        %1720 = vst.msk [vmem:[%s56 + $0x33b8] sm:$0xff] %vm86, 0.0
        %1721 = vst [vmem:[%s56 + $0x33c0] sm:$0xff] 0.0
        %1722 = vst [vmem:[%s56 + $0x33c8] sm:$0xff] 0.0
        %1723 = vst [vmem:[%s56 + $0x33d0] sm:$0xff] 0.0
        %1724 = vst [vmem:[%s56 + $0x33d8] sm:$0xff] 0.0
        %1725 = vst [vmem:[%s56 + $0x33e0] sm:$0xff] 0.0
        %1726 = vst [vmem:[%s56 + $0x33e8] sm:$0xff] 0.0
        %1727 = vst [vmem:[%s56 + $0x33f0] sm:$0xff] 0.0
        %1728 = vst [vmem:[%s56 + $0x33f8] sm:$0xff] 0.0
        %1729 = vst [vmem:[%s56 + $0x3400] sm:$0xff] 0.0
        %1730 = vst [vmem:[%s56 + $0x3408] sm:$0xff] 0.0
        %1731 = vst [vmem:[%s56 + $0x3410] sm:$0xff] 0.0
        %1732 = vst [vmem:[%s56 + $0x3418] sm:$0xff] 0.0
        %1733 = vst [vmem:[%s56 + $0x3420] sm:$0xff] 0.0
        %1734 = vst [vmem:[%s56 + $0x3428] sm:$0xff] 0.0
        %1735 = vst [vmem:[%s56 + $0x3430] sm:$0xff] 0.0
        %1736 = vst [vmem:[%s56 + $0x3438] sm:$0xff] 0.0
        %1737 = vst [vmem:[%s56 + $0x3440] sm:$0xff] 0.0
        %1738 = vst [vmem:[%s56 + $0x3448] sm:$0xff] 0.0
        %1739 = vst [vmem:[%s56 + $0x3450] sm:$0xff] 0.0
        %1740 = vst [vmem:[%s56 + $0x3458] sm:$0xff] 0.0
        %1741 = vst [vmem:[%s56 + $0x3460] sm:$0xff] 0.0
        %1742 = vst [vmem:[%s56 + $0x3468] sm:$0xff] 0.0
        %1743 = vst.msk [vmem:[%s56 + $0x3470] sm:$0xff] %vm86, 0.0
        %1744 = vst [vmem:[%s56 + $0x3478] sm:$0xff] 0.0
        %1745 = vst [vmem:[%s56 + $0x3480] sm:$0xff] 0.0
        %1746 = vst [vmem:[%s56 + $0x3488] sm:$0xff] 0.0
        %1747 = vst [vmem:[%s56 + $0x3490] sm:$0xff] 0.0
        %1748 = vst [vmem:[%s56 + $0x3498] sm:$0xff] 0.0
        %1749 = vst [vmem:[%s56 + $0x34a0] sm:$0xff] 0.0
        %1750 = vst [vmem:[%s56 + $0x34a8] sm:$0xff] 0.0
        %1751 = vst [vmem:[%s56 + $0x34b0] sm:$0xff] 0.0
        %1752 = vst [vmem:[%s56 + $0x34b8] sm:$0xff] 0.0
        %1753 = vst [vmem:[%s56 + $0x34c0] sm:$0xff] 0.0
        %1754 = vst [vmem:[%s56 + $0x34c8] sm:$0xff] 0.0
        %1755 = vst [vmem:[%s56 + $0x34d0] sm:$0xff] 0.0
        %1756 = vst [vmem:[%s56 + $0x34d8] sm:$0xff] 0.0
        %1757 = vst [vmem:[%s56 + $0x34e0] sm:$0xff] 0.0
        %1758 = vst [vmem:[%s56 + $0x34e8] sm:$0xff] 0.0
        %1759 = vst [vmem:[%s56 + $0x34f0] sm:$0xff] 0.0
        %1760 = vst [vmem:[%s56 + $0x34f8] sm:$0xff] 0.0
        %1761 = vst [vmem:[%s56 + $0x3500] sm:$0xff] 0.0
        %1762 = vst [vmem:[%s56 + $0x3508] sm:$0xff] 0.0
        %1763 = vst [vmem:[%s56 + $0x3510] sm:$0xff] 0.0
        %1764 = vst [vmem:[%s56 + $0x3518] sm:$0xff] 0.0
        %1765 = vst [vmem:[%s56 + $0x3520] sm:$0xff] 0.0
        %1766 = vst.msk [vmem:[%s56 + $0x3528] sm:$0xff] %vm86, 0.0
        %1767 = vst [vmem:[%s56 + $0x3530] sm:$0xff] 0.0
        %1768 = vst [vmem:[%s56 + $0x3538] sm:$0xff] 0.0
        %1769 = vst [vmem:[%s56 + $0x3540] sm:$0xff] 0.0
        %1770 = vst [vmem:[%s56 + $0x3548] sm:$0xff] 0.0
        %1771 = vst [vmem:[%s56 + $0x3550] sm:$0xff] 0.0
        %1772 = vst [vmem:[%s56 + $0x3558] sm:$0xff] 0.0
        %1773 = vst [vmem:[%s56 + $0x3560] sm:$0xff] 0.0
        %1774 = vst [vmem:[%s56 + $0x3568] sm:$0xff] 0.0
        %1775 = vst [vmem:[%s56 + $0x3570] sm:$0xff] 0.0
        %1776 = vst [vmem:[%s56 + $0x3578] sm:$0xff] 0.0
        %1777 = vst [vmem:[%s56 + $0x3580] sm:$0xff] 0.0
        %1778 = vst [vmem:[%s56 + $0x3588] sm:$0xff] 0.0
        %1779 = vst [vmem:[%s56 + $0x3590] sm:$0xff] 0.0
        %1780 = vst [vmem:[%s56 + $0x3598] sm:$0xff] 0.0
        %1781 = vst [vmem:[%s56 + $0x35a0] sm:$0xff] 0.0
        %1782 = vst [vmem:[%s56 + $0x35a8] sm:$0xff] 0.0
        %1783 = vst [vmem:[%s56 + $0x35b0] sm:$0xff] 0.0
        %1784 = vst [vmem:[%s56 + $0x35b8] sm:$0xff] 0.0
        %1785 = vst [vmem:[%s56 + $0x35c0] sm:$0xff] 0.0
        %1786 = vst [vmem:[%s56 + $0x35c8] sm:$0xff] 0.0
        %1787 = vst [vmem:[%s56 + $0x35d0] sm:$0xff] 0.0
        %1788 = vst [vmem:[%s56 + $0x35d8] sm:$0xff] 0.0
        %1789 = vst.msk [vmem:[%s56 + $0x35e0] sm:$0xff] %vm86, 0.0
        %1790 = vst [vmem:[%s56 + $0x35e8] sm:$0xff] 0.0
        %1791 = vst [vmem:[%s56 + $0x35f0] sm:$0xff] 0.0
        %1792 = vst [vmem:[%s56 + $0x35f8] sm:$0xff] 0.0
        %1793 = vst [vmem:[%s56 + $0x3600] sm:$0xff] 0.0
        %1794 = vst [vmem:[%s56 + $0x3608] sm:$0xff] 0.0
        %1795 = vst [vmem:[%s56 + $0x3610] sm:$0xff] 0.0
        %1796 = vst [vmem:[%s56 + $0x3618] sm:$0xff] 0.0
        %1797 = vst [vmem:[%s56 + $0x3620] sm:$0xff] 0.0
        %1798 = vst [vmem:[%s56 + $0x3628] sm:$0xff] 0.0
        %1799 = vst [vmem:[%s56 + $0x3630] sm:$0xff] 0.0
        %1800 = vst [vmem:[%s56 + $0x3638] sm:$0xff] 0.0
        %1801 = vst [vmem:[%s56 + $0x3640] sm:$0xff] 0.0
        %1802 = vst [vmem:[%s56 + $0x3648] sm:$0xff] 0.0
        %1803 = vst [vmem:[%s56 + $0x3650] sm:$0xff] 0.0
        %1804 = vst [vmem:[%s56 + $0x3658] sm:$0xff] 0.0
        %1805 = vst [vmem:[%s56 + $0x3660] sm:$0xff] 0.0
        %1806 = vst [vmem:[%s56 + $0x3668] sm:$0xff] 0.0
        %1807 = vst [vmem:[%s56 + $0x3670] sm:$0xff] 0.0
        %1808 = vst [vmem:[%s56 + $0x3678] sm:$0xff] 0.0
        %1809 = vst [vmem:[%s56 + $0x3680] sm:$0xff] 0.0
        %1810 = vst [vmem:[%s56 + $0x3688] sm:$0xff] 0.0
        %1811 = vst [vmem:[%s56 + $0x3690] sm:$0xff] 0.0
        %1812 = vst.msk [vmem:[%s56 + $0x3698] sm:$0xff] %vm86, 0.0
        %1813 = vst [vmem:[%s56 + $0x36a0] sm:$0xff] 0.0
        %1814 = vst [vmem:[%s56 + $0x36a8] sm:$0xff] 0.0
        %1815 = vst [vmem:[%s56 + $0x36b0] sm:$0xff] 0.0
        %1816 = vst [vmem:[%s56 + $0x36b8] sm:$0xff] 0.0
        %1817 = vst [vmem:[%s56 + $0x36c0] sm:$0xff] 0.0
        %1818 = vst [vmem:[%s56 + $0x36c8] sm:$0xff] 0.0
        %1819 = vst [vmem:[%s56 + $0x36d0] sm:$0xff] 0.0
        %1820 = vst [vmem:[%s56 + $0x36d8] sm:$0xff] 0.0
        %1821 = vst [vmem:[%s56 + $0x36e0] sm:$0xff] 0.0
        %1822 = vst [vmem:[%s56 + $0x36e8] sm:$0xff] 0.0
        %1823 = vst [vmem:[%s56 + $0x36f0] sm:$0xff] 0.0
        %1824 = vst [vmem:[%s56 + $0x36f8] sm:$0xff] 0.0
        %1825 = vst [vmem:[%s56 + $0x3700] sm:$0xff] 0.0
        %1826 = vst [vmem:[%s56 + $0x3708] sm:$0xff] 0.0
        %1827 = vst [vmem:[%s56 + $0x3710] sm:$0xff] 0.0
        %1828 = vst [vmem:[%s56 + $0x3718] sm:$0xff] 0.0
        %1829 = vst [vmem:[%s56 + $0x3720] sm:$0xff] 0.0
        %1830 = vst [vmem:[%s56 + $0x3728] sm:$0xff] 0.0
        %1831 = vst [vmem:[%s56 + $0x3730] sm:$0xff] 0.0
        %1832 = vst [vmem:[%s56 + $0x3738] sm:$0xff] 0.0
        %1833 = vst [vmem:[%s56 + $0x3740] sm:$0xff] 0.0
        %1834 = vst [vmem:[%s56 + $0x3748] sm:$0xff] 0.0
        %1835 = vst.msk [vmem:[%s56 + $0x3750] sm:$0xff] %vm86, 0.0
        %1836 = vst [vmem:[%s56 + $0x3758] sm:$0xff] 0.0
        %1837 = vst [vmem:[%s56 + $0x3760] sm:$0xff] 0.0
        %1838 = vst [vmem:[%s56 + $0x3768] sm:$0xff] 0.0
        %1839 = vst [vmem:[%s56 + $0x3770] sm:$0xff] 0.0
        %1840 = vst [vmem:[%s56 + $0x3778] sm:$0xff] 0.0
        %1841 = vst [vmem:[%s56 + $0x3780] sm:$0xff] 0.0
        %1842 = vst [vmem:[%s56 + $0x3788] sm:$0xff] 0.0
        %1843 = vst [vmem:[%s56 + $0x3790] sm:$0xff] 0.0
        %1844 = vst [vmem:[%s56 + $0x3798] sm:$0xff] 0.0
        %1845 = vst [vmem:[%s56 + $0x37a0] sm:$0xff] 0.0
        %1846 = vst [vmem:[%s56 + $0x37a8] sm:$0xff] 0.0
        %1847 = vst [vmem:[%s56 + $0x37b0] sm:$0xff] 0.0
        %1848 = vst [vmem:[%s56 + $0x37b8] sm:$0xff] 0.0
        %1849 = vst [vmem:[%s56 + $0x37c0] sm:$0xff] 0.0
        %1850 = vst [vmem:[%s56 + $0x37c8] sm:$0xff] 0.0
        %1851 = vst [vmem:[%s56 + $0x37d0] sm:$0xff] 0.0
        %1852 = vst [vmem:[%s56 + $0x37d8] sm:$0xff] 0.0
        %1853 = vst [vmem:[%s56 + $0x37e0] sm:$0xff] 0.0
        %1854 = vst [vmem:[%s56 + $0x37e8] sm:$0xff] 0.0
        %1855 = vst [vmem:[%s56 + $0x37f0] sm:$0xff] 0.0
        %1856 = vst [vmem:[%s56 + $0x37f8] sm:$0xff] 0.0
        %1857 = vst [vmem:[%s56 + $0x3800] sm:$0xff] 0.0
        %1858 = vst.msk [vmem:[%s56 + $0x3808] sm:$0xff] %vm86, 0.0
        %1859 = vst [vmem:[%s56 + $0x3810] sm:$0xff] 0.0
        %1860 = vst [vmem:[%s56 + $0x3818] sm:$0xff] 0.0
        %1861 = vst [vmem:[%s56 + $0x3820] sm:$0xff] 0.0
        %1862 = vst [vmem:[%s56 + $0x3828] sm:$0xff] 0.0
        %1863 = vst [vmem:[%s56 + $0x3830] sm:$0xff] 0.0
        %1864 = vst [vmem:[%s56 + $0x3838] sm:$0xff] 0.0
        %1865 = vst [vmem:[%s56 + $0x3840] sm:$0xff] 0.0
        %1866 = vst [vmem:[%s56 + $0x3848] sm:$0xff] 0.0
        %1867 = vst [vmem:[%s56 + $0x3850] sm:$0xff] 0.0
        %1868 = vst [vmem:[%s56 + $0x3858] sm:$0xff] 0.0
        %1869 = vst [vmem:[%s56 + $0x3860] sm:$0xff] 0.0
        %1870 = vst [vmem:[%s56 + $0x3868] sm:$0xff] 0.0
        %1871 = vst [vmem:[%s56 + $0x3870] sm:$0xff] 0.0
        %1872 = vst [vmem:[%s56 + $0x3878] sm:$0xff] 0.0
        %1873 = vst [vmem:[%s56 + $0x3880] sm:$0xff] 0.0
        %1874 = vst [vmem:[%s56 + $0x3888] sm:$0xff] 0.0
        %1875 = vst [vmem:[%s56 + $0x3890] sm:$0xff] 0.0
        %1876 = vst [vmem:[%s56 + $0x3898] sm:$0xff] 0.0
        %1877 = vst [vmem:[%s56 + $0x38a0] sm:$0xff] 0.0
        %1878 = vst [vmem:[%s56 + $0x38a8] sm:$0xff] 0.0
        %1879 = vst [vmem:[%s56 + $0x38b0] sm:$0xff] 0.0
        %1880 = vst [vmem:[%s56 + $0x38b8] sm:$0xff] 0.0
        %1881 = vst.msk [vmem:[%s56 + $0x38c0] sm:$0xff] %vm86, 0.0
        %1882 = vst [vmem:[%s56 + $0x38c8] sm:$0xff] 0.0
        %1883 = vst [vmem:[%s56 + $0x38d0] sm:$0xff] 0.0
        %1884 = vst [vmem:[%s56 + $0x38d8] sm:$0xff] 0.0
        %1885 = vst [vmem:[%s56 + $0x38e0] sm:$0xff] 0.0
        %1886 = vst [vmem:[%s56 + $0x38e8] sm:$0xff] 0.0
        %1887 = vst [vmem:[%s56 + $0x38f0] sm:$0xff] 0.0
        %1888 = vst [vmem:[%s56 + $0x38f8] sm:$0xff] 0.0
        %1889 = vst [vmem:[%s56 + $0x3900] sm:$0xff] 0.0
        %1890 = vst [vmem:[%s56 + $0x3908] sm:$0xff] 0.0
        %1891 = vst [vmem:[%s56 + $0x3910] sm:$0xff] 0.0
        %1892 = vst [vmem:[%s56 + $0x3918] sm:$0xff] 0.0
        %1893 = vst [vmem:[%s56 + $0x3920] sm:$0xff] 0.0
        %1894 = vst [vmem:[%s56 + $0x3928] sm:$0xff] 0.0
        %1895 = vst [vmem:[%s56 + $0x3930] sm:$0xff] 0.0
        %1896 = vst [vmem:[%s56 + $0x3938] sm:$0xff] 0.0
        %1897 = vst [vmem:[%s56 + $0x3940] sm:$0xff] 0.0
        %1898 = vst [vmem:[%s56 + $0x3948] sm:$0xff] 0.0
        %1899 = vst [vmem:[%s56 + $0x3950] sm:$0xff] 0.0
        %1900 = vst [vmem:[%s56 + $0x3958] sm:$0xff] 0.0
        %1901 = vst [vmem:[%s56 + $0x3960] sm:$0xff] 0.0
        %1902 = vst [vmem:[%s56 + $0x3968] sm:$0xff] 0.0
        %1903 = vst [vmem:[%s56 + $0x3970] sm:$0xff] 0.0
        %1904 = vst.msk [vmem:[%s56 + $0x3978] sm:$0xff] %vm86, 0.0
        %1905 = vst [vmem:[%s56 + $0x3980] sm:$0xff] 0.0
        %1906 = vst [vmem:[%s56 + $0x3988] sm:$0xff] 0.0
        %1907 = vst [vmem:[%s56 + $0x3990] sm:$0xff] 0.0
        %1908 = vst [vmem:[%s56 + $0x3998] sm:$0xff] 0.0
        %1909 = vst [vmem:[%s56 + $0x39a0] sm:$0xff] 0.0
        %1910 = vst [vmem:[%s56 + $0x39a8] sm:$0xff] 0.0
        %1911 = vst [vmem:[%s56 + $0x39b0] sm:$0xff] 0.0
        %1912 = vst [vmem:[%s56 + $0x39b8] sm:$0xff] 0.0
        %1913 = vst [vmem:[%s56 + $0x39c0] sm:$0xff] 0.0
        %1914 = vst [vmem:[%s56 + $0x39c8] sm:$0xff] 0.0
        %1915 = vst [vmem:[%s56 + $0x39d0] sm:$0xff] 0.0
        %1916 = vst [vmem:[%s56 + $0x39d8] sm:$0xff] 0.0
        %1917 = vst [vmem:[%s56 + $0x39e0] sm:$0xff] 0.0
        %1918 = vst [vmem:[%s56 + $0x39e8] sm:$0xff] 0.0
        %1919 = vst [vmem:[%s56 + $0x39f0] sm:$0xff] 0.0
        %1920 = vst [vmem:[%s56 + $0x39f8] sm:$0xff] 0.0
        %1921 = vst [vmem:[%s56 + $0x3a00] sm:$0xff] 0.0
        %1922 = vst [vmem:[%s56 + $0x3a08] sm:$0xff] 0.0
        %1923 = vst [vmem:[%s56 + $0x3a10] sm:$0xff] 0.0
        %1924 = vst [vmem:[%s56 + $0x3a18] sm:$0xff] 0.0
        %1925 = vst [vmem:[%s56 + $0x3a20] sm:$0xff] 0.0
        %1926 = vst [vmem:[%s56 + $0x3a28] sm:$0xff] 0.0
        %1927 = vst.msk [vmem:[%s56 + $0x3a30] sm:$0xff] %vm86, 0.0
        %1928 = vst [vmem:[%s56 + $0x3a38] sm:$0xff] 0.0
        %1929 = vst [vmem:[%s56 + $0x3a40] sm:$0xff] 0.0
        %1930 = vst [vmem:[%s56 + $0x3a48] sm:$0xff] 0.0
        %1931 = vst [vmem:[%s56 + $0x3a50] sm:$0xff] 0.0
        %1932 = vst [vmem:[%s56 + $0x3a58] sm:$0xff] 0.0
        %1933 = vst [vmem:[%s56 + $0x3a60] sm:$0xff] 0.0
        %1934 = vst [vmem:[%s56 + $0x3a68] sm:$0xff] 0.0
        %1935 = vst [vmem:[%s56 + $0x3a70] sm:$0xff] 0.0
        %1936 = vst [vmem:[%s56 + $0x3a78] sm:$0xff] 0.0
        %1937 = vst [vmem:[%s56 + $0x3a80] sm:$0xff] 0.0
        %1938 = vst [vmem:[%s56 + $0x3a88] sm:$0xff] 0.0
        %1939 = vst [vmem:[%s56 + $0x3a90] sm:$0xff] 0.0
        %1940 = vst [vmem:[%s56 + $0x3a98] sm:$0xff] 0.0
        %1941 = vst [vmem:[%s56 + $0x3aa0] sm:$0xff] 0.0
        %1942 = vst [vmem:[%s56 + $0x3aa8] sm:$0xff] 0.0
        %1943 = vst [vmem:[%s56 + $0x3ab0] sm:$0xff] 0.0
        %1944 = vst [vmem:[%s56 + $0x3ab8] sm:$0xff] 0.0
        %1945 = vst [vmem:[%s56 + $0x3ac0] sm:$0xff] 0.0
        %1946 = vst [vmem:[%s56 + $0x3ac8] sm:$0xff] 0.0
        %1947 = vst [vmem:[%s56 + $0x3ad0] sm:$0xff] 0.0
        %1948 = vst [vmem:[%s56 + $0x3ad8] sm:$0xff] 0.0
        %1949 = vst [vmem:[%s56 + $0x3ae0] sm:$0xff] 0.0
        %1950 = vst.msk [vmem:[%s56 + $0x3ae8] sm:$0xff] %vm86, 0.0
        %1951 = vst [vmem:[%s56 + $0x3af0] sm:$0xff] 0.0
        %1952 = vst [vmem:[%s56 + $0x3af8] sm:$0xff] 0.0
        %1953 = vst [vmem:[%s56 + $0x3b00] sm:$0xff] 0.0
        %1954 = vst [vmem:[%s56 + $0x3b08] sm:$0xff] 0.0
        %1955 = vst [vmem:[%s56 + $0x3b10] sm:$0xff] 0.0
        %1956 = vst [vmem:[%s56 + $0x3b18] sm:$0xff] 0.0
        %1957 = vst [vmem:[%s56 + $0x3b20] sm:$0xff] 0.0
        %1958 = vst [vmem:[%s56 + $0x3b28] sm:$0xff] 0.0
        %1959 = vst [vmem:[%s56 + $0x3b30] sm:$0xff] 0.0
        %1960 = vst [vmem:[%s56 + $0x3b38] sm:$0xff] 0.0
        %1961 = vst [vmem:[%s56 + $0x3b40] sm:$0xff] 0.0
        %1962 = vst [vmem:[%s56 + $0x3b48] sm:$0xff] 0.0
        %1963 = vst [vmem:[%s56 + $0x3b50] sm:$0xff] 0.0
        %1964 = vst [vmem:[%s56 + $0x3b58] sm:$0xff] 0.0
        %1965 = vst [vmem:[%s56 + $0x3b60] sm:$0xff] 0.0
        %1966 = vst [vmem:[%s56 + $0x3b68] sm:$0xff] 0.0
        %1967 = vst [vmem:[%s56 + $0x3b70] sm:$0xff] 0.0
        %1968 = vst [vmem:[%s56 + $0x3b78] sm:$0xff] 0.0
        %1969 = vst [vmem:[%s56 + $0x3b80] sm:$0xff] 0.0
        %1970 = vst [vmem:[%s56 + $0x3b88] sm:$0xff] 0.0
        %1971 = vst [vmem:[%s56 + $0x3b90] sm:$0xff] 0.0
        %1972 = vst [vmem:[%s56 + $0x3b98] sm:$0xff] 0.0
        %1973 = vst.msk [vmem:[%s56 + $0x3ba0] sm:$0xff] %vm86, 0.0
        %1974 = vst [vmem:[%s56 + $0x3ba8] sm:$0xff] 0.0
        %1975 = vst [vmem:[%s56 + $0x3bb0] sm:$0xff] 0.0
        %1976 = vst [vmem:[%s56 + $0x3bb8] sm:$0xff] 0.0
        %1977 = vst [vmem:[%s56 + $0x3bc0] sm:$0xff] 0.0
        %1978 = vst [vmem:[%s56 + $0x3bc8] sm:$0xff] 0.0
        %1979 = vst [vmem:[%s56 + $0x3bd0] sm:$0xff] 0.0
        %1980 = vst [vmem:[%s56 + $0x3bd8] sm:$0xff] 0.0
        %1981 = vst [vmem:[%s56 + $0x3be0] sm:$0xff] 0.0
        %1982 = vst [vmem:[%s56 + $0x3be8] sm:$0xff] 0.0
        %1983 = vst [vmem:[%s56 + $0x3bf0] sm:$0xff] 0.0
        %1984 = vst [vmem:[%s56 + $0x3bf8] sm:$0xff] 0.0
        %1985 = vst [vmem:[%s56 + $0x3c00] sm:$0xff] 0.0
        %1986 = vst [vmem:[%s56 + $0x3c08] sm:$0xff] 0.0
        %1987 = vst [vmem:[%s56 + $0x3c10] sm:$0xff] 0.0
        %1988 = vst [vmem:[%s56 + $0x3c18] sm:$0xff] 0.0
        %1989 = vst [vmem:[%s56 + $0x3c20] sm:$0xff] 0.0
        %1990 = vst [vmem:[%s56 + $0x3c28] sm:$0xff] 0.0
        %1991 = vst [vmem:[%s56 + $0x3c30] sm:$0xff] 0.0
        %1992 = vst [vmem:[%s56 + $0x3c38] sm:$0xff] 0.0
        %1993 = vst [vmem:[%s56 + $0x3c40] sm:$0xff] 0.0
        %1994 = vst [vmem:[%s56 + $0x3c48] sm:$0xff] 0.0
        %1995 = vst [vmem:[%s56 + $0x3c50] sm:$0xff] 0.0
        %1996 = vst.msk [vmem:[%s56 + $0x3c58] sm:$0xff] %vm86, 0.0
        %1997 = vst [vmem:[%s56 + $0x3c60] sm:$0xff] 0.0
        %1998 = vst [vmem:[%s56 + $0x3c68] sm:$0xff] 0.0
        %1999 = vst [vmem:[%s56 + $0x3c70] sm:$0xff] 0.0
        %2000 = vst [vmem:[%s56 + $0x3c78] sm:$0xff] 0.0
        %2001 = vst [vmem:[%s56 + $0x3c80] sm:$0xff] 0.0
        %2002 = vst [vmem:[%s56 + $0x3c88] sm:$0xff] 0.0
        %2003 = vst [vmem:[%s56 + $0x3c90] sm:$0xff] 0.0
        %2004 = vst [vmem:[%s56 + $0x3c98] sm:$0xff] 0.0
        %2005 = vst [vmem:[%s56 + $0x3ca0] sm:$0xff] 0.0
        %2006 = vst [vmem:[%s56 + $0x3ca8] sm:$0xff] 0.0
        %2007 = vst [vmem:[%s56 + $0x3cb0] sm:$0xff] 0.0
        %2008 = vst [vmem:[%s56 + $0x3cb8] sm:$0xff] 0.0
        %2009 = vst [vmem:[%s56 + $0x3cc0] sm:$0xff] 0.0
        %2010 = vst [vmem:[%s56 + $0x3cc8] sm:$0xff] 0.0
        %2011 = vst [vmem:[%s56 + $0x3cd0] sm:$0xff] 0.0
        %2012 = vst [vmem:[%s56 + $0x3cd8] sm:$0xff] 0.0
        %2013 = vst [vmem:[%s56 + $0x3ce0] sm:$0xff] 0.0
        %2014 = vst [vmem:[%s56 + $0x3ce8] sm:$0xff] 0.0
        %2015 = vst [vmem:[%s56 + $0x3cf0] sm:$0xff] 0.0
        %2016 = vst [vmem:[%s56 + $0x3cf8] sm:$0xff] 0.0
        %2017 = vst [vmem:[%s56 + $0x3d00] sm:$0xff] 0.0
        %2018 = vst [vmem:[%s56 + $0x3d08] sm:$0xff] 0.0
        %2019 = vst.msk [vmem:[%s56 + $0x3d10] sm:$0xff] %vm86, 0.0
        %2020 = vst [vmem:[%s56 + $0x3d18] sm:$0xff] 0.0
        %2021 = vst [vmem:[%s56 + $0x3d20] sm:$0xff] 0.0
        %2022 = vst [vmem:[%s56 + $0x3d28] sm:$0xff] 0.0
        %2023 = vst [vmem:[%s56 + $0x3d30] sm:$0xff] 0.0
        %2024 = vst [vmem:[%s56 + $0x3d38] sm:$0xff] 0.0
        %2025 = vst [vmem:[%s56 + $0x3d40] sm:$0xff] 0.0
        %2026 = vst [vmem:[%s56 + $0x3d48] sm:$0xff] 0.0
        %2027 = vst [vmem:[%s56 + $0x3d50] sm:$0xff] 0.0
        %2028 = vst [vmem:[%s56 + $0x3d58] sm:$0xff] 0.0
        %2029 = vst [vmem:[%s56 + $0x3d60] sm:$0xff] 0.0
        %2030 = vst [vmem:[%s56 + $0x3d68] sm:$0xff] 0.0
        %2031 = vst [vmem:[%s56 + $0x3d70] sm:$0xff] 0.0
        %2032 = vst [vmem:[%s56 + $0x3d78] sm:$0xff] 0.0
        %2033 = vst [vmem:[%s56 + $0x3d80] sm:$0xff] 0.0
        %2034 = vst [vmem:[%s56 + $0x3d88] sm:$0xff] 0.0
        %2035 = vst [vmem:[%s56 + $0x3d90] sm:$0xff] 0.0
        %2036 = vst [vmem:[%s56 + $0x3d98] sm:$0xff] 0.0
        %2037 = vst [vmem:[%s56 + $0x3da0] sm:$0xff] 0.0
        %2038 = vst [vmem:[%s56 + $0x3da8] sm:$0xff] 0.0
        %2039 = vst [vmem:[%s56 + $0x3db0] sm:$0xff] 0.0
        %2040 = vst [vmem:[%s56 + $0x3db8] sm:$0xff] 0.0
        %2041 = vst [vmem:[%s56 + $0x3dc0] sm:$0xff] 0.0
        %2042 = vst.msk [vmem:[%s56 + $0x3dc8] sm:$0xff] %vm86, 0.0
        %2043 = vst [vmem:[%s56 + $0x3dd0] sm:$0xff] 0.0
        %2044 = vst [vmem:[%s56 + $0x3dd8] sm:$0xff] 0.0
        %2045 = vst [vmem:[%s56 + $0x3de0] sm:$0xff] 0.0
        %2046 = vst [vmem:[%s56 + $0x3de8] sm:$0xff] 0.0
        %2047 = vst [vmem:[%s56 + $0x3df0] sm:$0xff] 0.0
        %2048 = vst [vmem:[%s56 + $0x3df8] sm:$0xff] 0.0
        %2049 = vst [vmem:[%s56 + $0x3e00] sm:$0xff] 0.0
        %2050 = vst [vmem:[%s56 + $0x3e08] sm:$0xff] 0.0
        %2051 = vst [vmem:[%s56 + $0x3e10] sm:$0xff] 0.0
        %2052 = vst [vmem:[%s56 + $0x3e18] sm:$0xff] 0.0
        %2053 = vst [vmem:[%s56 + $0x3e20] sm:$0xff] 0.0
        %2054 = vst [vmem:[%s56 + $0x3e28] sm:$0xff] 0.0
        %2055 = vst [vmem:[%s56 + $0x3e30] sm:$0xff] 0.0
        %2056 = vst [vmem:[%s56 + $0x3e38] sm:$0xff] 0.0
        %2057 = vst [vmem:[%s56 + $0x3e40] sm:$0xff] 0.0
        %2058 = vst [vmem:[%s56 + $0x3e48] sm:$0xff] 0.0
        %2059 = vst [vmem:[%s56 + $0x3e50] sm:$0xff] 0.0
        %2060 = vst [vmem:[%s56 + $0x3e58] sm:$0xff] 0.0
        %2061 = vst [vmem:[%s56 + $0x3e60] sm:$0xff] 0.0
        %2062 = vst [vmem:[%s56 + $0x3e68] sm:$0xff] 0.0
        %2063 = vst [vmem:[%s56 + $0x3e70] sm:$0xff] 0.0
        %2064 = vst [vmem:[%s56 + $0x3e78] sm:$0xff] 0.0
        %2065 = vst.msk [vmem:[%s56 + $0x3e80] sm:$0xff] %vm86, 0.0
        %2066 = vst [vmem:[%s56 + $0x3e88] sm:$0xff] 0.0
        %2067 = vst [vmem:[%s56 + $0x3e90] sm:$0xff] 0.0
        %2068 = vst [vmem:[%s56 + $0x3e98] sm:$0xff] 0.0
        %2069 = vst [vmem:[%s56 + $0x3ea0] sm:$0xff] 0.0
        %2070 = vst [vmem:[%s56 + $0x3ea8] sm:$0xff] 0.0
        %2071 = vst [vmem:[%s56 + $0x3eb0] sm:$0xff] 0.0
        %2072 = vst [vmem:[%s56 + $0x3eb8] sm:$0xff] 0.0
        %2073 = vst [vmem:[%s56 + $0x3ec0] sm:$0xff] 0.0
        %2074 = vst [vmem:[%s56 + $0x3ec8] sm:$0xff] 0.0
        %2075 = vst [vmem:[%s56 + $0x3ed0] sm:$0xff] 0.0
        %2076 = vst [vmem:[%s56 + $0x3ed8] sm:$0xff] 0.0
        %2077 = vst [vmem:[%s56 + $0x3ee0] sm:$0xff] 0.0
        %2078 = vst [vmem:[%s56 + $0x3ee8] sm:$0xff] 0.0
        %2079 = vst [vmem:[%s56 + $0x3ef0] sm:$0xff] 0.0
        %2080 = vst [vmem:[%s56 + $0x3ef8] sm:$0xff] 0.0
        %2081 = vst [vmem:[%s56 + $0x3f00] sm:$0xff] 0.0
        %2082 = vst [vmem:[%s56 + $0x3f08] sm:$0xff] 0.0
        %2083 = vst [vmem:[%s56 + $0x3f10] sm:$0xff] 0.0
        %2084 = vst [vmem:[%s56 + $0x3f18] sm:$0xff] 0.0
        %2085 = vst [vmem:[%s56 + $0x3f20] sm:$0xff] 0.0
        %2086 = vst [vmem:[%s56 + $0x3f28] sm:$0xff] 0.0
        %2087 = vst [vmem:[%s56 + $0x3f30] sm:$0xff] 0.0
        %2088 = vst.msk [vmem:[%s56 + $0x3f38] sm:$0xff] %vm86, 0.0
        %2089 = vst [vmem:[%s56 + $0x3f40] sm:$0xff] 0.0
        %2090 = vst [vmem:[%s56 + $0x3f48] sm:$0xff] 0.0
        %2091 = vst [vmem:[%s56 + $0x3f50] sm:$0xff] 0.0
        %2092 = vst [vmem:[%s56 + $0x3f58] sm:$0xff] 0.0
        %2093 = vst [vmem:[%s56 + $0x3f60] sm:$0xff] 0.0
        %2094 = vst [vmem:[%s56 + $0x3f68] sm:$0xff] 0.0
        %2095 = vst [vmem:[%s56 + $0x3f70] sm:$0xff] 0.0
        %2096 = vst [vmem:[%s56 + $0x3f78] sm:$0xff] 0.0
        %2097 = vst [vmem:[%s56 + $0x3f80] sm:$0xff] 0.0
        %2098 = vst [vmem:[%s56 + $0x3f88] sm:$0xff] 0.0
        %2099 = vst [vmem:[%s56 + $0x3f90] sm:$0xff] 0.0
        %2100 = vst [vmem:[%s56 + $0x3f98] sm:$0xff] 0.0
        %2101 = vst [vmem:[%s56 + $0x3fa0] sm:$0xff] 0.0
        %2102 = vst [vmem:[%s56 + $0x3fa8] sm:$0xff] 0.0
        %2103 = vst [vmem:[%s56 + $0x3fb0] sm:$0xff] 0.0
        %2104 = vst [vmem:[%s56 + $0x3fb8] sm:$0xff] 0.0
        %2105 = vst [vmem:[%s56 + $0x3fc0] sm:$0xff] 0.0
        %2106 = vst [vmem:[%s56 + $0x3fc8] sm:$0xff] 0.0
        %2107 = vst [vmem:[%s56 + $0x3fd0] sm:$0xff] 0.0
        %2108 = vst [vmem:[%s56 + $0x3fd8] sm:$0xff] 0.0
        %2109 = vst [vmem:[%s56 + $0x3fe0] sm:$0xff] 0.0
        %2110 = vst [vmem:[%s56 + $0x3fe8] sm:$0xff] 0.0
        %2111 = vst.msk [vmem:[%s56 + $0x3ff0] sm:$0xff] %vm86, 0.0
        %2112 = vst [vmem:[%s56 + $0x3ff8] sm:$0xff] 0.0
        %2113 = vst [vmem:[%s56 + $0x4000] sm:$0xff] 0.0
        %2114 = vst [vmem:[%s56 + $0x4008] sm:$0xff] 0.0
        %2115 = vst [vmem:[%s56 + $0x4010] sm:$0xff] 0.0
        %2116 = vst [vmem:[%s56 + $0x4018] sm:$0xff] 0.0
        %2117 = vst [vmem:[%s56 + $0x4020] sm:$0xff] 0.0
        %2118 = vst [vmem:[%s56 + $0x4028] sm:$0xff] 0.0
        %2119 = vst [vmem:[%s56 + $0x4030] sm:$0xff] 0.0
        %2120 = vst [vmem:[%s56 + $0x4038] sm:$0xff] 0.0
        %2121 = vst [vmem:[%s56 + $0x4040] sm:$0xff] 0.0
        %2122 = vst [vmem:[%s56 + $0x4048] sm:$0xff] 0.0
        %2123 = vst [vmem:[%s56 + $0x4050] sm:$0xff] 0.0
        %2124 = vst [vmem:[%s56 + $0x4058] sm:$0xff] 0.0
        %2125 = vst [vmem:[%s56 + $0x4060] sm:$0xff] 0.0
        %2126 = vst [vmem:[%s56 + $0x4068] sm:$0xff] 0.0
        %2127 = vst [vmem:[%s56 + $0x4070] sm:$0xff] 0.0
        %2128 = vst [vmem:[%s56 + $0x4078] sm:$0xff] 0.0
        %2129 = vst [vmem:[%s56 + $0x4080] sm:$0xff] 0.0
        %2130 = vst [vmem:[%s56 + $0x4088] sm:$0xff] 0.0
        %2131 = vst [vmem:[%s56 + $0x4090] sm:$0xff] 0.0
        %2132 = vst [vmem:[%s56 + $0x4098] sm:$0xff] 0.0
        %2133 = vst [vmem:[%s56 + $0x40a0] sm:$0xff] 0.0
        %2134 = vst.msk [vmem:[%s56 + $0x40a8] sm:$0xff] %vm86, 0.0
        %2135 = vst [vmem:[%s56 + $0x40b0] sm:$0xff] 0.0
        %2136 = vst [vmem:[%s56 + $0x40b8] sm:$0xff] 0.0
        %2137 = vst [vmem:[%s56 + $0x40c0] sm:$0xff] 0.0
        %2138 = vst [vmem:[%s56 + $0x40c8] sm:$0xff] 0.0
        %2139 = vst [vmem:[%s56 + $0x40d0] sm:$0xff] 0.0
        %2140 = vst [vmem:[%s56 + $0x40d8] sm:$0xff] 0.0
        %2141 = vst [vmem:[%s56 + $0x40e0] sm:$0xff] 0.0
        %2142 = vst [vmem:[%s56 + $0x40e8] sm:$0xff] 0.0
        %2143 = vst [vmem:[%s56 + $0x40f0] sm:$0xff] 0.0
        %2144 = vst [vmem:[%s56 + $0x40f8] sm:$0xff] 0.0
        %2145 = vst [vmem:[%s56 + $0x4100] sm:$0xff] 0.0
        %2146 = vst [vmem:[%s56 + $0x4108] sm:$0xff] 0.0
        %2147 = vst [vmem:[%s56 + $0x4110] sm:$0xff] 0.0
        %2148 = vst [vmem:[%s56 + $0x4118] sm:$0xff] 0.0
        %2149 = vst [vmem:[%s56 + $0x4120] sm:$0xff] 0.0
        %2150 = vst [vmem:[%s56 + $0x4128] sm:$0xff] 0.0
        %2151 = vst [vmem:[%s56 + $0x4130] sm:$0xff] 0.0
        %2152 = vst [vmem:[%s56 + $0x4138] sm:$0xff] 0.0
        %2153 = vst [vmem:[%s56 + $0x4140] sm:$0xff] 0.0
        %2154 = vst [vmem:[%s56 + $0x4148] sm:$0xff] 0.0
        %2155 = vst [vmem:[%s56 + $0x4150] sm:$0xff] 0.0
        %2156 = vst [vmem:[%s56 + $0x4158] sm:$0xff] 0.0
        %2157 = vst.msk [vmem:[%s56 + $0x4160] sm:$0xff] %vm86, 0.0
        %v2158 = vlaneseq
        %v2159 = vand.u32 %v2158, 127
        %v2160 = vadd.s32 %v2159, 128
        %v2161 = vadd.s32 %v2159, 256
        %v2162 = vadd.s32 %v2159, 384
        %v2163 = vadd.s32 %v2159, 512
        %v2164 = vadd.s32 %v2159, 640
        %v2165 = vadd.s32 %v2159, 768
        %v2166 = vadd.s32 %v2159, 896
        %v2167 = vadd.s32 %v2159, 1024
        %v2168 = vadd.s32 %v2159, 1152
        %v2169 = vadd.s32 %v2159, 1280
        %v2170 = vadd.s32 %v2159, 1408
        %v2171 = vadd.s32 %v2159, 1536
        %v2172 = vadd.s32 %v2159, 1664
        %v2173 = vadd.s32 %v2159, 1792
        %v2174 = vadd.s32 %v2159, 1920
        %v2175 = vadd.s32 %v2159, 2048
        %v2176 = vadd.s32 %v2159, 2176
        %v2177 = vadd.s32 %v2159, 2304
        %v2178 = vadd.s32 %v2159, 2432
        %v2179 = vadd.s32 %v2159, 2560
        %v2180 = vadd.s32 %v2159, 2688
        %v2181 = vadd.s32 %v2159, 2816
        %s2182 = sld [smem:[#allocation3]]
        %s2183 = sld [smem:[#allocation4]]
        %s2184 = sld [smem:[#allocation5]]
        %p2185 = scmp.ge.s32.totalorder %s2182, %s63
        %s2186 = sadd.s32 %s63, 728
        %p2187 = scmp.lt.s32.totalorder %s2182, %s2186
        %p2188 = pnand %p2185, %p2187
        %p2189 = pneg %p2188
        // Predicated region
        $region13: #{tpu_custom_call.1} parent=11 // pred_check
          _
        $region14: #{tpu_custom_call.1} parent=11 // pred_check_branch
          %2191 = sbr.rel (%p2188) target = $region16
        $region15: #{tpu_custom_call.1} parent=11 // pred_region
          %s2192 = ssub.s32 %s2182, %s63
          %v2193 = vstv %s2184
          %v2194 = vstv %s2183
          %vm2195 = vcmp.eq.s32.totalorder %v2159, %v2194
          %vm2196 = vcmp.eq.s32.totalorder %v2160, %v2194
          %vm2197 = vcmp.eq.s32.totalorder %v2161, %v2194
          %vm2198 = vcmp.eq.s32.totalorder %v2162, %v2194
          %vm2199 = vcmp.eq.s32.totalorder %v2163, %v2194
          %vm2200 = vcmp.eq.s32.totalorder %v2164, %v2194
          %vm2201 = vcmp.eq.s32.totalorder %v2165, %v2194
          %vm2202 = vcmp.eq.s32.totalorder %v2166, %v2194
          %vm2203 = vcmp.eq.s32.totalorder %v2167, %v2194
          %vm2204 = vcmp.eq.s32.totalorder %v2168, %v2194
          %vm2205 = vcmp.eq.s32.totalorder %v2169, %v2194
          %vm2206 = vcmp.eq.s32.totalorder %v2170, %v2194
          %vm2207 = vcmp.eq.s32.totalorder %v2171, %v2194
          %vm2208 = vcmp.eq.s32.totalorder %v2172, %v2194
          %vm2209 = vcmp.eq.s32.totalorder %v2173, %v2194
          %vm2210 = vcmp.eq.s32.totalorder %v2174, %v2194
          %vm2211 = vcmp.eq.s32.totalorder %v2175, %v2194
          %vm2212 = vcmp.eq.s32.totalorder %v2176, %v2194
          %vm2213 = vcmp.eq.s32.totalorder %v2177, %v2194
          %vm2214 = vcmp.eq.s32.totalorder %v2178, %v2194
          %vm2215 = vcmp.eq.s32.totalorder %v2179, %v2194
          %vm2216 = vcmp.eq.s32.totalorder %v2180, %v2194
          %vm2217 = vcmp.eq.s32.totalorder %v2181, %v2194
          %v2218 = vsel %vm2195, 1, 0
          %v2219 = vsel %vm2196, 1, 0
          %v2220 = vsel %vm2197, 1, 0
          %v2221 = vsel %vm2198, 1, 0
          %v2222 = vsel %vm2199, 1, 0
          %v2223 = vsel %vm2200, 1, 0
          %v2224 = vsel %vm2201, 1, 0
          %v2225 = vsel %vm2202, 1, 0
          %v2226 = vsel %vm2203, 1, 0
          %v2227 = vsel %vm2204, 1, 0
          %v2228 = vsel %vm2205, 1, 0
          %v2229 = vsel %vm2206, 1, 0
          %v2230 = vsel %vm2207, 1, 0
          %v2231 = vsel %vm2208, 1, 0
          %v2232 = vsel %vm2209, 1, 0
          %v2233 = vsel %vm2210, 1, 0
          %v2234 = vsel %vm2211, 1, 0
          %v2235 = vsel %vm2212, 1, 0
          %v2236 = vsel %vm2213, 1, 0
          %v2237 = vsel %vm2214, 1, 0
          %v2238 = vsel %vm2215, 1, 0
          %v2239 = vsel %vm2216, 1, 0
          %v2240 = vsel %vm2217, 1, 0
          %v2241 = vcombine.low %v2218, %v2219
          %v2242 = vcombine.low %v2220, %v2221
          %v2243 = vcombine.low %v2222, %v2223
          %v2244 = vcombine.low %v2224, %v2225
          %v2246 = vunpack.c.l.s4 1966171168
          %v2247 = vunpack.c.0.s8 %v2246
          %v2248 = vlaneseq
          %v2249 = vshrl.u32 %v2248, 7
          %v2250 = vsub.s32 %v2247, %v2249
          %v2251 = vrot.slane %v2241, %v2250
          %v2253 = vunpack.c.l.s4 1966171168
          %v2254 = vunpack.c.0.s8 %v2253
          %v2255 = vlaneseq
          %v2256 = vshrl.u32 %v2255, 7
          %v2257 = vsub.s32 %v2254, %v2256
          %v2258 = vrot.slane %v2242, %v2257
          %v2260 = vunpack.c.l.s4 1966171168
          %v2261 = vunpack.c.0.s8 %v2260
          %v2262 = vlaneseq
          %v2263 = vshrl.u32 %v2262, 7
          %v2264 = vsub.s32 %v2261, %v2263
          %v2265 = vrot.slane %v2243, %v2264
          %v2267 = vunpack.c.l.s4 1966171168
          %v2268 = vunpack.c.0.s8 %v2267
          %v2269 = vlaneseq
          %v2270 = vshrl.u32 %v2269, 7
          %v2271 = vsub.s32 %v2268, %v2270
          %v2272 = vrot.slane %v2244, %v2271
          %v2273 = vcombine.low %v2251, %v2258
          %v2274 = vcombine.low %v2265, %v2272
          %v2276 = vunpack.c.l.s4 1966171168
          %v2277 = vunpack.c.0.s8 %v2276
          %v2278 = vlaneseq
          %v2279 = vshrl.u32 %v2278, 7
          %v2280 = vsub.s32 %v2277, %v2279
          %v2281 = vrot.slane %v2273, %v2280
          %v2283 = vunpack.c.l.s4 1966171168
          %v2284 = vunpack.c.0.s8 %v2283
          %v2285 = vlaneseq
          %v2286 = vshrl.u32 %v2285, 7
          %v2287 = vsub.s32 %v2284, %v2286
          %v2288 = vrot.slane %v2274, %v2287
          %v2289 = vcombine.low %v2281, %v2288
          %v2290 = vcombine.low %v2226, %v2227
          %v2291 = vcombine.low %v2228, %v2229
          %v2292 = vcombine.low %v2230, %v2231
          %v2293 = vcombine.low %v2232, %v2233
          %v2295 = vunpack.c.l.s4 1966171168
          %v2296 = vunpack.c.0.s8 %v2295
          %v2297 = vlaneseq
          %v2298 = vshrl.u32 %v2297, 7
          %v2299 = vsub.s32 %v2296, %v2298
          %v2300 = vrot.slane %v2290, %v2299
          %v2302 = vunpack.c.l.s4 1966171168
          %v2303 = vunpack.c.0.s8 %v2302
          %v2304 = vlaneseq
          %v2305 = vshrl.u32 %v2304, 7
          %v2306 = vsub.s32 %v2303, %v2305
          %v2307 = vrot.slane %v2291, %v2306
          %v2309 = vunpack.c.l.s4 1966171168
          %v2310 = vunpack.c.0.s8 %v2309
          %v2311 = vlaneseq
          %v2312 = vshrl.u32 %v2311, 7
          %v2313 = vsub.s32 %v2310, %v2312
          %v2314 = vrot.slane %v2292, %v2313
          %v2316 = vunpack.c.l.s4 1966171168
          %v2317 = vunpack.c.0.s8 %v2316
          %v2318 = vlaneseq
          %v2319 = vshrl.u32 %v2318, 7
          %v2320 = vsub.s32 %v2317, %v2319
          %v2321 = vrot.slane %v2293, %v2320
          %v2322 = vcombine.low %v2300, %v2307
          %v2323 = vcombine.low %v2314, %v2321
          %v2325 = vunpack.c.l.s4 1966171168
          %v2326 = vunpack.c.0.s8 %v2325
          %v2327 = vlaneseq
          %v2328 = vshrl.u32 %v2327, 7
          %v2329 = vsub.s32 %v2326, %v2328
          %v2330 = vrot.slane %v2322, %v2329
          %v2332 = vunpack.c.l.s4 1966171168
          %v2333 = vunpack.c.0.s8 %v2332
          %v2334 = vlaneseq
          %v2335 = vshrl.u32 %v2334, 7
          %v2336 = vsub.s32 %v2333, %v2335
          %v2337 = vrot.slane %v2323, %v2336
          %v2338 = vcombine.low %v2330, %v2337
          %v2339 = vcombine.low %v2234, %v2235
          %v2340 = vcombine.low %v2236, %v2237
          %v2341 = vcombine.low %v2238, %v2239
          %v2343 = vunpack.c.l.s4 1966171168
          %v2344 = vunpack.c.0.s8 %v2343
          %v2345 = vlaneseq
          %v2346 = vshrl.u32 %v2345, 7
          %v2347 = vsub.s32 %v2344, %v2346
          %v2348 = vrot.slane %v2339, %v2347
          %v2350 = vunpack.c.l.s4 1966171168
          %v2351 = vunpack.c.0.s8 %v2350
          %v2352 = vlaneseq
          %v2353 = vshrl.u32 %v2352, 7
          %v2354 = vsub.s32 %v2351, %v2353
          %v2355 = vrot.slane %v2340, %v2354
          %v2357 = vunpack.c.l.s4 1966171168
          %v2358 = vunpack.c.0.s8 %v2357
          %v2359 = vlaneseq
          %v2360 = vshrl.u32 %v2359, 7
          %v2361 = vsub.s32 %v2358, %v2360
          %v2362 = vrot.slane %v2341, %v2361
          %v2364 = vunpack.c.l.s4 1966171168
          %v2365 = vunpack.c.0.s8 %v2364
          %v2366 = vlaneseq
          %v2367 = vshrl.u32 %v2366, 7
          %v2368 = vsub.s32 %v2365, %v2367
          %v2369 = vrot.slane %v2240, %v2368
          %v2370 = vcombine.low %v2348, %v2355
          %v2371 = vcombine.low %v2362, %v2369
          %v2373 = vunpack.c.l.s4 1966171168
          %v2374 = vunpack.c.0.s8 %v2373
          %v2375 = vlaneseq
          %v2376 = vshrl.u32 %v2375, 7
          %v2377 = vsub.s32 %v2374, %v2376
          %v2378 = vrot.slane %v2370, %v2377
          %v2380 = vunpack.c.l.s4 1966171168
          %v2381 = vunpack.c.0.s8 %v2380
          %v2382 = vlaneseq
          %v2383 = vshrl.u32 %v2382, 7
          %v2384 = vsub.s32 %v2381, %v2383
          %v2385 = vrot.slane %v2371, %v2384
          %v2386 = vcombine.low %v2378, %v2385
          %vm2387 = vcmp.ne.s32.totalorder %v2289, 0
          %vm2388 = vcmp.ne.s32.totalorder %v2338, 0
          %vm2389 = vcmp.ne.s32.totalorder %v2386, 0
          %s2390 = sshra.s32 %s2192, 3
          %s2391 = sand.u32 %s2192, 7
          %s2392 = sshra.s32 %s2192, 3
          %s2393 = sand.u32 %s2192, 7
          %s2394 = smul.u32 %s2390, 23
          %s2395 = smul.u32 %s2394, 8
          %s2396 = sadd.s32 %s2395, %s2393
          %s2397 = scalar_lea.vmem %s56, %s2396 [#allocation6]
          %2398 = vst.msk [vmem:[%s2397] ss:$8 sm:$0xf] %vm2387, %v2193
          %2399 = vst.msk [vmem:[%s2397] ss:$8 sm:$0xf0] %vm2387, %v2193
          %s2400 = sadd.s32 %s2394, 8
          %s2401 = smul.u32 %s2400, 8
          %s2402 = sadd.s32 %s2401, %s2393
          %s2403 = scalar_lea.vmem %s56, %s2402 [#allocation6]
          %2404 = vst.msk [vmem:[%s2403] ss:$8 sm:$0xf] %vm2388, %v2193
          %2405 = vst.msk [vmem:[%s2403] ss:$8 sm:$0xf0] %vm2388, %v2193
          %v2406 = vlaneseq
          %vm2407 = vcmp.ge.s32.totalorder %v2406, 0
          %vm2408 = vcmp.lt.s32.totalorder %v2406, 832
          %vm2409 = vmand %vm2407, %vm2408
          %vm2410 = vmand %vm2409, %vm2389
          %s2411 = sadd.s32 %s2394, 16
          %s2412 = smul.u32 %s2411, 8
          %s2413 = sadd.s32 %s2412, %s2393
          %s2414 = scalar_lea.vmem %s56, %s2413 [#allocation6]
          %2415 = vst.msk [vmem:[%s2414] ss:$8 sm:$0xf] %vm2410, %v2193
          %2416 = vst.msk [vmem:[%s2414] ss:$8 sm:$0x70] %vm2410, %v2193
        $region16: #{tpu_custom_call.1} parent=11 // pred_fallthru
          _
        %s2417 = sld [smem:[#allocation3 + $0x1]]
        %s2418 = sld [smem:[#allocation4 + $0x1]]
        %s2419 = sld [smem:[#allocation5 + $0x1]]
        %p2420 = scmp.ge.s32.totalorder %s2417, %s63
        %p2421 = scmp.lt.s32.totalorder %s2417, %s2186
        %p2422 = pnand %p2420, %p2421
        %p2423 = pneg %p2422
        // Predicated region
        $region17: #{tpu_custom_call.1} parent=11 // pred_check
          _
        $region18: #{tpu_custom_call.1} parent=11 // pred_check_branch
          %2425 = sbr.rel (%p2422) target = $region20
        $region19: #{tpu_custom_call.1} parent=11 // pred_region
          %s2426 = ssub.s32 %s2417, %s63
          %v2427 = vstv %s2419
          %v2428 = vstv %s2418
          %vm2429 = vcmp.eq.s32.totalorder %v2159, %v2428
          %vm2430 = vcmp.eq.s32.totalorder %v2160, %v2428
          %vm2431 = vcmp.eq.s32.totalorder %v2161, %v2428
          %vm2432 = vcmp.eq.s32.totalorder %v2162, %v2428
          %vm2433 = vcmp.eq.s32.totalorder %v2163, %v2428
          %vm2434 = vcmp.eq.s32.totalorder %v2164, %v2428
          %vm2435 = vcmp.eq.s32.totalorder %v2165, %v2428
          %vm2436 = vcmp.eq.s32.totalorder %v2166, %v2428
          %vm2437 = vcmp.eq.s32.totalorder %v2167, %v2428
          %vm2438 = vcmp.eq.s32.totalorder %v2168, %v2428
          %vm2439 = vcmp.eq.s32.totalorder %v2169, %v2428
          %vm2440 = vcmp.eq.s32.totalorder %v2170, %v2428
          %vm2441 = vcmp.eq.s32.totalorder %v2171, %v2428
          %vm2442 = vcmp.eq.s32.totalorder %v2172, %v2428
          %vm2443 = vcmp.eq.s32.totalorder %v2173, %v2428
          %vm2444 = vcmp.eq.s32.totalorder %v2174, %v2428
          %vm2445 = vcmp.eq.s32.totalorder %v2175, %v2428
          %vm2446 = vcmp.eq.s32.totalorder %v2176, %v2428
          %vm2447 = vcmp.eq.s32.totalorder %v2177, %v2428
          %vm2448 = vcmp.eq.s32.totalorder %v2178, %v2428
          %vm2449 = vcmp.eq.s32.totalorder %v2179, %v2428
          %vm2450 = vcmp.eq.s32.totalorder %v2180, %v2428
          %vm2451 = vcmp.eq.s32.totalorder %v2181, %v2428
          %v2452 = vsel %vm2429, 1, 0
          %v2453 = vsel %vm2430, 1, 0
          %v2454 = vsel %vm2431, 1, 0
          %v2455 = vsel %vm2432, 1, 0
          %v2456 = vsel %vm2433, 1, 0
          %v2457 = vsel %vm2434, 1, 0
          %v2458 = vsel %vm2435, 1, 0
          %v2459 = vsel %vm2436, 1, 0
          %v2460 = vsel %vm2437, 1, 0
          %v2461 = vsel %vm2438, 1, 0
          %v2462 = vsel %vm2439, 1, 0
          %v2463 = vsel %vm2440, 1, 0
          %v2464 = vsel %vm2441, 1, 0
          %v2465 = vsel %vm2442, 1, 0
          %v2466 = vsel %vm2443, 1, 0
          %v2467 = vsel %vm2444, 1, 0
          %v2468 = vsel %vm2445, 1, 0
          %v2469 = vsel %vm2446, 1, 0
          %v2470 = vsel %vm2447, 1, 0
          %v2471 = vsel %vm2448, 1, 0
          %v2472 = vsel %vm2449, 1, 0
          %v2473 = vsel %vm2450, 1, 0
          %v2474 = vsel %vm2451, 1, 0
          %v2475 = vcombine.low %v2452, %v2453
          %v2476 = vcombine.low %v2454, %v2455
          %v2477 = vcombine.low %v2456, %v2457
          %v2478 = vcombine.low %v2458, %v2459
          %v2480 = vunpack.c.l.s4 1966171168
          %v2481 = vunpack.c.0.s8 %v2480
          %v2482 = vlaneseq
          %v2483 = vshrl.u32 %v2482, 7
          %v2484 = vsub.s32 %v2481, %v2483
          %v2485 = vrot.slane %v2475, %v2484
          %v2487 = vunpack.c.l.s4 1966171168
          %v2488 = vunpack.c.0.s8 %v2487
          %v2489 = vlaneseq
          %v2490 = vshrl.u32 %v2489, 7
          %v2491 = vsub.s32 %v2488, %v2490
          %v2492 = vrot.slane %v2476, %v2491
          %v2494 = vunpack.c.l.s4 1966171168
          %v2495 = vunpack.c.0.s8 %v2494
          %v2496 = vlaneseq
          %v2497 = vshrl.u32 %v2496, 7
          %v2498 = vsub.s32 %v2495, %v2497
          %v2499 = vrot.slane %v2477, %v2498
          %v2501 = vunpack.c.l.s4 1966171168
          %v2502 = vunpack.c.0.s8 %v2501
          %v2503 = vlaneseq
          %v2504 = vshrl.u32 %v2503, 7
          %v2505 = vsub.s32 %v2502, %v2504
          %v2506 = vrot.slane %v2478, %v2505
          %v2507 = vcombine.low %v2485, %v2492
          %v2508 = vcombine.low %v2499, %v2506
          %v2510 = vunpack.c.l.s4 1966171168
          %v2511 = vunpack.c.0.s8 %v2510
          %v2512 = vlaneseq
          %v2513 = vshrl.u32 %v2512, 7
          %v2514 = vsub.s32 %v2511, %v2513
          %v2515 = vrot.slane %v2507, %v2514
          %v2517 = vunpack.c.l.s4 1966171168
          %v2518 = vunpack.c.0.s8 %v2517
          %v2519 = vlaneseq
          %v2520 = vshrl.u32 %v2519, 7
          %v2521 = vsub.s32 %v2518, %v2520
          %v2522 = vrot.slane %v2508, %v2521
          %v2523 = vcombine.low %v2515, %v2522
          %v2524 = vcombine.low %v2460, %v2461
          %v2525 = vcombine.low %v2462, %v2463
          %v2526 = vcombine.low %v2464, %v2465
          %v2527 = vcombine.low %v2466, %v2467
          %v2529 = vunpack.c.l.s4 1966171168
          %v2530 = vunpack.c.0.s8 %v2529
          %v2531 = vlaneseq
          %v2532 = vshrl.u32 %v2531, 7
          %v2533 = vsub.s32 %v2530, %v2532
          %v2534 = vrot.slane %v2524, %v2533
          %v2536 = vunpack.c.l.s4 1966171168
          %v2537 = vunpack.c.0.s8 %v2536
          %v2538 = vlaneseq
          %v2539 = vshrl.u32 %v2538, 7
          %v2540 = vsub.s32 %v2537, %v2539
          %v2541 = vrot.slane %v2525, %v2540
          %v2543 = vunpack.c.l.s4 1966171168
          %v2544 = vunpack.c.0.s8 %v2543
          %v2545 = vlaneseq
          %v2546 = vshrl.u32 %v2545, 7
          %v2547 = vsub.s32 %v2544, %v2546
          %v2548 = vrot.slane %v2526, %v2547
          %v2550 = vunpack.c.l.s4 1966171168
          %v2551 = vunpack.c.0.s8 %v2550
          %v2552 = vlaneseq
          %v2553 = vshrl.u32 %v2552, 7
          %v2554 = vsub.s32 %v2551, %v2553
          %v2555 = vrot.slane %v2527, %v2554
          %v2556 = vcombine.low %v2534, %v2541
          %v2557 = vcombine.low %v2548, %v2555
          %v2559 = vunpack.c.l.s4 1966171168
          %v2560 = vunpack.c.0.s8 %v2559
          %v2561 = vlaneseq
          %v2562 = vshrl.u32 %v2561, 7
          %v2563 = vsub.s32 %v2560, %v2562
          %v2564 = vrot.slane %v2556, %v2563
          %v2566 = vunpack.c.l.s4 1966171168
          %v2567 = vunpack.c.0.s8 %v2566
          %v2568 = vlaneseq
          %v2569 = vshrl.u32 %v2568, 7
          %v2570 = vsub.s32 %v2567, %v2569
          %v2571 = vrot.slane %v2557, %v2570
          %v2572 = vcombine.low %v2564, %v2571
          %v2573 = vcombine.low %v2468, %v2469
          %v2574 = vcombine.low %v2470, %v2471
          %v2575 = vcombine.low %v2472, %v2473
          %v2577 = vunpack.c.l.s4 1966171168
          %v2578 = vunpack.c.0.s8 %v2577
          %v2579 = vlaneseq
          %v2580 = vshrl.u32 %v2579, 7
          %v2581 = vsub.s32 %v2578, %v2580
          %v2582 = vrot.slane %v2573, %v2581
          %v2584 = vunpack.c.l.s4 1966171168
          %v2585 = vunpack.c.0.s8 %v2584
          %v2586 = vlaneseq
          %v2587 = vshrl.u32 %v2586, 7
          %v2588 = vsub.s32 %v2585, %v2587
          %v2589 = vrot.slane %v2574, %v2588
          %v2591 = vunpack.c.l.s4 1966171168
          %v2592 = vunpack.c.0.s8 %v2591
          %v2593 = vlaneseq
          %v2594 = vshrl.u32 %v2593, 7
          %v2595 = vsub.s32 %v2592, %v2594
          %v2596 = vrot.slane %v2575, %v2595
          %v2598 = vunpack.c.l.s4 1966171168
          %v2599 = vunpack.c.0.s8 %v2598
          %v2600 = vlaneseq
          %v2601 = vshrl.u32 %v2600, 7
          %v2602 = vsub.s32 %v2599, %v2601
          %v2603 = vrot.slane %v2474, %v2602
          %v2604 = vcombine.low %v2582, %v2589
          %v2605 = vcombine.low %v2596, %v2603
          %v2607 = vunpack.c.l.s4 1966171168
          %v2608 = vunpack.c.0.s8 %v2607
          %v2609 = vlaneseq
          %v2610 = vshrl.u32 %v2609, 7
          %v2611 = vsub.s32 %v2608, %v2610
          %v2612 = vrot.slane %v2604, %v2611
          %v2614 = vunpack.c.l.s4 1966171168
          %v2615 = vunpack.c.0.s8 %v2614
          %v2616 = vlaneseq
          %v2617 = vshrl.u32 %v2616, 7
          %v2618 = vsub.s32 %v2615, %v2617
          %v2619 = vrot.slane %v2605, %v2618
          %v2620 = vcombine.low %v2612, %v2619
          %vm2621 = vcmp.ne.s32.totalorder %v2523, 0
          %vm2622 = vcmp.ne.s32.totalorder %v2572, 0
          %vm2623 = vcmp.ne.s32.totalorder %v2620, 0
          %s2624 = sshra.s32 %s2426, 3
          %s2625 = sand.u32 %s2426, 7
          %s2626 = sshra.s32 %s2426, 3
          %s2627 = sand.u32 %s2426, 7
          %s2628 = smul.u32 %s2624, 23
          %s2629 = smul.u32 %s2628, 8
          %s2630 = sadd.s32 %s2629, %s2627
          %s2631 = scalar_lea.vmem %s56, %s2630 [#allocation6]
          %2632 = vst.msk [vmem:[%s2631] ss:$8 sm:$0xf] %vm2621, %v2427
          %2633 = vst.msk [vmem:[%s2631] ss:$8 sm:$0xf0] %vm2621, %v2427
          %s2634 = sadd.s32 %s2628, 8
          %s2635 = smul.u32 %s2634, 8
          %s2636 = sadd.s32 %s2635, %s2627
          %s2637 = scalar_lea.vmem %s56, %s2636 [#allocation6]
          %2638 = vst.msk [vmem:[%s2637] ss:$8 sm:$0xf] %vm2622, %v2427
          %2639 = vst.msk [vmem:[%s2637] ss:$8 sm:$0xf0] %vm2622, %v2427
          %v2640 = vlaneseq
          %vm2641 = vcmp.ge.s32.totalorder %v2640, 0
          %vm2642 = vcmp.lt.s32.totalorder %v2640, 832
          %vm2643 = vmand %vm2641, %vm2642
          %vm2644 = vmand %vm2643, %vm2623
          %s2645 = sadd.s32 %s2628, 16
          %s2646 = smul.u32 %s2645, 8
          %s2647 = sadd.s32 %s2646, %s2627
          %s2648 = scalar_lea.vmem %s56, %s2647 [#allocation6]
          %2649 = vst.msk [vmem:[%s2648] ss:$8 sm:$0xf] %vm2644, %v2427
          %2650 = vst.msk [vmem:[%s2648] ss:$8 sm:$0x70] %vm2644, %v2427
        $region20: #{tpu_custom_call.1} parent=11 // pred_fallthru
          _
        %s2651 = sld [smem:[#allocation3 + $0x2]]
        %s2652 = sld [smem:[#allocation4 + $0x2]]
        %s2653 = sld [smem:[#allocation5 + $0x2]]
        %p2654 = scmp.ge.s32.totalorder %s2651, %s63
        %p2655 = scmp.lt.s32.totalorder %s2651, %s2186
        %p2656 = pnand %p2654, %p2655
        %p2657 = pneg %p2656
        // Predicated region
        $region21: #{tpu_custom_call.1} parent=11 // pred_check
          _
        $region22: #{tpu_custom_call.1} parent=11 // pred_check_branch
          %2659 = sbr.rel (%p2656) target = $region24
        $region23: #{tpu_custom_call.1} parent=11 // pred_region
          %s2660 = ssub.s32 %s2651, %s63
          %v2661 = vstv %s2653
          %v2662 = vstv %s2652
          %vm2663 = vcmp.eq.s32.totalorder %v2159, %v2662
          %vm2664 = vcmp.eq.s32.totalorder %v2160, %v2662
          %vm2665 = vcmp.eq.s32.totalorder %v2161, %v2662
          %vm2666 = vcmp.eq.s32.totalorder %v2162, %v2662
          %vm2667 = vcmp.eq.s32.totalorder %v2163, %v2662
          %vm2668 = vcmp.eq.s32.totalorder %v2164, %v2662
          %vm2669 = vcmp.eq.s32.totalorder %v2165, %v2662
          %vm2670 = vcmp.eq.s32.totalorder %v2166, %v2662
          %vm2671 = vcmp.eq.s32.totalorder %v2167, %v2662
          %vm2672 = vcmp.eq.s32.totalorder %v2168, %v2662
          %vm2673 = vcmp.eq.s32.totalorder %v2169, %v2662
          %vm2674 = vcmp.eq.s32.totalorder %v2170, %v2662
          %vm2675 = vcmp.eq.s32.totalorder %v2171, %v2662
          %vm2676 = vcmp.eq.s32.totalorder %v2172, %v2662
          %vm2677 = vcmp.eq.s32.totalorder %v2173, %v2662
          %vm2678 = vcmp.eq.s32.totalorder %v2174, %v2662
          %vm2679 = vcmp.eq.s32.totalorder %v2175, %v2662
          %vm2680 = vcmp.eq.s32.totalorder %v2176, %v2662
          %vm2681 = vcmp.eq.s32.totalorder %v2177, %v2662
          %vm2682 = vcmp.eq.s32.totalorder %v2178, %v2662
          %vm2683 = vcmp.eq.s32.totalorder %v2179, %v2662
          %vm2684 = vcmp.eq.s32.totalorder %v2180, %v2662
          %vm2685 = vcmp.eq.s32.totalorder %v2181, %v2662
          %v2686 = vsel %vm2663, 1, 0
          %v2687 = vsel %vm2664, 1, 0
          %v2688 = vsel %vm2665, 1, 0
          %v2689 = vsel %vm2666, 1, 0
          %v2690 = vsel %vm2667, 1, 0
          %v2691 = vsel %vm2668, 1, 0
          %v2692 = vsel %vm2669, 1, 0
          %v2693 = vsel %vm2670, 1, 0
          %v2694 = vsel %vm2671, 1, 0
          %v2695 = vsel %vm2672, 1, 0
          %v2696 = vsel %vm2673, 1, 0
          %v2697 = vsel %vm2674, 1, 0
          %v2698 = vsel %vm2675, 1, 0
          %v2699 = vsel %vm2676, 1, 0
          %v2700 = vsel %vm2677, 1, 0
          %v2701 = vsel %vm2678, 1, 0
          %v2702 = vsel %vm2679, 1, 0
          %v2703 = vsel %vm2680, 1, 0
          %v2704 = vsel %vm2681, 1, 0
          %v2705 = vsel %vm2682, 1, 0
          %v2706 = vsel %vm2683, 1, 0
          %v2707 = vsel %vm2684, 1, 0
          %v2708 = vsel %vm2685, 1, 0
          %v2709 = vcombine.low %v2686, %v2687
          %v2710 = vcombine.low %v2688, %v2689
          %v2711 = vcombine.low %v2690, %v2691
          %v2712 = vcombine.low %v2692, %v2693
          %v2714 = vunpack.c.l.s4 1966171168
          %v2715 = vunpack.c.0.s8 %v2714
          %v2716 = vlaneseq
          %v2717 = vshrl.u32 %v2716, 7
          %v2718 = vsub.s32 %v2715, %v2717
          %v2719 = vrot.slane %v2709, %v2718
          %v2721 = vunpack.c.l.s4 1966171168
          %v2722 = vunpack.c.0.s8 %v2721
          %v2723 = vlaneseq
          %v2724 = vshrl.u32 %v2723, 7
          %v2725 = vsub.s32 %v2722, %v2724
          %v2726 = vrot.slane %v2710, %v2725
          %v2728 = vunpack.c.l.s4 1966171168
          %v2729 = vunpack.c.0.s8 %v2728
          %v2730 = vlaneseq
          %v2731 = vshrl.u32 %v2730, 7
          %v2732 = vsub.s32 %v2729, %v2731
          %v2733 = vrot.slane %v2711, %v2732
          %v2735 = vunpack.c.l.s4 1966171168
          %v2736 = vunpack.c.0.s8 %v2735
          %v2737 = vlaneseq
          %v2738 = vshrl.u32 %v2737, 7
          %v2739 = vsub.s32 %v2736, %v2738
          %v2740 = vrot.slane %v2712, %v2739
          %v2741 = vcombine.low %v2719, %v2726
          %v2742 = vcombine.low %v2733, %v2740
          %v2744 = vunpack.c.l.s4 1966171168
          %v2745 = vunpack.c.0.s8 %v2744
          %v2746 = vlaneseq
          %v2747 = vshrl.u32 %v2746, 7
          %v2748 = vsub.s32 %v2745, %v2747
          %v2749 = vrot.slane %v2741, %v2748
          %v2751 = vunpack.c.l.s4 1966171168
          %v2752 = vunpack.c.0.s8 %v2751
          %v2753 = vlaneseq
          %v2754 = vshrl.u32 %v2753, 7
          %v2755 = vsub.s32 %v2752, %v2754
          %v2756 = vrot.slane %v2742, %v2755
          %v2757 = vcombine.low %v2749, %v2756
          %v2758 = vcombine.low %v2694, %v2695
          %v2759 = vcombine.low %v2696, %v2697
          %v2760 = vcombine.low %v2698, %v2699
          %v2761 = vcombine.low %v2700, %v2701
          %v2763 = vunpack.c.l.s4 1966171168
          %v2764 = vunpack.c.0.s8 %v2763
          %v2765 = vlaneseq
          %v2766 = vshrl.u32 %v2765, 7
          %v2767 = vsub.s32 %v2764, %v2766
          %v2768 = vrot.slane %v2758, %v2767
          %v2770 = vunpack.c.l.s4 1966171168
          %v2771 = vunpack.c.0.s8 %v2770
          %v2772 = vlaneseq
          %v2773 = vshrl.u32 %v2772, 7
          %v2774 = vsub.s32 %v2771, %v2773
          %v2775 = vrot.slane %v2759, %v2774
          %v2777 = vunpack.c.l.s4 1966171168
          %v2778 = vunpack.c.0.s8 %v2777
          %v2779 = vlaneseq
          %v2780 = vshrl.u32 %v2779, 7
          %v2781 = vsub.s32 %v2778, %v2780
          %v2782 = vrot.slane %v2760, %v2781
          %v2784 = vunpack.c.l.s4 1966171168
          %v2785 = vunpack.c.0.s8 %v2784
          %v2786 = vlaneseq
          %v2787 = vshrl.u32 %v2786, 7
          %v2788 = vsub.s32 %v2785, %v2787
          %v2789 = vrot.slane %v2761, %v2788
          %v2790 = vcombine.low %v2768, %v2775
          %v2791 = vcombine.low %v2782, %v2789
          %v2793 = vunpack.c.l.s4 1966171168
          %v2794 = vunpack.c.0.s8 %v2793
          %v2795 = vlaneseq
          %v2796 = vshrl.u32 %v2795, 7
          %v2797 = vsub.s32 %v2794, %v2796
          %v2798 = vrot.slane %v2790, %v2797
          %v2800 = vunpack.c.l.s4 1966171168
          %v2801 = vunpack.c.0.s8 %v2800
          %v2802 = vlaneseq
          %v2803 = vshrl.u32 %v2802, 7
          %v2804 = vsub.s32 %v2801, %v2803
          %v2805 = vrot.slane %v2791, %v2804
          %v2806 = vcombine.low %v2798, %v2805
          %v2807 = vcombine.low %v2702, %v2703
          %v2808 = vcombine.low %v2704, %v2705
          %v2809 = vcombine.low %v2706, %v2707
          %v2811 = vunpack.c.l.s4 1966171168
          %v2812 = vunpack.c.0.s8 %v2811
          %v2813 = vlaneseq
          %v2814 = vshrl.u32 %v2813, 7
          %v2815 = vsub.s32 %v2812, %v2814
          %v2816 = vrot.slane %v2807, %v2815
          %v2818 = vunpack.c.l.s4 1966171168
          %v2819 = vunpack.c.0.s8 %v2818
          %v2820 = vlaneseq
          %v2821 = vshrl.u32 %v2820, 7
          %v2822 = vsub.s32 %v2819, %v2821
          %v2823 = vrot.slane %v2808, %v2822
          %v2825 = vunpack.c.l.s4 1966171168
          %v2826 = vunpack.c.0.s8 %v2825
          %v2827 = vlaneseq
          %v2828 = vshrl.u32 %v2827, 7
          %v2829 = vsub.s32 %v2826, %v2828
          %v2830 = vrot.slane %v2809, %v2829
          %v2832 = vunpack.c.l.s4 1966171168
          %v2833 = vunpack.c.0.s8 %v2832
          %v2834 = vlaneseq
          %v2835 = vshrl.u32 %v2834, 7
          %v2836 = vsub.s32 %v2833, %v2835
          %v2837 = vrot.slane %v2708, %v2836
          %v2838 = vcombine.low %v2816, %v2823
          %v2839 = vcombine.low %v2830, %v2837
          %v2841 = vunpack.c.l.s4 1966171168
          %v2842 = vunpack.c.0.s8 %v2841
          %v2843 = vlaneseq
          %v2844 = vshrl.u32 %v2843, 7
          %v2845 = vsub.s32 %v2842, %v2844
          %v2846 = vrot.slane %v2838, %v2845
          %v2848 = vunpack.c.l.s4 1966171168
          %v2849 = vunpack.c.0.s8 %v2848
          %v2850 = vlaneseq
          %v2851 = vshrl.u32 %v2850, 7
          %v2852 = vsub.s32 %v2849, %v2851
          %v2853 = vrot.slane %v2839, %v2852
          %v2854 = vcombine.low %v2846, %v2853
          %vm2855 = vcmp.ne.s32.totalorder %v2757, 0
          %vm2856 = vcmp.ne.s32.totalorder %v2806, 0
          %vm2857 = vcmp.ne.s32.totalorder %v2854, 0
          %s2858 = sshra.s32 %s2660, 3
          %s2859 = sand.u32 %s2660, 7
          %s2860 = sshra.s32 %s2660, 3
          %s2861 = sand.u32 %s2660, 7
          %s2862 = smul.u32 %s2858, 23
          %s2863 = smul.u32 %s2862, 8
          %s2864 = sadd.s32 %s2863, %s2861
          %s2865 = scalar_lea.vmem %s56, %s2864 [#allocation6]
          %2866 = vst.msk [vmem:[%s2865] ss:$8 sm:$0xf] %vm2855, %v2661
          %2867 = vst.msk [vmem:[%s2865] ss:$8 sm:$0xf0] %vm2855, %v2661
          %s2868 = sadd.s32 %s2862, 8
          %s2869 = smul.u32 %s2868, 8
          %s2870 = sadd.s32 %s2869, %s2861
          %s2871 = scalar_lea.vmem %s56, %s2870 [#allocation6]
          %2872 = vst.msk [vmem:[%s2871] ss:$8 sm:$0xf] %vm2856, %v2661
          %2873 = vst.msk [vmem:[%s2871] ss:$8 sm:$0xf0] %vm2856, %v2661
          %v2874 = vlaneseq
          %vm2875 = vcmp.ge.s32.totalorder %v2874, 0
          %vm2876 = vcmp.lt.s32.totalorder %v2874, 832
          %vm2877 = vmand %vm2875, %vm2876
          %vm2878 = vmand %vm2877, %vm2857
          %s2879 = sadd.s32 %s2862, 16
          %s2880 = smul.u32 %s2879, 8
          %s2881 = sadd.s32 %s2880, %s2861
          %s2882 = scalar_lea.vmem %s56, %s2881 [#allocation6]
          %2883 = vst.msk [vmem:[%s2882] ss:$8 sm:$0xf] %vm2878, %v2661
          %2884 = vst.msk [vmem:[%s2882] ss:$8 sm:$0x70] %vm2878, %v2661
        $region24: #{tpu_custom_call.1} parent=11 // pred_fallthru
          _
        %s2885 = sld [smem:[#allocation3 + $0x3]]
        %s2886 = sld [smem:[#allocation4 + $0x3]]
        %s2887 = sld [smem:[#allocation5 + $0x3]]
        %p2888 = scmp.ge.s32.totalorder %s2885, %s63
        %p2889 = scmp.lt.s32.totalorder %s2885, %s2186
        %p2890 = pnand %p2888, %p2889
        %p2891 = pneg %p2890
        // Predicated region
        $region25: #{tpu_custom_call.1} parent=11 // pred_check
          _
        $region26: #{tpu_custom_call.1} parent=11 // pred_check_branch
          %2893 = sbr.rel (%p2890) target = $region28
        $region27: #{tpu_custom_call.1} parent=11 // pred_region
          %s2894 = ssub.s32 %s2885, %s63
          %v2895 = vstv %s2887
          %v2896 = vstv %s2886
          %vm2897 = vcmp.eq.s32.totalorder %v2159, %v2896
          %vm2898 = vcmp.eq.s32.totalorder %v2160, %v2896
          %vm2899 = vcmp.eq.s32.totalorder %v2161, %v2896
          %vm2900 = vcmp.eq.s32.totalorder %v2162, %v2896
          %vm2901 = vcmp.eq.s32.totalorder %v2163, %v2896
          %vm2902 = vcmp.eq.s32.totalorder %v2164, %v2896
          %vm2903 = vcmp.eq.s32.totalorder %v2165, %v2896
          %vm2904 = vcmp.eq.s32.totalorder %v2166, %v2896
          %vm2905 = vcmp.eq.s32.totalorder %v2167, %v2896
          %vm2906 = vcmp.eq.s32.totalorder %v2168, %v2896
          %vm2907 = vcmp.eq.s32.totalorder %v2169, %v2896
          %vm2908 = vcmp.eq.s32.totalorder %v2170, %v2896
          %vm2909 = vcmp.eq.s32.totalorder %v2171, %v2896
          %vm2910 = vcmp.eq.s32.totalorder %v2172, %v2896
          %vm2911 = vcmp.eq.s32.totalorder %v2173, %v2896
          %vm2912 = vcmp.eq.s32.totalorder %v2174, %v2896
          %vm2913 = vcmp.eq.s32.totalorder %v2175, %v2896
          %vm2914 = vcmp.eq.s32.totalorder %v2176, %v2896
          %vm2915 = vcmp.eq.s32.totalorder %v2177, %v2896
          %vm2916 = vcmp.eq.s32.totalorder %v2178, %v2896
          %vm2917 = vcmp.eq.s32.totalorder %v2179, %v2896
          %vm2918 = vcmp.eq.s32.totalorder %v2180, %v2896
          %vm2919 = vcmp.eq.s32.totalorder %v2181, %v2896
          %v2920 = vsel %vm2897, 1, 0
          %v2921 = vsel %vm2898, 1, 0
          %v2922 = vsel %vm2899, 1, 0
          %v2923 = vsel %vm2900, 1, 0
          %v2924 = vsel %vm2901, 1, 0
          %v2925 = vsel %vm2902, 1, 0
          %v2926 = vsel %vm2903, 1, 0
          %v2927 = vsel %vm2904, 1, 0
          %v2928 = vsel %vm2905, 1, 0
          %v2929 = vsel %vm2906, 1, 0
          %v2930 = vsel %vm2907, 1, 0
          %v2931 = vsel %vm2908, 1, 0
          %v2932 = vsel %vm2909, 1, 0
          %v2933 = vsel %vm2910, 1, 0
          %v2934 = vsel %vm2911, 1, 0
          %v2935 = vsel %vm2912, 1, 0
          %v2936 = vsel %vm2913, 1, 0
          %v2937 = vsel %vm2914, 1, 0
          %v2938 = vsel %vm2915, 1, 0
          %v2939 = vsel %vm2916, 1, 0
          %v2940 = vsel %vm2917, 1, 0
          %v2941 = vsel %vm2918, 1, 0
          %v2942 = vsel %vm2919, 1, 0
          %v2943 = vcombine.low %v2920, %v2921
          %v2944 = vcombine.low %v2922, %v2923
          %v2945 = vcombine.low %v2924, %v2925
          %v2946 = vcombine.low %v2926, %v2927
          %v2948 = vunpack.c.l.s4 1966171168
          %v2949 = vunpack.c.0.s8 %v2948
          %v2950 = vlaneseq
          %v2951 = vshrl.u32 %v2950, 7
          %v2952 = vsub.s32 %v2949, %v2951
          %v2953 = vrot.slane %v2943, %v2952
          %v2955 = vunpack.c.l.s4 1966171168
          %v2956 = vunpack.c.0.s8 %v2955
          %v2957 = vlaneseq
          %v2958 = vshrl.u32 %v2957, 7
          %v2959 = vsub.s32 %v2956, %v2958
          %v2960 = vrot.slane %v2944, %v2959
          %v2962 = vunpack.c.l.s4 1966171168
          %v2963 = vunpack.c.0.s8 %v2962
          %v2964 = vlaneseq
          %v2965 = vshrl.u32 %v2964, 7
          %v2966 = vsub.s32 %v2963, %v2965
          %v2967 = vrot.slane %v2945, %v2966
          %v2969 = vunpack.c.l.s4 1966171168
          %v2970 = vunpack.c.0.s8 %v2969
          %v2971 = vlaneseq
          %v2972 = vshrl.u32 %v2971, 7
          %v2973 = vsub.s32 %v2970, %v2972
          %v2974 = vrot.slane %v2946, %v2973
          %v2975 = vcombine.low %v2953, %v2960
          %v2976 = vcombine.low %v2967, %v2974
          %v2978 = vunpack.c.l.s4 1966171168
          %v2979 = vunpack.c.0.s8 %v2978
          %v2980 = vlaneseq
          %v2981 = vshrl.u32 %v2980, 7
          %v2982 = vsub.s32 %v2979, %v2981
          %v2983 = vrot.slane %v2975, %v2982
          %v2985 = vunpack.c.l.s4 1966171168
          %v2986 = vunpack.c.0.s8 %v2985
          %v2987 = vlaneseq
          %v2988 = vshrl.u32 %v2987, 7
          %v2989 = vsub.s32 %v2986, %v2988
          %v2990 = vrot.slane %v2976, %v2989
          %v2991 = vcombine.low %v2983, %v2990
          %v2992 = vcombine.low %v2928, %v2929
          %v2993 = vcombine.low %v2930, %v2931
          %v2994 = vcombine.low %v2932, %v2933
          %v2995 = vcombine.low %v2934, %v2935
          %v2997 = vunpack.c.l.s4 1966171168
          %v2998 = vunpack.c.0.s8 %v2997
          %v2999 = vlaneseq
          %v3000 = vshrl.u32 %v2999, 7
          %v3001 = vsub.s32 %v2998, %v3000
          %v3002 = vrot.slane %v2992, %v3001
          %v3004 = vunpack.c.l.s4 1966171168
          %v3005 = vunpack.c.0.s8 %v3004
          %v3006 = vlaneseq
          %v3007 = vshrl.u32 %v3006, 7
          %v3008 = vsub.s32 %v3005, %v3007
          %v3009 = vrot.slane %v2993, %v3008
          %v3011 = vunpack.c.l.s4 1966171168
          %v3012 = vunpack.c.0.s8 %v3011
          %v3013 = vlaneseq
          %v3014 = vshrl.u32 %v3013, 7
          %v3015 = vsub.s32 %v3012, %v3014
          %v3016 = vrot.slane %v2994, %v3015
          %v3018 = vunpack.c.l.s4 1966171168
          %v3019 = vunpack.c.0.s8 %v3018
          %v3020 = vlaneseq
          %v3021 = vshrl.u32 %v3020, 7
          %v3022 = vsub.s32 %v3019, %v3021
          %v3023 = vrot.slane %v2995, %v3022
          %v3024 = vcombine.low %v3002, %v3009
          %v3025 = vcombine.low %v3016, %v3023
          %v3027 = vunpack.c.l.s4 1966171168
          %v3028 = vunpack.c.0.s8 %v3027
          %v3029 = vlaneseq
          %v3030 = vshrl.u32 %v3029, 7
          %v3031 = vsub.s32 %v3028, %v3030
          %v3032 = vrot.slane %v3024, %v3031
          %v3034 = vunpack.c.l.s4 1966171168
          %v3035 = vunpack.c.0.s8 %v3034
          %v3036 = vlaneseq
          %v3037 = vshrl.u32 %v3036, 7
          %v3038 = vsub.s32 %v3035, %v3037
          %v3039 = vrot.slane %v3025, %v3038
          %v3040 = vcombine.low %v3032, %v3039
          %v3041 = vcombine.low %v2936, %v2937
          %v3042 = vcombine.low %v2938, %v2939
          %v3043 = vcombine.low %v2940, %v2941
          %v3045 = vunpack.c.l.s4 1966171168
          %v3046 = vunpack.c.0.s8 %v3045
          %v3047 = vlaneseq
          %v3048 = vshrl.u32 %v3047, 7
          %v3049 = vsub.s32 %v3046, %v3048
          %v3050 = vrot.slane %v3041, %v3049
          %v3052 = vunpack.c.l.s4 1966171168
          %v3053 = vunpack.c.0.s8 %v3052
          %v3054 = vlaneseq
          %v3055 = vshrl.u32 %v3054, 7
          %v3056 = vsub.s32 %v3053, %v3055
          %v3057 = vrot.slane %v3042, %v3056
          %v3059 = vunpack.c.l.s4 1966171168
          %v3060 = vunpack.c.0.s8 %v3059
          %v3061 = vlaneseq
          %v3062 = vshrl.u32 %v3061, 7
          %v3063 = vsub.s32 %v3060, %v3062
          %v3064 = vrot.slane %v3043, %v3063
          %v3066 = vunpack.c.l.s4 1966171168
          %v3067 = vunpack.c.0.s8 %v3066
          %v3068 = vlaneseq
          %v3069 = vshrl.u32 %v3068, 7
          %v3070 = vsub.s32 %v3067, %v3069
          %v3071 = vrot.slane %v2942, %v3070
          %v3072 = vcombine.low %v3050, %v3057
          %v3073 = vcombine.low %v3064, %v3071
          %v3075 = vunpack.c.l.s4 1966171168
          %v3076 = vunpack.c.0.s8 %v3075
          %v3077 = vlaneseq
          %v3078 = vshrl.u32 %v3077, 7
          %v3079 = vsub.s32 %v3076, %v3078
          %v3080 = vrot.slane %v3072, %v3079
          %v3082 = vunpack.c.l.s4 1966171168
          %v3083 = vunpack.c.0.s8 %v3082
          %v3084 = vlaneseq
          %v3085 = vshrl.u32 %v3084, 7
          %v3086 = vsub.s32 %v3083, %v3085
          %v3087 = vrot.slane %v3073, %v3086
          %v3088 = vcombine.low %v3080, %v3087
          %vm3089 = vcmp.ne.s32.totalorder %v2991, 0
          %vm3090 = vcmp.ne.s32.totalorder %v3040, 0
          %vm3091 = vcmp.ne.s32.totalorder %v3088, 0
          %s3092 = sshra.s32 %s2894, 3
          %s3093 = sand.u32 %s2894, 7
          %s3094 = sshra.s32 %s2894, 3
          %s3095 = sand.u32 %s2894, 7
          %s3096 = smul.u32 %s3092, 23
          %s3097 = smul.u32 %s3096, 8
          %s3098 = sadd.s32 %s3097, %s3095
          %s3099 = scalar_lea.vmem %s56, %s3098 [#allocation6]
          %3100 = vst.msk [vmem:[%s3099] ss:$8 sm:$0xf] %vm3089, %v2895
          %3101 = vst.msk [vmem:[%s3099] ss:$8 sm:$0xf0] %vm3089, %v2895
          %s3102 = sadd.s32 %s3096, 8
          %s3103 = smul.u32 %s3102, 8
          %s3104 = sadd.s32 %s3103, %s3095
          %s3105 = scalar_lea.vmem %s56, %s3104 [#allocation6]
          %3106 = vst.msk [vmem:[%s3105] ss:$8 sm:$0xf] %vm3090, %v2895
          %3107 = vst.msk [vmem:[%s3105] ss:$8 sm:$0xf0] %vm3090, %v2895
          %v3108 = vlaneseq
          %vm3109 = vcmp.ge.s32.totalorder %v3108, 0
          %vm3110 = vcmp.lt.s32.totalorder %v3108, 832
          %vm3111 = vmand %vm3109, %vm3110
          %vm3112 = vmand %vm3111, %vm3091
          %s3113 = sadd.s32 %s3096, 16
          %s3114 = smul.u32 %s3113, 8
          %s3115 = sadd.s32 %s3114, %s3095
          %s3116 = scalar_lea.vmem %s56, %s3115 [#allocation6]
          %3117 = vst.msk [vmem:[%s3116] ss:$8 sm:$0xf] %vm3112, %v2895
          %3118 = vst.msk [vmem:[%s3116] ss:$8 sm:$0x70] %vm3112, %v2895
        $region28: #{tpu_custom_call.1} parent=11 // pred_fallthru
          _
        %s3119 = sld [smem:[#allocation3 + $0x4]]
        %s3120 = sld [smem:[#allocation4 + $0x4]]
        %s3121 = sld [smem:[#allocation5 + $0x4]]
        %p3122 = scmp.ge.s32.totalorder %s3119, %s63
        %p3123 = scmp.lt.s32.totalorder %s3119, %s2186
        %p3124 = pnand %p3122, %p3123
        %p3125 = pneg %p3124
        // Predicated region
        $region29: #{tpu_custom_call.1} parent=11 // pred_check
          _
        $region30: #{tpu_custom_call.1} parent=11 // pred_check_branch
          %3127 = sbr.rel (%p3124) target = $region32
        $region31: #{tpu_custom_call.1} parent=11 // pred_region
          %s3128 = ssub.s32 %s3119, %s63
          %v3129 = vstv %s3121
          %v3130 = vstv %s3120
          %vm3131 = vcmp.eq.s32.totalorder %v2159, %v3130
          %vm3132 = vcmp.eq.s32.totalorder %v2160, %v3130
          %vm3133 = vcmp.eq.s32.totalorder %v2161, %v3130
          %vm3134 = vcmp.eq.s32.totalorder %v2162, %v3130
          %vm3135 = vcmp.eq.s32.totalorder %v2163, %v3130
          %vm3136 = vcmp.eq.s32.totalorder %v2164, %v3130
          %vm3137 = vcmp.eq.s32.totalorder %v2165, %v3130
          %vm3138 = vcmp.eq.s32.totalorder %v2166, %v3130
          %vm3139 = vcmp.eq.s32.totalorder %v2167, %v3130
          %vm3140 = vcmp.eq.s32.totalorder %v2168, %v3130
          %vm3141 = vcmp.eq.s32.totalorder %v2169, %v3130
          %vm3142 = vcmp.eq.s32.totalorder %v2170, %v3130
          %vm3143 = vcmp.eq.s32.totalorder %v2171, %v3130
          %vm3144 = vcmp.eq.s32.totalorder %v2172, %v3130
          %vm3145 = vcmp.eq.s32.totalorder %v2173, %v3130
          %vm3146 = vcmp.eq.s32.totalorder %v2174, %v3130
          %vm3147 = vcmp.eq.s32.totalorder %v2175, %v3130
          %vm3148 = vcmp.eq.s32.totalorder %v2176, %v3130
          %vm3149 = vcmp.eq.s32.totalorder %v2177, %v3130
          %vm3150 = vcmp.eq.s32.totalorder %v2178, %v3130
          %vm3151 = vcmp.eq.s32.totalorder %v2179, %v3130
          %vm3152 = vcmp.eq.s32.totalorder %v2180, %v3130
          %vm3153 = vcmp.eq.s32.totalorder %v2181, %v3130
          %v3154 = vsel %vm3131, 1, 0
          %v3155 = vsel %vm3132, 1, 0
          %v3156 = vsel %vm3133, 1, 0
          %v3157 = vsel %vm3134, 1, 0
          %v3158 = vsel %vm3135, 1, 0
          %v3159 = vsel %vm3136, 1, 0
          %v3160 = vsel %vm3137, 1, 0
          %v3161 = vsel %vm3138, 1, 0
          %v3162 = vsel %vm3139, 1, 0
          %v3163 = vsel %vm3140, 1, 0
          %v3164 = vsel %vm3141, 1, 0
          %v3165 = vsel %vm3142, 1, 0
          %v3166 = vsel %vm3143, 1, 0
          %v3167 = vsel %vm3144, 1, 0
          %v3168 = vsel %vm3145, 1, 0
          %v3169 = vsel %vm3146, 1, 0
          %v3170 = vsel %vm3147, 1, 0
          %v3171 = vsel %vm3148, 1, 0
          %v3172 = vsel %vm3149, 1, 0
          %v3173 = vsel %vm3150, 1, 0
          %v3174 = vsel %vm3151, 1, 0
          %v3175 = vsel %vm3152, 1, 0
          %v3176 = vsel %vm3153, 1, 0
          %v3177 = vcombine.low %v3154, %v3155
          %v3178 = vcombine.low %v3156, %v3157
          %v3179 = vcombine.low %v3158, %v3159
          %v3180 = vcombine.low %v3160, %v3161
          %v3182 = vunpack.c.l.s4 1966171168
          %v3183 = vunpack.c.0.s8 %v3182
          %v3184 = vlaneseq
          %v3185 = vshrl.u32 %v3184, 7
          %v3186 = vsub.s32 %v3183, %v3185
          %v3187 = vrot.slane %v3177, %v3186
          %v3189 = vunpack.c.l.s4 1966171168
          %v3190 = vunpack.c.0.s8 %v3189
          %v3191 = vlaneseq
          %v3192 = vshrl.u32 %v3191, 7
          %v3193 = vsub.s32 %v3190, %v3192
          %v3194 = vrot.slane %v3178, %v3193
          %v3196 = vunpack.c.l.s4 1966171168
          %v3197 = vunpack.c.0.s8 %v3196
          %v3198 = vlaneseq
          %v3199 = vshrl.u32 %v3198, 7
          %v3200 = vsub.s32 %v3197, %v3199
          %v3201 = vrot.slane %v3179, %v3200
          %v3203 = vunpack.c.l.s4 1966171168
          %v3204 = vunpack.c.0.s8 %v3203
          %v3205 = vlaneseq
          %v3206 = vshrl.u32 %v3205, 7
          %v3207 = vsub.s32 %v3204, %v3206
          %v3208 = vrot.slane %v3180, %v3207
          %v3209 = vcombine.low %v3187, %v3194
          %v3210 = vcombine.low %v3201, %v3208
          %v3212 = vunpack.c.l.s4 1966171168
          %v3213 = vunpack.c.0.s8 %v3212
          %v3214 = vlaneseq
          %v3215 = vshrl.u32 %v3214, 7
          %v3216 = vsub.s32 %v3213, %v3215
          %v3217 = vrot.slane %v3209, %v3216
          %v3219 = vunpack.c.l.s4 1966171168
          %v3220 = vunpack.c.0.s8 %v3219
          %v3221 = vlaneseq
          %v3222 = vshrl.u32 %v3221, 7
          %v3223 = vsub.s32 %v3220, %v3222
          %v3224 = vrot.slane %v3210, %v3223
          %v3225 = vcombine.low %v3217, %v3224
          %v3226 = vcombine.low %v3162, %v3163
          %v3227 = vcombine.low %v3164, %v3165
          %v3228 = vcombine.low %v3166, %v3167
          %v3229 = vcombine.low %v3168, %v3169
          %v3231 = vunpack.c.l.s4 1966171168
          %v3232 = vunpack.c.0.s8 %v3231
          %v3233 = vlaneseq
          %v3234 = vshrl.u32 %v3233, 7
          %v3235 = vsub.s32 %v3232, %v3234
          %v3236 = vrot.slane %v3226, %v3235
          %v3238 = vunpack.c.l.s4 1966171168
          %v3239 = vunpack.c.0.s8 %v3238
          %v3240 = vlaneseq
          %v3241 = vshrl.u32 %v3240, 7
          %v3242 = vsub.s32 %v3239, %v3241
          %v3243 = vrot.slane %v3227, %v3242
          %v3245 = vunpack.c.l.s4 1966171168
          %v3246 = vunpack.c.0.s8 %v3245
          %v3247 = vlaneseq
          %v3248 = vshrl.u32 %v3247, 7
          %v3249 = vsub.s32 %v3246, %v3248
          %v3250 = vrot.slane %v3228, %v3249
          %v3252 = vunpack.c.l.s4 1966171168
          %v3253 = vunpack.c.0.s8 %v3252
          %v3254 = vlaneseq
          %v3255 = vshrl.u32 %v3254, 7
          %v3256 = vsub.s32 %v3253, %v3255
          %v3257 = vrot.slane %v3229, %v3256
          %v3258 = vcombine.low %v3236, %v3243
          %v3259 = vcombine.low %v3250, %v3257
          %v3261 = vunpack.c.l.s4 1966171168
          %v3262 = vunpack.c.0.s8 %v3261
          %v3263 = vlaneseq
          %v3264 = vshrl.u32 %v3263, 7
          %v3265 = vsub.s32 %v3262, %v3264
          %v3266 = vrot.slane %v3258, %v3265
          %v3268 = vunpack.c.l.s4 1966171168
          %v3269 = vunpack.c.0.s8 %v3268
          %v3270 = vlaneseq
          %v3271 = vshrl.u32 %v3270, 7
          %v3272 = vsub.s32 %v3269, %v3271
          %v3273 = vrot.slane %v3259, %v3272
          %v3274 = vcombine.low %v3266, %v3273
          %v3275 = vcombine.low %v3170, %v3171
          %v3276 = vcombine.low %v3172, %v3173
          %v3277 = vcombine.low %v3174, %v3175
          %v3279 = vunpack.c.l.s4 1966171168
          %v3280 = vunpack.c.0.s8 %v3279
          %v3281 = vlaneseq
          %v3282 = vshrl.u32 %v3281, 7
          %v3283 = vsub.s32 %v3280, %v3282
          %v3284 = vrot.slane %v3275, %v3283
          %v3286 = vunpack.c.l.s4 1966171168
          %v3287 = vunpack.c.0.s8 %v3286
          %v3288 = vlaneseq
          %v3289 = vshrl.u32 %v3288, 7
          %v3290 = vsub.s32 %v3287, %v3289
          %v3291 = vrot.slane %v3276, %v3290
          %v3293 = vunpack.c.l.s4 1966171168
          %v3294 = vunpack.c.0.s8 %v3293
          %v3295 = vlaneseq
          %v3296 = vshrl.u32 %v3295, 7
          %v3297 = vsub.s32 %v3294, %v3296
          %v3298 = vrot.slane %v3277, %v3297
          %v3300 = vunpack.c.l.s4 1966171168
          %v3301 = vunpack.c.0.s8 %v3300
          %v3302 = vlaneseq
          %v3303 = vshrl.u32 %v3302, 7
          %v3304 = vsub.s32 %v3301, %v3303
          %v3305 = vrot.slane %v3176, %v3304
          %v3306 = vcombine.low %v3284, %v3291
          %v3307 = vcombine.low %v3298, %v3305
          %v3309 = vunpack.c.l.s4 1966171168
          %v3310 = vunpack.c.0.s8 %v3309
          %v3311 = vlaneseq
          %v3312 = vshrl.u32 %v3311, 7
          %v3313 = vsub.s32 %v3310, %v3312
          %v3314 = vrot.slane %v3306, %v3313
          %v3316 = vunpack.c.l.s4 1966171168
          %v3317 = vunpack.c.0.s8 %v3316
          %v3318 = vlaneseq
          %v3319 = vshrl.u32 %v3318, 7
          %v3320 = vsub.s32 %v3317, %v3319
          %v3321 = vrot.slane %v3307, %v3320
          %v3322 = vcombine.low %v3314, %v3321
          %vm3323 = vcmp.ne.s32.totalorder %v3225, 0
          %vm3324 = vcmp.ne.s32.totalorder %v3274, 0
          %vm3325 = vcmp.ne.s32.totalorder %v3322, 0
          %s3326 = sshra.s32 %s3128, 3
          %s3327 = sand.u32 %s3128, 7
          %s3328 = sshra.s32 %s3128, 3
          %s3329 = sand.u32 %s3128, 7
          %s3330 = smul.u32 %s3326, 23
          %s3331 = smul.u32 %s3330, 8
          %s3332 = sadd.s32 %s3331, %s3329
          %s3333 = scalar_lea.vmem %s56, %s3332 [#allocation6]
          %3334 = vst.msk [vmem:[%s3333] ss:$8 sm:$0xf] %vm3323, %v3129
          %3335 = vst.msk [vmem:[%s3333] ss:$8 sm:$0xf0] %vm3323, %v3129
          %s3336 = sadd.s32 %s3330, 8
          %s3337 = smul.u32 %s3336, 8
          %s3338 = sadd.s32 %s3337, %s3329
          %s3339 = scalar_lea.vmem %s56, %s3338 [#allocation6]
          %3340 = vst.msk [vmem:[%s3339] ss:$8 sm:$0xf] %vm3324, %v3129
          %3341 = vst.msk [vmem:[%s3339] ss:$8 sm:$0xf0] %vm3324, %v3129
          %v3342 = vlaneseq
          %vm3343 = vcmp.ge.s32.totalorder %v3342, 0
          %vm3344 = vcmp.lt.s32.totalorder %v3342, 832
          %vm3345 = vmand %vm3343, %vm3344
          %vm3346 = vmand %vm3345, %vm3325
          %s3347 = sadd.s32 %s3330, 16
          %s3348 = smul.u32 %s3347, 8
          %s3349 = sadd.s32 %s3348, %s3329
          %s3350 = scalar_lea.vmem %s56, %s3349 [#allocation6]
          %3351 = vst.msk [vmem:[%s3350] ss:$8 sm:$0xf] %vm3346, %v3129
          %3352 = vst.msk [vmem:[%s3350] ss:$8 sm:$0x70] %vm3346, %v3129
        $region32: #{tpu_custom_call.1} parent=11 // pred_fallthru
          _
        %s3353 = sld [smem:[#allocation3 + $0x5]]
        %s3354 = sld [smem:[#allocation4 + $0x5]]
        %s3355 = sld [smem:[#allocation5 + $0x5]]
        %p3356 = scmp.ge.s32.totalorder %s3353, %s63
        %p3357 = scmp.lt.s32.totalorder %s3353, %s2186
        %p3358 = pnand %p3356, %p3357
        %p3359 = pneg %p3358
        // Predicated region
        $region33: #{tpu_custom_call.1} parent=11 // pred_check
          _
        $region34: #{tpu_custom_call.1} parent=11 // pred_check_branch
          %3361 = sbr.rel (%p3358) target = $region36
        $region35: #{tpu_custom_call.1} parent=11 // pred_region
          %s3362 = ssub.s32 %s3353, %s63
          %v3363 = vstv %s3355
          %v3364 = vstv %s3354
          %vm3365 = vcmp.eq.s32.totalorder %v2159, %v3364
          %vm3366 = vcmp.eq.s32.totalorder %v2160, %v3364
          %vm3367 = vcmp.eq.s32.totalorder %v2161, %v3364
          %vm3368 = vcmp.eq.s32.totalorder %v2162, %v3364
          %vm3369 = vcmp.eq.s32.totalorder %v2163, %v3364
          %vm3370 = vcmp.eq.s32.totalorder %v2164, %v3364
          %vm3371 = vcmp.eq.s32.totalorder %v2165, %v3364
          %vm3372 = vcmp.eq.s32.totalorder %v2166, %v3364
          %vm3373 = vcmp.eq.s32.totalorder %v2167, %v3364
          %vm3374 = vcmp.eq.s32.totalorder %v2168, %v3364
          %vm3375 = vcmp.eq.s32.totalorder %v2169, %v3364
          %vm3376 = vcmp.eq.s32.totalorder %v2170, %v3364
          %vm3377 = vcmp.eq.s32.totalorder %v2171, %v3364
          %vm3378 = vcmp.eq.s32.totalorder %v2172, %v3364
          %vm3379 = vcmp.eq.s32.totalorder %v2173, %v3364
          %vm3380 = vcmp.eq.s32.totalorder %v2174, %v3364
          %vm3381 = vcmp.eq.s32.totalorder %v2175, %v3364
          %vm3382 = vcmp.eq.s32.totalorder %v2176, %v3364
          %vm3383 = vcmp.eq.s32.totalorder %v2177, %v3364
          %vm3384 = vcmp.eq.s32.totalorder %v2178, %v3364
          %vm3385 = vcmp.eq.s32.totalorder %v2179, %v3364
          %vm3386 = vcmp.eq.s32.totalorder %v2180, %v3364
          %vm3387 = vcmp.eq.s32.totalorder %v2181, %v3364
          %v3388 = vsel %vm3365, 1, 0
          %v3389 = vsel %vm3366, 1, 0
          %v3390 = vsel %vm3367, 1, 0
          %v3391 = vsel %vm3368, 1, 0
          %v3392 = vsel %vm3369, 1, 0
          %v3393 = vsel %vm3370, 1, 0
          %v3394 = vsel %vm3371, 1, 0
          %v3395 = vsel %vm3372, 1, 0
          %v3396 = vsel %vm3373, 1, 0
          %v3397 = vsel %vm3374, 1, 0
          %v3398 = vsel %vm3375, 1, 0
          %v3399 = vsel %vm3376, 1, 0
          %v3400 = vsel %vm3377, 1, 0
          %v3401 = vsel %vm3378, 1, 0
          %v3402 = vsel %vm3379, 1, 0
          %v3403 = vsel %vm3380, 1, 0
          %v3404 = vsel %vm3381, 1, 0
          %v3405 = vsel %vm3382, 1, 0
          %v3406 = vsel %vm3383, 1, 0
          %v3407 = vsel %vm3384, 1, 0
          %v3408 = vsel %vm3385, 1, 0
          %v3409 = vsel %vm3386, 1, 0
          %v3410 = vsel %vm3387, 1, 0
          %v3411 = vcombine.low %v3388, %v3389
          %v3412 = vcombine.low %v3390, %v3391
          %v3413 = vcombine.low %v3392, %v3393
          %v3414 = vcombine.low %v3394, %v3395
          %v3416 = vunpack.c.l.s4 1966171168
          %v3417 = vunpack.c.0.s8 %v3416
          %v3418 = vlaneseq
          %v3419 = vshrl.u32 %v3418, 7
          %v3420 = vsub.s32 %v3417, %v3419
          %v3421 = vrot.slane %v3411, %v3420
          %v3423 = vunpack.c.l.s4 1966171168
          %v3424 = vunpack.c.0.s8 %v3423
          %v3425 = vlaneseq
          %v3426 = vshrl.u32 %v3425, 7
          %v3427 = vsub.s32 %v3424, %v3426
          %v3428 = vrot.slane %v3412, %v3427
          %v3430 = vunpack.c.l.s4 1966171168
          %v3431 = vunpack.c.0.s8 %v3430
          %v3432 = vlaneseq
          %v3433 = vshrl.u32 %v3432, 7
          %v3434 = vsub.s32 %v3431, %v3433
          %v3435 = vrot.slane %v3413, %v3434
          %v3437 = vunpack.c.l.s4 1966171168
          %v3438 = vunpack.c.0.s8 %v3437
          %v3439 = vlaneseq
          %v3440 = vshrl.u32 %v3439, 7
          %v3441 = vsub.s32 %v3438, %v3440
          %v3442 = vrot.slane %v3414, %v3441
          %v3443 = vcombine.low %v3421, %v3428
          %v3444 = vcombine.low %v3435, %v3442
          %v3446 = vunpack.c.l.s4 1966171168
          %v3447 = vunpack.c.0.s8 %v3446
          %v3448 = vlaneseq
          %v3449 = vshrl.u32 %v3448, 7
          %v3450 = vsub.s32 %v3447, %v3449
          %v3451 = vrot.slane %v3443, %v3450
          %v3453 = vunpack.c.l.s4 1966171168
          %v3454 = vunpack.c.0.s8 %v3453
          %v3455 = vlaneseq
          %v3456 = vshrl.u32 %v3455, 7
          %v3457 = vsub.s32 %v3454, %v3456
          %v3458 = vrot.slane %v3444, %v3457
          %v3459 = vcombine.low %v3451, %v3458
          %v3460 = vcombine.low %v3396, %v3397
          %v3461 = vcombine.low %v3398, %v3399
          %v3462 = vcombine.low %v3400, %v3401
          %v3463 = vcombine.low %v3402, %v3403
          %v3465 = vunpack.c.l.s4 1966171168
          %v3466 = vunpack.c.0.s8 %v3465
          %v3467 = vlaneseq
          %v3468 = vshrl.u32 %v3467, 7
          %v3469 = vsub.s32 %v3466, %v3468
          %v3470 = vrot.slane %v3460, %v3469
          %v3472 = vunpack.c.l.s4 1966171168
          %v3473 = vunpack.c.0.s8 %v3472
          %v3474 = vlaneseq
          %v3475 = vshrl.u32 %v3474, 7
          %v3476 = vsub.s32 %v3473, %v3475
          %v3477 = vrot.slane %v3461, %v3476
          %v3479 = vunpack.c.l.s4 1966171168
          %v3480 = vunpack.c.0.s8 %v3479
          %v3481 = vlaneseq
          %v3482 = vshrl.u32 %v3481, 7
          %v3483 = vsub.s32 %v3480, %v3482
          %v3484 = vrot.slane %v3462, %v3483
          %v3486 = vunpack.c.l.s4 1966171168
          %v3487 = vunpack.c.0.s8 %v3486
          %v3488 = vlaneseq
          %v3489 = vshrl.u32 %v3488, 7
          %v3490 = vsub.s32 %v3487, %v3489
          %v3491 = vrot.slane %v3463, %v3490
          %v3492 = vcombine.low %v3470, %v3477
          %v3493 = vcombine.low %v3484, %v3491
          %v3495 = vunpack.c.l.s4 1966171168
          %v3496 = vunpack.c.0.s8 %v3495
          %v3497 = vlaneseq
          %v3498 = vshrl.u32 %v3497, 7
          %v3499 = vsub.s32 %v3496, %v3498
          %v3500 = vrot.slane %v3492, %v3499
          %v3502 = vunpack.c.l.s4 1966171168
          %v3503 = vunpack.c.0.s8 %v3502
          %v3504 = vlaneseq
          %v3505 = vshrl.u32 %v3504, 7
          %v3506 = vsub.s32 %v3503, %v3505
          %v3507 = vrot.slane %v3493, %v3506
          %v3508 = vcombine.low %v3500, %v3507
          %v3509 = vcombine.low %v3404, %v3405
          %v3510 = vcombine.low %v3406, %v3407
          %v3511 = vcombine.low %v3408, %v3409
          %v3513 = vunpack.c.l.s4 1966171168
          %v3514 = vunpack.c.0.s8 %v3513
          %v3515 = vlaneseq
          %v3516 = vshrl.u32 %v3515, 7
          %v3517 = vsub.s32 %v3514, %v3516
          %v3518 = vrot.slane %v3509, %v3517
          %v3520 = vunpack.c.l.s4 1966171168
          %v3521 = vunpack.c.0.s8 %v3520
          %v3522 = vlaneseq
          %v3523 = vshrl.u32 %v3522, 7
          %v3524 = vsub.s32 %v3521, %v3523
          %v3525 = vrot.slane %v3510, %v3524
          %v3527 = vunpack.c.l.s4 1966171168
          %v3528 = vunpack.c.0.s8 %v3527
          %v3529 = vlaneseq
          %v3530 = vshrl.u32 %v3529, 7
          %v3531 = vsub.s32 %v3528, %v3530
          %v3532 = vrot.slane %v3511, %v3531
          %v3534 = vunpack.c.l.s4 1966171168
          %v3535 = vunpack.c.0.s8 %v3534
          %v3536 = vlaneseq
          %v3537 = vshrl.u32 %v3536, 7
          %v3538 = vsub.s32 %v3535, %v3537
          %v3539 = vrot.slane %v3410, %v3538
          %v3540 = vcombine.low %v3518, %v3525
          %v3541 = vcombine.low %v3532, %v3539
          %v3543 = vunpack.c.l.s4 1966171168
          %v3544 = vunpack.c.0.s8 %v3543
          %v3545 = vlaneseq
          %v3546 = vshrl.u32 %v3545, 7
          %v3547 = vsub.s32 %v3544, %v3546
          %v3548 = vrot.slane %v3540, %v3547
          %v3550 = vunpack.c.l.s4 1966171168
          %v3551 = vunpack.c.0.s8 %v3550
          %v3552 = vlaneseq
          %v3553 = vshrl.u32 %v3552, 7
          %v3554 = vsub.s32 %v3551, %v3553
          %v3555 = vrot.slane %v3541, %v3554
          %v3556 = vcombine.low %v3548, %v3555
          %vm3557 = vcmp.ne.s32.totalorder %v3459, 0
          %vm3558 = vcmp.ne.s32.totalorder %v3508, 0
          %vm3559 = vcmp.ne.s32.totalorder %v3556, 0
          %s3560 = sshra.s32 %s3362, 3
          %s3561 = sand.u32 %s3362, 7
          %s3562 = sshra.s32 %s3362, 3
          %s3563 = sand.u32 %s3362, 7
          %s3564 = smul.u32 %s3560, 23
          %s3565 = smul.u32 %s3564, 8
          %s3566 = sadd.s32 %s3565, %s3563
          %s3567 = scalar_lea.vmem %s56, %s3566 [#allocation6]
          %3568 = vst.msk [vmem:[%s3567] ss:$8 sm:$0xf] %vm3557, %v3363
          %3569 = vst.msk [vmem:[%s3567] ss:$8 sm:$0xf0] %vm3557, %v3363
          %s3570 = sadd.s32 %s3564, 8
          %s3571 = smul.u32 %s3570, 8
          %s3572 = sadd.s32 %s3571, %s3563
          %s3573 = scalar_lea.vmem %s56, %s3572 [#allocation6]
          %3574 = vst.msk [vmem:[%s3573] ss:$8 sm:$0xf] %vm3558, %v3363
          %3575 = vst.msk [vmem:[%s3573] ss:$8 sm:$0xf0] %vm3558, %v3363
          %v3576 = vlaneseq
          %vm3577 = vcmp.ge.s32.totalorder %v3576, 0
          %vm3578 = vcmp.lt.s32.totalorder %v3576, 832
          %vm3579 = vmand %vm3577, %vm3578
          %vm3580 = vmand %vm3579, %vm3559
          %s3581 = sadd.s32 %s3564, 16
          %s3582 = smul.u32 %s3581, 8
          %s3583 = sadd.s32 %s3582, %s3563
          %s3584 = scalar_lea.vmem %s56, %s3583 [#allocation6]
          %3585 = vst.msk [vmem:[%s3584] ss:$8 sm:$0xf] %vm3580, %v3363
          %3586 = vst.msk [vmem:[%s3584] ss:$8 sm:$0x70] %vm3580, %v3363
        $region36: #{tpu_custom_call.1} parent=11 // pred_fallthru
          _
        %s3587 = sld [smem:[#allocation3 + $0x6]]
        %s3588 = sld [smem:[#allocation4 + $0x6]]
        %s3589 = sld [smem:[#allocation5 + $0x6]]
        %p3590 = scmp.ge.s32.totalorder %s3587, %s63
        %p3591 = scmp.lt.s32.totalorder %s3587, %s2186
        %p3592 = pnand %p3590, %p3591
        %p3593 = pneg %p3592
        // Predicated region
        $region37: #{tpu_custom_call.1} parent=11 // pred_check
          _
        $region38: #{tpu_custom_call.1} parent=11 // pred_check_branch
          %3595 = sbr.rel (%p3592) target = $region40
        $region39: #{tpu_custom_call.1} parent=11 // pred_region
          %s3596 = ssub.s32 %s3587, %s63
          %v3597 = vstv %s3589
          %v3598 = vstv %s3588
          %vm3599 = vcmp.eq.s32.totalorder %v2159, %v3598
          %vm3600 = vcmp.eq.s32.totalorder %v2160, %v3598
          %vm3601 = vcmp.eq.s32.totalorder %v2161, %v3598
          %vm3602 = vcmp.eq.s32.totalorder %v2162, %v3598
          %vm3603 = vcmp.eq.s32.totalorder %v2163, %v3598
          %vm3604 = vcmp.eq.s32.totalorder %v2164, %v3598
          %vm3605 = vcmp.eq.s32.totalorder %v2165, %v3598
          %vm3606 = vcmp.eq.s32.totalorder %v2166, %v3598
          %vm3607 = vcmp.eq.s32.totalorder %v2167, %v3598
          %vm3608 = vcmp.eq.s32.totalorder %v2168, %v3598
          %vm3609 = vcmp.eq.s32.totalorder %v2169, %v3598
          %vm3610 = vcmp.eq.s32.totalorder %v2170, %v3598
          %vm3611 = vcmp.eq.s32.totalorder %v2171, %v3598
          %vm3612 = vcmp.eq.s32.totalorder %v2172, %v3598
          %vm3613 = vcmp.eq.s32.totalorder %v2173, %v3598
          %vm3614 = vcmp.eq.s32.totalorder %v2174, %v3598
          %vm3615 = vcmp.eq.s32.totalorder %v2175, %v3598
          %vm3616 = vcmp.eq.s32.totalorder %v2176, %v3598
          %vm3617 = vcmp.eq.s32.totalorder %v2177, %v3598
          %vm3618 = vcmp.eq.s32.totalorder %v2178, %v3598
          %vm3619 = vcmp.eq.s32.totalorder %v2179, %v3598
          %vm3620 = vcmp.eq.s32.totalorder %v2180, %v3598
          %vm3621 = vcmp.eq.s32.totalorder %v2181, %v3598
          %v3622 = vsel %vm3599, 1, 0
          %v3623 = vsel %vm3600, 1, 0
          %v3624 = vsel %vm3601, 1, 0
          %v3625 = vsel %vm3602, 1, 0
          %v3626 = vsel %vm3603, 1, 0
          %v3627 = vsel %vm3604, 1, 0
          %v3628 = vsel %vm3605, 1, 0
          %v3629 = vsel %vm3606, 1, 0
          %v3630 = vsel %vm3607, 1, 0
          %v3631 = vsel %vm3608, 1, 0
          %v3632 = vsel %vm3609, 1, 0
          %v3633 = vsel %vm3610, 1, 0
          %v3634 = vsel %vm3611, 1, 0
          %v3635 = vsel %vm3612, 1, 0
          %v3636 = vsel %vm3613, 1, 0
          %v3637 = vsel %vm3614, 1, 0
          %v3638 = vsel %vm3615, 1, 0
          %v3639 = vsel %vm3616, 1, 0
          %v3640 = vsel %vm3617, 1, 0
          %v3641 = vsel %vm3618, 1, 0
          %v3642 = vsel %vm3619, 1, 0
          %v3643 = vsel %vm3620, 1, 0
          %v3644 = vsel %vm3621, 1, 0
          %v3645 = vcombine.low %v3622, %v3623
          %v3646 = vcombine.low %v3624, %v3625
          %v3647 = vcombine.low %v3626, %v3627
          %v3648 = vcombine.low %v3628, %v3629
          %v3650 = vunpack.c.l.s4 1966171168
          %v3651 = vunpack.c.0.s8 %v3650
          %v3652 = vlaneseq
          %v3653 = vshrl.u32 %v3652, 7
          %v3654 = vsub.s32 %v3651, %v3653
          %v3655 = vrot.slane %v3645, %v3654
          %v3657 = vunpack.c.l.s4 1966171168
          %v3658 = vunpack.c.0.s8 %v3657
          %v3659 = vlaneseq
          %v3660 = vshrl.u32 %v3659, 7
          %v3661 = vsub.s32 %v3658, %v3660
          %v3662 = vrot.slane %v3646, %v3661
          %v3664 = vunpack.c.l.s4 1966171168
          %v3665 = vunpack.c.0.s8 %v3664
          %v3666 = vlaneseq
          %v3667 = vshrl.u32 %v3666, 7
          %v3668 = vsub.s32 %v3665, %v3667
          %v3669 = vrot.slane %v3647, %v3668
          %v3671 = vunpack.c.l.s4 1966171168
          %v3672 = vunpack.c.0.s8 %v3671
          %v3673 = vlaneseq
          %v3674 = vshrl.u32 %v3673, 7
          %v3675 = vsub.s32 %v3672, %v3674
          %v3676 = vrot.slane %v3648, %v3675
          %v3677 = vcombine.low %v3655, %v3662
          %v3678 = vcombine.low %v3669, %v3676
          %v3680 = vunpack.c.l.s4 1966171168
          %v3681 = vunpack.c.0.s8 %v3680
          %v3682 = vlaneseq
          %v3683 = vshrl.u32 %v3682, 7
          %v3684 = vsub.s32 %v3681, %v3683
          %v3685 = vrot.slane %v3677, %v3684
          %v3687 = vunpack.c.l.s4 1966171168
          %v3688 = vunpack.c.0.s8 %v3687
          %v3689 = vlaneseq
          %v3690 = vshrl.u32 %v3689, 7
          %v3691 = vsub.s32 %v3688, %v3690
          %v3692 = vrot.slane %v3678, %v3691
          %v3693 = vcombine.low %v3685, %v3692
          %v3694 = vcombine.low %v3630, %v3631
          %v3695 = vcombine.low %v3632, %v3633
          %v3696 = vcombine.low %v3634, %v3635
          %v3697 = vcombine.low %v3636, %v3637
          %v3699 = vunpack.c.l.s4 1966171168
          %v3700 = vunpack.c.0.s8 %v3699
          %v3701 = vlaneseq
          %v3702 = vshrl.u32 %v3701, 7
          %v3703 = vsub.s32 %v3700, %v3702
          %v3704 = vrot.slane %v3694, %v3703
          %v3706 = vunpack.c.l.s4 1966171168
          %v3707 = vunpack.c.0.s8 %v3706
          %v3708 = vlaneseq
          %v3709 = vshrl.u32 %v3708, 7
          %v3710 = vsub.s32 %v3707, %v3709
          %v3711 = vrot.slane %v3695, %v3710
          %v3713 = vunpack.c.l.s4 1966171168
          %v3714 = vunpack.c.0.s8 %v3713
          %v3715 = vlaneseq
          %v3716 = vshrl.u32 %v3715, 7
          %v3717 = vsub.s32 %v3714, %v3716
          %v3718 = vrot.slane %v3696, %v3717
          %v3720 = vunpack.c.l.s4 1966171168
          %v3721 = vunpack.c.0.s8 %v3720
          %v3722 = vlaneseq
          %v3723 = vshrl.u32 %v3722, 7
          %v3724 = vsub.s32 %v3721, %v3723
          %v3725 = vrot.slane %v3697, %v3724
          %v3726 = vcombine.low %v3704, %v3711
          %v3727 = vcombine.low %v3718, %v3725
          %v3729 = vunpack.c.l.s4 1966171168
          %v3730 = vunpack.c.0.s8 %v3729
          %v3731 = vlaneseq
          %v3732 = vshrl.u32 %v3731, 7
          %v3733 = vsub.s32 %v3730, %v3732
          %v3734 = vrot.slane %v3726, %v3733
          %v3736 = vunpack.c.l.s4 1966171168
          %v3737 = vunpack.c.0.s8 %v3736
          %v3738 = vlaneseq
          %v3739 = vshrl.u32 %v3738, 7
          %v3740 = vsub.s32 %v3737, %v3739
          %v3741 = vrot.slane %v3727, %v3740
          %v3742 = vcombine.low %v3734, %v3741
          %v3743 = vcombine.low %v3638, %v3639
          %v3744 = vcombine.low %v3640, %v3641
          %v3745 = vcombine.low %v3642, %v3643
          %v3747 = vunpack.c.l.s4 1966171168
          %v3748 = vunpack.c.0.s8 %v3747
          %v3749 = vlaneseq
          %v3750 = vshrl.u32 %v3749, 7
          %v3751 = vsub.s32 %v3748, %v3750
          %v3752 = vrot.slane %v3743, %v3751
          %v3754 = vunpack.c.l.s4 1966171168
          %v3755 = vunpack.c.0.s8 %v3754
          %v3756 = vlaneseq
          %v3757 = vshrl.u32 %v3756, 7
          %v3758 = vsub.s32 %v3755, %v3757
          %v3759 = vrot.slane %v3744, %v3758
          %v3761 = vunpack.c.l.s4 1966171168
          %v3762 = vunpack.c.0.s8 %v3761
          %v3763 = vlaneseq
          %v3764 = vshrl.u32 %v3763, 7
          %v3765 = vsub.s32 %v3762, %v3764
          %v3766 = vrot.slane %v3745, %v3765
          %v3768 = vunpack.c.l.s4 1966171168
          %v3769 = vunpack.c.0.s8 %v3768
          %v3770 = vlaneseq
          %v3771 = vshrl.u32 %v3770, 7
          %v3772 = vsub.s32 %v3769, %v3771
          %v3773 = vrot.slane %v3644, %v3772
          %v3774 = vcombine.low %v3752, %v3759
          %v3775 = vcombine.low %v3766, %v3773
          %v3777 = vunpack.c.l.s4 1966171168
          %v3778 = vunpack.c.0.s8 %v3777
          %v3779 = vlaneseq
          %v3780 = vshrl.u32 %v3779, 7
          %v3781 = vsub.s32 %v3778, %v3780
          %v3782 = vrot.slane %v3774, %v3781
          %v3784 = vunpack.c.l.s4 1966171168
          %v3785 = vunpack.c.0.s8 %v3784
          %v3786 = vlaneseq
          %v3787 = vshrl.u32 %v3786, 7
          %v3788 = vsub.s32 %v3785, %v3787
          %v3789 = vrot.slane %v3775, %v3788
          %v3790 = vcombine.low %v3782, %v3789
          %vm3791 = vcmp.ne.s32.totalorder %v3693, 0
          %vm3792 = vcmp.ne.s32.totalorder %v3742, 0
          %vm3793 = vcmp.ne.s32.totalorder %v3790, 0
          %s3794 = sshra.s32 %s3596, 3
          %s3795 = sand.u32 %s3596, 7
          %s3796 = sshra.s32 %s3596, 3
          %s3797 = sand.u32 %s3596, 7
          %s3798 = smul.u32 %s3794, 23
          %s3799 = smul.u32 %s3798, 8
          %s3800 = sadd.s32 %s3799, %s3797
          %s3801 = scalar_lea.vmem %s56, %s3800 [#allocation6]
          %3802 = vst.msk [vmem:[%s3801] ss:$8 sm:$0xf] %vm3791, %v3597
          %3803 = vst.msk [vmem:[%s3801] ss:$8 sm:$0xf0] %vm3791, %v3597
          %s3804 = sadd.s32 %s3798, 8
          %s3805 = smul.u32 %s3804, 8
          %s3806 = sadd.s32 %s3805, %s3797
          %s3807 = scalar_lea.vmem %s56, %s3806 [#allocation6]
          %3808 = vst.msk [vmem:[%s3807] ss:$8 sm:$0xf] %vm3792, %v3597
          %3809 = vst.msk [vmem:[%s3807] ss:$8 sm:$0xf0] %vm3792, %v3597
          %v3810 = vlaneseq
          %vm3811 = vcmp.ge.s32.totalorder %v3810, 0
          %vm3812 = vcmp.lt.s32.totalorder %v3810, 832
          %vm3813 = vmand %vm3811, %vm3812
          %vm3814 = vmand %vm3813, %vm3793
          %s3815 = sadd.s32 %s3798, 16
          %s3816 = smul.u32 %s3815, 8
          %s3817 = sadd.s32 %s3816, %s3797
          %s3818 = scalar_lea.vmem %s56, %s3817 [#allocation6]
          %3819 = vst.msk [vmem:[%s3818] ss:$8 sm:$0xf] %vm3814, %v3597
          %3820 = vst.msk [vmem:[%s3818] ss:$8 sm:$0x70] %vm3814, %v3597
        $region40: #{tpu_custom_call.1} parent=11 // pred_fallthru
          _
        %s3821 = sld [smem:[#allocation3 + $0x7]]
        %s3822 = sld [smem:[#allocation4 + $0x7]]
        %s3823 = sld [smem:[#allocation5 + $0x7]]
        %p3824 = scmp.ge.s32.totalorder %s3821, %s63
        %p3825 = scmp.lt.s32.totalorder %s3821, %s2186
        %p3826 = pnand %p3824, %p3825
        %p3827 = pneg %p3826
        // Predicated region
        $region41: #{tpu_custom_call.1} parent=11 // pred_check
          _
        $region42: #{tpu_custom_call.1} parent=11 // pred_check_branch
          %3829 = sbr.rel (%p3826) target = $region44
        $region43: #{tpu_custom_call.1} parent=11 // pred_region
          %s3830 = ssub.s32 %s3821, %s63
          %v3831 = vstv %s3823
          %v3832 = vstv %s3822
          %vm3833 = vcmp.eq.s32.totalorder %v2159, %v3832
          %vm3834 = vcmp.eq.s32.totalorder %v2160, %v3832
          %vm3835 = vcmp.eq.s32.totalorder %v2161, %v3832
          %vm3836 = vcmp.eq.s32.totalorder %v2162, %v3832
          %vm3837 = vcmp.eq.s32.totalorder %v2163, %v3832
          %vm3838 = vcmp.eq.s32.totalorder %v2164, %v3832
          %vm3839 = vcmp.eq.s32.totalorder %v2165, %v3832
          %vm3840 = vcmp.eq.s32.totalorder %v2166, %v3832
          %vm3841 = vcmp.eq.s32.totalorder %v2167, %v3832
          %vm3842 = vcmp.eq.s32.totalorder %v2168, %v3832
          %vm3843 = vcmp.eq.s32.totalorder %v2169, %v3832
          %vm3844 = vcmp.eq.s32.totalorder %v2170, %v3832
          %vm3845 = vcmp.eq.s32.totalorder %v2171, %v3832
          %vm3846 = vcmp.eq.s32.totalorder %v2172, %v3832
          %vm3847 = vcmp.eq.s32.totalorder %v2173, %v3832
          %vm3848 = vcmp.eq.s32.totalorder %v2174, %v3832
          %vm3849 = vcmp.eq.s32.totalorder %v2175, %v3832
          %vm3850 = vcmp.eq.s32.totalorder %v2176, %v3832
          %vm3851 = vcmp.eq.s32.totalorder %v2177, %v3832
          %vm3852 = vcmp.eq.s32.totalorder %v2178, %v3832
          %vm3853 = vcmp.eq.s32.totalorder %v2179, %v3832
          %vm3854 = vcmp.eq.s32.totalorder %v2180, %v3832
          %vm3855 = vcmp.eq.s32.totalorder %v2181, %v3832
          %v3856 = vsel %vm3833, 1, 0
          %v3857 = vsel %vm3834, 1, 0
          %v3858 = vsel %vm3835, 1, 0
          %v3859 = vsel %vm3836, 1, 0
          %v3860 = vsel %vm3837, 1, 0
          %v3861 = vsel %vm3838, 1, 0
          %v3862 = vsel %vm3839, 1, 0
          %v3863 = vsel %vm3840, 1, 0
          %v3864 = vsel %vm3841, 1, 0
          %v3865 = vsel %vm3842, 1, 0
          %v3866 = vsel %vm3843, 1, 0
          %v3867 = vsel %vm3844, 1, 0
          %v3868 = vsel %vm3845, 1, 0
          %v3869 = vsel %vm3846, 1, 0
          %v3870 = vsel %vm3847, 1, 0
          %v3871 = vsel %vm3848, 1, 0
          %v3872 = vsel %vm3849, 1, 0
          %v3873 = vsel %vm3850, 1, 0
          %v3874 = vsel %vm3851, 1, 0
          %v3875 = vsel %vm3852, 1, 0
          %v3876 = vsel %vm3853, 1, 0
          %v3877 = vsel %vm3854, 1, 0
          %v3878 = vsel %vm3855, 1, 0
          %v3879 = vcombine.low %v3856, %v3857
          %v3880 = vcombine.low %v3858, %v3859
          %v3881 = vcombine.low %v3860, %v3861
          %v3882 = vcombine.low %v3862, %v3863
          %v3884 = vunpack.c.l.s4 1966171168
          %v3885 = vunpack.c.0.s8 %v3884
          %v3886 = vlaneseq
          %v3887 = vshrl.u32 %v3886, 7
          %v3888 = vsub.s32 %v3885, %v3887
          %v3889 = vrot.slane %v3879, %v3888
          %v3891 = vunpack.c.l.s4 1966171168
          %v3892 = vunpack.c.0.s8 %v3891
          %v3893 = vlaneseq
          %v3894 = vshrl.u32 %v3893, 7
          %v3895 = vsub.s32 %v3892, %v3894
          %v3896 = vrot.slane %v3880, %v3895
          %v3898 = vunpack.c.l.s4 1966171168
          %v3899 = vunpack.c.0.s8 %v3898
          %v3900 = vlaneseq
          %v3901 = vshrl.u32 %v3900, 7
          %v3902 = vsub.s32 %v3899, %v3901
          %v3903 = vrot.slane %v3881, %v3902
          %v3905 = vunpack.c.l.s4 1966171168
          %v3906 = vunpack.c.0.s8 %v3905
          %v3907 = vlaneseq
          %v3908 = vshrl.u32 %v3907, 7
          %v3909 = vsub.s32 %v3906, %v3908
          %v3910 = vrot.slane %v3882, %v3909
          %v3911 = vcombine.low %v3889, %v3896
          %v3912 = vcombine.low %v3903, %v3910
          %v3914 = vunpack.c.l.s4 1966171168
          %v3915 = vunpack.c.0.s8 %v3914
          %v3916 = vlaneseq
          %v3917 = vshrl.u32 %v3916, 7
          %v3918 = vsub.s32 %v3915, %v3917
          %v3919 = vrot.slane %v3911, %v3918
          %v3921 = vunpack.c.l.s4 1966171168
          %v3922 = vunpack.c.0.s8 %v3921
          %v3923 = vlaneseq
          %v3924 = vshrl.u32 %v3923, 7
          %v3925 = vsub.s32 %v3922, %v3924
          %v3926 = vrot.slane %v3912, %v3925
          %v3927 = vcombine.low %v3919, %v3926
          %v3928 = vcombine.low %v3864, %v3865
          %v3929 = vcombine.low %v3866, %v3867
          %v3930 = vcombine.low %v3868, %v3869
          %v3931 = vcombine.low %v3870, %v3871
          %v3933 = vunpack.c.l.s4 1966171168
          %v3934 = vunpack.c.0.s8 %v3933
          %v3935 = vlaneseq
          %v3936 = vshrl.u32 %v3935, 7
          %v3937 = vsub.s32 %v3934, %v3936
          %v3938 = vrot.slane %v3928, %v3937
          %v3940 = vunpack.c.l.s4 1966171168
          %v3941 = vunpack.c.0.s8 %v3940
          %v3942 = vlaneseq
          %v3943 = vshrl.u32 %v3942, 7
          %v3944 = vsub.s32 %v3941, %v3943
          %v3945 = vrot.slane %v3929, %v3944
          %v3947 = vunpack.c.l.s4 1966171168
          %v3948 = vunpack.c.0.s8 %v3947
          %v3949 = vlaneseq
          %v3950 = vshrl.u32 %v3949, 7
          %v3951 = vsub.s32 %v3948, %v3950
          %v3952 = vrot.slane %v3930, %v3951
          %v3954 = vunpack.c.l.s4 1966171168
          %v3955 = vunpack.c.0.s8 %v3954
          %v3956 = vlaneseq
          %v3957 = vshrl.u32 %v3956, 7
          %v3958 = vsub.s32 %v3955, %v3957
          %v3959 = vrot.slane %v3931, %v3958
          %v3960 = vcombine.low %v3938, %v3945
          %v3961 = vcombine.low %v3952, %v3959
          %v3963 = vunpack.c.l.s4 1966171168
          %v3964 = vunpack.c.0.s8 %v3963
          %v3965 = vlaneseq
          %v3966 = vshrl.u32 %v3965, 7
          %v3967 = vsub.s32 %v3964, %v3966
          %v3968 = vrot.slane %v3960, %v3967
          %v3970 = vunpack.c.l.s4 1966171168
          %v3971 = vunpack.c.0.s8 %v3970
          %v3972 = vlaneseq
          %v3973 = vshrl.u32 %v3972, 7
          %v3974 = vsub.s32 %v3971, %v3973
          %v3975 = vrot.slane %v3961, %v3974
          %v3976 = vcombine.low %v3968, %v3975
          %v3977 = vcombine.low %v3872, %v3873
          %v3978 = vcombine.low %v3874, %v3875
          %v3979 = vcombine.low %v3876, %v3877
          %v3981 = vunpack.c.l.s4 1966171168
          %v3982 = vunpack.c.0.s8 %v3981
          %v3983 = vlaneseq
          %v3984 = vshrl.u32 %v3983, 7
          %v3985 = vsub.s32 %v3982, %v3984
          %v3986 = vrot.slane %v3977, %v3985
          %v3988 = vunpack.c.l.s4 1966171168
          %v3989 = vunpack.c.0.s8 %v3988
          %v3990 = vlaneseq
          %v3991 = vshrl.u32 %v3990, 7
          %v3992 = vsub.s32 %v3989, %v3991
          %v3993 = vrot.slane %v3978, %v3992
          %v3995 = vunpack.c.l.s4 1966171168
          %v3996 = vunpack.c.0.s8 %v3995
          %v3997 = vlaneseq
          %v3998 = vshrl.u32 %v3997, 7
          %v3999 = vsub.s32 %v3996, %v3998
          %v4000 = vrot.slane %v3979, %v3999
          %v4002 = vunpack.c.l.s4 1966171168
          %v4003 = vunpack.c.0.s8 %v4002
          %v4004 = vlaneseq
          %v4005 = vshrl.u32 %v4004, 7
          %v4006 = vsub.s32 %v4003, %v4005
          %v4007 = vrot.slane %v3878, %v4006
          %v4008 = vcombine.low %v3986, %v3993
          %v4009 = vcombine.low %v4000, %v4007
          %v4011 = vunpack.c.l.s4 1966171168
          %v4012 = vunpack.c.0.s8 %v4011
          %v4013 = vlaneseq
          %v4014 = vshrl.u32 %v4013, 7
          %v4015 = vsub.s32 %v4012, %v4014
          %v4016 = vrot.slane %v4008, %v4015
          %v4018 = vunpack.c.l.s4 1966171168
          %v4019 = vunpack.c.0.s8 %v4018
          %v4020 = vlaneseq
          %v4021 = vshrl.u32 %v4020, 7
          %v4022 = vsub.s32 %v4019, %v4021
          %v4023 = vrot.slane %v4009, %v4022
          %v4024 = vcombine.low %v4016, %v4023
          %vm4025 = vcmp.ne.s32.totalorder %v3927, 0
          %vm4026 = vcmp.ne.s32.totalorder %v3976, 0
          %vm4027 = vcmp.ne.s32.totalorder %v4024, 0
          %s4028 = sshra.s32 %s3830, 3
          %s4029 = sand.u32 %s3830, 7
          %s4030 = sshra.s32 %s3830, 3
          %s4031 = sand.u32 %s3830, 7
          %s4032 = smul.u32 %s4028, 23
          %s4033 = smul.u32 %s4032, 8
          %s4034 = sadd.s32 %s4033, %s4031
          %s4035 = scalar_lea.vmem %s56, %s4034 [#allocation6]
          %4036 = vst.msk [vmem:[%s4035] ss:$8 sm:$0xf] %vm4025, %v3831
          %4037 = vst.msk [vmem:[%s4035] ss:$8 sm:$0xf0] %vm4025, %v3831
          %s4038 = sadd.s32 %s4032, 8
          %s4039 = smul.u32 %s4038, 8
          %s4040 = sadd.s32 %s4039, %s4031
          %s4041 = scalar_lea.vmem %s56, %s4040 [#allocation6]
          %4042 = vst.msk [vmem:[%s4041] ss:$8 sm:$0xf] %vm4026, %v3831
          %4043 = vst.msk [vmem:[%s4041] ss:$8 sm:$0xf0] %vm4026, %v3831
          %v4044 = vlaneseq
          %vm4045 = vcmp.ge.s32.totalorder %v4044, 0
          %vm4046 = vcmp.lt.s32.totalorder %v4044, 832
          %vm4047 = vmand %vm4045, %vm4046
          %vm4048 = vmand %vm4047, %vm4027
          %s4049 = sadd.s32 %s4032, 16
          %s4050 = smul.u32 %s4049, 8
          %s4051 = sadd.s32 %s4050, %s4031
          %s4052 = scalar_lea.vmem %s56, %s4051 [#allocation6]
          %4053 = vst.msk [vmem:[%s4052] ss:$8 sm:$0xf] %vm4048, %v3831
          %4054 = vst.msk [vmem:[%s4052] ss:$8 sm:$0x70] %vm4048, %v3831
        $region44: #{tpu_custom_call.1} parent=11 // pred_fallthru
          _
        %s4055 = sld [smem:[#allocation3 + $0x8]]
        %s4056 = sld [smem:[#allocation4 + $0x8]]
        %s4057 = sld [smem:[#allocation5 + $0x8]]
        %p4058 = scmp.ge.s32.totalorder %s4055, %s63
        %p4059 = scmp.lt.s32.totalorder %s4055, %s2186
        %p4060 = pnand %p4058, %p4059
        %p4061 = pneg %p4060
        // Predicated region
        $region45: #{tpu_custom_call.1} parent=11 // pred_check
          _
        $region46: #{tpu_custom_call.1} parent=11 // pred_check_branch
          %4063 = sbr.rel (%p4060) target = $region48
        $region47: #{tpu_custom_call.1} parent=11 // pred_region
          %s4064 = ssub.s32 %s4055, %s63
          %v4065 = vstv %s4057
          %v4066 = vstv %s4056
          %vm4067 = vcmp.eq.s32.totalorder %v2159, %v4066
          %vm4068 = vcmp.eq.s32.totalorder %v2160, %v4066
          %vm4069 = vcmp.eq.s32.totalorder %v2161, %v4066
          %vm4070 = vcmp.eq.s32.totalorder %v2162, %v4066
          %vm4071 = vcmp.eq.s32.totalorder %v2163, %v4066
          %vm4072 = vcmp.eq.s32.totalorder %v2164, %v4066
          %vm4073 = vcmp.eq.s32.totalorder %v2165, %v4066
          %vm4074 = vcmp.eq.s32.totalorder %v2166, %v4066
          %vm4075 = vcmp.eq.s32.totalorder %v2167, %v4066
          %vm4076 = vcmp.eq.s32.totalorder %v2168, %v4066
          %vm4077 = vcmp.eq.s32.totalorder %v2169, %v4066
          %vm4078 = vcmp.eq.s32.totalorder %v2170, %v4066
          %vm4079 = vcmp.eq.s32.totalorder %v2171, %v4066
          %vm4080 = vcmp.eq.s32.totalorder %v2172, %v4066
          %vm4081 = vcmp.eq.s32.totalorder %v2173, %v4066
          %vm4082 = vcmp.eq.s32.totalorder %v2174, %v4066
          %vm4083 = vcmp.eq.s32.totalorder %v2175, %v4066
          %vm4084 = vcmp.eq.s32.totalorder %v2176, %v4066
          %vm4085 = vcmp.eq.s32.totalorder %v2177, %v4066
          %vm4086 = vcmp.eq.s32.totalorder %v2178, %v4066
          %vm4087 = vcmp.eq.s32.totalorder %v2179, %v4066
          %vm4088 = vcmp.eq.s32.totalorder %v2180, %v4066
          %vm4089 = vcmp.eq.s32.totalorder %v2181, %v4066
          %v4090 = vsel %vm4067, 1, 0
          %v4091 = vsel %vm4068, 1, 0
          %v4092 = vsel %vm4069, 1, 0
          %v4093 = vsel %vm4070, 1, 0
          %v4094 = vsel %vm4071, 1, 0
          %v4095 = vsel %vm4072, 1, 0
          %v4096 = vsel %vm4073, 1, 0
          %v4097 = vsel %vm4074, 1, 0
          %v4098 = vsel %vm4075, 1, 0
          %v4099 = vsel %vm4076, 1, 0
          %v4100 = vsel %vm4077, 1, 0
          %v4101 = vsel %vm4078, 1, 0
          %v4102 = vsel %vm4079, 1, 0
          %v4103 = vsel %vm4080, 1, 0
          %v4104 = vsel %vm4081, 1, 0
          %v4105 = vsel %vm4082, 1, 0
          %v4106 = vsel %vm4083, 1, 0
          %v4107 = vsel %vm4084, 1, 0
          %v4108 = vsel %vm4085, 1, 0
          %v4109 = vsel %vm4086, 1, 0
          %v4110 = vsel %vm4087, 1, 0
          %v4111 = vsel %vm4088, 1, 0
          %v4112 = vsel %vm4089, 1, 0
          %v4113 = vcombine.low %v4090, %v4091
          %v4114 = vcombine.low %v4092, %v4093
          %v4115 = vcombine.low %v4094, %v4095
          %v4116 = vcombine.low %v4096, %v4097
          %v4118 = vunpack.c.l.s4 1966171168
          %v4119 = vunpack.c.0.s8 %v4118
          %v4120 = vlaneseq
          %v4121 = vshrl.u32 %v4120, 7
          %v4122 = vsub.s32 %v4119, %v4121
          %v4123 = vrot.slane %v4113, %v4122
          %v4125 = vunpack.c.l.s4 1966171168
          %v4126 = vunpack.c.0.s8 %v4125
          %v4127 = vlaneseq
          %v4128 = vshrl.u32 %v4127, 7
          %v4129 = vsub.s32 %v4126, %v4128
          %v4130 = vrot.slane %v4114, %v4129
          %v4132 = vunpack.c.l.s4 1966171168
          %v4133 = vunpack.c.0.s8 %v4132
          %v4134 = vlaneseq
          %v4135 = vshrl.u32 %v4134, 7
          %v4136 = vsub.s32 %v4133, %v4135
          %v4137 = vrot.slane %v4115, %v4136
          %v4139 = vunpack.c.l.s4 1966171168
          %v4140 = vunpack.c.0.s8 %v4139
          %v4141 = vlaneseq
          %v4142 = vshrl.u32 %v4141, 7
          %v4143 = vsub.s32 %v4140, %v4142
          %v4144 = vrot.slane %v4116, %v4143
          %v4145 = vcombine.low %v4123, %v4130
          %v4146 = vcombine.low %v4137, %v4144
          %v4148 = vunpack.c.l.s4 1966171168
          %v4149 = vunpack.c.0.s8 %v4148
          %v4150 = vlaneseq
          %v4151 = vshrl.u32 %v4150, 7
          %v4152 = vsub.s32 %v4149, %v4151
          %v4153 = vrot.slane %v4145, %v4152
          %v4155 = vunpack.c.l.s4 1966171168
          %v4156 = vunpack.c.0.s8 %v4155
          %v4157 = vlaneseq
          %v4158 = vshrl.u32 %v4157, 7
          %v4159 = vsub.s32 %v4156, %v4158
          %v4160 = vrot.slane %v4146, %v4159
          %v4161 = vcombine.low %v4153, %v4160
          %v4162 = vcombine.low %v4098, %v4099
          %v4163 = vcombine.low %v4100, %v4101
          %v4164 = vcombine.low %v4102, %v4103
          %v4165 = vcombine.low %v4104, %v4105
          %v4167 = vunpack.c.l.s4 1966171168
          %v4168 = vunpack.c.0.s8 %v4167
          %v4169 = vlaneseq
          %v4170 = vshrl.u32 %v4169, 7
          %v4171 = vsub.s32 %v4168, %v4170
          %v4172 = vrot.slane %v4162, %v4171
          %v4174 = vunpack.c.l.s4 1966171168
          %v4175 = vunpack.c.0.s8 %v4174
          %v4176 = vlaneseq
          %v4177 = vshrl.u32 %v4176, 7
          %v4178 = vsub.s32 %v4175, %v4177
          %v4179 = vrot.slane %v4163, %v4178
          %v4181 = vunpack.c.l.s4 1966171168
          %v4182 = vunpack.c.0.s8 %v4181
          %v4183 = vlaneseq
          %v4184 = vshrl.u32 %v4183, 7
          %v4185 = vsub.s32 %v4182, %v4184
          %v4186 = vrot.slane %v4164, %v4185
          %v4188 = vunpack.c.l.s4 1966171168
          %v4189 = vunpack.c.0.s8 %v4188
          %v4190 = vlaneseq
          %v4191 = vshrl.u32 %v4190, 7
          %v4192 = vsub.s32 %v4189, %v4191
          %v4193 = vrot.slane %v4165, %v4192
          %v4194 = vcombine.low %v4172, %v4179
          %v4195 = vcombine.low %v4186, %v4193
          %v4197 = vunpack.c.l.s4 1966171168
          %v4198 = vunpack.c.0.s8 %v4197
          %v4199 = vlaneseq
          %v4200 = vshrl.u32 %v4199, 7
          %v4201 = vsub.s32 %v4198, %v4200
          %v4202 = vrot.slane %v4194, %v4201
          %v4204 = vunpack.c.l.s4 1966171168
          %v4205 = vunpack.c.0.s8 %v4204
          %v4206 = vlaneseq
          %v4207 = vshrl.u32 %v4206, 7
          %v4208 = vsub.s32 %v4205, %v4207
          %v4209 = vrot.slane %v4195, %v4208
          %v4210 = vcombine.low %v4202, %v4209
          %v4211 = vcombine.low %v4106, %v4107
          %v4212 = vcombine.low %v4108, %v4109
          %v4213 = vcombine.low %v4110, %v4111
          %v4215 = vunpack.c.l.s4 1966171168
          %v4216 = vunpack.c.0.s8 %v4215
          %v4217 = vlaneseq
          %v4218 = vshrl.u32 %v4217, 7
          %v4219 = vsub.s32 %v4216, %v4218
          %v4220 = vrot.slane %v4211, %v4219
          %v4222 = vunpack.c.l.s4 1966171168
          %v4223 = vunpack.c.0.s8 %v4222
          %v4224 = vlaneseq
          %v4225 = vshrl.u32 %v4224, 7
          %v4226 = vsub.s32 %v4223, %v4225
          %v4227 = vrot.slane %v4212, %v4226
          %v4229 = vunpack.c.l.s4 1966171168
          %v4230 = vunpack.c.0.s8 %v4229
          %v4231 = vlaneseq
          %v4232 = vshrl.u32 %v4231, 7
          %v4233 = vsub.s32 %v4230, %v4232
          %v4234 = vrot.slane %v4213, %v4233
          %v4236 = vunpack.c.l.s4 1966171168
          %v4237 = vunpack.c.0.s8 %v4236
          %v4238 = vlaneseq
          %v4239 = vshrl.u32 %v4238, 7
          %v4240 = vsub.s32 %v4237, %v4239
          %v4241 = vrot.slane %v4112, %v4240
          %v4242 = vcombine.low %v4220, %v4227
          %v4243 = vcombine.low %v4234, %v4241
          %v4245 = vunpack.c.l.s4 1966171168
          %v4246 = vunpack.c.0.s8 %v4245
          %v4247 = vlaneseq
          %v4248 = vshrl.u32 %v4247, 7
          %v4249 = vsub.s32 %v4246, %v4248
          %v4250 = vrot.slane %v4242, %v4249
          %v4252 = vunpack.c.l.s4 1966171168
          %v4253 = vunpack.c.0.s8 %v4252
          %v4254 = vlaneseq
          %v4255 = vshrl.u32 %v4254, 7
          %v4256 = vsub.s32 %v4253, %v4255
          %v4257 = vrot.slane %v4243, %v4256
          %v4258 = vcombine.low %v4250, %v4257
          %vm4259 = vcmp.ne.s32.totalorder %v4161, 0
          %vm4260 = vcmp.ne.s32.totalorder %v4210, 0
          %vm4261 = vcmp.ne.s32.totalorder %v4258, 0
          %s4262 = sshra.s32 %s4064, 3
          %s4263 = sand.u32 %s4064, 7
          %s4264 = sshra.s32 %s4064, 3
          %s4265 = sand.u32 %s4064, 7
          %s4266 = smul.u32 %s4262, 23
          %s4267 = smul.u32 %s4266, 8
          %s4268 = sadd.s32 %s4267, %s4265
          %s4269 = scalar_lea.vmem %s56, %s4268 [#allocation6]
          %4270 = vst.msk [vmem:[%s4269] ss:$8 sm:$0xf] %vm4259, %v4065
          %4271 = vst.msk [vmem:[%s4269] ss:$8 sm:$0xf0] %vm4259, %v4065
          %s4272 = sadd.s32 %s4266, 8
          %s4273 = smul.u32 %s4272, 8
          %s4274 = sadd.s32 %s4273, %s4265
          %s4275 = scalar_lea.vmem %s56, %s4274 [#allocation6]
          %4276 = vst.msk [vmem:[%s4275] ss:$8 sm:$0xf] %vm4260, %v4065
          %4277 = vst.msk [vmem:[%s4275] ss:$8 sm:$0xf0] %vm4260, %v4065
          %v4278 = vlaneseq
          %vm4279 = vcmp.ge.s32.totalorder %v4278, 0
          %vm4280 = vcmp.lt.s32.totalorder %v4278, 832
          %vm4281 = vmand %vm4279, %vm4280
          %vm4282 = vmand %vm4281, %vm4261
          %s4283 = sadd.s32 %s4266, 16
          %s4284 = smul.u32 %s4283, 8
          %s4285 = sadd.s32 %s4284, %s4265
          %s4286 = scalar_lea.vmem %s56, %s4285 [#allocation6]
          %4287 = vst.msk [vmem:[%s4286] ss:$8 sm:$0xf] %vm4282, %v4065
          %4288 = vst.msk [vmem:[%s4286] ss:$8 sm:$0x70] %vm4282, %v4065
        $region48: #{tpu_custom_call.1} parent=11 // pred_fallthru
          _
        %s4289 = sld [smem:[#allocation3 + $0x9]]
        %s4290 = sld [smem:[#allocation4 + $0x9]]
        %s4291 = sld [smem:[#allocation5 + $0x9]]
        %p4292 = scmp.ge.s32.totalorder %s4289, %s63
        %p4293 = scmp.lt.s32.totalorder %s4289, %s2186
        %p4294 = pnand %p4292, %p4293
        %p4295 = pneg %p4294
        // Predicated region
        $region49: #{tpu_custom_call.1} parent=11 // pred_check
          _
        $region50: #{tpu_custom_call.1} parent=11 // pred_check_branch
          %4297 = sbr.rel (%p4294) target = $region52
        $region51: #{tpu_custom_call.1} parent=11 // pred_region
          %s4298 = ssub.s32 %s4289, %s63
          %v4299 = vstv %s4291
          %v4300 = vstv %s4290
          %vm4301 = vcmp.eq.s32.totalorder %v2159, %v4300
          %vm4302 = vcmp.eq.s32.totalorder %v2160, %v4300
          %vm4303 = vcmp.eq.s32.totalorder %v2161, %v4300
          %vm4304 = vcmp.eq.s32.totalorder %v2162, %v4300
          %vm4305 = vcmp.eq.s32.totalorder %v2163, %v4300
          %vm4306 = vcmp.eq.s32.totalorder %v2164, %v4300
          %vm4307 = vcmp.eq.s32.totalorder %v2165, %v4300
          %vm4308 = vcmp.eq.s32.totalorder %v2166, %v4300
          %vm4309 = vcmp.eq.s32.totalorder %v2167, %v4300
          %vm4310 = vcmp.eq.s32.totalorder %v2168, %v4300
          %vm4311 = vcmp.eq.s32.totalorder %v2169, %v4300
          %vm4312 = vcmp.eq.s32.totalorder %v2170, %v4300
          %vm4313 = vcmp.eq.s32.totalorder %v2171, %v4300
          %vm4314 = vcmp.eq.s32.totalorder %v2172, %v4300
          %vm4315 = vcmp.eq.s32.totalorder %v2173, %v4300
          %vm4316 = vcmp.eq.s32.totalorder %v2174, %v4300
          %vm4317 = vcmp.eq.s32.totalorder %v2175, %v4300
          %vm4318 = vcmp.eq.s32.totalorder %v2176, %v4300
          %vm4319 = vcmp.eq.s32.totalorder %v2177, %v4300
          %vm4320 = vcmp.eq.s32.totalorder %v2178, %v4300
          %vm4321 = vcmp.eq.s32.totalorder %v2179, %v4300
          %vm4322 = vcmp.eq.s32.totalorder %v2180, %v4300
          %vm4323 = vcmp.eq.s32.totalorder %v2181, %v4300
          %v4324 = vsel %vm4301, 1, 0
          %v4325 = vsel %vm4302, 1, 0
          %v4326 = vsel %vm4303, 1, 0
          %v4327 = vsel %vm4304, 1, 0
          %v4328 = vsel %vm4305, 1, 0
          %v4329 = vsel %vm4306, 1, 0
          %v4330 = vsel %vm4307, 1, 0
          %v4331 = vsel %vm4308, 1, 0
          %v4332 = vsel %vm4309, 1, 0
          %v4333 = vsel %vm4310, 1, 0
          %v4334 = vsel %vm4311, 1, 0
          %v4335 = vsel %vm4312, 1, 0
          %v4336 = vsel %vm4313, 1, 0
          %v4337 = vsel %vm4314, 1, 0
          %v4338 = vsel %vm4315, 1, 0
          %v4339 = vsel %vm4316, 1, 0
          %v4340 = vsel %vm4317, 1, 0
          %v4341 = vsel %vm4318, 1, 0
          %v4342 = vsel %vm4319, 1, 0
          %v4343 = vsel %vm4320, 1, 0
          %v4344 = vsel %vm4321, 1, 0
          %v4345 = vsel %vm4322, 1, 0
          %v4346 = vsel %vm4323, 1, 0
          %v4347 = vcombine.low %v4324, %v4325
          %v4348 = vcombine.low %v4326, %v4327
          %v4349 = vcombine.low %v4328, %v4329
          %v4350 = vcombine.low %v4330, %v4331
          %v4352 = vunpack.c.l.s4 1966171168
          %v4353 = vunpack.c.0.s8 %v4352
          %v4354 = vlaneseq
          %v4355 = vshrl.u32 %v4354, 7
          %v4356 = vsub.s32 %v4353, %v4355
          %v4357 = vrot.slane %v4347, %v4356
          %v4359 = vunpack.c.l.s4 1966171168
          %v4360 = vunpack.c.0.s8 %v4359
          %v4361 = vlaneseq
          %v4362 = vshrl.u32 %v4361, 7
          %v4363 = vsub.s32 %v4360, %v4362
          %v4364 = vrot.slane %v4348, %v4363
          %v4366 = vunpack.c.l.s4 1966171168
          %v4367 = vunpack.c.0.s8 %v4366
          %v4368 = vlaneseq
          %v4369 = vshrl.u32 %v4368, 7
          %v4370 = vsub.s32 %v4367, %v4369
          %v4371 = vrot.slane %v4349, %v4370
          %v4373 = vunpack.c.l.s4 1966171168
          %v4374 = vunpack.c.0.s8 %v4373
          %v4375 = vlaneseq
          %v4376 = vshrl.u32 %v4375, 7
          %v4377 = vsub.s32 %v4374, %v4376
          %v4378 = vrot.slane %v4350, %v4377
          %v4379 = vcombine.low %v4357, %v4364
          %v4380 = vcombine.low %v4371, %v4378
          %v4382 = vunpack.c.l.s4 1966171168
          %v4383 = vunpack.c.0.s8 %v4382
          %v4384 = vlaneseq
          %v4385 = vshrl.u32 %v4384, 7
          %v4386 = vsub.s32 %v4383, %v4385
          %v4387 = vrot.slane %v4379, %v4386
          %v4389 = vunpack.c.l.s4 1966171168
          %v4390 = vunpack.c.0.s8 %v4389
          %v4391 = vlaneseq
          %v4392 = vshrl.u32 %v4391, 7
          %v4393 = vsub.s32 %v4390, %v4392
          %v4394 = vrot.slane %v4380, %v4393
          %v4395 = vcombine.low %v4387, %v4394
          %v4396 = vcombine.low %v4332, %v4333
          %v4397 = vcombine.low %v4334, %v4335
          %v4398 = vcombine.low %v4336, %v4337
          %v4399 = vcombine.low %v4338, %v4339
          %v4401 = vunpack.c.l.s4 1966171168
          %v4402 = vunpack.c.0.s8 %v4401
          %v4403 = vlaneseq
          %v4404 = vshrl.u32 %v4403, 7
          %v4405 = vsub.s32 %v4402, %v4404
          %v4406 = vrot.slane %v4396, %v4405
          %v4408 = vunpack.c.l.s4 1966171168
          %v4409 = vunpack.c.0.s8 %v4408
          %v4410 = vlaneseq
          %v4411 = vshrl.u32 %v4410, 7
          %v4412 = vsub.s32 %v4409, %v4411
          %v4413 = vrot.slane %v4397, %v4412
          %v4415 = vunpack.c.l.s4 1966171168
          %v4416 = vunpack.c.0.s8 %v4415
          %v4417 = vlaneseq
          %v4418 = vshrl.u32 %v4417, 7
          %v4419 = vsub.s32 %v4416, %v4418
          %v4420 = vrot.slane %v4398, %v4419
          %v4422 = vunpack.c.l.s4 1966171168
          %v4423 = vunpack.c.0.s8 %v4422
          %v4424 = vlaneseq
          %v4425 = vshrl.u32 %v4424, 7
          %v4426 = vsub.s32 %v4423, %v4425
          %v4427 = vrot.slane %v4399, %v4426
          %v4428 = vcombine.low %v4406, %v4413
          %v4429 = vcombine.low %v4420, %v4427
          %v4431 = vunpack.c.l.s4 1966171168
          %v4432 = vunpack.c.0.s8 %v4431
          %v4433 = vlaneseq
          %v4434 = vshrl.u32 %v4433, 7
          %v4435 = vsub.s32 %v4432, %v4434
          %v4436 = vrot.slane %v4428, %v4435
          %v4438 = vunpack.c.l.s4 1966171168
          %v4439 = vunpack.c.0.s8 %v4438
          %v4440 = vlaneseq
          %v4441 = vshrl.u32 %v4440, 7
          %v4442 = vsub.s32 %v4439, %v4441
          %v4443 = vrot.slane %v4429, %v4442
          %v4444 = vcombine.low %v4436, %v4443
          %v4445 = vcombine.low %v4340, %v4341
          %v4446 = vcombine.low %v4342, %v4343
          %v4447 = vcombine.low %v4344, %v4345
          %v4449 = vunpack.c.l.s4 1966171168
          %v4450 = vunpack.c.0.s8 %v4449
          %v4451 = vlaneseq
          %v4452 = vshrl.u32 %v4451, 7
          %v4453 = vsub.s32 %v4450, %v4452
          %v4454 = vrot.slane %v4445, %v4453
          %v4456 = vunpack.c.l.s4 1966171168
          %v4457 = vunpack.c.0.s8 %v4456
          %v4458 = vlaneseq
          %v4459 = vshrl.u32 %v4458, 7
          %v4460 = vsub.s32 %v4457, %v4459
          %v4461 = vrot.slane %v4446, %v4460
          %v4463 = vunpack.c.l.s4 1966171168
          %v4464 = vunpack.c.0.s8 %v4463
          %v4465 = vlaneseq
          %v4466 = vshrl.u32 %v4465, 7
          %v4467 = vsub.s32 %v4464, %v4466
          %v4468 = vrot.slane %v4447, %v4467
          %v4470 = vunpack.c.l.s4 1966171168
          %v4471 = vunpack.c.0.s8 %v4470
          %v4472 = vlaneseq
          %v4473 = vshrl.u32 %v4472, 7
          %v4474 = vsub.s32 %v4471, %v4473
          %v4475 = vrot.slane %v4346, %v4474
          %v4476 = vcombine.low %v4454, %v4461
          %v4477 = vcombine.low %v4468, %v4475
          %v4479 = vunpack.c.l.s4 1966171168
          %v4480 = vunpack.c.0.s8 %v4479
          %v4481 = vlaneseq
          %v4482 = vshrl.u32 %v4481, 7
          %v4483 = vsub.s32 %v4480, %v4482
          %v4484 = vrot.slane %v4476, %v4483
          %v4486 = vunpack.c.l.s4 1966171168
          %v4487 = vunpack.c.0.s8 %v4486
          %v4488 = vlaneseq
          %v4489 = vshrl.u32 %v4488, 7
          %v4490 = vsub.s32 %v4487, %v4489
          %v4491 = vrot.slane %v4477, %v4490
          %v4492 = vcombine.low %v4484, %v4491
          %vm4493 = vcmp.ne.s32.totalorder %v4395, 0
          %vm4494 = vcmp.ne.s32.totalorder %v4444, 0
          %vm4495 = vcmp.ne.s32.totalorder %v4492, 0
          %s4496 = sshra.s32 %s4298, 3
          %s4497 = sand.u32 %s4298, 7
          %s4498 = sshra.s32 %s4298, 3
          %s4499 = sand.u32 %s4298, 7
          %s4500 = smul.u32 %s4496, 23
          %s4501 = smul.u32 %s4500, 8
          %s4502 = sadd.s32 %s4501, %s4499
          %s4503 = scalar_lea.vmem %s56, %s4502 [#allocation6]
          %4504 = vst.msk [vmem:[%s4503] ss:$8 sm:$0xf] %vm4493, %v4299
          %4505 = vst.msk [vmem:[%s4503] ss:$8 sm:$0xf0] %vm4493, %v4299
          %s4506 = sadd.s32 %s4500, 8
          %s4507 = smul.u32 %s4506, 8
          %s4508 = sadd.s32 %s4507, %s4499
          %s4509 = scalar_lea.vmem %s56, %s4508 [#allocation6]
          %4510 = vst.msk [vmem:[%s4509] ss:$8 sm:$0xf] %vm4494, %v4299
          %4511 = vst.msk [vmem:[%s4509] ss:$8 sm:$0xf0] %vm4494, %v4299
          %v4512 = vlaneseq
          %vm4513 = vcmp.ge.s32.totalorder %v4512, 0
          %vm4514 = vcmp.lt.s32.totalorder %v4512, 832
          %vm4515 = vmand %vm4513, %vm4514
          %vm4516 = vmand %vm4515, %vm4495
          %s4517 = sadd.s32 %s4500, 16
          %s4518 = smul.u32 %s4517, 8
          %s4519 = sadd.s32 %s4518, %s4499
          %s4520 = scalar_lea.vmem %s56, %s4519 [#allocation6]
          %4521 = vst.msk [vmem:[%s4520] ss:$8 sm:$0xf] %vm4516, %v4299
          %4522 = vst.msk [vmem:[%s4520] ss:$8 sm:$0x70] %vm4516, %v4299
        $region52: #{tpu_custom_call.1} parent=11 // pred_fallthru
          _
        %s4523 = sld [smem:[#allocation3 + $0xa]]
        %s4524 = sld [smem:[#allocation4 + $0xa]]
        %s4525 = sld [smem:[#allocation5 + $0xa]]
        %p4526 = scmp.ge.s32.totalorder %s4523, %s63
        %p4527 = scmp.lt.s32.totalorder %s4523, %s2186
        %p4528 = pnand %p4526, %p4527
        %p4529 = pneg %p4528
        // Predicated region
        $region53: #{tpu_custom_call.1} parent=11 // pred_check
          _
        $region54: #{tpu_custom_call.1} parent=11 // pred_check_branch
          %4531 = sbr.rel (%p4528) target = $region56
        $region55: #{tpu_custom_call.1} parent=11 // pred_region
          %s4532 = ssub.s32 %s4523, %s63
          %v4533 = vstv %s4525
          %v4534 = vstv %s4524
          %vm4535 = vcmp.eq.s32.totalorder %v2159, %v4534
          %vm4536 = vcmp.eq.s32.totalorder %v2160, %v4534
          %vm4537 = vcmp.eq.s32.totalorder %v2161, %v4534
          %vm4538 = vcmp.eq.s32.totalorder %v2162, %v4534
          %vm4539 = vcmp.eq.s32.totalorder %v2163, %v4534
          %vm4540 = vcmp.eq.s32.totalorder %v2164, %v4534
          %vm4541 = vcmp.eq.s32.totalorder %v2165, %v4534
          %vm4542 = vcmp.eq.s32.totalorder %v2166, %v4534
          %vm4543 = vcmp.eq.s32.totalorder %v2167, %v4534
          %vm4544 = vcmp.eq.s32.totalorder %v2168, %v4534
          %vm4545 = vcmp.eq.s32.totalorder %v2169, %v4534
          %vm4546 = vcmp.eq.s32.totalorder %v2170, %v4534
          %vm4547 = vcmp.eq.s32.totalorder %v2171, %v4534
          %vm4548 = vcmp.eq.s32.totalorder %v2172, %v4534
          %vm4549 = vcmp.eq.s32.totalorder %v2173, %v4534
          %vm4550 = vcmp.eq.s32.totalorder %v2174, %v4534
          %vm4551 = vcmp.eq.s32.totalorder %v2175, %v4534
          %vm4552 = vcmp.eq.s32.totalorder %v2176, %v4534
          %vm4553 = vcmp.eq.s32.totalorder %v2177, %v4534
          %vm4554 = vcmp.eq.s32.totalorder %v2178, %v4534
          %vm4555 = vcmp.eq.s32.totalorder %v2179, %v4534
          %vm4556 = vcmp.eq.s32.totalorder %v2180, %v4534
          %vm4557 = vcmp.eq.s32.totalorder %v2181, %v4534
          %v4558 = vsel %vm4535, 1, 0
          %v4559 = vsel %vm4536, 1, 0
          %v4560 = vsel %vm4537, 1, 0
          %v4561 = vsel %vm4538, 1, 0
          %v4562 = vsel %vm4539, 1, 0
          %v4563 = vsel %vm4540, 1, 0
          %v4564 = vsel %vm4541, 1, 0
          %v4565 = vsel %vm4542, 1, 0
          %v4566 = vsel %vm4543, 1, 0
          %v4567 = vsel %vm4544, 1, 0
          %v4568 = vsel %vm4545, 1, 0
          %v4569 = vsel %vm4546, 1, 0
          %v4570 = vsel %vm4547, 1, 0
          %v4571 = vsel %vm4548, 1, 0
          %v4572 = vsel %vm4549, 1, 0
          %v4573 = vsel %vm4550, 1, 0
          %v4574 = vsel %vm4551, 1, 0
          %v4575 = vsel %vm4552, 1, 0
          %v4576 = vsel %vm4553, 1, 0
          %v4577 = vsel %vm4554, 1, 0
          %v4578 = vsel %vm4555, 1, 0
          %v4579 = vsel %vm4556, 1, 0
          %v4580 = vsel %vm4557, 1, 0
          %v4581 = vcombine.low %v4558, %v4559
          %v4582 = vcombine.low %v4560, %v4561
          %v4583 = vcombine.low %v4562, %v4563
          %v4584 = vcombine.low %v4564, %v4565
          %v4586 = vunpack.c.l.s4 1966171168
          %v4587 = vunpack.c.0.s8 %v4586
          %v4588 = vlaneseq
          %v4589 = vshrl.u32 %v4588, 7
          %v4590 = vsub.s32 %v4587, %v4589
          %v4591 = vrot.slane %v4581, %v4590
          %v4593 = vunpack.c.l.s4 1966171168
          %v4594 = vunpack.c.0.s8 %v4593
          %v4595 = vlaneseq
          %v4596 = vshrl.u32 %v4595, 7
          %v4597 = vsub.s32 %v4594, %v4596
          %v4598 = vrot.slane %v4582, %v4597
          %v4600 = vunpack.c.l.s4 1966171168
          %v4601 = vunpack.c.0.s8 %v4600
          %v4602 = vlaneseq
          %v4603 = vshrl.u32 %v4602, 7
          %v4604 = vsub.s32 %v4601, %v4603
          %v4605 = vrot.slane %v4583, %v4604
          %v4607 = vunpack.c.l.s4 1966171168
          %v4608 = vunpack.c.0.s8 %v4607
          %v4609 = vlaneseq
          %v4610 = vshrl.u32 %v4609, 7
          %v4611 = vsub.s32 %v4608, %v4610
          %v4612 = vrot.slane %v4584, %v4611
          %v4613 = vcombine.low %v4591, %v4598
          %v4614 = vcombine.low %v4605, %v4612
          %v4616 = vunpack.c.l.s4 1966171168
          %v4617 = vunpack.c.0.s8 %v4616
          %v4618 = vlaneseq
          %v4619 = vshrl.u32 %v4618, 7
          %v4620 = vsub.s32 %v4617, %v4619
          %v4621 = vrot.slane %v4613, %v4620
          %v4623 = vunpack.c.l.s4 1966171168
          %v4624 = vunpack.c.0.s8 %v4623
          %v4625 = vlaneseq
          %v4626 = vshrl.u32 %v4625, 7
          %v4627 = vsub.s32 %v4624, %v4626
          %v4628 = vrot.slane %v4614, %v4627
          %v4629 = vcombine.low %v4621, %v4628
          %v4630 = vcombine.low %v4566, %v4567
          %v4631 = vcombine.low %v4568, %v4569
          %v4632 = vcombine.low %v4570, %v4571
          %v4633 = vcombine.low %v4572, %v4573
          %v4635 = vunpack.c.l.s4 1966171168
          %v4636 = vunpack.c.0.s8 %v4635
          %v4637 = vlaneseq
          %v4638 = vshrl.u32 %v4637, 7
          %v4639 = vsub.s32 %v4636, %v4638
          %v4640 = vrot.slane %v4630, %v4639
          %v4642 = vunpack.c.l.s4 1966171168
          %v4643 = vunpack.c.0.s8 %v4642
          %v4644 = vlaneseq
          %v4645 = vshrl.u32 %v4644, 7
          %v4646 = vsub.s32 %v4643, %v4645
          %v4647 = vrot.slane %v4631, %v4646
          %v4649 = vunpack.c.l.s4 1966171168
          %v4650 = vunpack.c.0.s8 %v4649
          %v4651 = vlaneseq
          %v4652 = vshrl.u32 %v4651, 7
          %v4653 = vsub.s32 %v4650, %v4652
          %v4654 = vrot.slane %v4632, %v4653
          %v4656 = vunpack.c.l.s4 1966171168
          %v4657 = vunpack.c.0.s8 %v4656
          %v4658 = vlaneseq
          %v4659 = vshrl.u32 %v4658, 7
          %v4660 = vsub.s32 %v4657, %v4659
          %v4661 = vrot.slane %v4633, %v4660
          %v4662 = vcombine.low %v4640, %v4647
          %v4663 = vcombine.low %v4654, %v4661
          %v4665 = vunpack.c.l.s4 1966171168
          %v4666 = vunpack.c.0.s8 %v4665
          %v4667 = vlaneseq
          %v4668 = vshrl.u32 %v4667, 7
          %v4669 = vsub.s32 %v4666, %v4668
          %v4670 = vrot.slane %v4662, %v4669
          %v4672 = vunpack.c.l.s4 1966171168
          %v4673 = vunpack.c.0.s8 %v4672
          %v4674 = vlaneseq
          %v4675 = vshrl.u32 %v4674, 7
          %v4676 = vsub.s32 %v4673, %v4675
          %v4677 = vrot.slane %v4663, %v4676
          %v4678 = vcombine.low %v4670, %v4677
          %v4679 = vcombine.low %v4574, %v4575
          %v4680 = vcombine.low %v4576, %v4577
          %v4681 = vcombine.low %v4578, %v4579
          %v4683 = vunpack.c.l.s4 1966171168
          %v4684 = vunpack.c.0.s8 %v4683
          %v4685 = vlaneseq
          %v4686 = vshrl.u32 %v4685, 7
          %v4687 = vsub.s32 %v4684, %v4686
          %v4688 = vrot.slane %v4679, %v4687
          %v4690 = vunpack.c.l.s4 1966171168
          %v4691 = vunpack.c.0.s8 %v4690
          %v4692 = vlaneseq
          %v4693 = vshrl.u32 %v4692, 7
          %v4694 = vsub.s32 %v4691, %v4693
          %v4695 = vrot.slane %v4680, %v4694
          %v4697 = vunpack.c.l.s4 1966171168
          %v4698 = vunpack.c.0.s8 %v4697
          %v4699 = vlaneseq
          %v4700 = vshrl.u32 %v4699, 7
          %v4701 = vsub.s32 %v4698, %v4700
          %v4702 = vrot.slane %v4681, %v4701
          %v4704 = vunpack.c.l.s4 1966171168
          %v4705 = vunpack.c.0.s8 %v4704
          %v4706 = vlaneseq
          %v4707 = vshrl.u32 %v4706, 7
          %v4708 = vsub.s32 %v4705, %v4707
          %v4709 = vrot.slane %v4580, %v4708
          %v4710 = vcombine.low %v4688, %v4695
          %v4711 = vcombine.low %v4702, %v4709
          %v4713 = vunpack.c.l.s4 1966171168
          %v4714 = vunpack.c.0.s8 %v4713
          %v4715 = vlaneseq
          %v4716 = vshrl.u32 %v4715, 7
          %v4717 = vsub.s32 %v4714, %v4716
          %v4718 = vrot.slane %v4710, %v4717
          %v4720 = vunpack.c.l.s4 1966171168
          %v4721 = vunpack.c.0.s8 %v4720
          %v4722 = vlaneseq
          %v4723 = vshrl.u32 %v4722, 7
          %v4724 = vsub.s32 %v4721, %v4723
          %v4725 = vrot.slane %v4711, %v4724
          %v4726 = vcombine.low %v4718, %v4725
          %vm4727 = vcmp.ne.s32.totalorder %v4629, 0
          %vm4728 = vcmp.ne.s32.totalorder %v4678, 0
          %vm4729 = vcmp.ne.s32.totalorder %v4726, 0
          %s4730 = sshra.s32 %s4532, 3
          %s4731 = sand.u32 %s4532, 7
          %s4732 = sshra.s32 %s4532, 3
          %s4733 = sand.u32 %s4532, 7
          %s4734 = smul.u32 %s4730, 23
          %s4735 = smul.u32 %s4734, 8
          %s4736 = sadd.s32 %s4735, %s4733
          %s4737 = scalar_lea.vmem %s56, %s4736 [#allocation6]
          %4738 = vst.msk [vmem:[%s4737] ss:$8 sm:$0xf] %vm4727, %v4533
          %4739 = vst.msk [vmem:[%s4737] ss:$8 sm:$0xf0] %vm4727, %v4533
          %s4740 = sadd.s32 %s4734, 8
          %s4741 = smul.u32 %s4740, 8
          %s4742 = sadd.s32 %s4741, %s4733
          %s4743 = scalar_lea.vmem %s56, %s4742 [#allocation6]
          %4744 = vst.msk [vmem:[%s4743] ss:$8 sm:$0xf] %vm4728, %v4533
          %4745 = vst.msk [vmem:[%s4743] ss:$8 sm:$0xf0] %vm4728, %v4533
          %v4746 = vlaneseq
          %vm4747 = vcmp.ge.s32.totalorder %v4746, 0
          %vm4748 = vcmp.lt.s32.totalorder %v4746, 832
          %vm4749 = vmand %vm4747, %vm4748
          %vm4750 = vmand %vm4749, %vm4729
          %s4751 = sadd.s32 %s4734, 16
          %s4752 = smul.u32 %s4751, 8
          %s4753 = sadd.s32 %s4752, %s4733
          %s4754 = scalar_lea.vmem %s56, %s4753 [#allocation6]
          %4755 = vst.msk [vmem:[%s4754] ss:$8 sm:$0xf] %vm4750, %v4533
          %4756 = vst.msk [vmem:[%s4754] ss:$8 sm:$0x70] %vm4750, %v4533
        $region56: #{tpu_custom_call.1} parent=11 // pred_fallthru
          _
        %s4757 = sld [smem:[#allocation3 + $0xb]]
        %s4758 = sld [smem:[#allocation4 + $0xb]]
        %s4759 = sld [smem:[#allocation5 + $0xb]]
        %p4760 = scmp.ge.s32.totalorder %s4757, %s63
        %p4761 = scmp.lt.s32.totalorder %s4757, %s2186
        %p4762 = pnand %p4760, %p4761
        %p4763 = pneg %p4762
        // Predicated region
        $region57: #{tpu_custom_call.1} parent=11 // pred_check
          _
        $region58: #{tpu_custom_call.1} parent=11 // pred_check_branch
          %4765 = sbr.rel (%p4762) target = $region60
        $region59: #{tpu_custom_call.1} parent=11 // pred_region
          %s4766 = ssub.s32 %s4757, %s63
          %v4767 = vstv %s4759
          %v4768 = vstv %s4758
          %vm4769 = vcmp.eq.s32.totalorder %v2159, %v4768
          %vm4770 = vcmp.eq.s32.totalorder %v2160, %v4768
          %vm4771 = vcmp.eq.s32.totalorder %v2161, %v4768
          %vm4772 = vcmp.eq.s32.totalorder %v2162, %v4768
          %vm4773 = vcmp.eq.s32.totalorder %v2163, %v4768
          %vm4774 = vcmp.eq.s32.totalorder %v2164, %v4768
          %vm4775 = vcmp.eq.s32.totalorder %v2165, %v4768
          %vm4776 = vcmp.eq.s32.totalorder %v2166, %v4768
          %vm4777 = vcmp.eq.s32.totalorder %v2167, %v4768
          %vm4778 = vcmp.eq.s32.totalorder %v2168, %v4768
          %vm4779 = vcmp.eq.s32.totalorder %v2169, %v4768
          %vm4780 = vcmp.eq.s32.totalorder %v2170, %v4768
          %vm4781 = vcmp.eq.s32.totalorder %v2171, %v4768
          %vm4782 = vcmp.eq.s32.totalorder %v2172, %v4768
          %vm4783 = vcmp.eq.s32.totalorder %v2173, %v4768
          %vm4784 = vcmp.eq.s32.totalorder %v2174, %v4768
          %vm4785 = vcmp.eq.s32.totalorder %v2175, %v4768
          %vm4786 = vcmp.eq.s32.totalorder %v2176, %v4768
          %vm4787 = vcmp.eq.s32.totalorder %v2177, %v4768
          %vm4788 = vcmp.eq.s32.totalorder %v2178, %v4768
          %vm4789 = vcmp.eq.s32.totalorder %v2179, %v4768
          %vm4790 = vcmp.eq.s32.totalorder %v2180, %v4768
          %vm4791 = vcmp.eq.s32.totalorder %v2181, %v4768
          %v4792 = vsel %vm4769, 1, 0
          %v4793 = vsel %vm4770, 1, 0
          %v4794 = vsel %vm4771, 1, 0
          %v4795 = vsel %vm4772, 1, 0
          %v4796 = vsel %vm4773, 1, 0
          %v4797 = vsel %vm4774, 1, 0
          %v4798 = vsel %vm4775, 1, 0
          %v4799 = vsel %vm4776, 1, 0
          %v4800 = vsel %vm4777, 1, 0
          %v4801 = vsel %vm4778, 1, 0
          %v4802 = vsel %vm4779, 1, 0
          %v4803 = vsel %vm4780, 1, 0
          %v4804 = vsel %vm4781, 1, 0
          %v4805 = vsel %vm4782, 1, 0
          %v4806 = vsel %vm4783, 1, 0
          %v4807 = vsel %vm4784, 1, 0
          %v4808 = vsel %vm4785, 1, 0
          %v4809 = vsel %vm4786, 1, 0
          %v4810 = vsel %vm4787, 1, 0
          %v4811 = vsel %vm4788, 1, 0
          %v4812 = vsel %vm4789, 1, 0
          %v4813 = vsel %vm4790, 1, 0
          %v4814 = vsel %vm4791, 1, 0
          %v4815 = vcombine.low %v4792, %v4793
          %v4816 = vcombine.low %v4794, %v4795
          %v4817 = vcombine.low %v4796, %v4797
          %v4818 = vcombine.low %v4798, %v4799
          %v4820 = vunpack.c.l.s4 1966171168
          %v4821 = vunpack.c.0.s8 %v4820
          %v4822 = vlaneseq
          %v4823 = vshrl.u32 %v4822, 7
          %v4824 = vsub.s32 %v4821, %v4823
          %v4825 = vrot.slane %v4815, %v4824
          %v4827 = vunpack.c.l.s4 1966171168
          %v4828 = vunpack.c.0.s8 %v4827
          %v4829 = vlaneseq
          %v4830 = vshrl.u32 %v4829, 7
          %v4831 = vsub.s32 %v4828, %v4830
          %v4832 = vrot.slane %v4816, %v4831
          %v4834 = vunpack.c.l.s4 1966171168
          %v4835 = vunpack.c.0.s8 %v4834
          %v4836 = vlaneseq
          %v4837 = vshrl.u32 %v4836, 7
          %v4838 = vsub.s32 %v4835, %v4837
          %v4839 = vrot.slane %v4817, %v4838
          %v4841 = vunpack.c.l.s4 1966171168
          %v4842 = vunpack.c.0.s8 %v4841
          %v4843 = vlaneseq
          %v4844 = vshrl.u32 %v4843, 7
          %v4845 = vsub.s32 %v4842, %v4844
          %v4846 = vrot.slane %v4818, %v4845
          %v4847 = vcombine.low %v4825, %v4832
          %v4848 = vcombine.low %v4839, %v4846
          %v4850 = vunpack.c.l.s4 1966171168
          %v4851 = vunpack.c.0.s8 %v4850
          %v4852 = vlaneseq
          %v4853 = vshrl.u32 %v4852, 7
          %v4854 = vsub.s32 %v4851, %v4853
          %v4855 = vrot.slane %v4847, %v4854
          %v4857 = vunpack.c.l.s4 1966171168
          %v4858 = vunpack.c.0.s8 %v4857
          %v4859 = vlaneseq
          %v4860 = vshrl.u32 %v4859, 7
          %v4861 = vsub.s32 %v4858, %v4860
          %v4862 = vrot.slane %v4848, %v4861
          %v4863 = vcombine.low %v4855, %v4862
          %v4864 = vcombine.low %v4800, %v4801
          %v4865 = vcombine.low %v4802, %v4803
          %v4866 = vcombine.low %v4804, %v4805
          %v4867 = vcombine.low %v4806, %v4807
          %v4869 = vunpack.c.l.s4 1966171168
          %v4870 = vunpack.c.0.s8 %v4869
          %v4871 = vlaneseq
          %v4872 = vshrl.u32 %v4871, 7
          %v4873 = vsub.s32 %v4870, %v4872
          %v4874 = vrot.slane %v4864, %v4873
          %v4876 = vunpack.c.l.s4 1966171168
          %v4877 = vunpack.c.0.s8 %v4876
          %v4878 = vlaneseq
          %v4879 = vshrl.u32 %v4878, 7
          %v4880 = vsub.s32 %v4877, %v4879
          %v4881 = vrot.slane %v4865, %v4880
          %v4883 = vunpack.c.l.s4 1966171168
          %v4884 = vunpack.c.0.s8 %v4883
          %v4885 = vlaneseq
          %v4886 = vshrl.u32 %v4885, 7
          %v4887 = vsub.s32 %v4884, %v4886
          %v4888 = vrot.slane %v4866, %v4887
          %v4890 = vunpack.c.l.s4 1966171168
          %v4891 = vunpack.c.0.s8 %v4890
          %v4892 = vlaneseq
          %v4893 = vshrl.u32 %v4892, 7
          %v4894 = vsub.s32 %v4891, %v4893
          %v4895 = vrot.slane %v4867, %v4894
          %v4896 = vcombine.low %v4874, %v4881
          %v4897 = vcombine.low %v4888, %v4895
          %v4899 = vunpack.c.l.s4 1966171168
          %v4900 = vunpack.c.0.s8 %v4899
          %v4901 = vlaneseq
          %v4902 = vshrl.u32 %v4901, 7
          %v4903 = vsub.s32 %v4900, %v4902
          %v4904 = vrot.slane %v4896, %v4903
          %v4906 = vunpack.c.l.s4 1966171168
          %v4907 = vunpack.c.0.s8 %v4906
          %v4908 = vlaneseq
          %v4909 = vshrl.u32 %v4908, 7
          %v4910 = vsub.s32 %v4907, %v4909
          %v4911 = vrot.slane %v4897, %v4910
          %v4912 = vcombine.low %v4904, %v4911
          %v4913 = vcombine.low %v4808, %v4809
          %v4914 = vcombine.low %v4810, %v4811
          %v4915 = vcombine.low %v4812, %v4813
          %v4917 = vunpack.c.l.s4 1966171168
          %v4918 = vunpack.c.0.s8 %v4917
          %v4919 = vlaneseq
          %v4920 = vshrl.u32 %v4919, 7
          %v4921 = vsub.s32 %v4918, %v4920
          %v4922 = vrot.slane %v4913, %v4921
          %v4924 = vunpack.c.l.s4 1966171168
          %v4925 = vunpack.c.0.s8 %v4924
          %v4926 = vlaneseq
          %v4927 = vshrl.u32 %v4926, 7
          %v4928 = vsub.s32 %v4925, %v4927
          %v4929 = vrot.slane %v4914, %v4928
          %v4931 = vunpack.c.l.s4 1966171168
          %v4932 = vunpack.c.0.s8 %v4931
          %v4933 = vlaneseq
          %v4934 = vshrl.u32 %v4933, 7
          %v4935 = vsub.s32 %v4932, %v4934
          %v4936 = vrot.slane %v4915, %v4935
          %v4938 = vunpack.c.l.s4 1966171168
          %v4939 = vunpack.c.0.s8 %v4938
          %v4940 = vlaneseq
          %v4941 = vshrl.u32 %v4940, 7
          %v4942 = vsub.s32 %v4939, %v4941
          %v4943 = vrot.slane %v4814, %v4942
          %v4944 = vcombine.low %v4922, %v4929
          %v4945 = vcombine.low %v4936, %v4943
          %v4947 = vunpack.c.l.s4 1966171168
          %v4948 = vunpack.c.0.s8 %v4947
          %v4949 = vlaneseq
          %v4950 = vshrl.u32 %v4949, 7
          %v4951 = vsub.s32 %v4948, %v4950
          %v4952 = vrot.slane %v4944, %v4951
          %v4954 = vunpack.c.l.s4 1966171168
          %v4955 = vunpack.c.0.s8 %v4954
          %v4956 = vlaneseq
          %v4957 = vshrl.u32 %v4956, 7
          %v4958 = vsub.s32 %v4955, %v4957
          %v4959 = vrot.slane %v4945, %v4958
          %v4960 = vcombine.low %v4952, %v4959
          %vm4961 = vcmp.ne.s32.totalorder %v4863, 0
          %vm4962 = vcmp.ne.s32.totalorder %v4912, 0
          %vm4963 = vcmp.ne.s32.totalorder %v4960, 0
          %s4964 = sshra.s32 %s4766, 3
          %s4965 = sand.u32 %s4766, 7
          %s4966 = sshra.s32 %s4766, 3
          %s4967 = sand.u32 %s4766, 7
          %s4968 = smul.u32 %s4964, 23
          %s4969 = smul.u32 %s4968, 8
          %s4970 = sadd.s32 %s4969, %s4967
          %s4971 = scalar_lea.vmem %s56, %s4970 [#allocation6]
          %4972 = vst.msk [vmem:[%s4971] ss:$8 sm:$0xf] %vm4961, %v4767
          %4973 = vst.msk [vmem:[%s4971] ss:$8 sm:$0xf0] %vm4961, %v4767
          %s4974 = sadd.s32 %s4968, 8
          %s4975 = smul.u32 %s4974, 8
          %s4976 = sadd.s32 %s4975, %s4967
          %s4977 = scalar_lea.vmem %s56, %s4976 [#allocation6]
          %4978 = vst.msk [vmem:[%s4977] ss:$8 sm:$0xf] %vm4962, %v4767
          %4979 = vst.msk [vmem:[%s4977] ss:$8 sm:$0xf0] %vm4962, %v4767
          %v4980 = vlaneseq
          %vm4981 = vcmp.ge.s32.totalorder %v4980, 0
          %vm4982 = vcmp.lt.s32.totalorder %v4980, 832
          %vm4983 = vmand %vm4981, %vm4982
          %vm4984 = vmand %vm4983, %vm4963
          %s4985 = sadd.s32 %s4968, 16
          %s4986 = smul.u32 %s4985, 8
          %s4987 = sadd.s32 %s4986, %s4967
          %s4988 = scalar_lea.vmem %s56, %s4987 [#allocation6]
          %4989 = vst.msk [vmem:[%s4988] ss:$8 sm:$0xf] %vm4984, %v4767
          %4990 = vst.msk [vmem:[%s4988] ss:$8 sm:$0x70] %vm4984, %v4767
        $region60: #{tpu_custom_call.1} parent=11 // pred_fallthru
          _
        %s4991 = sld [smem:[#allocation3 + $0xc]]
        %s4992 = sld [smem:[#allocation4 + $0xc]]
        %s4993 = sld [smem:[#allocation5 + $0xc]]
        %p4994 = scmp.ge.s32.totalorder %s4991, %s63
        %p4995 = scmp.lt.s32.totalorder %s4991, %s2186
        %p4996 = pnand %p4994, %p4995
        %p4997 = pneg %p4996
        // Predicated region
        $region61: #{tpu_custom_call.1} parent=11 // pred_check
          _
        $region62: #{tpu_custom_call.1} parent=11 // pred_check_branch
          %4999 = sbr.rel (%p4996) target = $region64
        $region63: #{tpu_custom_call.1} parent=11 // pred_region
          %s5000 = ssub.s32 %s4991, %s63
          %v5001 = vstv %s4993
          %v5002 = vstv %s4992
          %vm5003 = vcmp.eq.s32.totalorder %v2159, %v5002
          %vm5004 = vcmp.eq.s32.totalorder %v2160, %v5002
          %vm5005 = vcmp.eq.s32.totalorder %v2161, %v5002
          %vm5006 = vcmp.eq.s32.totalorder %v2162, %v5002
          %vm5007 = vcmp.eq.s32.totalorder %v2163, %v5002
          %vm5008 = vcmp.eq.s32.totalorder %v2164, %v5002
          %vm5009 = vcmp.eq.s32.totalorder %v2165, %v5002
          %vm5010 = vcmp.eq.s32.totalorder %v2166, %v5002
          %vm5011 = vcmp.eq.s32.totalorder %v2167, %v5002
          %vm5012 = vcmp.eq.s32.totalorder %v2168, %v5002
          %vm5013 = vcmp.eq.s32.totalorder %v2169, %v5002
          %vm5014 = vcmp.eq.s32.totalorder %v2170, %v5002
          %vm5015 = vcmp.eq.s32.totalorder %v2171, %v5002
          %vm5016 = vcmp.eq.s32.totalorder %v2172, %v5002
          %vm5017 = vcmp.eq.s32.totalorder %v2173, %v5002
          %vm5018 = vcmp.eq.s32.totalorder %v2174, %v5002
          %vm5019 = vcmp.eq.s32.totalorder %v2175, %v5002
          %vm5020 = vcmp.eq.s32.totalorder %v2176, %v5002
          %vm5021 = vcmp.eq.s32.totalorder %v2177, %v5002
          %vm5022 = vcmp.eq.s32.totalorder %v2178, %v5002
          %vm5023 = vcmp.eq.s32.totalorder %v2179, %v5002
          %vm5024 = vcmp.eq.s32.totalorder %v2180, %v5002
          %vm5025 = vcmp.eq.s32.totalorder %v2181, %v5002
          %v5026 = vsel %vm5003, 1, 0
          %v5027 = vsel %vm5004, 1, 0
          %v5028 = vsel %vm5005, 1, 0
          %v5029 = vsel %vm5006, 1, 0
          %v5030 = vsel %vm5007, 1, 0
          %v5031 = vsel %vm5008, 1, 0
          %v5032 = vsel %vm5009, 1, 0
          %v5033 = vsel %vm5010, 1, 0
          %v5034 = vsel %vm5011, 1, 0
          %v5035 = vsel %vm5012, 1, 0
          %v5036 = vsel %vm5013, 1, 0
          %v5037 = vsel %vm5014, 1, 0
          %v5038 = vsel %vm5015, 1, 0
          %v5039 = vsel %vm5016, 1, 0
          %v5040 = vsel %vm5017, 1, 0
          %v5041 = vsel %vm5018, 1, 0
          %v5042 = vsel %vm5019, 1, 0
          %v5043 = vsel %vm5020, 1, 0
          %v5044 = vsel %vm5021, 1, 0
          %v5045 = vsel %vm5022, 1, 0
          %v5046 = vsel %vm5023, 1, 0
          %v5047 = vsel %vm5024, 1, 0
          %v5048 = vsel %vm5025, 1, 0
          %v5049 = vcombine.low %v5026, %v5027
          %v5050 = vcombine.low %v5028, %v5029
          %v5051 = vcombine.low %v5030, %v5031
          %v5052 = vcombine.low %v5032, %v5033
          %v5054 = vunpack.c.l.s4 1966171168
          %v5055 = vunpack.c.0.s8 %v5054
          %v5056 = vlaneseq
          %v5057 = vshrl.u32 %v5056, 7
          %v5058 = vsub.s32 %v5055, %v5057
          %v5059 = vrot.slane %v5049, %v5058
          %v5061 = vunpack.c.l.s4 1966171168
          %v5062 = vunpack.c.0.s8 %v5061
          %v5063 = vlaneseq
          %v5064 = vshrl.u32 %v5063, 7
          %v5065 = vsub.s32 %v5062, %v5064
          %v5066 = vrot.slane %v5050, %v5065
          %v5068 = vunpack.c.l.s4 1966171168
          %v5069 = vunpack.c.0.s8 %v5068
          %v5070 = vlaneseq
          %v5071 = vshrl.u32 %v5070, 7
          %v5072 = vsub.s32 %v5069, %v5071
          %v5073 = vrot.slane %v5051, %v5072
          %v5075 = vunpack.c.l.s4 1966171168
          %v5076 = vunpack.c.0.s8 %v5075
          %v5077 = vlaneseq
          %v5078 = vshrl.u32 %v5077, 7
          %v5079 = vsub.s32 %v5076, %v5078
          %v5080 = vrot.slane %v5052, %v5079
          %v5081 = vcombine.low %v5059, %v5066
          %v5082 = vcombine.low %v5073, %v5080
          %v5084 = vunpack.c.l.s4 1966171168
          %v5085 = vunpack.c.0.s8 %v5084
          %v5086 = vlaneseq
          %v5087 = vshrl.u32 %v5086, 7
          %v5088 = vsub.s32 %v5085, %v5087
          %v5089 = vrot.slane %v5081, %v5088
          %v5091 = vunpack.c.l.s4 1966171168
          %v5092 = vunpack.c.0.s8 %v5091
          %v5093 = vlaneseq
          %v5094 = vshrl.u32 %v5093, 7
          %v5095 = vsub.s32 %v5092, %v5094
          %v5096 = vrot.slane %v5082, %v5095
          %v5097 = vcombine.low %v5089, %v5096
          %v5098 = vcombine.low %v5034, %v5035
          %v5099 = vcombine.low %v5036, %v5037
          %v5100 = vcombine.low %v5038, %v5039
          %v5101 = vcombine.low %v5040, %v5041
          %v5103 = vunpack.c.l.s4 1966171168
          %v5104 = vunpack.c.0.s8 %v5103
          %v5105 = vlaneseq
          %v5106 = vshrl.u32 %v5105, 7
          %v5107 = vsub.s32 %v5104, %v5106
          %v5108 = vrot.slane %v5098, %v5107
          %v5110 = vunpack.c.l.s4 1966171168
          %v5111 = vunpack.c.0.s8 %v5110
          %v5112 = vlaneseq
          %v5113 = vshrl.u32 %v5112, 7
          %v5114 = vsub.s32 %v5111, %v5113
          %v5115 = vrot.slane %v5099, %v5114
          %v5117 = vunpack.c.l.s4 1966171168
          %v5118 = vunpack.c.0.s8 %v5117
          %v5119 = vlaneseq
          %v5120 = vshrl.u32 %v5119, 7
          %v5121 = vsub.s32 %v5118, %v5120
          %v5122 = vrot.slane %v5100, %v5121
          %v5124 = vunpack.c.l.s4 1966171168
          %v5125 = vunpack.c.0.s8 %v5124
          %v5126 = vlaneseq
          %v5127 = vshrl.u32 %v5126, 7
          %v5128 = vsub.s32 %v5125, %v5127
          %v5129 = vrot.slane %v5101, %v5128
          %v5130 = vcombine.low %v5108, %v5115
          %v5131 = vcombine.low %v5122, %v5129
          %v5133 = vunpack.c.l.s4 1966171168
          %v5134 = vunpack.c.0.s8 %v5133
          %v5135 = vlaneseq
          %v5136 = vshrl.u32 %v5135, 7
          %v5137 = vsub.s32 %v5134, %v5136
          %v5138 = vrot.slane %v5130, %v5137
          %v5140 = vunpack.c.l.s4 1966171168
          %v5141 = vunpack.c.0.s8 %v5140
          %v5142 = vlaneseq
          %v5143 = vshrl.u32 %v5142, 7
          %v5144 = vsub.s32 %v5141, %v5143
          %v5145 = vrot.slane %v5131, %v5144
          %v5146 = vcombine.low %v5138, %v5145
          %v5147 = vcombine.low %v5042, %v5043
          %v5148 = vcombine.low %v5044, %v5045
          %v5149 = vcombine.low %v5046, %v5047
          %v5151 = vunpack.c.l.s4 1966171168
          %v5152 = vunpack.c.0.s8 %v5151
          %v5153 = vlaneseq
          %v5154 = vshrl.u32 %v5153, 7
          %v5155 = vsub.s32 %v5152, %v5154
          %v5156 = vrot.slane %v5147, %v5155
          %v5158 = vunpack.c.l.s4 1966171168
          %v5159 = vunpack.c.0.s8 %v5158
          %v5160 = vlaneseq
          %v5161 = vshrl.u32 %v5160, 7
          %v5162 = vsub.s32 %v5159, %v5161
          %v5163 = vrot.slane %v5148, %v5162
          %v5165 = vunpack.c.l.s4 1966171168
          %v5166 = vunpack.c.0.s8 %v5165
          %v5167 = vlaneseq
          %v5168 = vshrl.u32 %v5167, 7
          %v5169 = vsub.s32 %v5166, %v5168
          %v5170 = vrot.slane %v5149, %v5169
          %v5172 = vunpack.c.l.s4 1966171168
          %v5173 = vunpack.c.0.s8 %v5172
          %v5174 = vlaneseq
          %v5175 = vshrl.u32 %v5174, 7
          %v5176 = vsub.s32 %v5173, %v5175
          %v5177 = vrot.slane %v5048, %v5176
          %v5178 = vcombine.low %v5156, %v5163
          %v5179 = vcombine.low %v5170, %v5177
          %v5181 = vunpack.c.l.s4 1966171168
          %v5182 = vunpack.c.0.s8 %v5181
          %v5183 = vlaneseq
          %v5184 = vshrl.u32 %v5183, 7
          %v5185 = vsub.s32 %v5182, %v5184
          %v5186 = vrot.slane %v5178, %v5185
          %v5188 = vunpack.c.l.s4 1966171168
          %v5189 = vunpack.c.0.s8 %v5188
          %v5190 = vlaneseq
          %v5191 = vshrl.u32 %v5190, 7
          %v5192 = vsub.s32 %v5189, %v5191
          %v5193 = vrot.slane %v5179, %v5192
          %v5194 = vcombine.low %v5186, %v5193
          %vm5195 = vcmp.ne.s32.totalorder %v5097, 0
          %vm5196 = vcmp.ne.s32.totalorder %v5146, 0
          %vm5197 = vcmp.ne.s32.totalorder %v5194, 0
          %s5198 = sshra.s32 %s5000, 3
          %s5199 = sand.u32 %s5000, 7
          %s5200 = sshra.s32 %s5000, 3
          %s5201 = sand.u32 %s5000, 7
          %s5202 = smul.u32 %s5198, 23
          %s5203 = smul.u32 %s5202, 8
          %s5204 = sadd.s32 %s5203, %s5201
          %s5205 = scalar_lea.vmem %s56, %s5204 [#allocation6]
          %5206 = vst.msk [vmem:[%s5205] ss:$8 sm:$0xf] %vm5195, %v5001
          %5207 = vst.msk [vmem:[%s5205] ss:$8 sm:$0xf0] %vm5195, %v5001
          %s5208 = sadd.s32 %s5202, 8
          %s5209 = smul.u32 %s5208, 8
          %s5210 = sadd.s32 %s5209, %s5201
          %s5211 = scalar_lea.vmem %s56, %s5210 [#allocation6]
          %5212 = vst.msk [vmem:[%s5211] ss:$8 sm:$0xf] %vm5196, %v5001
          %5213 = vst.msk [vmem:[%s5211] ss:$8 sm:$0xf0] %vm5196, %v5001
          %v5214 = vlaneseq
          %vm5215 = vcmp.ge.s32.totalorder %v5214, 0
          %vm5216 = vcmp.lt.s32.totalorder %v5214, 832
          %vm5217 = vmand %vm5215, %vm5216
          %vm5218 = vmand %vm5217, %vm5197
          %s5219 = sadd.s32 %s5202, 16
          %s5220 = smul.u32 %s5219, 8
          %s5221 = sadd.s32 %s5220, %s5201
          %s5222 = scalar_lea.vmem %s56, %s5221 [#allocation6]
          %5223 = vst.msk [vmem:[%s5222] ss:$8 sm:$0xf] %vm5218, %v5001
          %5224 = vst.msk [vmem:[%s5222] ss:$8 sm:$0x70] %vm5218, %v5001
        $region64: #{tpu_custom_call.1} parent=11 // pred_fallthru
          _
        %s5225 = sld [smem:[#allocation3 + $0xd]]
        %s5226 = sld [smem:[#allocation4 + $0xd]]
        %s5227 = sld [smem:[#allocation5 + $0xd]]
        %p5228 = scmp.ge.s32.totalorder %s5225, %s63
        %p5229 = scmp.lt.s32.totalorder %s5225, %s2186
        %p5230 = pnand %p5228, %p5229
        %p5231 = pneg %p5230
        // Predicated region
        $region65: #{tpu_custom_call.1} parent=11 // pred_check
          _
        $region66: #{tpu_custom_call.1} parent=11 // pred_check_branch
          %5233 = sbr.rel (%p5230) target = $region68
        $region67: #{tpu_custom_call.1} parent=11 // pred_region
          %s5234 = ssub.s32 %s5225, %s63
          %v5235 = vstv %s5227
          %v5236 = vstv %s5226
          %vm5237 = vcmp.eq.s32.totalorder %v2159, %v5236
          %vm5238 = vcmp.eq.s32.totalorder %v2160, %v5236
          %vm5239 = vcmp.eq.s32.totalorder %v2161, %v5236
          %vm5240 = vcmp.eq.s32.totalorder %v2162, %v5236
          %vm5241 = vcmp.eq.s32.totalorder %v2163, %v5236
          %vm5242 = vcmp.eq.s32.totalorder %v2164, %v5236
          %vm5243 = vcmp.eq.s32.totalorder %v2165, %v5236
          %vm5244 = vcmp.eq.s32.totalorder %v2166, %v5236
          %vm5245 = vcmp.eq.s32.totalorder %v2167, %v5236
          %vm5246 = vcmp.eq.s32.totalorder %v2168, %v5236
          %vm5247 = vcmp.eq.s32.totalorder %v2169, %v5236
          %vm5248 = vcmp.eq.s32.totalorder %v2170, %v5236
          %vm5249 = vcmp.eq.s32.totalorder %v2171, %v5236
          %vm5250 = vcmp.eq.s32.totalorder %v2172, %v5236
          %vm5251 = vcmp.eq.s32.totalorder %v2173, %v5236
          %vm5252 = vcmp.eq.s32.totalorder %v2174, %v5236
          %vm5253 = vcmp.eq.s32.totalorder %v2175, %v5236
          %vm5254 = vcmp.eq.s32.totalorder %v2176, %v5236
          %vm5255 = vcmp.eq.s32.totalorder %v2177, %v5236
          %vm5256 = vcmp.eq.s32.totalorder %v2178, %v5236
          %vm5257 = vcmp.eq.s32.totalorder %v2179, %v5236
          %vm5258 = vcmp.eq.s32.totalorder %v2180, %v5236
          %vm5259 = vcmp.eq.s32.totalorder %v2181, %v5236
          %v5260 = vsel %vm5237, 1, 0
          %v5261 = vsel %vm5238, 1, 0
          %v5262 = vsel %vm5239, 1, 0
          %v5263 = vsel %vm5240, 1, 0
          %v5264 = vsel %vm5241, 1, 0
          %v5265 = vsel %vm5242, 1, 0
          %v5266 = vsel %vm5243, 1, 0
          %v5267 = vsel %vm5244, 1, 0
          %v5268 = vsel %vm5245, 1, 0
          %v5269 = vsel %vm5246, 1, 0
          %v5270 = vsel %vm5247, 1, 0
          %v5271 = vsel %vm5248, 1, 0
          %v5272 = vsel %vm5249, 1, 0
          %v5273 = vsel %vm5250, 1, 0
          %v5274 = vsel %vm5251, 1, 0
          %v5275 = vsel %vm5252, 1, 0
          %v5276 = vsel %vm5253, 1, 0
          %v5277 = vsel %vm5254, 1, 0
          %v5278 = vsel %vm5255, 1, 0
          %v5279 = vsel %vm5256, 1, 0
          %v5280 = vsel %vm5257, 1, 0
          %v5281 = vsel %vm5258, 1, 0
          %v5282 = vsel %vm5259, 1, 0
          %v5283 = vcombine.low %v5260, %v5261
          %v5284 = vcombine.low %v5262, %v5263
          %v5285 = vcombine.low %v5264, %v5265
          %v5286 = vcombine.low %v5266, %v5267
          %v5288 = vunpack.c.l.s4 1966171168
          %v5289 = vunpack.c.0.s8 %v5288
          %v5290 = vlaneseq
          %v5291 = vshrl.u32 %v5290, 7
          %v5292 = vsub.s32 %v5289, %v5291
          %v5293 = vrot.slane %v5283, %v5292
          %v5295 = vunpack.c.l.s4 1966171168
          %v5296 = vunpack.c.0.s8 %v5295
          %v5297 = vlaneseq
          %v5298 = vshrl.u32 %v5297, 7
          %v5299 = vsub.s32 %v5296, %v5298
          %v5300 = vrot.slane %v5284, %v5299
          %v5302 = vunpack.c.l.s4 1966171168
          %v5303 = vunpack.c.0.s8 %v5302
          %v5304 = vlaneseq
          %v5305 = vshrl.u32 %v5304, 7
          %v5306 = vsub.s32 %v5303, %v5305
          %v5307 = vrot.slane %v5285, %v5306
          %v5309 = vunpack.c.l.s4 1966171168
          %v5310 = vunpack.c.0.s8 %v5309
          %v5311 = vlaneseq
          %v5312 = vshrl.u32 %v5311, 7
          %v5313 = vsub.s32 %v5310, %v5312
          %v5314 = vrot.slane %v5286, %v5313
          %v5315 = vcombine.low %v5293, %v5300
          %v5316 = vcombine.low %v5307, %v5314
          %v5318 = vunpack.c.l.s4 1966171168
          %v5319 = vunpack.c.0.s8 %v5318
          %v5320 = vlaneseq
          %v5321 = vshrl.u32 %v5320, 7
          %v5322 = vsub.s32 %v5319, %v5321
          %v5323 = vrot.slane %v5315, %v5322
          %v5325 = vunpack.c.l.s4 1966171168
          %v5326 = vunpack.c.0.s8 %v5325
          %v5327 = vlaneseq
          %v5328 = vshrl.u32 %v5327, 7
          %v5329 = vsub.s32 %v5326, %v5328
          %v5330 = vrot.slane %v5316, %v5329
          %v5331 = vcombine.low %v5323, %v5330
          %v5332 = vcombine.low %v5268, %v5269
          %v5333 = vcombine.low %v5270, %v5271
          %v5334 = vcombine.low %v5272, %v5273
          %v5335 = vcombine.low %v5274, %v5275
          %v5337 = vunpack.c.l.s4 1966171168
          %v5338 = vunpack.c.0.s8 %v5337
          %v5339 = vlaneseq
          %v5340 = vshrl.u32 %v5339, 7
          %v5341 = vsub.s32 %v5338, %v5340
          %v5342 = vrot.slane %v5332, %v5341
          %v5344 = vunpack.c.l.s4 1966171168
          %v5345 = vunpack.c.0.s8 %v5344
          %v5346 = vlaneseq
          %v5347 = vshrl.u32 %v5346, 7
          %v5348 = vsub.s32 %v5345, %v5347
          %v5349 = vrot.slane %v5333, %v5348
          %v5351 = vunpack.c.l.s4 1966171168
          %v5352 = vunpack.c.0.s8 %v5351
          %v5353 = vlaneseq
          %v5354 = vshrl.u32 %v5353, 7
          %v5355 = vsub.s32 %v5352, %v5354
          %v5356 = vrot.slane %v5334, %v5355
          %v5358 = vunpack.c.l.s4 1966171168
          %v5359 = vunpack.c.0.s8 %v5358
          %v5360 = vlaneseq
          %v5361 = vshrl.u32 %v5360, 7
          %v5362 = vsub.s32 %v5359, %v5361
          %v5363 = vrot.slane %v5335, %v5362
          %v5364 = vcombine.low %v5342, %v5349
          %v5365 = vcombine.low %v5356, %v5363
          %v5367 = vunpack.c.l.s4 1966171168
          %v5368 = vunpack.c.0.s8 %v5367
          %v5369 = vlaneseq
          %v5370 = vshrl.u32 %v5369, 7
          %v5371 = vsub.s32 %v5368, %v5370
          %v5372 = vrot.slane %v5364, %v5371
          %v5374 = vunpack.c.l.s4 1966171168
          %v5375 = vunpack.c.0.s8 %v5374
          %v5376 = vlaneseq
          %v5377 = vshrl.u32 %v5376, 7
          %v5378 = vsub.s32 %v5375, %v5377
          %v5379 = vrot.slane %v5365, %v5378
          %v5380 = vcombine.low %v5372, %v5379
          %v5381 = vcombine.low %v5276, %v5277
          %v5382 = vcombine.low %v5278, %v5279
          %v5383 = vcombine.low %v5280, %v5281
          %v5385 = vunpack.c.l.s4 1966171168
          %v5386 = vunpack.c.0.s8 %v5385
          %v5387 = vlaneseq
          %v5388 = vshrl.u32 %v5387, 7
          %v5389 = vsub.s32 %v5386, %v5388
          %v5390 = vrot.slane %v5381, %v5389
          %v5392 = vunpack.c.l.s4 1966171168
          %v5393 = vunpack.c.0.s8 %v5392
          %v5394 = vlaneseq
          %v5395 = vshrl.u32 %v5394, 7
          %v5396 = vsub.s32 %v5393, %v5395
          %v5397 = vrot.slane %v5382, %v5396
          %v5399 = vunpack.c.l.s4 1966171168
          %v5400 = vunpack.c.0.s8 %v5399
          %v5401 = vlaneseq
          %v5402 = vshrl.u32 %v5401, 7
          %v5403 = vsub.s32 %v5400, %v5402
          %v5404 = vrot.slane %v5383, %v5403
          %v5406 = vunpack.c.l.s4 1966171168
          %v5407 = vunpack.c.0.s8 %v5406
          %v5408 = vlaneseq
          %v5409 = vshrl.u32 %v5408, 7
          %v5410 = vsub.s32 %v5407, %v5409
          %v5411 = vrot.slane %v5282, %v5410
          %v5412 = vcombine.low %v5390, %v5397
          %v5413 = vcombine.low %v5404, %v5411
          %v5415 = vunpack.c.l.s4 1966171168
          %v5416 = vunpack.c.0.s8 %v5415
          %v5417 = vlaneseq
          %v5418 = vshrl.u32 %v5417, 7
          %v5419 = vsub.s32 %v5416, %v5418
          %v5420 = vrot.slane %v5412, %v5419
          %v5422 = vunpack.c.l.s4 1966171168
          %v5423 = vunpack.c.0.s8 %v5422
          %v5424 = vlaneseq
          %v5425 = vshrl.u32 %v5424, 7
          %v5426 = vsub.s32 %v5423, %v5425
          %v5427 = vrot.slane %v5413, %v5426
          %v5428 = vcombine.low %v5420, %v5427
          %vm5429 = vcmp.ne.s32.totalorder %v5331, 0
          %vm5430 = vcmp.ne.s32.totalorder %v5380, 0
          %vm5431 = vcmp.ne.s32.totalorder %v5428, 0
          %s5432 = sshra.s32 %s5234, 3
          %s5433 = sand.u32 %s5234, 7
          %s5434 = sshra.s32 %s5234, 3
          %s5435 = sand.u32 %s5234, 7
          %s5436 = smul.u32 %s5432, 23
          %s5437 = smul.u32 %s5436, 8
          %s5438 = sadd.s32 %s5437, %s5435
          %s5439 = scalar_lea.vmem %s56, %s5438 [#allocation6]
          %5440 = vst.msk [vmem:[%s5439] ss:$8 sm:$0xf] %vm5429, %v5235
          %5441 = vst.msk [vmem:[%s5439] ss:$8 sm:$0xf0] %vm5429, %v5235
          %s5442 = sadd.s32 %s5436, 8
          %s5443 = smul.u32 %s5442, 8
          %s5444 = sadd.s32 %s5443, %s5435
          %s5445 = scalar_lea.vmem %s56, %s5444 [#allocation6]
          %5446 = vst.msk [vmem:[%s5445] ss:$8 sm:$0xf] %vm5430, %v5235
          %5447 = vst.msk [vmem:[%s5445] ss:$8 sm:$0xf0] %vm5430, %v5235
          %v5448 = vlaneseq
          %vm5449 = vcmp.ge.s32.totalorder %v5448, 0
          %vm5450 = vcmp.lt.s32.totalorder %v5448, 832
          %vm5451 = vmand %vm5449, %vm5450
          %vm5452 = vmand %vm5451, %vm5431
          %s5453 = sadd.s32 %s5436, 16
          %s5454 = smul.u32 %s5453, 8
          %s5455 = sadd.s32 %s5454, %s5435
          %s5456 = scalar_lea.vmem %s56, %s5455 [#allocation6]
          %5457 = vst.msk [vmem:[%s5456] ss:$8 sm:$0xf] %vm5452, %v5235
          %5458 = vst.msk [vmem:[%s5456] ss:$8 sm:$0x70] %vm5452, %v5235
        $region68: #{tpu_custom_call.1} parent=11 // pred_fallthru
          _
        %s5459 = sld [smem:[#allocation3 + $0xe]]
        %s5460 = sld [smem:[#allocation4 + $0xe]]
        %s5461 = sld [smem:[#allocation5 + $0xe]]
        %p5462 = scmp.ge.s32.totalorder %s5459, %s63
        %p5463 = scmp.lt.s32.totalorder %s5459, %s2186
        %p5464 = pnand %p5462, %p5463
        %p5465 = pneg %p5464
        // Predicated region
        $region69: #{tpu_custom_call.1} parent=11 // pred_check
          _
        $region70: #{tpu_custom_call.1} parent=11 // pred_check_branch
          %5467 = sbr.rel (%p5464) target = $region72
        $region71: #{tpu_custom_call.1} parent=11 // pred_region
          %s5468 = ssub.s32 %s5459, %s63
          %v5469 = vstv %s5461
          %v5470 = vstv %s5460
          %vm5471 = vcmp.eq.s32.totalorder %v2159, %v5470
          %vm5472 = vcmp.eq.s32.totalorder %v2160, %v5470
          %vm5473 = vcmp.eq.s32.totalorder %v2161, %v5470
          %vm5474 = vcmp.eq.s32.totalorder %v2162, %v5470
          %vm5475 = vcmp.eq.s32.totalorder %v2163, %v5470
          %vm5476 = vcmp.eq.s32.totalorder %v2164, %v5470
          %vm5477 = vcmp.eq.s32.totalorder %v2165, %v5470
          %vm5478 = vcmp.eq.s32.totalorder %v2166, %v5470
          %vm5479 = vcmp.eq.s32.totalorder %v2167, %v5470
          %vm5480 = vcmp.eq.s32.totalorder %v2168, %v5470
          %vm5481 = vcmp.eq.s32.totalorder %v2169, %v5470
          %vm5482 = vcmp.eq.s32.totalorder %v2170, %v5470
          %vm5483 = vcmp.eq.s32.totalorder %v2171, %v5470
          %vm5484 = vcmp.eq.s32.totalorder %v2172, %v5470
          %vm5485 = vcmp.eq.s32.totalorder %v2173, %v5470
          %vm5486 = vcmp.eq.s32.totalorder %v2174, %v5470
          %vm5487 = vcmp.eq.s32.totalorder %v2175, %v5470
          %vm5488 = vcmp.eq.s32.totalorder %v2176, %v5470
          %vm5489 = vcmp.eq.s32.totalorder %v2177, %v5470
          %vm5490 = vcmp.eq.s32.totalorder %v2178, %v5470
          %vm5491 = vcmp.eq.s32.totalorder %v2179, %v5470
          %vm5492 = vcmp.eq.s32.totalorder %v2180, %v5470
          %vm5493 = vcmp.eq.s32.totalorder %v2181, %v5470
          %v5494 = vsel %vm5471, 1, 0
          %v5495 = vsel %vm5472, 1, 0
          %v5496 = vsel %vm5473, 1, 0
          %v5497 = vsel %vm5474, 1, 0
          %v5498 = vsel %vm5475, 1, 0
          %v5499 = vsel %vm5476, 1, 0
          %v5500 = vsel %vm5477, 1, 0
          %v5501 = vsel %vm5478, 1, 0
          %v5502 = vsel %vm5479, 1, 0
          %v5503 = vsel %vm5480, 1, 0
          %v5504 = vsel %vm5481, 1, 0
          %v5505 = vsel %vm5482, 1, 0
          %v5506 = vsel %vm5483, 1, 0
          %v5507 = vsel %vm5484, 1, 0
          %v5508 = vsel %vm5485, 1, 0
          %v5509 = vsel %vm5486, 1, 0
          %v5510 = vsel %vm5487, 1, 0
          %v5511 = vsel %vm5488, 1, 0
          %v5512 = vsel %vm5489, 1, 0
          %v5513 = vsel %vm5490, 1, 0
          %v5514 = vsel %vm5491, 1, 0
          %v5515 = vsel %vm5492, 1, 0
          %v5516 = vsel %vm5493, 1, 0
          %v5517 = vcombine.low %v5494, %v5495
          %v5518 = vcombine.low %v5496, %v5497
          %v5519 = vcombine.low %v5498, %v5499
          %v5520 = vcombine.low %v5500, %v5501
          %v5522 = vunpack.c.l.s4 1966171168
          %v5523 = vunpack.c.0.s8 %v5522
          %v5524 = vlaneseq
          %v5525 = vshrl.u32 %v5524, 7
          %v5526 = vsub.s32 %v5523, %v5525
          %v5527 = vrot.slane %v5517, %v5526
          %v5529 = vunpack.c.l.s4 1966171168
          %v5530 = vunpack.c.0.s8 %v5529
          %v5531 = vlaneseq
          %v5532 = vshrl.u32 %v5531, 7
          %v5533 = vsub.s32 %v5530, %v5532
          %v5534 = vrot.slane %v5518, %v5533
          %v5536 = vunpack.c.l.s4 1966171168
          %v5537 = vunpack.c.0.s8 %v5536
          %v5538 = vlaneseq
          %v5539 = vshrl.u32 %v5538, 7
          %v5540 = vsub.s32 %v5537, %v5539
          %v5541 = vrot.slane %v5519, %v5540
          %v5543 = vunpack.c.l.s4 1966171168
          %v5544 = vunpack.c.0.s8 %v5543
          %v5545 = vlaneseq
          %v5546 = vshrl.u32 %v5545, 7
          %v5547 = vsub.s32 %v5544, %v5546
          %v5548 = vrot.slane %v5520, %v5547
          %v5549 = vcombine.low %v5527, %v5534
          %v5550 = vcombine.low %v5541, %v5548
          %v5552 = vunpack.c.l.s4 1966171168
          %v5553 = vunpack.c.0.s8 %v5552
          %v5554 = vlaneseq
          %v5555 = vshrl.u32 %v5554, 7
          %v5556 = vsub.s32 %v5553, %v5555
          %v5557 = vrot.slane %v5549, %v5556
          %v5559 = vunpack.c.l.s4 1966171168
          %v5560 = vunpack.c.0.s8 %v5559
          %v5561 = vlaneseq
          %v5562 = vshrl.u32 %v5561, 7
          %v5563 = vsub.s32 %v5560, %v5562
          %v5564 = vrot.slane %v5550, %v5563
          %v5565 = vcombine.low %v5557, %v5564
          %v5566 = vcombine.low %v5502, %v5503
          %v5567 = vcombine.low %v5504, %v5505
          %v5568 = vcombine.low %v5506, %v5507
          %v5569 = vcombine.low %v5508, %v5509
          %v5571 = vunpack.c.l.s4 1966171168
          %v5572 = vunpack.c.0.s8 %v5571
          %v5573 = vlaneseq
          %v5574 = vshrl.u32 %v5573, 7
          %v5575 = vsub.s32 %v5572, %v5574
          %v5576 = vrot.slane %v5566, %v5575
          %v5578 = vunpack.c.l.s4 1966171168
          %v5579 = vunpack.c.0.s8 %v5578
          %v5580 = vlaneseq
          %v5581 = vshrl.u32 %v5580, 7
          %v5582 = vsub.s32 %v5579, %v5581
          %v5583 = vrot.slane %v5567, %v5582
          %v5585 = vunpack.c.l.s4 1966171168
          %v5586 = vunpack.c.0.s8 %v5585
          %v5587 = vlaneseq
          %v5588 = vshrl.u32 %v5587, 7
          %v5589 = vsub.s32 %v5586, %v5588
          %v5590 = vrot.slane %v5568, %v5589
          %v5592 = vunpack.c.l.s4 1966171168
          %v5593 = vunpack.c.0.s8 %v5592
          %v5594 = vlaneseq
          %v5595 = vshrl.u32 %v5594, 7
          %v5596 = vsub.s32 %v5593, %v5595
          %v5597 = vrot.slane %v5569, %v5596
          %v5598 = vcombine.low %v5576, %v5583
          %v5599 = vcombine.low %v5590, %v5597
          %v5601 = vunpack.c.l.s4 1966171168
          %v5602 = vunpack.c.0.s8 %v5601
          %v5603 = vlaneseq
          %v5604 = vshrl.u32 %v5603, 7
          %v5605 = vsub.s32 %v5602, %v5604
          %v5606 = vrot.slane %v5598, %v5605
          %v5608 = vunpack.c.l.s4 1966171168
          %v5609 = vunpack.c.0.s8 %v5608
          %v5610 = vlaneseq
          %v5611 = vshrl.u32 %v5610, 7
          %v5612 = vsub.s32 %v5609, %v5611
          %v5613 = vrot.slane %v5599, %v5612
          %v5614 = vcombine.low %v5606, %v5613
          %v5615 = vcombine.low %v5510, %v5511
          %v5616 = vcombine.low %v5512, %v5513
          %v5617 = vcombine.low %v5514, %v5515
          %v5619 = vunpack.c.l.s4 1966171168
          %v5620 = vunpack.c.0.s8 %v5619
          %v5621 = vlaneseq
          %v5622 = vshrl.u32 %v5621, 7
          %v5623 = vsub.s32 %v5620, %v5622
          %v5624 = vrot.slane %v5615, %v5623
          %v5626 = vunpack.c.l.s4 1966171168
          %v5627 = vunpack.c.0.s8 %v5626
          %v5628 = vlaneseq
          %v5629 = vshrl.u32 %v5628, 7
          %v5630 = vsub.s32 %v5627, %v5629
          %v5631 = vrot.slane %v5616, %v5630
          %v5633 = vunpack.c.l.s4 1966171168
          %v5634 = vunpack.c.0.s8 %v5633
          %v5635 = vlaneseq
          %v5636 = vshrl.u32 %v5635, 7
          %v5637 = vsub.s32 %v5634, %v5636
          %v5638 = vrot.slane %v5617, %v5637
          %v5640 = vunpack.c.l.s4 1966171168
          %v5641 = vunpack.c.0.s8 %v5640
          %v5642 = vlaneseq
          %v5643 = vshrl.u32 %v5642, 7
          %v5644 = vsub.s32 %v5641, %v5643
          %v5645 = vrot.slane %v5516, %v5644
          %v5646 = vcombine.low %v5624, %v5631
          %v5647 = vcombine.low %v5638, %v5645
          %v5649 = vunpack.c.l.s4 1966171168
          %v5650 = vunpack.c.0.s8 %v5649
          %v5651 = vlaneseq
          %v5652 = vshrl.u32 %v5651, 7
          %v5653 = vsub.s32 %v5650, %v5652
          %v5654 = vrot.slane %v5646, %v5653
          %v5656 = vunpack.c.l.s4 1966171168
          %v5657 = vunpack.c.0.s8 %v5656
          %v5658 = vlaneseq
          %v5659 = vshrl.u32 %v5658, 7
          %v5660 = vsub.s32 %v5657, %v5659
          %v5661 = vrot.slane %v5647, %v5660
          %v5662 = vcombine.low %v5654, %v5661
          %vm5663 = vcmp.ne.s32.totalorder %v5565, 0
          %vm5664 = vcmp.ne.s32.totalorder %v5614, 0
          %vm5665 = vcmp.ne.s32.totalorder %v5662, 0
          %s5666 = sshra.s32 %s5468, 3
          %s5667 = sand.u32 %s5468, 7
          %s5668 = sshra.s32 %s5468, 3
          %s5669 = sand.u32 %s5468, 7
          %s5670 = smul.u32 %s5666, 23
          %s5671 = smul.u32 %s5670, 8
          %s5672 = sadd.s32 %s5671, %s5669
          %s5673 = scalar_lea.vmem %s56, %s5672 [#allocation6]
          %5674 = vst.msk [vmem:[%s5673] ss:$8 sm:$0xf] %vm5663, %v5469
          %5675 = vst.msk [vmem:[%s5673] ss:$8 sm:$0xf0] %vm5663, %v5469
          %s5676 = sadd.s32 %s5670, 8
          %s5677 = smul.u32 %s5676, 8
          %s5678 = sadd.s32 %s5677, %s5669
          %s5679 = scalar_lea.vmem %s56, %s5678 [#allocation6]
          %5680 = vst.msk [vmem:[%s5679] ss:$8 sm:$0xf] %vm5664, %v5469
          %5681 = vst.msk [vmem:[%s5679] ss:$8 sm:$0xf0] %vm5664, %v5469
          %v5682 = vlaneseq
          %vm5683 = vcmp.ge.s32.totalorder %v5682, 0
          %vm5684 = vcmp.lt.s32.totalorder %v5682, 832
          %vm5685 = vmand %vm5683, %vm5684
          %vm5686 = vmand %vm5685, %vm5665
          %s5687 = sadd.s32 %s5670, 16
          %s5688 = smul.u32 %s5687, 8
          %s5689 = sadd.s32 %s5688, %s5669
          %s5690 = scalar_lea.vmem %s56, %s5689 [#allocation6]
          %5691 = vst.msk [vmem:[%s5690] ss:$8 sm:$0xf] %vm5686, %v5469
          %5692 = vst.msk [vmem:[%s5690] ss:$8 sm:$0x70] %vm5686, %v5469
        $region72: #{tpu_custom_call.1} parent=11 // pred_fallthru
          _
        %s5693 = sld [smem:[#allocation3 + $0xf]]
        %s5694 = sld [smem:[#allocation4 + $0xf]]
        %s5695 = sld [smem:[#allocation5 + $0xf]]
        %p5696 = scmp.ge.s32.totalorder %s5693, %s63
        %p5697 = scmp.lt.s32.totalorder %s5693, %s2186
        %p5698 = pnand %p5696, %p5697
        %p5699 = pneg %p5698
        // Predicated region
        $region73: #{tpu_custom_call.1} parent=11 // pred_check
          _
        $region74: #{tpu_custom_call.1} parent=11 // pred_check_branch
          %5701 = sbr.rel (%p5698) target = $region76
        $region75: #{tpu_custom_call.1} parent=11 // pred_region
          %s5702 = ssub.s32 %s5693, %s63
          %v5703 = vstv %s5695
          %v5704 = vstv %s5694
          %vm5705 = vcmp.eq.s32.totalorder %v2159, %v5704
          %vm5706 = vcmp.eq.s32.totalorder %v2160, %v5704
          %vm5707 = vcmp.eq.s32.totalorder %v2161, %v5704
          %vm5708 = vcmp.eq.s32.totalorder %v2162, %v5704
          %vm5709 = vcmp.eq.s32.totalorder %v2163, %v5704
          %vm5710 = vcmp.eq.s32.totalorder %v2164, %v5704
          %vm5711 = vcmp.eq.s32.totalorder %v2165, %v5704
          %vm5712 = vcmp.eq.s32.totalorder %v2166, %v5704
          %vm5713 = vcmp.eq.s32.totalorder %v2167, %v5704
          %vm5714 = vcmp.eq.s32.totalorder %v2168, %v5704
          %vm5715 = vcmp.eq.s32.totalorder %v2169, %v5704
          %vm5716 = vcmp.eq.s32.totalorder %v2170, %v5704
          %vm5717 = vcmp.eq.s32.totalorder %v2171, %v5704
          %vm5718 = vcmp.eq.s32.totalorder %v2172, %v5704
          %vm5719 = vcmp.eq.s32.totalorder %v2173, %v5704
          %vm5720 = vcmp.eq.s32.totalorder %v2174, %v5704
          %vm5721 = vcmp.eq.s32.totalorder %v2175, %v5704
          %vm5722 = vcmp.eq.s32.totalorder %v2176, %v5704
          %vm5723 = vcmp.eq.s32.totalorder %v2177, %v5704
          %vm5724 = vcmp.eq.s32.totalorder %v2178, %v5704
          %vm5725 = vcmp.eq.s32.totalorder %v2179, %v5704
          %vm5726 = vcmp.eq.s32.totalorder %v2180, %v5704
          %vm5727 = vcmp.eq.s32.totalorder %v2181, %v5704
          %v5728 = vsel %vm5705, 1, 0
          %v5729 = vsel %vm5706, 1, 0
          %v5730 = vsel %vm5707, 1, 0
          %v5731 = vsel %vm5708, 1, 0
          %v5732 = vsel %vm5709, 1, 0
          %v5733 = vsel %vm5710, 1, 0
          %v5734 = vsel %vm5711, 1, 0
          %v5735 = vsel %vm5712, 1, 0
          %v5736 = vsel %vm5713, 1, 0
          %v5737 = vsel %vm5714, 1, 0
          %v5738 = vsel %vm5715, 1, 0
          %v5739 = vsel %vm5716, 1, 0
          %v5740 = vsel %vm5717, 1, 0
          %v5741 = vsel %vm5718, 1, 0
          %v5742 = vsel %vm5719, 1, 0
          %v5743 = vsel %vm5720, 1, 0
          %v5744 = vsel %vm5721, 1, 0
          %v5745 = vsel %vm5722, 1, 0
          %v5746 = vsel %vm5723, 1, 0
          %v5747 = vsel %vm5724, 1, 0
          %v5748 = vsel %vm5725, 1, 0
          %v5749 = vsel %vm5726, 1, 0
          %v5750 = vsel %vm5727, 1, 0
          %v5751 = vcombine.low %v5728, %v5729
          %v5752 = vcombine.low %v5730, %v5731
          %v5753 = vcombine.low %v5732, %v5733
          %v5754 = vcombine.low %v5734, %v5735
          %v5756 = vunpack.c.l.s4 1966171168
          %v5757 = vunpack.c.0.s8 %v5756
          %v5758 = vlaneseq
          %v5759 = vshrl.u32 %v5758, 7
          %v5760 = vsub.s32 %v5757, %v5759
          %v5761 = vrot.slane %v5751, %v5760
          %v5763 = vunpack.c.l.s4 1966171168
          %v5764 = vunpack.c.0.s8 %v5763
          %v5765 = vlaneseq
          %v5766 = vshrl.u32 %v5765, 7
          %v5767 = vsub.s32 %v5764, %v5766
          %v5768 = vrot.slane %v5752, %v5767
          %v5770 = vunpack.c.l.s4 1966171168
          %v5771 = vunpack.c.0.s8 %v5770
          %v5772 = vlaneseq
          %v5773 = vshrl.u32 %v5772, 7
          %v5774 = vsub.s32 %v5771, %v5773
          %v5775 = vrot.slane %v5753, %v5774
          %v5777 = vunpack.c.l.s4 1966171168
          %v5778 = vunpack.c.0.s8 %v5777
          %v5779 = vlaneseq
          %v5780 = vshrl.u32 %v5779, 7
          %v5781 = vsub.s32 %v5778, %v5780
          %v5782 = vrot.slane %v5754, %v5781
          %v5783 = vcombine.low %v5761, %v5768
          %v5784 = vcombine.low %v5775, %v5782
          %v5786 = vunpack.c.l.s4 1966171168
          %v5787 = vunpack.c.0.s8 %v5786
          %v5788 = vlaneseq
          %v5789 = vshrl.u32 %v5788, 7
          %v5790 = vsub.s32 %v5787, %v5789
          %v5791 = vrot.slane %v5783, %v5790
          %v5793 = vunpack.c.l.s4 1966171168
          %v5794 = vunpack.c.0.s8 %v5793
          %v5795 = vlaneseq
          %v5796 = vshrl.u32 %v5795, 7
          %v5797 = vsub.s32 %v5794, %v5796
          %v5798 = vrot.slane %v5784, %v5797
          %v5799 = vcombine.low %v5791, %v5798
          %v5800 = vcombine.low %v5736, %v5737
          %v5801 = vcombine.low %v5738, %v5739
          %v5802 = vcombine.low %v5740, %v5741
          %v5803 = vcombine.low %v5742, %v5743
          %v5805 = vunpack.c.l.s4 1966171168
          %v5806 = vunpack.c.0.s8 %v5805
          %v5807 = vlaneseq
          %v5808 = vshrl.u32 %v5807, 7
          %v5809 = vsub.s32 %v5806, %v5808
          %v5810 = vrot.slane %v5800, %v5809
          %v5812 = vunpack.c.l.s4 1966171168
          %v5813 = vunpack.c.0.s8 %v5812
          %v5814 = vlaneseq
          %v5815 = vshrl.u32 %v5814, 7
          %v5816 = vsub.s32 %v5813, %v5815
          %v5817 = vrot.slane %v5801, %v5816
          %v5819 = vunpack.c.l.s4 1966171168
          %v5820 = vunpack.c.0.s8 %v5819
          %v5821 = vlaneseq
          %v5822 = vshrl.u32 %v5821, 7
          %v5823 = vsub.s32 %v5820, %v5822
          %v5824 = vrot.slane %v5802, %v5823
          %v5826 = vunpack.c.l.s4 1966171168
          %v5827 = vunpack.c.0.s8 %v5826
          %v5828 = vlaneseq
          %v5829 = vshrl.u32 %v5828, 7
          %v5830 = vsub.s32 %v5827, %v5829
          %v5831 = vrot.slane %v5803, %v5830
          %v5832 = vcombine.low %v5810, %v5817
          %v5833 = vcombine.low %v5824, %v5831
          %v5835 = vunpack.c.l.s4 1966171168
          %v5836 = vunpack.c.0.s8 %v5835
          %v5837 = vlaneseq
          %v5838 = vshrl.u32 %v5837, 7
          %v5839 = vsub.s32 %v5836, %v5838
          %v5840 = vrot.slane %v5832, %v5839
          %v5842 = vunpack.c.l.s4 1966171168
          %v5843 = vunpack.c.0.s8 %v5842
          %v5844 = vlaneseq
          %v5845 = vshrl.u32 %v5844, 7
          %v5846 = vsub.s32 %v5843, %v5845
          %v5847 = vrot.slane %v5833, %v5846
          %v5848 = vcombine.low %v5840, %v5847
          %v5849 = vcombine.low %v5744, %v5745
          %v5850 = vcombine.low %v5746, %v5747
          %v5851 = vcombine.low %v5748, %v5749
          %v5853 = vunpack.c.l.s4 1966171168
          %v5854 = vunpack.c.0.s8 %v5853
          %v5855 = vlaneseq
          %v5856 = vshrl.u32 %v5855, 7
          %v5857 = vsub.s32 %v5854, %v5856
          %v5858 = vrot.slane %v5849, %v5857
          %v5860 = vunpack.c.l.s4 1966171168
          %v5861 = vunpack.c.0.s8 %v5860
          %v5862 = vlaneseq
          %v5863 = vshrl.u32 %v5862, 7
          %v5864 = vsub.s32 %v5861, %v5863
          %v5865 = vrot.slane %v5850, %v5864
          %v5867 = vunpack.c.l.s4 1966171168
          %v5868 = vunpack.c.0.s8 %v5867
          %v5869 = vlaneseq
          %v5870 = vshrl.u32 %v5869, 7
          %v5871 = vsub.s32 %v5868, %v5870
          %v5872 = vrot.slane %v5851, %v5871
          %v5874 = vunpack.c.l.s4 1966171168
          %v5875 = vunpack.c.0.s8 %v5874
          %v5876 = vlaneseq
          %v5877 = vshrl.u32 %v5876, 7
          %v5878 = vsub.s32 %v5875, %v5877
          %v5879 = vrot.slane %v5750, %v5878
          %v5880 = vcombine.low %v5858, %v5865
          %v5881 = vcombine.low %v5872, %v5879
          %v5883 = vunpack.c.l.s4 1966171168
          %v5884 = vunpack.c.0.s8 %v5883
          %v5885 = vlaneseq
          %v5886 = vshrl.u32 %v5885, 7
          %v5887 = vsub.s32 %v5884, %v5886
          %v5888 = vrot.slane %v5880, %v5887
          %v5890 = vunpack.c.l.s4 1966171168
          %v5891 = vunpack.c.0.s8 %v5890
          %v5892 = vlaneseq
          %v5893 = vshrl.u32 %v5892, 7
          %v5894 = vsub.s32 %v5891, %v5893
          %v5895 = vrot.slane %v5881, %v5894
          %v5896 = vcombine.low %v5888, %v5895
          %vm5897 = vcmp.ne.s32.totalorder %v5799, 0
          %vm5898 = vcmp.ne.s32.totalorder %v5848, 0
          %vm5899 = vcmp.ne.s32.totalorder %v5896, 0
          %s5900 = sshra.s32 %s5702, 3
          %s5901 = sand.u32 %s5702, 7
          %s5902 = sshra.s32 %s5702, 3
          %s5903 = sand.u32 %s5702, 7
          %s5904 = smul.u32 %s5900, 23
          %s5905 = smul.u32 %s5904, 8
          %s5906 = sadd.s32 %s5905, %s5903
          %s5907 = scalar_lea.vmem %s56, %s5906 [#allocation6]
          %5908 = vst.msk [vmem:[%s5907] ss:$8 sm:$0xf] %vm5897, %v5703
          %5909 = vst.msk [vmem:[%s5907] ss:$8 sm:$0xf0] %vm5897, %v5703
          %s5910 = sadd.s32 %s5904, 8
          %s5911 = smul.u32 %s5910, 8
          %s5912 = sadd.s32 %s5911, %s5903
          %s5913 = scalar_lea.vmem %s56, %s5912 [#allocation6]
          %5914 = vst.msk [vmem:[%s5913] ss:$8 sm:$0xf] %vm5898, %v5703
          %5915 = vst.msk [vmem:[%s5913] ss:$8 sm:$0xf0] %vm5898, %v5703
          %v5916 = vlaneseq
          %vm5917 = vcmp.ge.s32.totalorder %v5916, 0
          %vm5918 = vcmp.lt.s32.totalorder %v5916, 832
          %vm5919 = vmand %vm5917, %vm5918
          %vm5920 = vmand %vm5919, %vm5899
          %s5921 = sadd.s32 %s5904, 16
          %s5922 = smul.u32 %s5921, 8
          %s5923 = sadd.s32 %s5922, %s5903
          %s5924 = scalar_lea.vmem %s56, %s5923 [#allocation6]
          %5925 = vst.msk [vmem:[%s5924] ss:$8 sm:$0xf] %vm5920, %v5703
          %5926 = vst.msk [vmem:[%s5924] ss:$8 sm:$0x70] %vm5920, %v5703
        $region76: #{tpu_custom_call.1} parent=11 // pred_fallthru
          _
        %s5927 = sld [smem:[#allocation3 + $0x10]]
        %s5928 = sld [smem:[#allocation4 + $0x10]]
        %s5929 = sld [smem:[#allocation5 + $0x10]]
        %p5930 = scmp.ge.s32.totalorder %s5927, %s63
        %p5931 = scmp.lt.s32.totalorder %s5927, %s2186
        %p5932 = pnand %p5930, %p5931
        %p5933 = pneg %p5932
        // Predicated region
        $region77: #{tpu_custom_call.1} parent=11 // pred_check
          _
        $region78: #{tpu_custom_call.1} parent=11 // pred_check_branch
          %5935 = sbr.rel (%p5932) target = $region80
        $region79: #{tpu_custom_call.1} parent=11 // pred_region
          %s5936 = ssub.s32 %s5927, %s63
          %v5937 = vstv %s5929
          %v5938 = vstv %s5928
          %vm5939 = vcmp.eq.s32.totalorder %v2159, %v5938
          %vm5940 = vcmp.eq.s32.totalorder %v2160, %v5938
          %vm5941 = vcmp.eq.s32.totalorder %v2161, %v5938
          %vm5942 = vcmp.eq.s32.totalorder %v2162, %v5938
          %vm5943 = vcmp.eq.s32.totalorder %v2163, %v5938
          %vm5944 = vcmp.eq.s32.totalorder %v2164, %v5938
          %vm5945 = vcmp.eq.s32.totalorder %v2165, %v5938
          %vm5946 = vcmp.eq.s32.totalorder %v2166, %v5938
          %vm5947 = vcmp.eq.s32.totalorder %v2167, %v5938
          %vm5948 = vcmp.eq.s32.totalorder %v2168, %v5938
          %vm5949 = vcmp.eq.s32.totalorder %v2169, %v5938
          %vm5950 = vcmp.eq.s32.totalorder %v2170, %v5938
          %vm5951 = vcmp.eq.s32.totalorder %v2171, %v5938
          %vm5952 = vcmp.eq.s32.totalorder %v2172, %v5938
          %vm5953 = vcmp.eq.s32.totalorder %v2173, %v5938
          %vm5954 = vcmp.eq.s32.totalorder %v2174, %v5938
          %vm5955 = vcmp.eq.s32.totalorder %v2175, %v5938
          %vm5956 = vcmp.eq.s32.totalorder %v2176, %v5938
          %vm5957 = vcmp.eq.s32.totalorder %v2177, %v5938
          %vm5958 = vcmp.eq.s32.totalorder %v2178, %v5938
          %vm5959 = vcmp.eq.s32.totalorder %v2179, %v5938
          %vm5960 = vcmp.eq.s32.totalorder %v2180, %v5938
          %vm5961 = vcmp.eq.s32.totalorder %v2181, %v5938
          %v5962 = vsel %vm5939, 1, 0
          %v5963 = vsel %vm5940, 1, 0
          %v5964 = vsel %vm5941, 1, 0
          %v5965 = vsel %vm5942, 1, 0
          %v5966 = vsel %vm5943, 1, 0
          %v5967 = vsel %vm5944, 1, 0
          %v5968 = vsel %vm5945, 1, 0
          %v5969 = vsel %vm5946, 1, 0
          %v5970 = vsel %vm5947, 1, 0
          %v5971 = vsel %vm5948, 1, 0
          %v5972 = vsel %vm5949, 1, 0
          %v5973 = vsel %vm5950, 1, 0
          %v5974 = vsel %vm5951, 1, 0
          %v5975 = vsel %vm5952, 1, 0
          %v5976 = vsel %vm5953, 1, 0
          %v5977 = vsel %vm5954, 1, 0
          %v5978 = vsel %vm5955, 1, 0
          %v5979 = vsel %vm5956, 1, 0
          %v5980 = vsel %vm5957, 1, 0
          %v5981 = vsel %vm5958, 1, 0
          %v5982 = vsel %vm5959, 1, 0
          %v5983 = vsel %vm5960, 1, 0
          %v5984 = vsel %vm5961, 1, 0
          %v5985 = vcombine.low %v5962, %v5963
          %v5986 = vcombine.low %v5964, %v5965
          %v5987 = vcombine.low %v5966, %v5967
          %v5988 = vcombine.low %v5968, %v5969
          %v5990 = vunpack.c.l.s4 1966171168
          %v5991 = vunpack.c.0.s8 %v5990
          %v5992 = vlaneseq
          %v5993 = vshrl.u32 %v5992, 7
          %v5994 = vsub.s32 %v5991, %v5993
          %v5995 = vrot.slane %v5985, %v5994
          %v5997 = vunpack.c.l.s4 1966171168
          %v5998 = vunpack.c.0.s8 %v5997
          %v5999 = vlaneseq
          %v6000 = vshrl.u32 %v5999, 7
          %v6001 = vsub.s32 %v5998, %v6000
          %v6002 = vrot.slane %v5986, %v6001
          %v6004 = vunpack.c.l.s4 1966171168
          %v6005 = vunpack.c.0.s8 %v6004
          %v6006 = vlaneseq
          %v6007 = vshrl.u32 %v6006, 7
          %v6008 = vsub.s32 %v6005, %v6007
          %v6009 = vrot.slane %v5987, %v6008
          %v6011 = vunpack.c.l.s4 1966171168
          %v6012 = vunpack.c.0.s8 %v6011
          %v6013 = vlaneseq
          %v6014 = vshrl.u32 %v6013, 7
          %v6015 = vsub.s32 %v6012, %v6014
          %v6016 = vrot.slane %v5988, %v6015
          %v6017 = vcombine.low %v5995, %v6002
          %v6018 = vcombine.low %v6009, %v6016
          %v6020 = vunpack.c.l.s4 1966171168
          %v6021 = vunpack.c.0.s8 %v6020
          %v6022 = vlaneseq
          %v6023 = vshrl.u32 %v6022, 7
          %v6024 = vsub.s32 %v6021, %v6023
          %v6025 = vrot.slane %v6017, %v6024
          %v6027 = vunpack.c.l.s4 1966171168
          %v6028 = vunpack.c.0.s8 %v6027
          %v6029 = vlaneseq
          %v6030 = vshrl.u32 %v6029, 7
          %v6031 = vsub.s32 %v6028, %v6030
          %v6032 = vrot.slane %v6018, %v6031
          %v6033 = vcombine.low %v6025, %v6032
          %v6034 = vcombine.low %v5970, %v5971
          %v6035 = vcombine.low %v5972, %v5973
          %v6036 = vcombine.low %v5974, %v5975
          %v6037 = vcombine.low %v5976, %v5977
          %v6039 = vunpack.c.l.s4 1966171168
          %v6040 = vunpack.c.0.s8 %v6039
          %v6041 = vlaneseq
          %v6042 = vshrl.u32 %v6041, 7
          %v6043 = vsub.s32 %v6040, %v6042
          %v6044 = vrot.slane %v6034, %v6043
          %v6046 = vunpack.c.l.s4 1966171168
          %v6047 = vunpack.c.0.s8 %v6046
          %v6048 = vlaneseq
          %v6049 = vshrl.u32 %v6048, 7
          %v6050 = vsub.s32 %v6047, %v6049
          %v6051 = vrot.slane %v6035, %v6050
          %v6053 = vunpack.c.l.s4 1966171168
          %v6054 = vunpack.c.0.s8 %v6053
          %v6055 = vlaneseq
          %v6056 = vshrl.u32 %v6055, 7
          %v6057 = vsub.s32 %v6054, %v6056
          %v6058 = vrot.slane %v6036, %v6057
          %v6060 = vunpack.c.l.s4 1966171168
          %v6061 = vunpack.c.0.s8 %v6060
          %v6062 = vlaneseq
          %v6063 = vshrl.u32 %v6062, 7
          %v6064 = vsub.s32 %v6061, %v6063
          %v6065 = vrot.slane %v6037, %v6064
          %v6066 = vcombine.low %v6044, %v6051
          %v6067 = vcombine.low %v6058, %v6065
          %v6069 = vunpack.c.l.s4 1966171168
          %v6070 = vunpack.c.0.s8 %v6069
          %v6071 = vlaneseq
          %v6072 = vshrl.u32 %v6071, 7
          %v6073 = vsub.s32 %v6070, %v6072
          %v6074 = vrot.slane %v6066, %v6073
          %v6076 = vunpack.c.l.s4 1966171168
          %v6077 = vunpack.c.0.s8 %v6076
          %v6078 = vlaneseq
          %v6079 = vshrl.u32 %v6078, 7
          %v6080 = vsub.s32 %v6077, %v6079
          %v6081 = vrot.slane %v6067, %v6080
          %v6082 = vcombine.low %v6074, %v6081
          %v6083 = vcombine.low %v5978, %v5979
          %v6084 = vcombine.low %v5980, %v5981
          %v6085 = vcombine.low %v5982, %v5983
          %v6087 = vunpack.c.l.s4 1966171168
          %v6088 = vunpack.c.0.s8 %v6087
          %v6089 = vlaneseq
          %v6090 = vshrl.u32 %v6089, 7
          %v6091 = vsub.s32 %v6088, %v6090
          %v6092 = vrot.slane %v6083, %v6091
          %v6094 = vunpack.c.l.s4 1966171168
          %v6095 = vunpack.c.0.s8 %v6094
          %v6096 = vlaneseq
          %v6097 = vshrl.u32 %v6096, 7
          %v6098 = vsub.s32 %v6095, %v6097
          %v6099 = vrot.slane %v6084, %v6098
          %v6101 = vunpack.c.l.s4 1966171168
          %v6102 = vunpack.c.0.s8 %v6101
          %v6103 = vlaneseq
          %v6104 = vshrl.u32 %v6103, 7
          %v6105 = vsub.s32 %v6102, %v6104
          %v6106 = vrot.slane %v6085, %v6105
          %v6108 = vunpack.c.l.s4 1966171168
          %v6109 = vunpack.c.0.s8 %v6108
          %v6110 = vlaneseq
          %v6111 = vshrl.u32 %v6110, 7
          %v6112 = vsub.s32 %v6109, %v6111
          %v6113 = vrot.slane %v5984, %v6112
          %v6114 = vcombine.low %v6092, %v6099
          %v6115 = vcombine.low %v6106, %v6113
          %v6117 = vunpack.c.l.s4 1966171168
          %v6118 = vunpack.c.0.s8 %v6117
          %v6119 = vlaneseq
          %v6120 = vshrl.u32 %v6119, 7
          %v6121 = vsub.s32 %v6118, %v6120
          %v6122 = vrot.slane %v6114, %v6121
          %v6124 = vunpack.c.l.s4 1966171168
          %v6125 = vunpack.c.0.s8 %v6124
          %v6126 = vlaneseq
          %v6127 = vshrl.u32 %v6126, 7
          %v6128 = vsub.s32 %v6125, %v6127
          %v6129 = vrot.slane %v6115, %v6128
          %v6130 = vcombine.low %v6122, %v6129
          %vm6131 = vcmp.ne.s32.totalorder %v6033, 0
          %vm6132 = vcmp.ne.s32.totalorder %v6082, 0
          %vm6133 = vcmp.ne.s32.totalorder %v6130, 0
          %s6134 = sshra.s32 %s5936, 3
          %s6135 = sand.u32 %s5936, 7
          %s6136 = sshra.s32 %s5936, 3
          %s6137 = sand.u32 %s5936, 7
          %s6138 = smul.u32 %s6134, 23
          %s6139 = smul.u32 %s6138, 8
          %s6140 = sadd.s32 %s6139, %s6137
          %s6141 = scalar_lea.vmem %s56, %s6140 [#allocation6]
          %6142 = vst.msk [vmem:[%s6141] ss:$8 sm:$0xf] %vm6131, %v5937
          %6143 = vst.msk [vmem:[%s6141] ss:$8 sm:$0xf0] %vm6131, %v5937
          %s6144 = sadd.s32 %s6138, 8
          %s6145 = smul.u32 %s6144, 8
          %s6146 = sadd.s32 %s6145, %s6137
          %s6147 = scalar_lea.vmem %s56, %s6146 [#allocation6]
          %6148 = vst.msk [vmem:[%s6147] ss:$8 sm:$0xf] %vm6132, %v5937
          %6149 = vst.msk [vmem:[%s6147] ss:$8 sm:$0xf0] %vm6132, %v5937
          %v6150 = vlaneseq
          %vm6151 = vcmp.ge.s32.totalorder %v6150, 0
          %vm6152 = vcmp.lt.s32.totalorder %v6150, 832
          %vm6153 = vmand %vm6151, %vm6152
          %vm6154 = vmand %vm6153, %vm6133
          %s6155 = sadd.s32 %s6138, 16
          %s6156 = smul.u32 %s6155, 8
          %s6157 = sadd.s32 %s6156, %s6137
          %s6158 = scalar_lea.vmem %s56, %s6157 [#allocation6]
          %6159 = vst.msk [vmem:[%s6158] ss:$8 sm:$0xf] %vm6154, %v5937
          %6160 = vst.msk [vmem:[%s6158] ss:$8 sm:$0x70] %vm6154, %v5937
        $region80: #{tpu_custom_call.1} parent=11 // pred_fallthru
          _
        %s6161 = sld [smem:[#allocation3 + $0x11]]
        %s6162 = sld [smem:[#allocation4 + $0x11]]
        %s6163 = sld [smem:[#allocation5 + $0x11]]
        %p6164 = scmp.ge.s32.totalorder %s6161, %s63
        %p6165 = scmp.lt.s32.totalorder %s6161, %s2186
        %p6166 = pnand %p6164, %p6165
        %p6167 = pneg %p6166
        // Predicated region
        $region81: #{tpu_custom_call.1} parent=11 // pred_check
          _
        $region82: #{tpu_custom_call.1} parent=11 // pred_check_branch
          %6169 = sbr.rel (%p6166) target = $region84
        $region83: #{tpu_custom_call.1} parent=11 // pred_region
          %s6170 = ssub.s32 %s6161, %s63
          %v6171 = vstv %s6163
          %v6172 = vstv %s6162
          %vm6173 = vcmp.eq.s32.totalorder %v2159, %v6172
          %vm6174 = vcmp.eq.s32.totalorder %v2160, %v6172
          %vm6175 = vcmp.eq.s32.totalorder %v2161, %v6172
          %vm6176 = vcmp.eq.s32.totalorder %v2162, %v6172
          %vm6177 = vcmp.eq.s32.totalorder %v2163, %v6172
          %vm6178 = vcmp.eq.s32.totalorder %v2164, %v6172
          %vm6179 = vcmp.eq.s32.totalorder %v2165, %v6172
          %vm6180 = vcmp.eq.s32.totalorder %v2166, %v6172
          %vm6181 = vcmp.eq.s32.totalorder %v2167, %v6172
          %vm6182 = vcmp.eq.s32.totalorder %v2168, %v6172
          %vm6183 = vcmp.eq.s32.totalorder %v2169, %v6172
          %vm6184 = vcmp.eq.s32.totalorder %v2170, %v6172
          %vm6185 = vcmp.eq.s32.totalorder %v2171, %v6172
          %vm6186 = vcmp.eq.s32.totalorder %v2172, %v6172
          %vm6187 = vcmp.eq.s32.totalorder %v2173, %v6172
          %vm6188 = vcmp.eq.s32.totalorder %v2174, %v6172
          %vm6189 = vcmp.eq.s32.totalorder %v2175, %v6172
          %vm6190 = vcmp.eq.s32.totalorder %v2176, %v6172
          %vm6191 = vcmp.eq.s32.totalorder %v2177, %v6172
          %vm6192 = vcmp.eq.s32.totalorder %v2178, %v6172
          %vm6193 = vcmp.eq.s32.totalorder %v2179, %v6172
          %vm6194 = vcmp.eq.s32.totalorder %v2180, %v6172
          %vm6195 = vcmp.eq.s32.totalorder %v2181, %v6172
          %v6196 = vsel %vm6173, 1, 0
          %v6197 = vsel %vm6174, 1, 0
          %v6198 = vsel %vm6175, 1, 0
          %v6199 = vsel %vm6176, 1, 0
          %v6200 = vsel %vm6177, 1, 0
          %v6201 = vsel %vm6178, 1, 0
          %v6202 = vsel %vm6179, 1, 0
          %v6203 = vsel %vm6180, 1, 0
          %v6204 = vsel %vm6181, 1, 0
          %v6205 = vsel %vm6182, 1, 0
          %v6206 = vsel %vm6183, 1, 0
          %v6207 = vsel %vm6184, 1, 0
          %v6208 = vsel %vm6185, 1, 0
          %v6209 = vsel %vm6186, 1, 0
          %v6210 = vsel %vm6187, 1, 0
          %v6211 = vsel %vm6188, 1, 0
          %v6212 = vsel %vm6189, 1, 0
          %v6213 = vsel %vm6190, 1, 0
          %v6214 = vsel %vm6191, 1, 0
          %v6215 = vsel %vm6192, 1, 0
          %v6216 = vsel %vm6193, 1, 0
          %v6217 = vsel %vm6194, 1, 0
          %v6218 = vsel %vm6195, 1, 0
          %v6219 = vcombine.low %v6196, %v6197
          %v6220 = vcombine.low %v6198, %v6199
          %v6221 = vcombine.low %v6200, %v6201
          %v6222 = vcombine.low %v6202, %v6203
          %v6224 = vunpack.c.l.s4 1966171168
          %v6225 = vunpack.c.0.s8 %v6224
          %v6226 = vlaneseq
          %v6227 = vshrl.u32 %v6226, 7
          %v6228 = vsub.s32 %v6225, %v6227
          %v6229 = vrot.slane %v6219, %v6228
          %v6231 = vunpack.c.l.s4 1966171168
          %v6232 = vunpack.c.0.s8 %v6231
          %v6233 = vlaneseq
          %v6234 = vshrl.u32 %v6233, 7
          %v6235 = vsub.s32 %v6232, %v6234
          %v6236 = vrot.slane %v6220, %v6235
          %v6238 = vunpack.c.l.s4 1966171168
          %v6239 = vunpack.c.0.s8 %v6238
          %v6240 = vlaneseq
          %v6241 = vshrl.u32 %v6240, 7
          %v6242 = vsub.s32 %v6239, %v6241
          %v6243 = vrot.slane %v6221, %v6242
          %v6245 = vunpack.c.l.s4 1966171168
          %v6246 = vunpack.c.0.s8 %v6245
          %v6247 = vlaneseq
          %v6248 = vshrl.u32 %v6247, 7
          %v6249 = vsub.s32 %v6246, %v6248
          %v6250 = vrot.slane %v6222, %v6249
          %v6251 = vcombine.low %v6229, %v6236
          %v6252 = vcombine.low %v6243, %v6250
          %v6254 = vunpack.c.l.s4 1966171168
          %v6255 = vunpack.c.0.s8 %v6254
          %v6256 = vlaneseq
          %v6257 = vshrl.u32 %v6256, 7
          %v6258 = vsub.s32 %v6255, %v6257
          %v6259 = vrot.slane %v6251, %v6258
          %v6261 = vunpack.c.l.s4 1966171168
          %v6262 = vunpack.c.0.s8 %v6261
          %v6263 = vlaneseq
          %v6264 = vshrl.u32 %v6263, 7
          %v6265 = vsub.s32 %v6262, %v6264
          %v6266 = vrot.slane %v6252, %v6265
          %v6267 = vcombine.low %v6259, %v6266
          %v6268 = vcombine.low %v6204, %v6205
          %v6269 = vcombine.low %v6206, %v6207
          %v6270 = vcombine.low %v6208, %v6209
          %v6271 = vcombine.low %v6210, %v6211
          %v6273 = vunpack.c.l.s4 1966171168
          %v6274 = vunpack.c.0.s8 %v6273
          %v6275 = vlaneseq
          %v6276 = vshrl.u32 %v6275, 7
          %v6277 = vsub.s32 %v6274, %v6276
          %v6278 = vrot.slane %v6268, %v6277
          %v6280 = vunpack.c.l.s4 1966171168
          %v6281 = vunpack.c.0.s8 %v6280
          %v6282 = vlaneseq
          %v6283 = vshrl.u32 %v6282, 7
          %v6284 = vsub.s32 %v6281, %v6283
          %v6285 = vrot.slane %v6269, %v6284
          %v6287 = vunpack.c.l.s4 1966171168
          %v6288 = vunpack.c.0.s8 %v6287
          %v6289 = vlaneseq
          %v6290 = vshrl.u32 %v6289, 7
          %v6291 = vsub.s32 %v6288, %v6290
          %v6292 = vrot.slane %v6270, %v6291
          %v6294 = vunpack.c.l.s4 1966171168
          %v6295 = vunpack.c.0.s8 %v6294
          %v6296 = vlaneseq
          %v6297 = vshrl.u32 %v6296, 7
          %v6298 = vsub.s32 %v6295, %v6297
          %v6299 = vrot.slane %v6271, %v6298
          %v6300 = vcombine.low %v6278, %v6285
          %v6301 = vcombine.low %v6292, %v6299
          %v6303 = vunpack.c.l.s4 1966171168
          %v6304 = vunpack.c.0.s8 %v6303
          %v6305 = vlaneseq
          %v6306 = vshrl.u32 %v6305, 7
          %v6307 = vsub.s32 %v6304, %v6306
          %v6308 = vrot.slane %v6300, %v6307
          %v6310 = vunpack.c.l.s4 1966171168
          %v6311 = vunpack.c.0.s8 %v6310
          %v6312 = vlaneseq
          %v6313 = vshrl.u32 %v6312, 7
          %v6314 = vsub.s32 %v6311, %v6313
          %v6315 = vrot.slane %v6301, %v6314
          %v6316 = vcombine.low %v6308, %v6315
          %v6317 = vcombine.low %v6212, %v6213
          %v6318 = vcombine.low %v6214, %v6215
          %v6319 = vcombine.low %v6216, %v6217
          %v6321 = vunpack.c.l.s4 1966171168
          %v6322 = vunpack.c.0.s8 %v6321
          %v6323 = vlaneseq
          %v6324 = vshrl.u32 %v6323, 7
          %v6325 = vsub.s32 %v6322, %v6324
          %v6326 = vrot.slane %v6317, %v6325
          %v6328 = vunpack.c.l.s4 1966171168
          %v6329 = vunpack.c.0.s8 %v6328
          %v6330 = vlaneseq
          %v6331 = vshrl.u32 %v6330, 7
          %v6332 = vsub.s32 %v6329, %v6331
          %v6333 = vrot.slane %v6318, %v6332
          %v6335 = vunpack.c.l.s4 1966171168
          %v6336 = vunpack.c.0.s8 %v6335
          %v6337 = vlaneseq
          %v6338 = vshrl.u32 %v6337, 7
          %v6339 = vsub.s32 %v6336, %v6338
          %v6340 = vrot.slane %v6319, %v6339
          %v6342 = vunpack.c.l.s4 1966171168
          %v6343 = vunpack.c.0.s8 %v6342
          %v6344 = vlaneseq
          %v6345 = vshrl.u32 %v6344, 7
          %v6346 = vsub.s32 %v6343, %v6345
          %v6347 = vrot.slane %v6218, %v6346
          %v6348 = vcombine.low %v6326, %v6333
          %v6349 = vcombine.low %v6340, %v6347
          %v6351 = vunpack.c.l.s4 1966171168
          %v6352 = vunpack.c.0.s8 %v6351
          %v6353 = vlaneseq
          %v6354 = vshrl.u32 %v6353, 7
          %v6355 = vsub.s32 %v6352, %v6354
          %v6356 = vrot.slane %v6348, %v6355
          %v6358 = vunpack.c.l.s4 1966171168
          %v6359 = vunpack.c.0.s8 %v6358
          %v6360 = vlaneseq
          %v6361 = vshrl.u32 %v6360, 7
          %v6362 = vsub.s32 %v6359, %v6361
          %v6363 = vrot.slane %v6349, %v6362
          %v6364 = vcombine.low %v6356, %v6363
          %vm6365 = vcmp.ne.s32.totalorder %v6267, 0
          %vm6366 = vcmp.ne.s32.totalorder %v6316, 0
          %vm6367 = vcmp.ne.s32.totalorder %v6364, 0
          %s6368 = sshra.s32 %s6170, 3
          %s6369 = sand.u32 %s6170, 7
          %s6370 = sshra.s32 %s6170, 3
          %s6371 = sand.u32 %s6170, 7
          %s6372 = smul.u32 %s6368, 23
          %s6373 = smul.u32 %s6372, 8
          %s6374 = sadd.s32 %s6373, %s6371
          %s6375 = scalar_lea.vmem %s56, %s6374 [#allocation6]
          %6376 = vst.msk [vmem:[%s6375] ss:$8 sm:$0xf] %vm6365, %v6171
          %6377 = vst.msk [vmem:[%s6375] ss:$8 sm:$0xf0] %vm6365, %v6171
          %s6378 = sadd.s32 %s6372, 8
          %s6379 = smul.u32 %s6378, 8
          %s6380 = sadd.s32 %s6379, %s6371
          %s6381 = scalar_lea.vmem %s56, %s6380 [#allocation6]
          %6382 = vst.msk [vmem:[%s6381] ss:$8 sm:$0xf] %vm6366, %v6171
          %6383 = vst.msk [vmem:[%s6381] ss:$8 sm:$0xf0] %vm6366, %v6171
          %v6384 = vlaneseq
          %vm6385 = vcmp.ge.s32.totalorder %v6384, 0
          %vm6386 = vcmp.lt.s32.totalorder %v6384, 832
          %vm6387 = vmand %vm6385, %vm6386
          %vm6388 = vmand %vm6387, %vm6367
          %s6389 = sadd.s32 %s6372, 16
          %s6390 = smul.u32 %s6389, 8
          %s6391 = sadd.s32 %s6390, %s6371
          %s6392 = scalar_lea.vmem %s56, %s6391 [#allocation6]
          %6393 = vst.msk [vmem:[%s6392] ss:$8 sm:$0xf] %vm6388, %v6171
          %6394 = vst.msk [vmem:[%s6392] ss:$8 sm:$0x70] %vm6388, %v6171
        $region84: #{tpu_custom_call.1} parent=11 // pred_fallthru
          _
        %s6395 = sld [smem:[#allocation3 + $0x12]]
        %s6396 = sld [smem:[#allocation4 + $0x12]]
        %s6397 = sld [smem:[#allocation5 + $0x12]]
        %p6398 = scmp.ge.s32.totalorder %s6395, %s63
        %p6399 = scmp.lt.s32.totalorder %s6395, %s2186
        %p6400 = pnand %p6398, %p6399
        %p6401 = pneg %p6400
        // Predicated region
        $region85: #{tpu_custom_call.1} parent=11 // pred_check
          _
        $region86: #{tpu_custom_call.1} parent=11 // pred_check_branch
          %6403 = sbr.rel (%p6400) target = $region88
        $region87: #{tpu_custom_call.1} parent=11 // pred_region
          %s6404 = ssub.s32 %s6395, %s63
          %v6405 = vstv %s6397
          %v6406 = vstv %s6396
          %vm6407 = vcmp.eq.s32.totalorder %v2159, %v6406
          %vm6408 = vcmp.eq.s32.totalorder %v2160, %v6406
          %vm6409 = vcmp.eq.s32.totalorder %v2161, %v6406
          %vm6410 = vcmp.eq.s32.totalorder %v2162, %v6406
          %vm6411 = vcmp.eq.s32.totalorder %v2163, %v6406
          %vm6412 = vcmp.eq.s32.totalorder %v2164, %v6406
          %vm6413 = vcmp.eq.s32.totalorder %v2165, %v6406
          %vm6414 = vcmp.eq.s32.totalorder %v2166, %v6406
          %vm6415 = vcmp.eq.s32.totalorder %v2167, %v6406
          %vm6416 = vcmp.eq.s32.totalorder %v2168, %v6406
          %vm6417 = vcmp.eq.s32.totalorder %v2169, %v6406
          %vm6418 = vcmp.eq.s32.totalorder %v2170, %v6406
          %vm6419 = vcmp.eq.s32.totalorder %v2171, %v6406
          %vm6420 = vcmp.eq.s32.totalorder %v2172, %v6406
          %vm6421 = vcmp.eq.s32.totalorder %v2173, %v6406
          %vm6422 = vcmp.eq.s32.totalorder %v2174, %v6406
          %vm6423 = vcmp.eq.s32.totalorder %v2175, %v6406
          %vm6424 = vcmp.eq.s32.totalorder %v2176, %v6406
          %vm6425 = vcmp.eq.s32.totalorder %v2177, %v6406
          %vm6426 = vcmp.eq.s32.totalorder %v2178, %v6406
          %vm6427 = vcmp.eq.s32.totalorder %v2179, %v6406
          %vm6428 = vcmp.eq.s32.totalorder %v2180, %v6406
          %vm6429 = vcmp.eq.s32.totalorder %v2181, %v6406
          %v6430 = vsel %vm6407, 1, 0
          %v6431 = vsel %vm6408, 1, 0
          %v6432 = vsel %vm6409, 1, 0
          %v6433 = vsel %vm6410, 1, 0
          %v6434 = vsel %vm6411, 1, 0
          %v6435 = vsel %vm6412, 1, 0
          %v6436 = vsel %vm6413, 1, 0
          %v6437 = vsel %vm6414, 1, 0
          %v6438 = vsel %vm6415, 1, 0
          %v6439 = vsel %vm6416, 1, 0
          %v6440 = vsel %vm6417, 1, 0
          %v6441 = vsel %vm6418, 1, 0
          %v6442 = vsel %vm6419, 1, 0
          %v6443 = vsel %vm6420, 1, 0
          %v6444 = vsel %vm6421, 1, 0
          %v6445 = vsel %vm6422, 1, 0
          %v6446 = vsel %vm6423, 1, 0
          %v6447 = vsel %vm6424, 1, 0
          %v6448 = vsel %vm6425, 1, 0
          %v6449 = vsel %vm6426, 1, 0
          %v6450 = vsel %vm6427, 1, 0
          %v6451 = vsel %vm6428, 1, 0
          %v6452 = vsel %vm6429, 1, 0
          %v6453 = vcombine.low %v6430, %v6431
          %v6454 = vcombine.low %v6432, %v6433
          %v6455 = vcombine.low %v6434, %v6435
          %v6456 = vcombine.low %v6436, %v6437
          %v6458 = vunpack.c.l.s4 1966171168
          %v6459 = vunpack.c.0.s8 %v6458
          %v6460 = vlaneseq
          %v6461 = vshrl.u32 %v6460, 7
          %v6462 = vsub.s32 %v6459, %v6461
          %v6463 = vrot.slane %v6453, %v6462
          %v6465 = vunpack.c.l.s4 1966171168
          %v6466 = vunpack.c.0.s8 %v6465
          %v6467 = vlaneseq
          %v6468 = vshrl.u32 %v6467, 7
          %v6469 = vsub.s32 %v6466, %v6468
          %v6470 = vrot.slane %v6454, %v6469
          %v6472 = vunpack.c.l.s4 1966171168
          %v6473 = vunpack.c.0.s8 %v6472
          %v6474 = vlaneseq
          %v6475 = vshrl.u32 %v6474, 7
          %v6476 = vsub.s32 %v6473, %v6475
          %v6477 = vrot.slane %v6455, %v6476
          %v6479 = vunpack.c.l.s4 1966171168
          %v6480 = vunpack.c.0.s8 %v6479
          %v6481 = vlaneseq
          %v6482 = vshrl.u32 %v6481, 7
          %v6483 = vsub.s32 %v6480, %v6482
          %v6484 = vrot.slane %v6456, %v6483
          %v6485 = vcombine.low %v6463, %v6470
          %v6486 = vcombine.low %v6477, %v6484
          %v6488 = vunpack.c.l.s4 1966171168
          %v6489 = vunpack.c.0.s8 %v6488
          %v6490 = vlaneseq
          %v6491 = vshrl.u32 %v6490, 7
          %v6492 = vsub.s32 %v6489, %v6491
          %v6493 = vrot.slane %v6485, %v6492
          %v6495 = vunpack.c.l.s4 1966171168
          %v6496 = vunpack.c.0.s8 %v6495
          %v6497 = vlaneseq
          %v6498 = vshrl.u32 %v6497, 7
          %v6499 = vsub.s32 %v6496, %v6498
          %v6500 = vrot.slane %v6486, %v6499
          %v6501 = vcombine.low %v6493, %v6500
          %v6502 = vcombine.low %v6438, %v6439
          %v6503 = vcombine.low %v6440, %v6441
          %v6504 = vcombine.low %v6442, %v6443
          %v6505 = vcombine.low %v6444, %v6445
          %v6507 = vunpack.c.l.s4 1966171168
          %v6508 = vunpack.c.0.s8 %v6507
          %v6509 = vlaneseq
          %v6510 = vshrl.u32 %v6509, 7
          %v6511 = vsub.s32 %v6508, %v6510
          %v6512 = vrot.slane %v6502, %v6511
          %v6514 = vunpack.c.l.s4 1966171168
          %v6515 = vunpack.c.0.s8 %v6514
          %v6516 = vlaneseq
          %v6517 = vshrl.u32 %v6516, 7
          %v6518 = vsub.s32 %v6515, %v6517
          %v6519 = vrot.slane %v6503, %v6518
          %v6521 = vunpack.c.l.s4 1966171168
          %v6522 = vunpack.c.0.s8 %v6521
          %v6523 = vlaneseq
          %v6524 = vshrl.u32 %v6523, 7
          %v6525 = vsub.s32 %v6522, %v6524
          %v6526 = vrot.slane %v6504, %v6525
          %v6528 = vunpack.c.l.s4 1966171168
          %v6529 = vunpack.c.0.s8 %v6528
          %v6530 = vlaneseq
          %v6531 = vshrl.u32 %v6530, 7
          %v6532 = vsub.s32 %v6529, %v6531
          %v6533 = vrot.slane %v6505, %v6532
          %v6534 = vcombine.low %v6512, %v6519
          %v6535 = vcombine.low %v6526, %v6533
          %v6537 = vunpack.c.l.s4 1966171168
          %v6538 = vunpack.c.0.s8 %v6537
          %v6539 = vlaneseq
          %v6540 = vshrl.u32 %v6539, 7
          %v6541 = vsub.s32 %v6538, %v6540
          %v6542 = vrot.slane %v6534, %v6541
          %v6544 = vunpack.c.l.s4 1966171168
          %v6545 = vunpack.c.0.s8 %v6544
          %v6546 = vlaneseq
          %v6547 = vshrl.u32 %v6546, 7
          %v6548 = vsub.s32 %v6545, %v6547
          %v6549 = vrot.slane %v6535, %v6548
          %v6550 = vcombine.low %v6542, %v6549
          %v6551 = vcombine.low %v6446, %v6447
          %v6552 = vcombine.low %v6448, %v6449
          %v6553 = vcombine.low %v6450, %v6451
          %v6555 = vunpack.c.l.s4 1966171168
          %v6556 = vunpack.c.0.s8 %v6555
          %v6557 = vlaneseq
          %v6558 = vshrl.u32 %v6557, 7
          %v6559 = vsub.s32 %v6556, %v6558
          %v6560 = vrot.slane %v6551, %v6559
          %v6562 = vunpack.c.l.s4 1966171168
          %v6563 = vunpack.c.0.s8 %v6562
          %v6564 = vlaneseq
          %v6565 = vshrl.u32 %v6564, 7
          %v6566 = vsub.s32 %v6563, %v6565
          %v6567 = vrot.slane %v6552, %v6566
          %v6569 = vunpack.c.l.s4 1966171168
          %v6570 = vunpack.c.0.s8 %v6569
          %v6571 = vlaneseq
          %v6572 = vshrl.u32 %v6571, 7
          %v6573 = vsub.s32 %v6570, %v6572
          %v6574 = vrot.slane %v6553, %v6573
          %v6576 = vunpack.c.l.s4 1966171168
          %v6577 = vunpack.c.0.s8 %v6576
          %v6578 = vlaneseq
          %v6579 = vshrl.u32 %v6578, 7
          %v6580 = vsub.s32 %v6577, %v6579
          %v6581 = vrot.slane %v6452, %v6580
          %v6582 = vcombine.low %v6560, %v6567
          %v6583 = vcombine.low %v6574, %v6581
          %v6585 = vunpack.c.l.s4 1966171168
          %v6586 = vunpack.c.0.s8 %v6585
          %v6587 = vlaneseq
          %v6588 = vshrl.u32 %v6587, 7
          %v6589 = vsub.s32 %v6586, %v6588
          %v6590 = vrot.slane %v6582, %v6589
          %v6592 = vunpack.c.l.s4 1966171168
          %v6593 = vunpack.c.0.s8 %v6592
          %v6594 = vlaneseq
          %v6595 = vshrl.u32 %v6594, 7
          %v6596 = vsub.s32 %v6593, %v6595
          %v6597 = vrot.slane %v6583, %v6596
          %v6598 = vcombine.low %v6590, %v6597
          %vm6599 = vcmp.ne.s32.totalorder %v6501, 0
          %vm6600 = vcmp.ne.s32.totalorder %v6550, 0
          %vm6601 = vcmp.ne.s32.totalorder %v6598, 0
          %s6602 = sshra.s32 %s6404, 3
          %s6603 = sand.u32 %s6404, 7
          %s6604 = sshra.s32 %s6404, 3
          %s6605 = sand.u32 %s6404, 7
          %s6606 = smul.u32 %s6602, 23
          %s6607 = smul.u32 %s6606, 8
          %s6608 = sadd.s32 %s6607, %s6605
          %s6609 = scalar_lea.vmem %s56, %s6608 [#allocation6]
          %6610 = vst.msk [vmem:[%s6609] ss:$8 sm:$0xf] %vm6599, %v6405
          %6611 = vst.msk [vmem:[%s6609] ss:$8 sm:$0xf0] %vm6599, %v6405
          %s6612 = sadd.s32 %s6606, 8
          %s6613 = smul.u32 %s6612, 8
          %s6614 = sadd.s32 %s6613, %s6605
          %s6615 = scalar_lea.vmem %s56, %s6614 [#allocation6]
          %6616 = vst.msk [vmem:[%s6615] ss:$8 sm:$0xf] %vm6600, %v6405
          %6617 = vst.msk [vmem:[%s6615] ss:$8 sm:$0xf0] %vm6600, %v6405
          %v6618 = vlaneseq
          %vm6619 = vcmp.ge.s32.totalorder %v6618, 0
          %vm6620 = vcmp.lt.s32.totalorder %v6618, 832
          %vm6621 = vmand %vm6619, %vm6620
          %vm6622 = vmand %vm6621, %vm6601
          %s6623 = sadd.s32 %s6606, 16
          %s6624 = smul.u32 %s6623, 8
          %s6625 = sadd.s32 %s6624, %s6605
          %s6626 = scalar_lea.vmem %s56, %s6625 [#allocation6]
          %6627 = vst.msk [vmem:[%s6626] ss:$8 sm:$0xf] %vm6622, %v6405
          %6628 = vst.msk [vmem:[%s6626] ss:$8 sm:$0x70] %vm6622, %v6405
        $region88: #{tpu_custom_call.1} parent=11 // pred_fallthru
          _
        %s6629 = sld [smem:[#allocation3 + $0x13]]
        %s6630 = sld [smem:[#allocation4 + $0x13]]
        %s6631 = sld [smem:[#allocation5 + $0x13]]
        %p6632 = scmp.ge.s32.totalorder %s6629, %s63
        %p6633 = scmp.lt.s32.totalorder %s6629, %s2186
        %p6634 = pnand %p6632, %p6633
        %p6635 = pneg %p6634
        // Predicated region
        $region89: #{tpu_custom_call.1} parent=11 // pred_check
          _
        $region90: #{tpu_custom_call.1} parent=11 // pred_check_branch
          %6637 = sbr.rel (%p6634) target = $region92
        $region91: #{tpu_custom_call.1} parent=11 // pred_region
          %s6638 = ssub.s32 %s6629, %s63
          %v6639 = vstv %s6631
          %v6640 = vstv %s6630
          %vm6641 = vcmp.eq.s32.totalorder %v2159, %v6640
          %vm6642 = vcmp.eq.s32.totalorder %v2160, %v6640
          %vm6643 = vcmp.eq.s32.totalorder %v2161, %v6640
          %vm6644 = vcmp.eq.s32.totalorder %v2162, %v6640
          %vm6645 = vcmp.eq.s32.totalorder %v2163, %v6640
          %vm6646 = vcmp.eq.s32.totalorder %v2164, %v6640
          %vm6647 = vcmp.eq.s32.totalorder %v2165, %v6640
          %vm6648 = vcmp.eq.s32.totalorder %v2166, %v6640
          %vm6649 = vcmp.eq.s32.totalorder %v2167, %v6640
          %vm6650 = vcmp.eq.s32.totalorder %v2168, %v6640
          %vm6651 = vcmp.eq.s32.totalorder %v2169, %v6640
          %vm6652 = vcmp.eq.s32.totalorder %v2170, %v6640
          %vm6653 = vcmp.eq.s32.totalorder %v2171, %v6640
          %vm6654 = vcmp.eq.s32.totalorder %v2172, %v6640
          %vm6655 = vcmp.eq.s32.totalorder %v2173, %v6640
          %vm6656 = vcmp.eq.s32.totalorder %v2174, %v6640
          %vm6657 = vcmp.eq.s32.totalorder %v2175, %v6640
          %vm6658 = vcmp.eq.s32.totalorder %v2176, %v6640
          %vm6659 = vcmp.eq.s32.totalorder %v2177, %v6640
          %vm6660 = vcmp.eq.s32.totalorder %v2178, %v6640
          %vm6661 = vcmp.eq.s32.totalorder %v2179, %v6640
          %vm6662 = vcmp.eq.s32.totalorder %v2180, %v6640
          %vm6663 = vcmp.eq.s32.totalorder %v2181, %v6640
          %v6664 = vsel %vm6641, 1, 0
          %v6665 = vsel %vm6642, 1, 0
          %v6666 = vsel %vm6643, 1, 0
          %v6667 = vsel %vm6644, 1, 0
          %v6668 = vsel %vm6645, 1, 0
          %v6669 = vsel %vm6646, 1, 0
          %v6670 = vsel %vm6647, 1, 0
          %v6671 = vsel %vm6648, 1, 0
          %v6672 = vsel %vm6649, 1, 0
          %v6673 = vsel %vm6650, 1, 0
          %v6674 = vsel %vm6651, 1, 0
          %v6675 = vsel %vm6652, 1, 0
          %v6676 = vsel %vm6653, 1, 0
          %v6677 = vsel %vm6654, 1, 0
          %v6678 = vsel %vm6655, 1, 0
          %v6679 = vsel %vm6656, 1, 0
          %v6680 = vsel %vm6657, 1, 0
          %v6681 = vsel %vm6658, 1, 0
          %v6682 = vsel %vm6659, 1, 0
          %v6683 = vsel %vm6660, 1, 0
          %v6684 = vsel %vm6661, 1, 0
          %v6685 = vsel %vm6662, 1, 0
          %v6686 = vsel %vm6663, 1, 0
          %v6687 = vcombine.low %v6664, %v6665
          %v6688 = vcombine.low %v6666, %v6667
          %v6689 = vcombine.low %v6668, %v6669
          %v6690 = vcombine.low %v6670, %v6671
          %v6692 = vunpack.c.l.s4 1966171168
          %v6693 = vunpack.c.0.s8 %v6692
          %v6694 = vlaneseq
          %v6695 = vshrl.u32 %v6694, 7
          %v6696 = vsub.s32 %v6693, %v6695
          %v6697 = vrot.slane %v6687, %v6696
          %v6699 = vunpack.c.l.s4 1966171168
          %v6700 = vunpack.c.0.s8 %v6699
          %v6701 = vlaneseq
          %v6702 = vshrl.u32 %v6701, 7
          %v6703 = vsub.s32 %v6700, %v6702
          %v6704 = vrot.slane %v6688, %v6703
          %v6706 = vunpack.c.l.s4 1966171168
          %v6707 = vunpack.c.0.s8 %v6706
          %v6708 = vlaneseq
          %v6709 = vshrl.u32 %v6708, 7
          %v6710 = vsub.s32 %v6707, %v6709
          %v6711 = vrot.slane %v6689, %v6710
          %v6713 = vunpack.c.l.s4 1966171168
          %v6714 = vunpack.c.0.s8 %v6713
          %v6715 = vlaneseq
          %v6716 = vshrl.u32 %v6715, 7
          %v6717 = vsub.s32 %v6714, %v6716
          %v6718 = vrot.slane %v6690, %v6717
          %v6719 = vcombine.low %v6697, %v6704
          %v6720 = vcombine.low %v6711, %v6718
          %v6722 = vunpack.c.l.s4 1966171168
          %v6723 = vunpack.c.0.s8 %v6722
          %v6724 = vlaneseq
          %v6725 = vshrl.u32 %v6724, 7
          %v6726 = vsub.s32 %v6723, %v6725
          %v6727 = vrot.slane %v6719, %v6726
          %v6729 = vunpack.c.l.s4 1966171168
          %v6730 = vunpack.c.0.s8 %v6729
          %v6731 = vlaneseq
          %v6732 = vshrl.u32 %v6731, 7
          %v6733 = vsub.s32 %v6730, %v6732
          %v6734 = vrot.slane %v6720, %v6733
          %v6735 = vcombine.low %v6727, %v6734
          %v6736 = vcombine.low %v6672, %v6673
          %v6737 = vcombine.low %v6674, %v6675
          %v6738 = vcombine.low %v6676, %v6677
          %v6739 = vcombine.low %v6678, %v6679
          %v6741 = vunpack.c.l.s4 1966171168
          %v6742 = vunpack.c.0.s8 %v6741
          %v6743 = vlaneseq
          %v6744 = vshrl.u32 %v6743, 7
          %v6745 = vsub.s32 %v6742, %v6744
          %v6746 = vrot.slane %v6736, %v6745
          %v6748 = vunpack.c.l.s4 1966171168
          %v6749 = vunpack.c.0.s8 %v6748
          %v6750 = vlaneseq
          %v6751 = vshrl.u32 %v6750, 7
          %v6752 = vsub.s32 %v6749, %v6751
          %v6753 = vrot.slane %v6737, %v6752
          %v6755 = vunpack.c.l.s4 1966171168
          %v6756 = vunpack.c.0.s8 %v6755
          %v6757 = vlaneseq
          %v6758 = vshrl.u32 %v6757, 7
          %v6759 = vsub.s32 %v6756, %v6758
          %v6760 = vrot.slane %v6738, %v6759
          %v6762 = vunpack.c.l.s4 1966171168
          %v6763 = vunpack.c.0.s8 %v6762
          %v6764 = vlaneseq
          %v6765 = vshrl.u32 %v6764, 7
          %v6766 = vsub.s32 %v6763, %v6765
          %v6767 = vrot.slane %v6739, %v6766
          %v6768 = vcombine.low %v6746, %v6753
          %v6769 = vcombine.low %v6760, %v6767
          %v6771 = vunpack.c.l.s4 1966171168
          %v6772 = vunpack.c.0.s8 %v6771
          %v6773 = vlaneseq
          %v6774 = vshrl.u32 %v6773, 7
          %v6775 = vsub.s32 %v6772, %v6774
          %v6776 = vrot.slane %v6768, %v6775
          %v6778 = vunpack.c.l.s4 1966171168
          %v6779 = vunpack.c.0.s8 %v6778
          %v6780 = vlaneseq
          %v6781 = vshrl.u32 %v6780, 7
          %v6782 = vsub.s32 %v6779, %v6781
          %v6783 = vrot.slane %v6769, %v6782
          %v6784 = vcombine.low %v6776, %v6783
          %v6785 = vcombine.low %v6680, %v6681
          %v6786 = vcombine.low %v6682, %v6683
          %v6787 = vcombine.low %v6684, %v6685
          %v6789 = vunpack.c.l.s4 1966171168
          %v6790 = vunpack.c.0.s8 %v6789
          %v6791 = vlaneseq
          %v6792 = vshrl.u32 %v6791, 7
          %v6793 = vsub.s32 %v6790, %v6792
          %v6794 = vrot.slane %v6785, %v6793
          %v6796 = vunpack.c.l.s4 1966171168
          %v6797 = vunpack.c.0.s8 %v6796
          %v6798 = vlaneseq
          %v6799 = vshrl.u32 %v6798, 7
          %v6800 = vsub.s32 %v6797, %v6799
          %v6801 = vrot.slane %v6786, %v6800
          %v6803 = vunpack.c.l.s4 1966171168
          %v6804 = vunpack.c.0.s8 %v6803
          %v6805 = vlaneseq
          %v6806 = vshrl.u32 %v6805, 7
          %v6807 = vsub.s32 %v6804, %v6806
          %v6808 = vrot.slane %v6787, %v6807
          %v6810 = vunpack.c.l.s4 1966171168
          %v6811 = vunpack.c.0.s8 %v6810
          %v6812 = vlaneseq
          %v6813 = vshrl.u32 %v6812, 7
          %v6814 = vsub.s32 %v6811, %v6813
          %v6815 = vrot.slane %v6686, %v6814
          %v6816 = vcombine.low %v6794, %v6801
          %v6817 = vcombine.low %v6808, %v6815
          %v6819 = vunpack.c.l.s4 1966171168
          %v6820 = vunpack.c.0.s8 %v6819
          %v6821 = vlaneseq
          %v6822 = vshrl.u32 %v6821, 7
          %v6823 = vsub.s32 %v6820, %v6822
          %v6824 = vrot.slane %v6816, %v6823
          %v6826 = vunpack.c.l.s4 1966171168
          %v6827 = vunpack.c.0.s8 %v6826
          %v6828 = vlaneseq
          %v6829 = vshrl.u32 %v6828, 7
          %v6830 = vsub.s32 %v6827, %v6829
          %v6831 = vrot.slane %v6817, %v6830
          %v6832 = vcombine.low %v6824, %v6831
          %vm6833 = vcmp.ne.s32.totalorder %v6735, 0
          %vm6834 = vcmp.ne.s32.totalorder %v6784, 0
          %vm6835 = vcmp.ne.s32.totalorder %v6832, 0
          %s6836 = sshra.s32 %s6638, 3
          %s6837 = sand.u32 %s6638, 7
          %s6838 = sshra.s32 %s6638, 3
          %s6839 = sand.u32 %s6638, 7
          %s6840 = smul.u32 %s6836, 23
          %s6841 = smul.u32 %s6840, 8
          %s6842 = sadd.s32 %s6841, %s6839
          %s6843 = scalar_lea.vmem %s56, %s6842 [#allocation6]
          %6844 = vst.msk [vmem:[%s6843] ss:$8 sm:$0xf] %vm6833, %v6639
          %6845 = vst.msk [vmem:[%s6843] ss:$8 sm:$0xf0] %vm6833, %v6639
          %s6846 = sadd.s32 %s6840, 8
          %s6847 = smul.u32 %s6846, 8
          %s6848 = sadd.s32 %s6847, %s6839
          %s6849 = scalar_lea.vmem %s56, %s6848 [#allocation6]
          %6850 = vst.msk [vmem:[%s6849] ss:$8 sm:$0xf] %vm6834, %v6639
          %6851 = vst.msk [vmem:[%s6849] ss:$8 sm:$0xf0] %vm6834, %v6639
          %v6852 = vlaneseq
          %vm6853 = vcmp.ge.s32.totalorder %v6852, 0
          %vm6854 = vcmp.lt.s32.totalorder %v6852, 832
          %vm6855 = vmand %vm6853, %vm6854
          %vm6856 = vmand %vm6855, %vm6835
          %s6857 = sadd.s32 %s6840, 16
          %s6858 = smul.u32 %s6857, 8
          %s6859 = sadd.s32 %s6858, %s6839
          %s6860 = scalar_lea.vmem %s56, %s6859 [#allocation6]
          %6861 = vst.msk [vmem:[%s6860] ss:$8 sm:$0xf] %vm6856, %v6639
          %6862 = vst.msk [vmem:[%s6860] ss:$8 sm:$0x70] %vm6856, %v6639
        $region92: #{tpu_custom_call.1} parent=11 // pred_fallthru
          _
        %s6863 = sld [smem:[#allocation3 + $0x14]]
        %s6864 = sld [smem:[#allocation4 + $0x14]]
        %s6865 = sld [smem:[#allocation5 + $0x14]]
        %p6866 = scmp.ge.s32.totalorder %s6863, %s63
        %p6867 = scmp.lt.s32.totalorder %s6863, %s2186
        %p6868 = pnand %p6866, %p6867
        %p6869 = pneg %p6868
        // Predicated region
        $region93: #{tpu_custom_call.1} parent=11 // pred_check
          _
        $region94: #{tpu_custom_call.1} parent=11 // pred_check_branch
          %6871 = sbr.rel (%p6868) target = $region96
        $region95: #{tpu_custom_call.1} parent=11 // pred_region
          %s6872 = ssub.s32 %s6863, %s63
          %v6873 = vstv %s6865
          %v6874 = vstv %s6864
          %vm6875 = vcmp.eq.s32.totalorder %v2159, %v6874
          %vm6876 = vcmp.eq.s32.totalorder %v2160, %v6874
          %vm6877 = vcmp.eq.s32.totalorder %v2161, %v6874
          %vm6878 = vcmp.eq.s32.totalorder %v2162, %v6874
          %vm6879 = vcmp.eq.s32.totalorder %v2163, %v6874
          %vm6880 = vcmp.eq.s32.totalorder %v2164, %v6874
          %vm6881 = vcmp.eq.s32.totalorder %v2165, %v6874
          %vm6882 = vcmp.eq.s32.totalorder %v2166, %v6874
          %vm6883 = vcmp.eq.s32.totalorder %v2167, %v6874
          %vm6884 = vcmp.eq.s32.totalorder %v2168, %v6874
          %vm6885 = vcmp.eq.s32.totalorder %v2169, %v6874
          %vm6886 = vcmp.eq.s32.totalorder %v2170, %v6874
          %vm6887 = vcmp.eq.s32.totalorder %v2171, %v6874
          %vm6888 = vcmp.eq.s32.totalorder %v2172, %v6874
          %vm6889 = vcmp.eq.s32.totalorder %v2173, %v6874
          %vm6890 = vcmp.eq.s32.totalorder %v2174, %v6874
          %vm6891 = vcmp.eq.s32.totalorder %v2175, %v6874
          %vm6892 = vcmp.eq.s32.totalorder %v2176, %v6874
          %vm6893 = vcmp.eq.s32.totalorder %v2177, %v6874
          %vm6894 = vcmp.eq.s32.totalorder %v2178, %v6874
          %vm6895 = vcmp.eq.s32.totalorder %v2179, %v6874
          %vm6896 = vcmp.eq.s32.totalorder %v2180, %v6874
          %vm6897 = vcmp.eq.s32.totalorder %v2181, %v6874
          %v6898 = vsel %vm6875, 1, 0
          %v6899 = vsel %vm6876, 1, 0
          %v6900 = vsel %vm6877, 1, 0
          %v6901 = vsel %vm6878, 1, 0
          %v6902 = vsel %vm6879, 1, 0
          %v6903 = vsel %vm6880, 1, 0
          %v6904 = vsel %vm6881, 1, 0
          %v6905 = vsel %vm6882, 1, 0
          %v6906 = vsel %vm6883, 1, 0
          %v6907 = vsel %vm6884, 1, 0
          %v6908 = vsel %vm6885, 1, 0
          %v6909 = vsel %vm6886, 1, 0
          %v6910 = vsel %vm6887, 1, 0
          %v6911 = vsel %vm6888, 1, 0
          %v6912 = vsel %vm6889, 1, 0
          %v6913 = vsel %vm6890, 1, 0
          %v6914 = vsel %vm6891, 1, 0
          %v6915 = vsel %vm6892, 1, 0
          %v6916 = vsel %vm6893, 1, 0
          %v6917 = vsel %vm6894, 1, 0
          %v6918 = vsel %vm6895, 1, 0
          %v6919 = vsel %vm6896, 1, 0
          %v6920 = vsel %vm6897, 1, 0
          %v6921 = vcombine.low %v6898, %v6899
          %v6922 = vcombine.low %v6900, %v6901
          %v6923 = vcombine.low %v6902, %v6903
          %v6924 = vcombine.low %v6904, %v6905
          %v6926 = vunpack.c.l.s4 1966171168
          %v6927 = vunpack.c.0.s8 %v6926
          %v6928 = vlaneseq
          %v6929 = vshrl.u32 %v6928, 7
          %v6930 = vsub.s32 %v6927, %v6929
          %v6931 = vrot.slane %v6921, %v6930
          %v6933 = vunpack.c.l.s4 1966171168
          %v6934 = vunpack.c.0.s8 %v6933
          %v6935 = vlaneseq
          %v6936 = vshrl.u32 %v6935, 7
          %v6937 = vsub.s32 %v6934, %v6936
          %v6938 = vrot.slane %v6922, %v6937
          %v6940 = vunpack.c.l.s4 1966171168
          %v6941 = vunpack.c.0.s8 %v6940
          %v6942 = vlaneseq
          %v6943 = vshrl.u32 %v6942, 7
          %v6944 = vsub.s32 %v6941, %v6943
          %v6945 = vrot.slane %v6923, %v6944
          %v6947 = vunpack.c.l.s4 1966171168
          %v6948 = vunpack.c.0.s8 %v6947
          %v6949 = vlaneseq
          %v6950 = vshrl.u32 %v6949, 7
          %v6951 = vsub.s32 %v6948, %v6950
          %v6952 = vrot.slane %v6924, %v6951
          %v6953 = vcombine.low %v6931, %v6938
          %v6954 = vcombine.low %v6945, %v6952
          %v6956 = vunpack.c.l.s4 1966171168
          %v6957 = vunpack.c.0.s8 %v6956
          %v6958 = vlaneseq
          %v6959 = vshrl.u32 %v6958, 7
          %v6960 = vsub.s32 %v6957, %v6959
          %v6961 = vrot.slane %v6953, %v6960
          %v6963 = vunpack.c.l.s4 1966171168
          %v6964 = vunpack.c.0.s8 %v6963
          %v6965 = vlaneseq
          %v6966 = vshrl.u32 %v6965, 7
          %v6967 = vsub.s32 %v6964, %v6966
          %v6968 = vrot.slane %v6954, %v6967
          %v6969 = vcombine.low %v6961, %v6968
          %v6970 = vcombine.low %v6906, %v6907
          %v6971 = vcombine.low %v6908, %v6909
          %v6972 = vcombine.low %v6910, %v6911
          %v6973 = vcombine.low %v6912, %v6913
          %v6975 = vunpack.c.l.s4 1966171168
          %v6976 = vunpack.c.0.s8 %v6975
          %v6977 = vlaneseq
          %v6978 = vshrl.u32 %v6977, 7
          %v6979 = vsub.s32 %v6976, %v6978
          %v6980 = vrot.slane %v6970, %v6979
          %v6982 = vunpack.c.l.s4 1966171168
          %v6983 = vunpack.c.0.s8 %v6982
          %v6984 = vlaneseq
          %v6985 = vshrl.u32 %v6984, 7
          %v6986 = vsub.s32 %v6983, %v6985
          %v6987 = vrot.slane %v6971, %v6986
          %v6989 = vunpack.c.l.s4 1966171168
          %v6990 = vunpack.c.0.s8 %v6989
          %v6991 = vlaneseq
          %v6992 = vshrl.u32 %v6991, 7
          %v6993 = vsub.s32 %v6990, %v6992
          %v6994 = vrot.slane %v6972, %v6993
          %v6996 = vunpack.c.l.s4 1966171168
          %v6997 = vunpack.c.0.s8 %v6996
          %v6998 = vlaneseq
          %v6999 = vshrl.u32 %v6998, 7
          %v7000 = vsub.s32 %v6997, %v6999
          %v7001 = vrot.slane %v6973, %v7000
          %v7002 = vcombine.low %v6980, %v6987
          %v7003 = vcombine.low %v6994, %v7001
          %v7005 = vunpack.c.l.s4 1966171168
          %v7006 = vunpack.c.0.s8 %v7005
          %v7007 = vlaneseq
          %v7008 = vshrl.u32 %v7007, 7
          %v7009 = vsub.s32 %v7006, %v7008
          %v7010 = vrot.slane %v7002, %v7009
          %v7012 = vunpack.c.l.s4 1966171168
          %v7013 = vunpack.c.0.s8 %v7012
          %v7014 = vlaneseq
          %v7015 = vshrl.u32 %v7014, 7
          %v7016 = vsub.s32 %v7013, %v7015
          %v7017 = vrot.slane %v7003, %v7016
          %v7018 = vcombine.low %v7010, %v7017
          %v7019 = vcombine.low %v6914, %v6915
          %v7020 = vcombine.low %v6916, %v6917
          %v7021 = vcombine.low %v6918, %v6919
          %v7023 = vunpack.c.l.s4 1966171168
          %v7024 = vunpack.c.0.s8 %v7023
          %v7025 = vlaneseq
          %v7026 = vshrl.u32 %v7025, 7
          %v7027 = vsub.s32 %v7024, %v7026
          %v7028 = vrot.slane %v7019, %v7027
          %v7030 = vunpack.c.l.s4 1966171168
          %v7031 = vunpack.c.0.s8 %v7030
          %v7032 = vlaneseq
          %v7033 = vshrl.u32 %v7032, 7
          %v7034 = vsub.s32 %v7031, %v7033
          %v7035 = vrot.slane %v7020, %v7034
          %v7037 = vunpack.c.l.s4 1966171168
          %v7038 = vunpack.c.0.s8 %v7037
          %v7039 = vlaneseq
          %v7040 = vshrl.u32 %v7039, 7
          %v7041 = vsub.s32 %v7038, %v7040
          %v7042 = vrot.slane %v7021, %v7041
          %v7044 = vunpack.c.l.s4 1966171168
          %v7045 = vunpack.c.0.s8 %v7044
          %v7046 = vlaneseq
          %v7047 = vshrl.u32 %v7046, 7
          %v7048 = vsub.s32 %v7045, %v7047
          %v7049 = vrot.slane %v6920, %v7048
          %v7050 = vcombine.low %v7028, %v7035
          %v7051 = vcombine.low %v7042, %v7049
          %v7053 = vunpack.c.l.s4 1966171168
          %v7054 = vunpack.c.0.s8 %v7053
          %v7055 = vlaneseq
          %v7056 = vshrl.u32 %v7055, 7
          %v7057 = vsub.s32 %v7054, %v7056
          %v7058 = vrot.slane %v7050, %v7057
          %v7060 = vunpack.c.l.s4 1966171168
          %v7061 = vunpack.c.0.s8 %v7060
          %v7062 = vlaneseq
          %v7063 = vshrl.u32 %v7062, 7
          %v7064 = vsub.s32 %v7061, %v7063
          %v7065 = vrot.slane %v7051, %v7064
          %v7066 = vcombine.low %v7058, %v7065
          %vm7067 = vcmp.ne.s32.totalorder %v6969, 0
          %vm7068 = vcmp.ne.s32.totalorder %v7018, 0
          %vm7069 = vcmp.ne.s32.totalorder %v7066, 0
          %s7070 = sshra.s32 %s6872, 3
          %s7071 = sand.u32 %s6872, 7
          %s7072 = sshra.s32 %s6872, 3
          %s7073 = sand.u32 %s6872, 7
          %s7074 = smul.u32 %s7070, 23
          %s7075 = smul.u32 %s7074, 8
          %s7076 = sadd.s32 %s7075, %s7073
          %s7077 = scalar_lea.vmem %s56, %s7076 [#allocation6]
          %7078 = vst.msk [vmem:[%s7077] ss:$8 sm:$0xf] %vm7067, %v6873
          %7079 = vst.msk [vmem:[%s7077] ss:$8 sm:$0xf0] %vm7067, %v6873
          %s7080 = sadd.s32 %s7074, 8
          %s7081 = smul.u32 %s7080, 8
          %s7082 = sadd.s32 %s7081, %s7073
          %s7083 = scalar_lea.vmem %s56, %s7082 [#allocation6]
          %7084 = vst.msk [vmem:[%s7083] ss:$8 sm:$0xf] %vm7068, %v6873
          %7085 = vst.msk [vmem:[%s7083] ss:$8 sm:$0xf0] %vm7068, %v6873
          %v7086 = vlaneseq
          %vm7087 = vcmp.ge.s32.totalorder %v7086, 0
          %vm7088 = vcmp.lt.s32.totalorder %v7086, 832
          %vm7089 = vmand %vm7087, %vm7088
          %vm7090 = vmand %vm7089, %vm7069
          %s7091 = sadd.s32 %s7074, 16
          %s7092 = smul.u32 %s7091, 8
          %s7093 = sadd.s32 %s7092, %s7073
          %s7094 = scalar_lea.vmem %s56, %s7093 [#allocation6]
          %7095 = vst.msk [vmem:[%s7094] ss:$8 sm:$0xf] %vm7090, %v6873
          %7096 = vst.msk [vmem:[%s7094] ss:$8 sm:$0x70] %vm7090, %v6873
        $region96: #{tpu_custom_call.1} parent=11 // pred_fallthru
          _
        %s7097 = sld [smem:[#allocation3 + $0x15]]
        %s7098 = sld [smem:[#allocation4 + $0x15]]
        %s7099 = sld [smem:[#allocation5 + $0x15]]
        %p7100 = scmp.ge.s32.totalorder %s7097, %s63
        %p7101 = scmp.lt.s32.totalorder %s7097, %s2186
        %p7102 = pnand %p7100, %p7101
        %p7103 = pneg %p7102
        // Predicated region
        $region97: #{tpu_custom_call.1} parent=11 // pred_check
          _
        $region98: #{tpu_custom_call.1} parent=11 // pred_check_branch
          %7105 = sbr.rel (%p7102) target = $region100
        $region99: #{tpu_custom_call.1} parent=11 // pred_region
          %s7106 = ssub.s32 %s7097, %s63
          %v7107 = vstv %s7099
          %v7108 = vstv %s7098
          %vm7109 = vcmp.eq.s32.totalorder %v2159, %v7108
          %vm7110 = vcmp.eq.s32.totalorder %v2160, %v7108
          %vm7111 = vcmp.eq.s32.totalorder %v2161, %v7108
          %vm7112 = vcmp.eq.s32.totalorder %v2162, %v7108
          %vm7113 = vcmp.eq.s32.totalorder %v2163, %v7108
          %vm7114 = vcmp.eq.s32.totalorder %v2164, %v7108
          %vm7115 = vcmp.eq.s32.totalorder %v2165, %v7108
          %vm7116 = vcmp.eq.s32.totalorder %v2166, %v7108
          %vm7117 = vcmp.eq.s32.totalorder %v2167, %v7108
          %vm7118 = vcmp.eq.s32.totalorder %v2168, %v7108
          %vm7119 = vcmp.eq.s32.totalorder %v2169, %v7108
          %vm7120 = vcmp.eq.s32.totalorder %v2170, %v7108
          %vm7121 = vcmp.eq.s32.totalorder %v2171, %v7108
          %vm7122 = vcmp.eq.s32.totalorder %v2172, %v7108
          %vm7123 = vcmp.eq.s32.totalorder %v2173, %v7108
          %vm7124 = vcmp.eq.s32.totalorder %v2174, %v7108
          %vm7125 = vcmp.eq.s32.totalorder %v2175, %v7108
          %vm7126 = vcmp.eq.s32.totalorder %v2176, %v7108
          %vm7127 = vcmp.eq.s32.totalorder %v2177, %v7108
          %vm7128 = vcmp.eq.s32.totalorder %v2178, %v7108
          %vm7129 = vcmp.eq.s32.totalorder %v2179, %v7108
          %vm7130 = vcmp.eq.s32.totalorder %v2180, %v7108
          %vm7131 = vcmp.eq.s32.totalorder %v2181, %v7108
          %v7132 = vsel %vm7109, 1, 0
          %v7133 = vsel %vm7110, 1, 0
          %v7134 = vsel %vm7111, 1, 0
          %v7135 = vsel %vm7112, 1, 0
          %v7136 = vsel %vm7113, 1, 0
          %v7137 = vsel %vm7114, 1, 0
          %v7138 = vsel %vm7115, 1, 0
          %v7139 = vsel %vm7116, 1, 0
          %v7140 = vsel %vm7117, 1, 0
          %v7141 = vsel %vm7118, 1, 0
          %v7142 = vsel %vm7119, 1, 0
          %v7143 = vsel %vm7120, 1, 0
          %v7144 = vsel %vm7121, 1, 0
          %v7145 = vsel %vm7122, 1, 0
          %v7146 = vsel %vm7123, 1, 0
          %v7147 = vsel %vm7124, 1, 0
          %v7148 = vsel %vm7125, 1, 0
          %v7149 = vsel %vm7126, 1, 0
          %v7150 = vsel %vm7127, 1, 0
          %v7151 = vsel %vm7128, 1, 0
          %v7152 = vsel %vm7129, 1, 0
          %v7153 = vsel %vm7130, 1, 0
          %v7154 = vsel %vm7131, 1, 0
          %v7155 = vcombine.low %v7132, %v7133
          %v7156 = vcombine.low %v7134, %v7135
          %v7157 = vcombine.low %v7136, %v7137
          %v7158 = vcombine.low %v7138, %v7139
          %v7160 = vunpack.c.l.s4 1966171168
          %v7161 = vunpack.c.0.s8 %v7160
          %v7162 = vlaneseq
          %v7163 = vshrl.u32 %v7162, 7
          %v7164 = vsub.s32 %v7161, %v7163
          %v7165 = vrot.slane %v7155, %v7164
          %v7167 = vunpack.c.l.s4 1966171168
          %v7168 = vunpack.c.0.s8 %v7167
          %v7169 = vlaneseq
          %v7170 = vshrl.u32 %v7169, 7
          %v7171 = vsub.s32 %v7168, %v7170
          %v7172 = vrot.slane %v7156, %v7171
          %v7174 = vunpack.c.l.s4 1966171168
          %v7175 = vunpack.c.0.s8 %v7174
          %v7176 = vlaneseq
          %v7177 = vshrl.u32 %v7176, 7
          %v7178 = vsub.s32 %v7175, %v7177
          %v7179 = vrot.slane %v7157, %v7178
          %v7181 = vunpack.c.l.s4 1966171168
          %v7182 = vunpack.c.0.s8 %v7181
          %v7183 = vlaneseq
          %v7184 = vshrl.u32 %v7183, 7
          %v7185 = vsub.s32 %v7182, %v7184
          %v7186 = vrot.slane %v7158, %v7185
          %v7187 = vcombine.low %v7165, %v7172
          %v7188 = vcombine.low %v7179, %v7186
          %v7190 = vunpack.c.l.s4 1966171168
          %v7191 = vunpack.c.0.s8 %v7190
          %v7192 = vlaneseq
          %v7193 = vshrl.u32 %v7192, 7
          %v7194 = vsub.s32 %v7191, %v7193
          %v7195 = vrot.slane %v7187, %v7194
          %v7197 = vunpack.c.l.s4 1966171168
          %v7198 = vunpack.c.0.s8 %v7197
          %v7199 = vlaneseq
          %v7200 = vshrl.u32 %v7199, 7
          %v7201 = vsub.s32 %v7198, %v7200
          %v7202 = vrot.slane %v7188, %v7201
          %v7203 = vcombine.low %v7195, %v7202
          %v7204 = vcombine.low %v7140, %v7141
          %v7205 = vcombine.low %v7142, %v7143
          %v7206 = vcombine.low %v7144, %v7145
          %v7207 = vcombine.low %v7146, %v7147
          %v7209 = vunpack.c.l.s4 1966171168
          %v7210 = vunpack.c.0.s8 %v7209
          %v7211 = vlaneseq
          %v7212 = vshrl.u32 %v7211, 7
          %v7213 = vsub.s32 %v7210, %v7212
          %v7214 = vrot.slane %v7204, %v7213
          %v7216 = vunpack.c.l.s4 1966171168
          %v7217 = vunpack.c.0.s8 %v7216
          %v7218 = vlaneseq
          %v7219 = vshrl.u32 %v7218, 7
          %v7220 = vsub.s32 %v7217, %v7219
          %v7221 = vrot.slane %v7205, %v7220
          %v7223 = vunpack.c.l.s4 1966171168
          %v7224 = vunpack.c.0.s8 %v7223
          %v7225 = vlaneseq
          %v7226 = vshrl.u32 %v7225, 7
          %v7227 = vsub.s32 %v7224, %v7226
          %v7228 = vrot.slane %v7206, %v7227
          %v7230 = vunpack.c.l.s4 1966171168
          %v7231 = vunpack.c.0.s8 %v7230
          %v7232 = vlaneseq
          %v7233 = vshrl.u32 %v7232, 7
          %v7234 = vsub.s32 %v7231, %v7233
          %v7235 = vrot.slane %v7207, %v7234
          %v7236 = vcombine.low %v7214, %v7221
          %v7237 = vcombine.low %v7228, %v7235
          %v7239 = vunpack.c.l.s4 1966171168
          %v7240 = vunpack.c.0.s8 %v7239
          %v7241 = vlaneseq
          %v7242 = vshrl.u32 %v7241, 7
          %v7243 = vsub.s32 %v7240, %v7242
          %v7244 = vrot.slane %v7236, %v7243
          %v7246 = vunpack.c.l.s4 1966171168
          %v7247 = vunpack.c.0.s8 %v7246
          %v7248 = vlaneseq
          %v7249 = vshrl.u32 %v7248, 7
          %v7250 = vsub.s32 %v7247, %v7249
          %v7251 = vrot.slane %v7237, %v7250
          %v7252 = vcombine.low %v7244, %v7251
          %v7253 = vcombine.low %v7148, %v7149
          %v7254 = vcombine.low %v7150, %v7151
          %v7255 = vcombine.low %v7152, %v7153
          %v7257 = vunpack.c.l.s4 1966171168
          %v7258 = vunpack.c.0.s8 %v7257
          %v7259 = vlaneseq
          %v7260 = vshrl.u32 %v7259, 7
          %v7261 = vsub.s32 %v7258, %v7260
          %v7262 = vrot.slane %v7253, %v7261
          %v7264 = vunpack.c.l.s4 1966171168
          %v7265 = vunpack.c.0.s8 %v7264
          %v7266 = vlaneseq
          %v7267 = vshrl.u32 %v7266, 7
          %v7268 = vsub.s32 %v7265, %v7267
          %v7269 = vrot.slane %v7254, %v7268
          %v7271 = vunpack.c.l.s4 1966171168
          %v7272 = vunpack.c.0.s8 %v7271
          %v7273 = vlaneseq
          %v7274 = vshrl.u32 %v7273, 7
          %v7275 = vsub.s32 %v7272, %v7274
          %v7276 = vrot.slane %v7255, %v7275
          %v7278 = vunpack.c.l.s4 1966171168
          %v7279 = vunpack.c.0.s8 %v7278
          %v7280 = vlaneseq
          %v7281 = vshrl.u32 %v7280, 7
          %v7282 = vsub.s32 %v7279, %v7281
          %v7283 = vrot.slane %v7154, %v7282
          %v7284 = vcombine.low %v7262, %v7269
          %v7285 = vcombine.low %v7276, %v7283
          %v7287 = vunpack.c.l.s4 1966171168
          %v7288 = vunpack.c.0.s8 %v7287
          %v7289 = vlaneseq
          %v7290 = vshrl.u32 %v7289, 7
          %v7291 = vsub.s32 %v7288, %v7290
          %v7292 = vrot.slane %v7284, %v7291
          %v7294 = vunpack.c.l.s4 1966171168
          %v7295 = vunpack.c.0.s8 %v7294
          %v7296 = vlaneseq
          %v7297 = vshrl.u32 %v7296, 7
          %v7298 = vsub.s32 %v7295, %v7297
          %v7299 = vrot.slane %v7285, %v7298
          %v7300 = vcombine.low %v7292, %v7299
          %vm7301 = vcmp.ne.s32.totalorder %v7203, 0
          %vm7302 = vcmp.ne.s32.totalorder %v7252, 0
          %vm7303 = vcmp.ne.s32.totalorder %v7300, 0
          %s7304 = sshra.s32 %s7106, 3
          %s7305 = sand.u32 %s7106, 7
          %s7306 = sshra.s32 %s7106, 3
          %s7307 = sand.u32 %s7106, 7
          %s7308 = smul.u32 %s7304, 23
          %s7309 = smul.u32 %s7308, 8
          %s7310 = sadd.s32 %s7309, %s7307
          %s7311 = scalar_lea.vmem %s56, %s7310 [#allocation6]
          %7312 = vst.msk [vmem:[%s7311] ss:$8 sm:$0xf] %vm7301, %v7107
          %7313 = vst.msk [vmem:[%s7311] ss:$8 sm:$0xf0] %vm7301, %v7107
          %s7314 = sadd.s32 %s7308, 8
          %s7315 = smul.u32 %s7314, 8
          %s7316 = sadd.s32 %s7315, %s7307
          %s7317 = scalar_lea.vmem %s56, %s7316 [#allocation6]
          %7318 = vst.msk [vmem:[%s7317] ss:$8 sm:$0xf] %vm7302, %v7107
          %7319 = vst.msk [vmem:[%s7317] ss:$8 sm:$0xf0] %vm7302, %v7107
          %v7320 = vlaneseq
          %vm7321 = vcmp.ge.s32.totalorder %v7320, 0
          %vm7322 = vcmp.lt.s32.totalorder %v7320, 832
          %vm7323 = vmand %vm7321, %vm7322
          %vm7324 = vmand %vm7323, %vm7303
          %s7325 = sadd.s32 %s7308, 16
          %s7326 = smul.u32 %s7325, 8
          %s7327 = sadd.s32 %s7326, %s7307
          %s7328 = scalar_lea.vmem %s56, %s7327 [#allocation6]
          %7329 = vst.msk [vmem:[%s7328] ss:$8 sm:$0xf] %vm7324, %v7107
          %7330 = vst.msk [vmem:[%s7328] ss:$8 sm:$0x70] %vm7324, %v7107
        $region100: #{tpu_custom_call.1} parent=11 // pred_fallthru
          _
        %s7331 = sld [smem:[#allocation3 + $0x16]]
        %s7332 = sld [smem:[#allocation4 + $0x16]]
        %s7333 = sld [smem:[#allocation5 + $0x16]]
        %p7334 = scmp.ge.s32.totalorder %s7331, %s63
        %p7335 = scmp.lt.s32.totalorder %s7331, %s2186
        %p7336 = pnand %p7334, %p7335
        %p7337 = pneg %p7336
        // Predicated region
        $region101: #{tpu_custom_call.1} parent=11 // pred_check
          _
        $region102: #{tpu_custom_call.1} parent=11 // pred_check_branch
          %7339 = sbr.rel (%p7336) target = $region104
        $region103: #{tpu_custom_call.1} parent=11 // pred_region
          %s7340 = ssub.s32 %s7331, %s63
          %v7341 = vstv %s7333
          %v7342 = vstv %s7332
          %vm7343 = vcmp.eq.s32.totalorder %v2159, %v7342
          %vm7344 = vcmp.eq.s32.totalorder %v2160, %v7342
          %vm7345 = vcmp.eq.s32.totalorder %v2161, %v7342
          %vm7346 = vcmp.eq.s32.totalorder %v2162, %v7342
          %vm7347 = vcmp.eq.s32.totalorder %v2163, %v7342
          %vm7348 = vcmp.eq.s32.totalorder %v2164, %v7342
          %vm7349 = vcmp.eq.s32.totalorder %v2165, %v7342
          %vm7350 = vcmp.eq.s32.totalorder %v2166, %v7342
          %vm7351 = vcmp.eq.s32.totalorder %v2167, %v7342
          %vm7352 = vcmp.eq.s32.totalorder %v2168, %v7342
          %vm7353 = vcmp.eq.s32.totalorder %v2169, %v7342
          %vm7354 = vcmp.eq.s32.totalorder %v2170, %v7342
          %vm7355 = vcmp.eq.s32.totalorder %v2171, %v7342
          %vm7356 = vcmp.eq.s32.totalorder %v2172, %v7342
          %vm7357 = vcmp.eq.s32.totalorder %v2173, %v7342
          %vm7358 = vcmp.eq.s32.totalorder %v2174, %v7342
          %vm7359 = vcmp.eq.s32.totalorder %v2175, %v7342
          %vm7360 = vcmp.eq.s32.totalorder %v2176, %v7342
          %vm7361 = vcmp.eq.s32.totalorder %v2177, %v7342
          %vm7362 = vcmp.eq.s32.totalorder %v2178, %v7342
          %vm7363 = vcmp.eq.s32.totalorder %v2179, %v7342
          %vm7364 = vcmp.eq.s32.totalorder %v2180, %v7342
          %vm7365 = vcmp.eq.s32.totalorder %v2181, %v7342
          %v7366 = vsel %vm7343, 1, 0
          %v7367 = vsel %vm7344, 1, 0
          %v7368 = vsel %vm7345, 1, 0
          %v7369 = vsel %vm7346, 1, 0
          %v7370 = vsel %vm7347, 1, 0
          %v7371 = vsel %vm7348, 1, 0
          %v7372 = vsel %vm7349, 1, 0
          %v7373 = vsel %vm7350, 1, 0
          %v7374 = vsel %vm7351, 1, 0
          %v7375 = vsel %vm7352, 1, 0
          %v7376 = vsel %vm7353, 1, 0
          %v7377 = vsel %vm7354, 1, 0
          %v7378 = vsel %vm7355, 1, 0
          %v7379 = vsel %vm7356, 1, 0
          %v7380 = vsel %vm7357, 1, 0
          %v7381 = vsel %vm7358, 1, 0
          %v7382 = vsel %vm7359, 1, 0
          %v7383 = vsel %vm7360, 1, 0
          %v7384 = vsel %vm7361, 1, 0
          %v7385 = vsel %vm7362, 1, 0
          %v7386 = vsel %vm7363, 1, 0
          %v7387 = vsel %vm7364, 1, 0
          %v7388 = vsel %vm7365, 1, 0
          %v7389 = vcombine.low %v7366, %v7367
          %v7390 = vcombine.low %v7368, %v7369
          %v7391 = vcombine.low %v7370, %v7371
          %v7392 = vcombine.low %v7372, %v7373
          %v7394 = vunpack.c.l.s4 1966171168
          %v7395 = vunpack.c.0.s8 %v7394
          %v7396 = vlaneseq
          %v7397 = vshrl.u32 %v7396, 7
          %v7398 = vsub.s32 %v7395, %v7397
          %v7399 = vrot.slane %v7389, %v7398
          %v7401 = vunpack.c.l.s4 1966171168
          %v7402 = vunpack.c.0.s8 %v7401
          %v7403 = vlaneseq
          %v7404 = vshrl.u32 %v7403, 7
          %v7405 = vsub.s32 %v7402, %v7404
          %v7406 = vrot.slane %v7390, %v7405
          %v7408 = vunpack.c.l.s4 1966171168
          %v7409 = vunpack.c.0.s8 %v7408
          %v7410 = vlaneseq
          %v7411 = vshrl.u32 %v7410, 7
          %v7412 = vsub.s32 %v7409, %v7411
          %v7413 = vrot.slane %v7391, %v7412
          %v7415 = vunpack.c.l.s4 1966171168
          %v7416 = vunpack.c.0.s8 %v7415
          %v7417 = vlaneseq
          %v7418 = vshrl.u32 %v7417, 7
          %v7419 = vsub.s32 %v7416, %v7418
          %v7420 = vrot.slane %v7392, %v7419
          %v7421 = vcombine.low %v7399, %v7406
          %v7422 = vcombine.low %v7413, %v7420
          %v7424 = vunpack.c.l.s4 1966171168
          %v7425 = vunpack.c.0.s8 %v7424
          %v7426 = vlaneseq
          %v7427 = vshrl.u32 %v7426, 7
          %v7428 = vsub.s32 %v7425, %v7427
          %v7429 = vrot.slane %v7421, %v7428
          %v7431 = vunpack.c.l.s4 1966171168
          %v7432 = vunpack.c.0.s8 %v7431
          %v7433 = vlaneseq
          %v7434 = vshrl.u32 %v7433, 7
          %v7435 = vsub.s32 %v7432, %v7434
          %v7436 = vrot.slane %v7422, %v7435
          %v7437 = vcombine.low %v7429, %v7436
          %v7438 = vcombine.low %v7374, %v7375
          %v7439 = vcombine.low %v7376, %v7377
          %v7440 = vcombine.low %v7378, %v7379
          %v7441 = vcombine.low %v7380, %v7381
          %v7443 = vunpack.c.l.s4 1966171168
          %v7444 = vunpack.c.0.s8 %v7443
          %v7445 = vlaneseq
          %v7446 = vshrl.u32 %v7445, 7
          %v7447 = vsub.s32 %v7444, %v7446
          %v7448 = vrot.slane %v7438, %v7447
          %v7450 = vunpack.c.l.s4 1966171168
          %v7451 = vunpack.c.0.s8 %v7450
          %v7452 = vlaneseq
          %v7453 = vshrl.u32 %v7452, 7
          %v7454 = vsub.s32 %v7451, %v7453
          %v7455 = vrot.slane %v7439, %v7454
          %v7457 = vunpack.c.l.s4 1966171168
          %v7458 = vunpack.c.0.s8 %v7457
          %v7459 = vlaneseq
          %v7460 = vshrl.u32 %v7459, 7
          %v7461 = vsub.s32 %v7458, %v7460
          %v7462 = vrot.slane %v7440, %v7461
          %v7464 = vunpack.c.l.s4 1966171168
          %v7465 = vunpack.c.0.s8 %v7464
          %v7466 = vlaneseq
          %v7467 = vshrl.u32 %v7466, 7
          %v7468 = vsub.s32 %v7465, %v7467
          %v7469 = vrot.slane %v7441, %v7468
          %v7470 = vcombine.low %v7448, %v7455
          %v7471 = vcombine.low %v7462, %v7469
          %v7473 = vunpack.c.l.s4 1966171168
          %v7474 = vunpack.c.0.s8 %v7473
          %v7475 = vlaneseq
          %v7476 = vshrl.u32 %v7475, 7
          %v7477 = vsub.s32 %v7474, %v7476
          %v7478 = vrot.slane %v7470, %v7477
          %v7480 = vunpack.c.l.s4 1966171168
          %v7481 = vunpack.c.0.s8 %v7480
          %v7482 = vlaneseq
          %v7483 = vshrl.u32 %v7482, 7
          %v7484 = vsub.s32 %v7481, %v7483
          %v7485 = vrot.slane %v7471, %v7484
          %v7486 = vcombine.low %v7478, %v7485
          %v7487 = vcombine.low %v7382, %v7383
          %v7488 = vcombine.low %v7384, %v7385
          %v7489 = vcombine.low %v7386, %v7387
          %v7491 = vunpack.c.l.s4 1966171168
          %v7492 = vunpack.c.0.s8 %v7491
          %v7493 = vlaneseq
          %v7494 = vshrl.u32 %v7493, 7
          %v7495 = vsub.s32 %v7492, %v7494
          %v7496 = vrot.slane %v7487, %v7495
          %v7498 = vunpack.c.l.s4 1966171168
          %v7499 = vunpack.c.0.s8 %v7498
          %v7500 = vlaneseq
          %v7501 = vshrl.u32 %v7500, 7
          %v7502 = vsub.s32 %v7499, %v7501
          %v7503 = vrot.slane %v7488, %v7502
          %v7505 = vunpack.c.l.s4 1966171168
          %v7506 = vunpack.c.0.s8 %v7505
          %v7507 = vlaneseq
          %v7508 = vshrl.u32 %v7507, 7
          %v7509 = vsub.s32 %v7506, %v7508
          %v7510 = vrot.slane %v7489, %v7509
          %v7512 = vunpack.c.l.s4 1966171168
          %v7513 = vunpack.c.0.s8 %v7512
          %v7514 = vlaneseq
          %v7515 = vshrl.u32 %v7514, 7
          %v7516 = vsub.s32 %v7513, %v7515
          %v7517 = vrot.slane %v7388, %v7516
          %v7518 = vcombine.low %v7496, %v7503
          %v7519 = vcombine.low %v7510, %v7517
          %v7521 = vunpack.c.l.s4 1966171168
          %v7522 = vunpack.c.0.s8 %v7521
          %v7523 = vlaneseq
          %v7524 = vshrl.u32 %v7523, 7
          %v7525 = vsub.s32 %v7522, %v7524
          %v7526 = vrot.slane %v7518, %v7525
          %v7528 = vunpack.c.l.s4 1966171168
          %v7529 = vunpack.c.0.s8 %v7528
          %v7530 = vlaneseq
          %v7531 = vshrl.u32 %v7530, 7
          %v7532 = vsub.s32 %v7529, %v7531
          %v7533 = vrot.slane %v7519, %v7532
          %v7534 = vcombine.low %v7526, %v7533
          %vm7535 = vcmp.ne.s32.totalorder %v7437, 0
          %vm7536 = vcmp.ne.s32.totalorder %v7486, 0
          %vm7537 = vcmp.ne.s32.totalorder %v7534, 0
          %s7538 = sshra.s32 %s7340, 3
          %s7539 = sand.u32 %s7340, 7
          %s7540 = sshra.s32 %s7340, 3
          %s7541 = sand.u32 %s7340, 7
          %s7542 = smul.u32 %s7538, 23
          %s7543 = smul.u32 %s7542, 8
          %s7544 = sadd.s32 %s7543, %s7541
          %s7545 = scalar_lea.vmem %s56, %s7544 [#allocation6]
          %7546 = vst.msk [vmem:[%s7545] ss:$8 sm:$0xf] %vm7535, %v7341
          %7547 = vst.msk [vmem:[%s7545] ss:$8 sm:$0xf0] %vm7535, %v7341
          %s7548 = sadd.s32 %s7542, 8
          %s7549 = smul.u32 %s7548, 8
          %s7550 = sadd.s32 %s7549, %s7541
          %s7551 = scalar_lea.vmem %s56, %s7550 [#allocation6]
          %7552 = vst.msk [vmem:[%s7551] ss:$8 sm:$0xf] %vm7536, %v7341
          %7553 = vst.msk [vmem:[%s7551] ss:$8 sm:$0xf0] %vm7536, %v7341
          %v7554 = vlaneseq
          %vm7555 = vcmp.ge.s32.totalorder %v7554, 0
          %vm7556 = vcmp.lt.s32.totalorder %v7554, 832
          %vm7557 = vmand %vm7555, %vm7556
          %vm7558 = vmand %vm7557, %vm7537
          %s7559 = sadd.s32 %s7542, 16
          %s7560 = smul.u32 %s7559, 8
          %s7561 = sadd.s32 %s7560, %s7541
          %s7562 = scalar_lea.vmem %s56, %s7561 [#allocation6]
          %7563 = vst.msk [vmem:[%s7562] ss:$8 sm:$0xf] %vm7558, %v7341
          %7564 = vst.msk [vmem:[%s7562] ss:$8 sm:$0x70] %vm7558, %v7341
        $region104: #{tpu_custom_call.1} parent=11 // pred_fallthru
          _
        %s7565 = sld [smem:[#allocation3 + $0x17]]
        %s7566 = sld [smem:[#allocation4 + $0x17]]
        %s7567 = sld [smem:[#allocation5 + $0x17]]
        %p7568 = scmp.ge.s32.totalorder %s7565, %s63
        %p7569 = scmp.lt.s32.totalorder %s7565, %s2186
        %p7570 = pnand %p7568, %p7569
        %p7571 = pneg %p7570
        // Predicated region
        $region105: #{tpu_custom_call.1} parent=11 // pred_check
          _
        $region106: #{tpu_custom_call.1} parent=11 // pred_check_branch
          %7573 = sbr.rel (%p7570) target = $region108
        $region107: #{tpu_custom_call.1} parent=11 // pred_region
          %s7574 = ssub.s32 %s7565, %s63
          %v7575 = vstv %s7567
          %v7576 = vstv %s7566
          %vm7577 = vcmp.eq.s32.totalorder %v2159, %v7576
          %vm7578 = vcmp.eq.s32.totalorder %v2160, %v7576
          %vm7579 = vcmp.eq.s32.totalorder %v2161, %v7576
          %vm7580 = vcmp.eq.s32.totalorder %v2162, %v7576
          %vm7581 = vcmp.eq.s32.totalorder %v2163, %v7576
          %vm7582 = vcmp.eq.s32.totalorder %v2164, %v7576
          %vm7583 = vcmp.eq.s32.totalorder %v2165, %v7576
          %vm7584 = vcmp.eq.s32.totalorder %v2166, %v7576
          %vm7585 = vcmp.eq.s32.totalorder %v2167, %v7576
          %vm7586 = vcmp.eq.s32.totalorder %v2168, %v7576
          %vm7587 = vcmp.eq.s32.totalorder %v2169, %v7576
          %vm7588 = vcmp.eq.s32.totalorder %v2170, %v7576
          %vm7589 = vcmp.eq.s32.totalorder %v2171, %v7576
          %vm7590 = vcmp.eq.s32.totalorder %v2172, %v7576
          %vm7591 = vcmp.eq.s32.totalorder %v2173, %v7576
          %vm7592 = vcmp.eq.s32.totalorder %v2174, %v7576
          %vm7593 = vcmp.eq.s32.totalorder %v2175, %v7576
          %vm7594 = vcmp.eq.s32.totalorder %v2176, %v7576
          %vm7595 = vcmp.eq.s32.totalorder %v2177, %v7576
          %vm7596 = vcmp.eq.s32.totalorder %v2178, %v7576
          %vm7597 = vcmp.eq.s32.totalorder %v2179, %v7576
          %vm7598 = vcmp.eq.s32.totalorder %v2180, %v7576
          %vm7599 = vcmp.eq.s32.totalorder %v2181, %v7576
          %v7600 = vsel %vm7577, 1, 0
          %v7601 = vsel %vm7578, 1, 0
          %v7602 = vsel %vm7579, 1, 0
          %v7603 = vsel %vm7580, 1, 0
          %v7604 = vsel %vm7581, 1, 0
          %v7605 = vsel %vm7582, 1, 0
          %v7606 = vsel %vm7583, 1, 0
          %v7607 = vsel %vm7584, 1, 0
          %v7608 = vsel %vm7585, 1, 0
          %v7609 = vsel %vm7586, 1, 0
          %v7610 = vsel %vm7587, 1, 0
          %v7611 = vsel %vm7588, 1, 0
          %v7612 = vsel %vm7589, 1, 0
          %v7613 = vsel %vm7590, 1, 0
          %v7614 = vsel %vm7591, 1, 0
          %v7615 = vsel %vm7592, 1, 0
          %v7616 = vsel %vm7593, 1, 0
          %v7617 = vsel %vm7594, 1, 0
          %v7618 = vsel %vm7595, 1, 0
          %v7619 = vsel %vm7596, 1, 0
          %v7620 = vsel %vm7597, 1, 0
          %v7621 = vsel %vm7598, 1, 0
          %v7622 = vsel %vm7599, 1, 0
          %v7623 = vcombine.low %v7600, %v7601
          %v7624 = vcombine.low %v7602, %v7603
          %v7625 = vcombine.low %v7604, %v7605
          %v7626 = vcombine.low %v7606, %v7607
          %v7628 = vunpack.c.l.s4 1966171168
          %v7629 = vunpack.c.0.s8 %v7628
          %v7630 = vlaneseq
          %v7631 = vshrl.u32 %v7630, 7
          %v7632 = vsub.s32 %v7629, %v7631
          %v7633 = vrot.slane %v7623, %v7632
          %v7635 = vunpack.c.l.s4 1966171168
          %v7636 = vunpack.c.0.s8 %v7635
          %v7637 = vlaneseq
          %v7638 = vshrl.u32 %v7637, 7
          %v7639 = vsub.s32 %v7636, %v7638
          %v7640 = vrot.slane %v7624, %v7639
          %v7642 = vunpack.c.l.s4 1966171168
          %v7643 = vunpack.c.0.s8 %v7642
          %v7644 = vlaneseq
          %v7645 = vshrl.u32 %v7644, 7
          %v7646 = vsub.s32 %v7643, %v7645
          %v7647 = vrot.slane %v7625, %v7646
          %v7649 = vunpack.c.l.s4 1966171168
          %v7650 = vunpack.c.0.s8 %v7649
          %v7651 = vlaneseq
          %v7652 = vshrl.u32 %v7651, 7
          %v7653 = vsub.s32 %v7650, %v7652
          %v7654 = vrot.slane %v7626, %v7653
          %v7655 = vcombine.low %v7633, %v7640
          %v7656 = vcombine.low %v7647, %v7654
          %v7658 = vunpack.c.l.s4 1966171168
          %v7659 = vunpack.c.0.s8 %v7658
          %v7660 = vlaneseq
          %v7661 = vshrl.u32 %v7660, 7
          %v7662 = vsub.s32 %v7659, %v7661
          %v7663 = vrot.slane %v7655, %v7662
          %v7665 = vunpack.c.l.s4 1966171168
          %v7666 = vunpack.c.0.s8 %v7665
          %v7667 = vlaneseq
          %v7668 = vshrl.u32 %v7667, 7
          %v7669 = vsub.s32 %v7666, %v7668
          %v7670 = vrot.slane %v7656, %v7669
          %v7671 = vcombine.low %v7663, %v7670
          %v7672 = vcombine.low %v7608, %v7609
          %v7673 = vcombine.low %v7610, %v7611
          %v7674 = vcombine.low %v7612, %v7613
          %v7675 = vcombine.low %v7614, %v7615
          %v7677 = vunpack.c.l.s4 1966171168
          %v7678 = vunpack.c.0.s8 %v7677
          %v7679 = vlaneseq
          %v7680 = vshrl.u32 %v7679, 7
          %v7681 = vsub.s32 %v7678, %v7680
          %v7682 = vrot.slane %v7672, %v7681
          %v7684 = vunpack.c.l.s4 1966171168
          %v7685 = vunpack.c.0.s8 %v7684
          %v7686 = vlaneseq
          %v7687 = vshrl.u32 %v7686, 7
          %v7688 = vsub.s32 %v7685, %v7687
          %v7689 = vrot.slane %v7673, %v7688
          %v7691 = vunpack.c.l.s4 1966171168
          %v7692 = vunpack.c.0.s8 %v7691
          %v7693 = vlaneseq
          %v7694 = vshrl.u32 %v7693, 7
          %v7695 = vsub.s32 %v7692, %v7694
          %v7696 = vrot.slane %v7674, %v7695
          %v7698 = vunpack.c.l.s4 1966171168
          %v7699 = vunpack.c.0.s8 %v7698
          %v7700 = vlaneseq
          %v7701 = vshrl.u32 %v7700, 7
          %v7702 = vsub.s32 %v7699, %v7701
          %v7703 = vrot.slane %v7675, %v7702
          %v7704 = vcombine.low %v7682, %v7689
          %v7705 = vcombine.low %v7696, %v7703
          %v7707 = vunpack.c.l.s4 1966171168
          %v7708 = vunpack.c.0.s8 %v7707
          %v7709 = vlaneseq
          %v7710 = vshrl.u32 %v7709, 7
          %v7711 = vsub.s32 %v7708, %v7710
          %v7712 = vrot.slane %v7704, %v7711
          %v7714 = vunpack.c.l.s4 1966171168
          %v7715 = vunpack.c.0.s8 %v7714
          %v7716 = vlaneseq
          %v7717 = vshrl.u32 %v7716, 7
          %v7718 = vsub.s32 %v7715, %v7717
          %v7719 = vrot.slane %v7705, %v7718
          %v7720 = vcombine.low %v7712, %v7719
          %v7721 = vcombine.low %v7616, %v7617
          %v7722 = vcombine.low %v7618, %v7619
          %v7723 = vcombine.low %v7620, %v7621
          %v7725 = vunpack.c.l.s4 1966171168
          %v7726 = vunpack.c.0.s8 %v7725
          %v7727 = vlaneseq
          %v7728 = vshrl.u32 %v7727, 7
          %v7729 = vsub.s32 %v7726, %v7728
          %v7730 = vrot.slane %v7721, %v7729
          %v7732 = vunpack.c.l.s4 1966171168
          %v7733 = vunpack.c.0.s8 %v7732
          %v7734 = vlaneseq
          %v7735 = vshrl.u32 %v7734, 7
          %v7736 = vsub.s32 %v7733, %v7735
          %v7737 = vrot.slane %v7722, %v7736
          %v7739 = vunpack.c.l.s4 1966171168
          %v7740 = vunpack.c.0.s8 %v7739
          %v7741 = vlaneseq
          %v7742 = vshrl.u32 %v7741, 7
          %v7743 = vsub.s32 %v7740, %v7742
          %v7744 = vrot.slane %v7723, %v7743
          %v7746 = vunpack.c.l.s4 1966171168
          %v7747 = vunpack.c.0.s8 %v7746
          %v7748 = vlaneseq
          %v7749 = vshrl.u32 %v7748, 7
          %v7750 = vsub.s32 %v7747, %v7749
          %v7751 = vrot.slane %v7622, %v7750
          %v7752 = vcombine.low %v7730, %v7737
          %v7753 = vcombine.low %v7744, %v7751
          %v7755 = vunpack.c.l.s4 1966171168
          %v7756 = vunpack.c.0.s8 %v7755
          %v7757 = vlaneseq
          %v7758 = vshrl.u32 %v7757, 7
          %v7759 = vsub.s32 %v7756, %v7758
          %v7760 = vrot.slane %v7752, %v7759
          %v7762 = vunpack.c.l.s4 1966171168
          %v7763 = vunpack.c.0.s8 %v7762
          %v7764 = vlaneseq
          %v7765 = vshrl.u32 %v7764, 7
          %v7766 = vsub.s32 %v7763, %v7765
          %v7767 = vrot.slane %v7753, %v7766
          %v7768 = vcombine.low %v7760, %v7767
          %vm7769 = vcmp.ne.s32.totalorder %v7671, 0
          %vm7770 = vcmp.ne.s32.totalorder %v7720, 0
          %vm7771 = vcmp.ne.s32.totalorder %v7768, 0
          %s7772 = sshra.s32 %s7574, 3
          %s7773 = sand.u32 %s7574, 7
          %s7774 = sshra.s32 %s7574, 3
          %s7775 = sand.u32 %s7574, 7
          %s7776 = smul.u32 %s7772, 23
          %s7777 = smul.u32 %s7776, 8
          %s7778 = sadd.s32 %s7777, %s7775
          %s7779 = scalar_lea.vmem %s56, %s7778 [#allocation6]
          %7780 = vst.msk [vmem:[%s7779] ss:$8 sm:$0xf] %vm7769, %v7575
          %7781 = vst.msk [vmem:[%s7779] ss:$8 sm:$0xf0] %vm7769, %v7575
          %s7782 = sadd.s32 %s7776, 8
          %s7783 = smul.u32 %s7782, 8
          %s7784 = sadd.s32 %s7783, %s7775
          %s7785 = scalar_lea.vmem %s56, %s7784 [#allocation6]
          %7786 = vst.msk [vmem:[%s7785] ss:$8 sm:$0xf] %vm7770, %v7575
          %7787 = vst.msk [vmem:[%s7785] ss:$8 sm:$0xf0] %vm7770, %v7575
          %v7788 = vlaneseq
          %vm7789 = vcmp.ge.s32.totalorder %v7788, 0
          %vm7790 = vcmp.lt.s32.totalorder %v7788, 832
          %vm7791 = vmand %vm7789, %vm7790
          %vm7792 = vmand %vm7791, %vm7771
          %s7793 = sadd.s32 %s7776, 16
          %s7794 = smul.u32 %s7793, 8
          %s7795 = sadd.s32 %s7794, %s7775
          %s7796 = scalar_lea.vmem %s56, %s7795 [#allocation6]
          %7797 = vst.msk [vmem:[%s7796] ss:$8 sm:$0xf] %vm7792, %v7575
          %7798 = vst.msk [vmem:[%s7796] ss:$8 sm:$0x70] %vm7792, %v7575
        $region108: #{tpu_custom_call.1} parent=11 // pred_fallthru
          _
        %s7799 = sld [smem:[#allocation3 + $0x18]]
        %s7800 = sld [smem:[#allocation4 + $0x18]]
        %s7801 = sld [smem:[#allocation5 + $0x18]]
        %p7802 = scmp.ge.s32.totalorder %s7799, %s63
        %p7803 = scmp.lt.s32.totalorder %s7799, %s2186
        %p7804 = pnand %p7802, %p7803
        %p7805 = pneg %p7804
        // Predicated region
        $region109: #{tpu_custom_call.1} parent=11 // pred_check
          _
        $region110: #{tpu_custom_call.1} parent=11 // pred_check_branch
          %7807 = sbr.rel (%p7804) target = $region112
        $region111: #{tpu_custom_call.1} parent=11 // pred_region
          %s7808 = ssub.s32 %s7799, %s63
          %v7809 = vstv %s7801
          %v7810 = vstv %s7800
          %vm7811 = vcmp.eq.s32.totalorder %v2159, %v7810
          %vm7812 = vcmp.eq.s32.totalorder %v2160, %v7810
          %vm7813 = vcmp.eq.s32.totalorder %v2161, %v7810
          %vm7814 = vcmp.eq.s32.totalorder %v2162, %v7810
          %vm7815 = vcmp.eq.s32.totalorder %v2163, %v7810
          %vm7816 = vcmp.eq.s32.totalorder %v2164, %v7810
          %vm7817 = vcmp.eq.s32.totalorder %v2165, %v7810
          %vm7818 = vcmp.eq.s32.totalorder %v2166, %v7810
          %vm7819 = vcmp.eq.s32.totalorder %v2167, %v7810
          %vm7820 = vcmp.eq.s32.totalorder %v2168, %v7810
          %vm7821 = vcmp.eq.s32.totalorder %v2169, %v7810
          %vm7822 = vcmp.eq.s32.totalorder %v2170, %v7810
          %vm7823 = vcmp.eq.s32.totalorder %v2171, %v7810
          %vm7824 = vcmp.eq.s32.totalorder %v2172, %v7810
          %vm7825 = vcmp.eq.s32.totalorder %v2173, %v7810
          %vm7826 = vcmp.eq.s32.totalorder %v2174, %v7810
          %vm7827 = vcmp.eq.s32.totalorder %v2175, %v7810
          %vm7828 = vcmp.eq.s32.totalorder %v2176, %v7810
          %vm7829 = vcmp.eq.s32.totalorder %v2177, %v7810
          %vm7830 = vcmp.eq.s32.totalorder %v2178, %v7810
          %vm7831 = vcmp.eq.s32.totalorder %v2179, %v7810
          %vm7832 = vcmp.eq.s32.totalorder %v2180, %v7810
          %vm7833 = vcmp.eq.s32.totalorder %v2181, %v7810
          %v7834 = vsel %vm7811, 1, 0
          %v7835 = vsel %vm7812, 1, 0
          %v7836 = vsel %vm7813, 1, 0
          %v7837 = vsel %vm7814, 1, 0
          %v7838 = vsel %vm7815, 1, 0
          %v7839 = vsel %vm7816, 1, 0
          %v7840 = vsel %vm7817, 1, 0
          %v7841 = vsel %vm7818, 1, 0
          %v7842 = vsel %vm7819, 1, 0
          %v7843 = vsel %vm7820, 1, 0
          %v7844 = vsel %vm7821, 1, 0
          %v7845 = vsel %vm7822, 1, 0
          %v7846 = vsel %vm7823, 1, 0
          %v7847 = vsel %vm7824, 1, 0
          %v7848 = vsel %vm7825, 1, 0
          %v7849 = vsel %vm7826, 1, 0
          %v7850 = vsel %vm7827, 1, 0
          %v7851 = vsel %vm7828, 1, 0
          %v7852 = vsel %vm7829, 1, 0
          %v7853 = vsel %vm7830, 1, 0
          %v7854 = vsel %vm7831, 1, 0
          %v7855 = vsel %vm7832, 1, 0
          %v7856 = vsel %vm7833, 1, 0
          %v7857 = vcombine.low %v7834, %v7835
          %v7858 = vcombine.low %v7836, %v7837
          %v7859 = vcombine.low %v7838, %v7839
          %v7860 = vcombine.low %v7840, %v7841
          %v7862 = vunpack.c.l.s4 1966171168
          %v7863 = vunpack.c.0.s8 %v7862
          %v7864 = vlaneseq
          %v7865 = vshrl.u32 %v7864, 7
          %v7866 = vsub.s32 %v7863, %v7865
          %v7867 = vrot.slane %v7857, %v7866
          %v7869 = vunpack.c.l.s4 1966171168
          %v7870 = vunpack.c.0.s8 %v7869
          %v7871 = vlaneseq
          %v7872 = vshrl.u32 %v7871, 7
          %v7873 = vsub.s32 %v7870, %v7872
          %v7874 = vrot.slane %v7858, %v7873
          %v7876 = vunpack.c.l.s4 1966171168
          %v7877 = vunpack.c.0.s8 %v7876
          %v7878 = vlaneseq
          %v7879 = vshrl.u32 %v7878, 7
          %v7880 = vsub.s32 %v7877, %v7879
          %v7881 = vrot.slane %v7859, %v7880
          %v7883 = vunpack.c.l.s4 1966171168
          %v7884 = vunpack.c.0.s8 %v7883
          %v7885 = vlaneseq
          %v7886 = vshrl.u32 %v7885, 7
          %v7887 = vsub.s32 %v7884, %v7886
          %v7888 = vrot.slane %v7860, %v7887
          %v7889 = vcombine.low %v7867, %v7874
          %v7890 = vcombine.low %v7881, %v7888
          %v7892 = vunpack.c.l.s4 1966171168
          %v7893 = vunpack.c.0.s8 %v7892
          %v7894 = vlaneseq
          %v7895 = vshrl.u32 %v7894, 7
          %v7896 = vsub.s32 %v7893, %v7895
          %v7897 = vrot.slane %v7889, %v7896
          %v7899 = vunpack.c.l.s4 1966171168
          %v7900 = vunpack.c.0.s8 %v7899
          %v7901 = vlaneseq
          %v7902 = vshrl.u32 %v7901, 7
          %v7903 = vsub.s32 %v7900, %v7902
          %v7904 = vrot.slane %v7890, %v7903
          %v7905 = vcombine.low %v7897, %v7904
          %v7906 = vcombine.low %v7842, %v7843
          %v7907 = vcombine.low %v7844, %v7845
          %v7908 = vcombine.low %v7846, %v7847
          %v7909 = vcombine.low %v7848, %v7849
          %v7911 = vunpack.c.l.s4 1966171168
          %v7912 = vunpack.c.0.s8 %v7911
          %v7913 = vlaneseq
          %v7914 = vshrl.u32 %v7913, 7
          %v7915 = vsub.s32 %v7912, %v7914
          %v7916 = vrot.slane %v7906, %v7915
          %v7918 = vunpack.c.l.s4 1966171168
          %v7919 = vunpack.c.0.s8 %v7918
          %v7920 = vlaneseq
          %v7921 = vshrl.u32 %v7920, 7
          %v7922 = vsub.s32 %v7919, %v7921
          %v7923 = vrot.slane %v7907, %v7922
          %v7925 = vunpack.c.l.s4 1966171168
          %v7926 = vunpack.c.0.s8 %v7925
          %v7927 = vlaneseq
          %v7928 = vshrl.u32 %v7927, 7
          %v7929 = vsub.s32 %v7926, %v7928
          %v7930 = vrot.slane %v7908, %v7929
          %v7932 = vunpack.c.l.s4 1966171168
          %v7933 = vunpack.c.0.s8 %v7932
          %v7934 = vlaneseq
          %v7935 = vshrl.u32 %v7934, 7
          %v7936 = vsub.s32 %v7933, %v7935
          %v7937 = vrot.slane %v7909, %v7936
          %v7938 = vcombine.low %v7916, %v7923
          %v7939 = vcombine.low %v7930, %v7937
          %v7941 = vunpack.c.l.s4 1966171168
          %v7942 = vunpack.c.0.s8 %v7941
          %v7943 = vlaneseq
          %v7944 = vshrl.u32 %v7943, 7
          %v7945 = vsub.s32 %v7942, %v7944
          %v7946 = vrot.slane %v7938, %v7945
          %v7948 = vunpack.c.l.s4 1966171168
          %v7949 = vunpack.c.0.s8 %v7948
          %v7950 = vlaneseq
          %v7951 = vshrl.u32 %v7950, 7
          %v7952 = vsub.s32 %v7949, %v7951
          %v7953 = vrot.slane %v7939, %v7952
          %v7954 = vcombine.low %v7946, %v7953
          %v7955 = vcombine.low %v7850, %v7851
          %v7956 = vcombine.low %v7852, %v7853
          %v7957 = vcombine.low %v7854, %v7855
          %v7959 = vunpack.c.l.s4 1966171168
          %v7960 = vunpack.c.0.s8 %v7959
          %v7961 = vlaneseq
          %v7962 = vshrl.u32 %v7961, 7
          %v7963 = vsub.s32 %v7960, %v7962
          %v7964 = vrot.slane %v7955, %v7963
          %v7966 = vunpack.c.l.s4 1966171168
          %v7967 = vunpack.c.0.s8 %v7966
          %v7968 = vlaneseq
          %v7969 = vshrl.u32 %v7968, 7
          %v7970 = vsub.s32 %v7967, %v7969
          %v7971 = vrot.slane %v7956, %v7970
          %v7973 = vunpack.c.l.s4 1966171168
          %v7974 = vunpack.c.0.s8 %v7973
          %v7975 = vlaneseq
          %v7976 = vshrl.u32 %v7975, 7
          %v7977 = vsub.s32 %v7974, %v7976
          %v7978 = vrot.slane %v7957, %v7977
          %v7980 = vunpack.c.l.s4 1966171168
          %v7981 = vunpack.c.0.s8 %v7980
          %v7982 = vlaneseq
          %v7983 = vshrl.u32 %v7982, 7
          %v7984 = vsub.s32 %v7981, %v7983
          %v7985 = vrot.slane %v7856, %v7984
          %v7986 = vcombine.low %v7964, %v7971
          %v7987 = vcombine.low %v7978, %v7985
          %v7989 = vunpack.c.l.s4 1966171168
          %v7990 = vunpack.c.0.s8 %v7989
          %v7991 = vlaneseq
          %v7992 = vshrl.u32 %v7991, 7
          %v7993 = vsub.s32 %v7990, %v7992
          %v7994 = vrot.slane %v7986, %v7993
          %v7996 = vunpack.c.l.s4 1966171168
          %v7997 = vunpack.c.0.s8 %v7996
          %v7998 = vlaneseq
          %v7999 = vshrl.u32 %v7998, 7
          %v8000 = vsub.s32 %v7997, %v7999
          %v8001 = vrot.slane %v7987, %v8000
          %v8002 = vcombine.low %v7994, %v8001
          %vm8003 = vcmp.ne.s32.totalorder %v7905, 0
          %vm8004 = vcmp.ne.s32.totalorder %v7954, 0
          %vm8005 = vcmp.ne.s32.totalorder %v8002, 0
          %s8006 = sshra.s32 %s7808, 3
          %s8007 = sand.u32 %s7808, 7
          %s8008 = sshra.s32 %s7808, 3
          %s8009 = sand.u32 %s7808, 7
          %s8010 = smul.u32 %s8006, 23
          %s8011 = smul.u32 %s8010, 8
          %s8012 = sadd.s32 %s8011, %s8009
          %s8013 = scalar_lea.vmem %s56, %s8012 [#allocation6]
          %8014 = vst.msk [vmem:[%s8013] ss:$8 sm:$0xf] %vm8003, %v7809
          %8015 = vst.msk [vmem:[%s8013] ss:$8 sm:$0xf0] %vm8003, %v7809
          %s8016 = sadd.s32 %s8010, 8
          %s8017 = smul.u32 %s8016, 8
          %s8018 = sadd.s32 %s8017, %s8009
          %s8019 = scalar_lea.vmem %s56, %s8018 [#allocation6]
          %8020 = vst.msk [vmem:[%s8019] ss:$8 sm:$0xf] %vm8004, %v7809
          %8021 = vst.msk [vmem:[%s8019] ss:$8 sm:$0xf0] %vm8004, %v7809
          %v8022 = vlaneseq
          %vm8023 = vcmp.ge.s32.totalorder %v8022, 0
          %vm8024 = vcmp.lt.s32.totalorder %v8022, 832
          %vm8025 = vmand %vm8023, %vm8024
          %vm8026 = vmand %vm8025, %vm8005
          %s8027 = sadd.s32 %s8010, 16
          %s8028 = smul.u32 %s8027, 8
          %s8029 = sadd.s32 %s8028, %s8009
          %s8030 = scalar_lea.vmem %s56, %s8029 [#allocation6]
          %8031 = vst.msk [vmem:[%s8030] ss:$8 sm:$0xf] %vm8026, %v7809
          %8032 = vst.msk [vmem:[%s8030] ss:$8 sm:$0x70] %vm8026, %v7809
        $region112: #{tpu_custom_call.1} parent=11 // pred_fallthru
          _
        %s8033 = sld [smem:[#allocation3 + $0x19]]
        %s8034 = sld [smem:[#allocation4 + $0x19]]
        %s8035 = sld [smem:[#allocation5 + $0x19]]
        %p8036 = scmp.ge.s32.totalorder %s8033, %s63
        %p8037 = scmp.lt.s32.totalorder %s8033, %s2186
        %p8038 = pnand %p8036, %p8037
        %p8039 = pneg %p8038
        // Predicated region
        $region113: #{tpu_custom_call.1} parent=11 // pred_check
          _
        $region114: #{tpu_custom_call.1} parent=11 // pred_check_branch
          %8041 = sbr.rel (%p8038) target = $region116
        $region115: #{tpu_custom_call.1} parent=11 // pred_region
          %s8042 = ssub.s32 %s8033, %s63
          %v8043 = vstv %s8035
          %v8044 = vstv %s8034
          %vm8045 = vcmp.eq.s32.totalorder %v2159, %v8044
          %vm8046 = vcmp.eq.s32.totalorder %v2160, %v8044
          %vm8047 = vcmp.eq.s32.totalorder %v2161, %v8044
          %vm8048 = vcmp.eq.s32.totalorder %v2162, %v8044
          %vm8049 = vcmp.eq.s32.totalorder %v2163, %v8044
          %vm8050 = vcmp.eq.s32.totalorder %v2164, %v8044
          %vm8051 = vcmp.eq.s32.totalorder %v2165, %v8044
          %vm8052 = vcmp.eq.s32.totalorder %v2166, %v8044
          %vm8053 = vcmp.eq.s32.totalorder %v2167, %v8044
          %vm8054 = vcmp.eq.s32.totalorder %v2168, %v8044
          %vm8055 = vcmp.eq.s32.totalorder %v2169, %v8044
          %vm8056 = vcmp.eq.s32.totalorder %v2170, %v8044
          %vm8057 = vcmp.eq.s32.totalorder %v2171, %v8044
          %vm8058 = vcmp.eq.s32.totalorder %v2172, %v8044
          %vm8059 = vcmp.eq.s32.totalorder %v2173, %v8044
          %vm8060 = vcmp.eq.s32.totalorder %v2174, %v8044
          %vm8061 = vcmp.eq.s32.totalorder %v2175, %v8044
          %vm8062 = vcmp.eq.s32.totalorder %v2176, %v8044
          %vm8063 = vcmp.eq.s32.totalorder %v2177, %v8044
          %vm8064 = vcmp.eq.s32.totalorder %v2178, %v8044
          %vm8065 = vcmp.eq.s32.totalorder %v2179, %v8044
          %vm8066 = vcmp.eq.s32.totalorder %v2180, %v8044
          %vm8067 = vcmp.eq.s32.totalorder %v2181, %v8044
          %v8068 = vsel %vm8045, 1, 0
          %v8069 = vsel %vm8046, 1, 0
          %v8070 = vsel %vm8047, 1, 0
          %v8071 = vsel %vm8048, 1, 0
          %v8072 = vsel %vm8049, 1, 0
          %v8073 = vsel %vm8050, 1, 0
          %v8074 = vsel %vm8051, 1, 0
          %v8075 = vsel %vm8052, 1, 0
          %v8076 = vsel %vm8053, 1, 0
          %v8077 = vsel %vm8054, 1, 0
          %v8078 = vsel %vm8055, 1, 0
          %v8079 = vsel %vm8056, 1, 0
          %v8080 = vsel %vm8057, 1, 0
          %v8081 = vsel %vm8058, 1, 0
          %v8082 = vsel %vm8059, 1, 0
          %v8083 = vsel %vm8060, 1, 0
          %v8084 = vsel %vm8061, 1, 0
          %v8085 = vsel %vm8062, 1, 0
          %v8086 = vsel %vm8063, 1, 0
          %v8087 = vsel %vm8064, 1, 0
          %v8088 = vsel %vm8065, 1, 0
          %v8089 = vsel %vm8066, 1, 0
          %v8090 = vsel %vm8067, 1, 0
          %v8091 = vcombine.low %v8068, %v8069
          %v8092 = vcombine.low %v8070, %v8071
          %v8093 = vcombine.low %v8072, %v8073
          %v8094 = vcombine.low %v8074, %v8075
          %v8096 = vunpack.c.l.s4 1966171168
          %v8097 = vunpack.c.0.s8 %v8096
          %v8098 = vlaneseq
          %v8099 = vshrl.u32 %v8098, 7
          %v8100 = vsub.s32 %v8097, %v8099
          %v8101 = vrot.slane %v8091, %v8100
          %v8103 = vunpack.c.l.s4 1966171168
          %v8104 = vunpack.c.0.s8 %v8103
          %v8105 = vlaneseq
          %v8106 = vshrl.u32 %v8105, 7
          %v8107 = vsub.s32 %v8104, %v8106
          %v8108 = vrot.slane %v8092, %v8107
          %v8110 = vunpack.c.l.s4 1966171168
          %v8111 = vunpack.c.0.s8 %v8110
          %v8112 = vlaneseq
          %v8113 = vshrl.u32 %v8112, 7
          %v8114 = vsub.s32 %v8111, %v8113
          %v8115 = vrot.slane %v8093, %v8114
          %v8117 = vunpack.c.l.s4 1966171168
          %v8118 = vunpack.c.0.s8 %v8117
          %v8119 = vlaneseq
          %v8120 = vshrl.u32 %v8119, 7
          %v8121 = vsub.s32 %v8118, %v8120
          %v8122 = vrot.slane %v8094, %v8121
          %v8123 = vcombine.low %v8101, %v8108
          %v8124 = vcombine.low %v8115, %v8122
          %v8126 = vunpack.c.l.s4 1966171168
          %v8127 = vunpack.c.0.s8 %v8126
          %v8128 = vlaneseq
          %v8129 = vshrl.u32 %v8128, 7
          %v8130 = vsub.s32 %v8127, %v8129
          %v8131 = vrot.slane %v8123, %v8130
          %v8133 = vunpack.c.l.s4 1966171168
          %v8134 = vunpack.c.0.s8 %v8133
          %v8135 = vlaneseq
          %v8136 = vshrl.u32 %v8135, 7
          %v8137 = vsub.s32 %v8134, %v8136
          %v8138 = vrot.slane %v8124, %v8137
          %v8139 = vcombine.low %v8131, %v8138
          %v8140 = vcombine.low %v8076, %v8077
          %v8141 = vcombine.low %v8078, %v8079
          %v8142 = vcombine.low %v8080, %v8081
          %v8143 = vcombine.low %v8082, %v8083
          %v8145 = vunpack.c.l.s4 1966171168
          %v8146 = vunpack.c.0.s8 %v8145
          %v8147 = vlaneseq
          %v8148 = vshrl.u32 %v8147, 7
          %v8149 = vsub.s32 %v8146, %v8148
          %v8150 = vrot.slane %v8140, %v8149
          %v8152 = vunpack.c.l.s4 1966171168
          %v8153 = vunpack.c.0.s8 %v8152
          %v8154 = vlaneseq
          %v8155 = vshrl.u32 %v8154, 7
          %v8156 = vsub.s32 %v8153, %v8155
          %v8157 = vrot.slane %v8141, %v8156
          %v8159 = vunpack.c.l.s4 1966171168
          %v8160 = vunpack.c.0.s8 %v8159
          %v8161 = vlaneseq
          %v8162 = vshrl.u32 %v8161, 7
          %v8163 = vsub.s32 %v8160, %v8162
          %v8164 = vrot.slane %v8142, %v8163
          %v8166 = vunpack.c.l.s4 1966171168
          %v8167 = vunpack.c.0.s8 %v8166
          %v8168 = vlaneseq
          %v8169 = vshrl.u32 %v8168, 7
          %v8170 = vsub.s32 %v8167, %v8169
          %v8171 = vrot.slane %v8143, %v8170
          %v8172 = vcombine.low %v8150, %v8157
          %v8173 = vcombine.low %v8164, %v8171
          %v8175 = vunpack.c.l.s4 1966171168
          %v8176 = vunpack.c.0.s8 %v8175
          %v8177 = vlaneseq
          %v8178 = vshrl.u32 %v8177, 7
          %v8179 = vsub.s32 %v8176, %v8178
          %v8180 = vrot.slane %v8172, %v8179
          %v8182 = vunpack.c.l.s4 1966171168
          %v8183 = vunpack.c.0.s8 %v8182
          %v8184 = vlaneseq
          %v8185 = vshrl.u32 %v8184, 7
          %v8186 = vsub.s32 %v8183, %v8185
          %v8187 = vrot.slane %v8173, %v8186
          %v8188 = vcombine.low %v8180, %v8187
          %v8189 = vcombine.low %v8084, %v8085
          %v8190 = vcombine.low %v8086, %v8087
          %v8191 = vcombine.low %v8088, %v8089
          %v8193 = vunpack.c.l.s4 1966171168
          %v8194 = vunpack.c.0.s8 %v8193
          %v8195 = vlaneseq
          %v8196 = vshrl.u32 %v8195, 7
          %v8197 = vsub.s32 %v8194, %v8196
          %v8198 = vrot.slane %v8189, %v8197
          %v8200 = vunpack.c.l.s4 1966171168
          %v8201 = vunpack.c.0.s8 %v8200
          %v8202 = vlaneseq
          %v8203 = vshrl.u32 %v8202, 7
          %v8204 = vsub.s32 %v8201, %v8203
          %v8205 = vrot.slane %v8190, %v8204
          %v8207 = vunpack.c.l.s4 1966171168
          %v8208 = vunpack.c.0.s8 %v8207
          %v8209 = vlaneseq
          %v8210 = vshrl.u32 %v8209, 7
          %v8211 = vsub.s32 %v8208, %v8210
          %v8212 = vrot.slane %v8191, %v8211
          %v8214 = vunpack.c.l.s4 1966171168
          %v8215 = vunpack.c.0.s8 %v8214
          %v8216 = vlaneseq
          %v8217 = vshrl.u32 %v8216, 7
          %v8218 = vsub.s32 %v8215, %v8217
          %v8219 = vrot.slane %v8090, %v8218
          %v8220 = vcombine.low %v8198, %v8205
          %v8221 = vcombine.low %v8212, %v8219
          %v8223 = vunpack.c.l.s4 1966171168
          %v8224 = vunpack.c.0.s8 %v8223
          %v8225 = vlaneseq
          %v8226 = vshrl.u32 %v8225, 7
          %v8227 = vsub.s32 %v8224, %v8226
          %v8228 = vrot.slane %v8220, %v8227
          %v8230 = vunpack.c.l.s4 1966171168
          %v8231 = vunpack.c.0.s8 %v8230
          %v8232 = vlaneseq
          %v8233 = vshrl.u32 %v8232, 7
          %v8234 = vsub.s32 %v8231, %v8233
          %v8235 = vrot.slane %v8221, %v8234
          %v8236 = vcombine.low %v8228, %v8235
          %vm8237 = vcmp.ne.s32.totalorder %v8139, 0
          %vm8238 = vcmp.ne.s32.totalorder %v8188, 0
          %vm8239 = vcmp.ne.s32.totalorder %v8236, 0
          %s8240 = sshra.s32 %s8042, 3
          %s8241 = sand.u32 %s8042, 7
          %s8242 = sshra.s32 %s8042, 3
          %s8243 = sand.u32 %s8042, 7
          %s8244 = smul.u32 %s8240, 23
          %s8245 = smul.u32 %s8244, 8
          %s8246 = sadd.s32 %s8245, %s8243
          %s8247 = scalar_lea.vmem %s56, %s8246 [#allocation6]
          %8248 = vst.msk [vmem:[%s8247] ss:$8 sm:$0xf] %vm8237, %v8043
          %8249 = vst.msk [vmem:[%s8247] ss:$8 sm:$0xf0] %vm8237, %v8043
          %s8250 = sadd.s32 %s8244, 8
          %s8251 = smul.u32 %s8250, 8
          %s8252 = sadd.s32 %s8251, %s8243
          %s8253 = scalar_lea.vmem %s56, %s8252 [#allocation6]
          %8254 = vst.msk [vmem:[%s8253] ss:$8 sm:$0xf] %vm8238, %v8043
          %8255 = vst.msk [vmem:[%s8253] ss:$8 sm:$0xf0] %vm8238, %v8043
          %v8256 = vlaneseq
          %vm8257 = vcmp.ge.s32.totalorder %v8256, 0
          %vm8258 = vcmp.lt.s32.totalorder %v8256, 832
          %vm8259 = vmand %vm8257, %vm8258
          %vm8260 = vmand %vm8259, %vm8239
          %s8261 = sadd.s32 %s8244, 16
          %s8262 = smul.u32 %s8261, 8
          %s8263 = sadd.s32 %s8262, %s8243
          %s8264 = scalar_lea.vmem %s56, %s8263 [#allocation6]
          %8265 = vst.msk [vmem:[%s8264] ss:$8 sm:$0xf] %vm8260, %v8043
          %8266 = vst.msk [vmem:[%s8264] ss:$8 sm:$0x70] %vm8260, %v8043
        $region116: #{tpu_custom_call.1} parent=11 // pred_fallthru
          _
        %s8267 = sld [smem:[#allocation3 + $0x1a]]
        %s8268 = sld [smem:[#allocation4 + $0x1a]]
        %s8269 = sld [smem:[#allocation5 + $0x1a]]
        %p8270 = scmp.ge.s32.totalorder %s8267, %s63
        %p8271 = scmp.lt.s32.totalorder %s8267, %s2186
        %p8272 = pnand %p8270, %p8271
        %p8273 = pneg %p8272
        // Predicated region
        $region117: #{tpu_custom_call.1} parent=11 // pred_check
          _
        $region118: #{tpu_custom_call.1} parent=11 // pred_check_branch
          %8275 = sbr.rel (%p8272) target = $region120
        $region119: #{tpu_custom_call.1} parent=11 // pred_region
          %s8276 = ssub.s32 %s8267, %s63
          %v8277 = vstv %s8269
          %v8278 = vstv %s8268
          %vm8279 = vcmp.eq.s32.totalorder %v2159, %v8278
          %vm8280 = vcmp.eq.s32.totalorder %v2160, %v8278
          %vm8281 = vcmp.eq.s32.totalorder %v2161, %v8278
          %vm8282 = vcmp.eq.s32.totalorder %v2162, %v8278
          %vm8283 = vcmp.eq.s32.totalorder %v2163, %v8278
          %vm8284 = vcmp.eq.s32.totalorder %v2164, %v8278
          %vm8285 = vcmp.eq.s32.totalorder %v2165, %v8278
          %vm8286 = vcmp.eq.s32.totalorder %v2166, %v8278
          %vm8287 = vcmp.eq.s32.totalorder %v2167, %v8278
          %vm8288 = vcmp.eq.s32.totalorder %v2168, %v8278
          %vm8289 = vcmp.eq.s32.totalorder %v2169, %v8278
          %vm8290 = vcmp.eq.s32.totalorder %v2170, %v8278
          %vm8291 = vcmp.eq.s32.totalorder %v2171, %v8278
          %vm8292 = vcmp.eq.s32.totalorder %v2172, %v8278
          %vm8293 = vcmp.eq.s32.totalorder %v2173, %v8278
          %vm8294 = vcmp.eq.s32.totalorder %v2174, %v8278
          %vm8295 = vcmp.eq.s32.totalorder %v2175, %v8278
          %vm8296 = vcmp.eq.s32.totalorder %v2176, %v8278
          %vm8297 = vcmp.eq.s32.totalorder %v2177, %v8278
          %vm8298 = vcmp.eq.s32.totalorder %v2178, %v8278
          %vm8299 = vcmp.eq.s32.totalorder %v2179, %v8278
          %vm8300 = vcmp.eq.s32.totalorder %v2180, %v8278
          %vm8301 = vcmp.eq.s32.totalorder %v2181, %v8278
          %v8302 = vsel %vm8279, 1, 0
          %v8303 = vsel %vm8280, 1, 0
          %v8304 = vsel %vm8281, 1, 0
          %v8305 = vsel %vm8282, 1, 0
          %v8306 = vsel %vm8283, 1, 0
          %v8307 = vsel %vm8284, 1, 0
          %v8308 = vsel %vm8285, 1, 0
          %v8309 = vsel %vm8286, 1, 0
          %v8310 = vsel %vm8287, 1, 0
          %v8311 = vsel %vm8288, 1, 0
          %v8312 = vsel %vm8289, 1, 0
          %v8313 = vsel %vm8290, 1, 0
          %v8314 = vsel %vm8291, 1, 0
          %v8315 = vsel %vm8292, 1, 0
          %v8316 = vsel %vm8293, 1, 0
          %v8317 = vsel %vm8294, 1, 0
          %v8318 = vsel %vm8295, 1, 0
          %v8319 = vsel %vm8296, 1, 0
          %v8320 = vsel %vm8297, 1, 0
          %v8321 = vsel %vm8298, 1, 0
          %v8322 = vsel %vm8299, 1, 0
          %v8323 = vsel %vm8300, 1, 0
          %v8324 = vsel %vm8301, 1, 0
          %v8325 = vcombine.low %v8302, %v8303
          %v8326 = vcombine.low %v8304, %v8305
          %v8327 = vcombine.low %v8306, %v8307
          %v8328 = vcombine.low %v8308, %v8309
          %v8330 = vunpack.c.l.s4 1966171168
          %v8331 = vunpack.c.0.s8 %v8330
          %v8332 = vlaneseq
          %v8333 = vshrl.u32 %v8332, 7
          %v8334 = vsub.s32 %v8331, %v8333
          %v8335 = vrot.slane %v8325, %v8334
          %v8337 = vunpack.c.l.s4 1966171168
          %v8338 = vunpack.c.0.s8 %v8337
          %v8339 = vlaneseq
          %v8340 = vshrl.u32 %v8339, 7
          %v8341 = vsub.s32 %v8338, %v8340
          %v8342 = vrot.slane %v8326, %v8341
          %v8344 = vunpack.c.l.s4 1966171168
          %v8345 = vunpack.c.0.s8 %v8344
          %v8346 = vlaneseq
          %v8347 = vshrl.u32 %v8346, 7
          %v8348 = vsub.s32 %v8345, %v8347
          %v8349 = vrot.slane %v8327, %v8348
          %v8351 = vunpack.c.l.s4 1966171168
          %v8352 = vunpack.c.0.s8 %v8351
          %v8353 = vlaneseq
          %v8354 = vshrl.u32 %v8353, 7
          %v8355 = vsub.s32 %v8352, %v8354
          %v8356 = vrot.slane %v8328, %v8355
          %v8357 = vcombine.low %v8335, %v8342
          %v8358 = vcombine.low %v8349, %v8356
          %v8360 = vunpack.c.l.s4 1966171168
          %v8361 = vunpack.c.0.s8 %v8360
          %v8362 = vlaneseq
          %v8363 = vshrl.u32 %v8362, 7
          %v8364 = vsub.s32 %v8361, %v8363
          %v8365 = vrot.slane %v8357, %v8364
          %v8367 = vunpack.c.l.s4 1966171168
          %v8368 = vunpack.c.0.s8 %v8367
          %v8369 = vlaneseq
          %v8370 = vshrl.u32 %v8369, 7
          %v8371 = vsub.s32 %v8368, %v8370
          %v8372 = vrot.slane %v8358, %v8371
          %v8373 = vcombine.low %v8365, %v8372
          %v8374 = vcombine.low %v8310, %v8311
          %v8375 = vcombine.low %v8312, %v8313
          %v8376 = vcombine.low %v8314, %v8315
          %v8377 = vcombine.low %v8316, %v8317
          %v8379 = vunpack.c.l.s4 1966171168
          %v8380 = vunpack.c.0.s8 %v8379
          %v8381 = vlaneseq
          %v8382 = vshrl.u32 %v8381, 7
          %v8383 = vsub.s32 %v8380, %v8382
          %v8384 = vrot.slane %v8374, %v8383
          %v8386 = vunpack.c.l.s4 1966171168
          %v8387 = vunpack.c.0.s8 %v8386
          %v8388 = vlaneseq
          %v8389 = vshrl.u32 %v8388, 7
          %v8390 = vsub.s32 %v8387, %v8389
          %v8391 = vrot.slane %v8375, %v8390
          %v8393 = vunpack.c.l.s4 1966171168
          %v8394 = vunpack.c.0.s8 %v8393
          %v8395 = vlaneseq
          %v8396 = vshrl.u32 %v8395, 7
          %v8397 = vsub.s32 %v8394, %v8396
          %v8398 = vrot.slane %v8376, %v8397
          %v8400 = vunpack.c.l.s4 1966171168
          %v8401 = vunpack.c.0.s8 %v8400
          %v8402 = vlaneseq
          %v8403 = vshrl.u32 %v8402, 7
          %v8404 = vsub.s32 %v8401, %v8403
          %v8405 = vrot.slane %v8377, %v8404
          %v8406 = vcombine.low %v8384, %v8391
          %v8407 = vcombine.low %v8398, %v8405
          %v8409 = vunpack.c.l.s4 1966171168
          %v8410 = vunpack.c.0.s8 %v8409
          %v8411 = vlaneseq
          %v8412 = vshrl.u32 %v8411, 7
          %v8413 = vsub.s32 %v8410, %v8412
          %v8414 = vrot.slane %v8406, %v8413
          %v8416 = vunpack.c.l.s4 1966171168
          %v8417 = vunpack.c.0.s8 %v8416
          %v8418 = vlaneseq
          %v8419 = vshrl.u32 %v8418, 7
          %v8420 = vsub.s32 %v8417, %v8419
          %v8421 = vrot.slane %v8407, %v8420
          %v8422 = vcombine.low %v8414, %v8421
          %v8423 = vcombine.low %v8318, %v8319
          %v8424 = vcombine.low %v8320, %v8321
          %v8425 = vcombine.low %v8322, %v8323
          %v8427 = vunpack.c.l.s4 1966171168
          %v8428 = vunpack.c.0.s8 %v8427
          %v8429 = vlaneseq
          %v8430 = vshrl.u32 %v8429, 7
          %v8431 = vsub.s32 %v8428, %v8430
          %v8432 = vrot.slane %v8423, %v8431
          %v8434 = vunpack.c.l.s4 1966171168
          %v8435 = vunpack.c.0.s8 %v8434
          %v8436 = vlaneseq
          %v8437 = vshrl.u32 %v8436, 7
          %v8438 = vsub.s32 %v8435, %v8437
          %v8439 = vrot.slane %v8424, %v8438
          %v8441 = vunpack.c.l.s4 1966171168
          %v8442 = vunpack.c.0.s8 %v8441
          %v8443 = vlaneseq
          %v8444 = vshrl.u32 %v8443, 7
          %v8445 = vsub.s32 %v8442, %v8444
          %v8446 = vrot.slane %v8425, %v8445
          %v8448 = vunpack.c.l.s4 1966171168
          %v8449 = vunpack.c.0.s8 %v8448
          %v8450 = vlaneseq
          %v8451 = vshrl.u32 %v8450, 7
          %v8452 = vsub.s32 %v8449, %v8451
          %v8453 = vrot.slane %v8324, %v8452
          %v8454 = vcombine.low %v8432, %v8439
          %v8455 = vcombine.low %v8446, %v8453
          %v8457 = vunpack.c.l.s4 1966171168
          %v8458 = vunpack.c.0.s8 %v8457
          %v8459 = vlaneseq
          %v8460 = vshrl.u32 %v8459, 7
          %v8461 = vsub.s32 %v8458, %v8460
          %v8462 = vrot.slane %v8454, %v8461
          %v8464 = vunpack.c.l.s4 1966171168
          %v8465 = vunpack.c.0.s8 %v8464
          %v8466 = vlaneseq
          %v8467 = vshrl.u32 %v8466, 7
          %v8468 = vsub.s32 %v8465, %v8467
          %v8469 = vrot.slane %v8455, %v8468
          %v8470 = vcombine.low %v8462, %v8469
          %vm8471 = vcmp.ne.s32.totalorder %v8373, 0
          %vm8472 = vcmp.ne.s32.totalorder %v8422, 0
          %vm8473 = vcmp.ne.s32.totalorder %v8470, 0
          %s8474 = sshra.s32 %s8276, 3
          %s8475 = sand.u32 %s8276, 7
          %s8476 = sshra.s32 %s8276, 3
          %s8477 = sand.u32 %s8276, 7
          %s8478 = smul.u32 %s8474, 23
          %s8479 = smul.u32 %s8478, 8
          %s8480 = sadd.s32 %s8479, %s8477
          %s8481 = scalar_lea.vmem %s56, %s8480 [#allocation6]
          %8482 = vst.msk [vmem:[%s8481] ss:$8 sm:$0xf] %vm8471, %v8277
          %8483 = vst.msk [vmem:[%s8481] ss:$8 sm:$0xf0] %vm8471, %v8277
          %s8484 = sadd.s32 %s8478, 8
          %s8485 = smul.u32 %s8484, 8
          %s8486 = sadd.s32 %s8485, %s8477
          %s8487 = scalar_lea.vmem %s56, %s8486 [#allocation6]
          %8488 = vst.msk [vmem:[%s8487] ss:$8 sm:$0xf] %vm8472, %v8277
          %8489 = vst.msk [vmem:[%s8487] ss:$8 sm:$0xf0] %vm8472, %v8277
          %v8490 = vlaneseq
          %vm8491 = vcmp.ge.s32.totalorder %v8490, 0
          %vm8492 = vcmp.lt.s32.totalorder %v8490, 832
          %vm8493 = vmand %vm8491, %vm8492
          %vm8494 = vmand %vm8493, %vm8473
          %s8495 = sadd.s32 %s8478, 16
          %s8496 = smul.u32 %s8495, 8
          %s8497 = sadd.s32 %s8496, %s8477
          %s8498 = scalar_lea.vmem %s56, %s8497 [#allocation6]
          %8499 = vst.msk [vmem:[%s8498] ss:$8 sm:$0xf] %vm8494, %v8277
          %8500 = vst.msk [vmem:[%s8498] ss:$8 sm:$0x70] %vm8494, %v8277
        $region120: #{tpu_custom_call.1} parent=11 // pred_fallthru
          _
        %s8501 = sld [smem:[#allocation3 + $0x1b]]
        %s8502 = sld [smem:[#allocation4 + $0x1b]]
        %s8503 = sld [smem:[#allocation5 + $0x1b]]
        %p8504 = scmp.ge.s32.totalorder %s8501, %s63
        %p8505 = scmp.lt.s32.totalorder %s8501, %s2186
        %p8506 = pnand %p8504, %p8505
        %p8507 = pneg %p8506
        // Predicated region
        $region121: #{tpu_custom_call.1} parent=11 // pred_check
          _
        $region122: #{tpu_custom_call.1} parent=11 // pred_check_branch
          %8509 = sbr.rel (%p8506) target = $region124
        $region123: #{tpu_custom_call.1} parent=11 // pred_region
          %s8510 = ssub.s32 %s8501, %s63
          %v8511 = vstv %s8503
          %v8512 = vstv %s8502
          %vm8513 = vcmp.eq.s32.totalorder %v2159, %v8512
          %vm8514 = vcmp.eq.s32.totalorder %v2160, %v8512
          %vm8515 = vcmp.eq.s32.totalorder %v2161, %v8512
          %vm8516 = vcmp.eq.s32.totalorder %v2162, %v8512
          %vm8517 = vcmp.eq.s32.totalorder %v2163, %v8512
          %vm8518 = vcmp.eq.s32.totalorder %v2164, %v8512
          %vm8519 = vcmp.eq.s32.totalorder %v2165, %v8512
          %vm8520 = vcmp.eq.s32.totalorder %v2166, %v8512
          %vm8521 = vcmp.eq.s32.totalorder %v2167, %v8512
          %vm8522 = vcmp.eq.s32.totalorder %v2168, %v8512
          %vm8523 = vcmp.eq.s32.totalorder %v2169, %v8512
          %vm8524 = vcmp.eq.s32.totalorder %v2170, %v8512
          %vm8525 = vcmp.eq.s32.totalorder %v2171, %v8512
          %vm8526 = vcmp.eq.s32.totalorder %v2172, %v8512
          %vm8527 = vcmp.eq.s32.totalorder %v2173, %v8512
          %vm8528 = vcmp.eq.s32.totalorder %v2174, %v8512
          %vm8529 = vcmp.eq.s32.totalorder %v2175, %v8512
          %vm8530 = vcmp.eq.s32.totalorder %v2176, %v8512
          %vm8531 = vcmp.eq.s32.totalorder %v2177, %v8512
          %vm8532 = vcmp.eq.s32.totalorder %v2178, %v8512
          %vm8533 = vcmp.eq.s32.totalorder %v2179, %v8512
          %vm8534 = vcmp.eq.s32.totalorder %v2180, %v8512
          %vm8535 = vcmp.eq.s32.totalorder %v2181, %v8512
          %v8536 = vsel %vm8513, 1, 0
          %v8537 = vsel %vm8514, 1, 0
          %v8538 = vsel %vm8515, 1, 0
          %v8539 = vsel %vm8516, 1, 0
          %v8540 = vsel %vm8517, 1, 0
          %v8541 = vsel %vm8518, 1, 0
          %v8542 = vsel %vm8519, 1, 0
          %v8543 = vsel %vm8520, 1, 0
          %v8544 = vsel %vm8521, 1, 0
          %v8545 = vsel %vm8522, 1, 0
          %v8546 = vsel %vm8523, 1, 0
          %v8547 = vsel %vm8524, 1, 0
          %v8548 = vsel %vm8525, 1, 0
          %v8549 = vsel %vm8526, 1, 0
          %v8550 = vsel %vm8527, 1, 0
          %v8551 = vsel %vm8528, 1, 0
          %v8552 = vsel %vm8529, 1, 0
          %v8553 = vsel %vm8530, 1, 0
          %v8554 = vsel %vm8531, 1, 0
          %v8555 = vsel %vm8532, 1, 0
          %v8556 = vsel %vm8533, 1, 0
          %v8557 = vsel %vm8534, 1, 0
          %v8558 = vsel %vm8535, 1, 0
          %v8559 = vcombine.low %v8536, %v8537
          %v8560 = vcombine.low %v8538, %v8539
          %v8561 = vcombine.low %v8540, %v8541
          %v8562 = vcombine.low %v8542, %v8543
          %v8564 = vunpack.c.l.s4 1966171168
          %v8565 = vunpack.c.0.s8 %v8564
          %v8566 = vlaneseq
          %v8567 = vshrl.u32 %v8566, 7
          %v8568 = vsub.s32 %v8565, %v8567
          %v8569 = vrot.slane %v8559, %v8568
          %v8571 = vunpack.c.l.s4 1966171168
          %v8572 = vunpack.c.0.s8 %v8571
          %v8573 = vlaneseq
          %v8574 = vshrl.u32 %v8573, 7
          %v8575 = vsub.s32 %v8572, %v8574
          %v8576 = vrot.slane %v8560, %v8575
          %v8578 = vunpack.c.l.s4 1966171168
          %v8579 = vunpack.c.0.s8 %v8578
          %v8580 = vlaneseq
          %v8581 = vshrl.u32 %v8580, 7
          %v8582 = vsub.s32 %v8579, %v8581
          %v8583 = vrot.slane %v8561, %v8582
          %v8585 = vunpack.c.l.s4 1966171168
          %v8586 = vunpack.c.0.s8 %v8585
          %v8587 = vlaneseq
          %v8588 = vshrl.u32 %v8587, 7
          %v8589 = vsub.s32 %v8586, %v8588
          %v8590 = vrot.slane %v8562, %v8589
          %v8591 = vcombine.low %v8569, %v8576
          %v8592 = vcombine.low %v8583, %v8590
          %v8594 = vunpack.c.l.s4 1966171168
          %v8595 = vunpack.c.0.s8 %v8594
          %v8596 = vlaneseq
          %v8597 = vshrl.u32 %v8596, 7
          %v8598 = vsub.s32 %v8595, %v8597
          %v8599 = vrot.slane %v8591, %v8598
          %v8601 = vunpack.c.l.s4 1966171168
          %v8602 = vunpack.c.0.s8 %v8601
          %v8603 = vlaneseq
          %v8604 = vshrl.u32 %v8603, 7
          %v8605 = vsub.s32 %v8602, %v8604
          %v8606 = vrot.slane %v8592, %v8605
          %v8607 = vcombine.low %v8599, %v8606
          %v8608 = vcombine.low %v8544, %v8545
          %v8609 = vcombine.low %v8546, %v8547
          %v8610 = vcombine.low %v8548, %v8549
          %v8611 = vcombine.low %v8550, %v8551
          %v8613 = vunpack.c.l.s4 1966171168
          %v8614 = vunpack.c.0.s8 %v8613
          %v8615 = vlaneseq
          %v8616 = vshrl.u32 %v8615, 7
          %v8617 = vsub.s32 %v8614, %v8616
          %v8618 = vrot.slane %v8608, %v8617
          %v8620 = vunpack.c.l.s4 1966171168
          %v8621 = vunpack.c.0.s8 %v8620
          %v8622 = vlaneseq
          %v8623 = vshrl.u32 %v8622, 7
          %v8624 = vsub.s32 %v8621, %v8623
          %v8625 = vrot.slane %v8609, %v8624
          %v8627 = vunpack.c.l.s4 1966171168
          %v8628 = vunpack.c.0.s8 %v8627
          %v8629 = vlaneseq
          %v8630 = vshrl.u32 %v8629, 7
          %v8631 = vsub.s32 %v8628, %v8630
          %v8632 = vrot.slane %v8610, %v8631
          %v8634 = vunpack.c.l.s4 1966171168
          %v8635 = vunpack.c.0.s8 %v8634
          %v8636 = vlaneseq
          %v8637 = vshrl.u32 %v8636, 7
          %v8638 = vsub.s32 %v8635, %v8637
          %v8639 = vrot.slane %v8611, %v8638
          %v8640 = vcombine.low %v8618, %v8625
          %v8641 = vcombine.low %v8632, %v8639
          %v8643 = vunpack.c.l.s4 1966171168
          %v8644 = vunpack.c.0.s8 %v8643
          %v8645 = vlaneseq
          %v8646 = vshrl.u32 %v8645, 7
          %v8647 = vsub.s32 %v8644, %v8646
          %v8648 = vrot.slane %v8640, %v8647
          %v8650 = vunpack.c.l.s4 1966171168
          %v8651 = vunpack.c.0.s8 %v8650
          %v8652 = vlaneseq
          %v8653 = vshrl.u32 %v8652, 7
          %v8654 = vsub.s32 %v8651, %v8653
          %v8655 = vrot.slane %v8641, %v8654
          %v8656 = vcombine.low %v8648, %v8655
          %v8657 = vcombine.low %v8552, %v8553
          %v8658 = vcombine.low %v8554, %v8555
          %v8659 = vcombine.low %v8556, %v8557
          %v8661 = vunpack.c.l.s4 1966171168
          %v8662 = vunpack.c.0.s8 %v8661
          %v8663 = vlaneseq
          %v8664 = vshrl.u32 %v8663, 7
          %v8665 = vsub.s32 %v8662, %v8664
          %v8666 = vrot.slane %v8657, %v8665
          %v8668 = vunpack.c.l.s4 1966171168
          %v8669 = vunpack.c.0.s8 %v8668
          %v8670 = vlaneseq
          %v8671 = vshrl.u32 %v8670, 7
          %v8672 = vsub.s32 %v8669, %v8671
          %v8673 = vrot.slane %v8658, %v8672
          %v8675 = vunpack.c.l.s4 1966171168
          %v8676 = vunpack.c.0.s8 %v8675
          %v8677 = vlaneseq
          %v8678 = vshrl.u32 %v8677, 7
          %v8679 = vsub.s32 %v8676, %v8678
          %v8680 = vrot.slane %v8659, %v8679
          %v8682 = vunpack.c.l.s4 1966171168
          %v8683 = vunpack.c.0.s8 %v8682
          %v8684 = vlaneseq
          %v8685 = vshrl.u32 %v8684, 7
          %v8686 = vsub.s32 %v8683, %v8685
          %v8687 = vrot.slane %v8558, %v8686
          %v8688 = vcombine.low %v8666, %v8673
          %v8689 = vcombine.low %v8680, %v8687
          %v8691 = vunpack.c.l.s4 1966171168
          %v8692 = vunpack.c.0.s8 %v8691
          %v8693 = vlaneseq
          %v8694 = vshrl.u32 %v8693, 7
          %v8695 = vsub.s32 %v8692, %v8694
          %v8696 = vrot.slane %v8688, %v8695
          %v8698 = vunpack.c.l.s4 1966171168
          %v8699 = vunpack.c.0.s8 %v8698
          %v8700 = vlaneseq
          %v8701 = vshrl.u32 %v8700, 7
          %v8702 = vsub.s32 %v8699, %v8701
          %v8703 = vrot.slane %v8689, %v8702
          %v8704 = vcombine.low %v8696, %v8703
          %vm8705 = vcmp.ne.s32.totalorder %v8607, 0
          %vm8706 = vcmp.ne.s32.totalorder %v8656, 0
          %vm8707 = vcmp.ne.s32.totalorder %v8704, 0
          %s8708 = sshra.s32 %s8510, 3
          %s8709 = sand.u32 %s8510, 7
          %s8710 = sshra.s32 %s8510, 3
          %s8711 = sand.u32 %s8510, 7
          %s8712 = smul.u32 %s8708, 23
          %s8713 = smul.u32 %s8712, 8
          %s8714 = sadd.s32 %s8713, %s8711
          %s8715 = scalar_lea.vmem %s56, %s8714 [#allocation6]
          %8716 = vst.msk [vmem:[%s8715] ss:$8 sm:$0xf] %vm8705, %v8511
          %8717 = vst.msk [vmem:[%s8715] ss:$8 sm:$0xf0] %vm8705, %v8511
          %s8718 = sadd.s32 %s8712, 8
          %s8719 = smul.u32 %s8718, 8
          %s8720 = sadd.s32 %s8719, %s8711
          %s8721 = scalar_lea.vmem %s56, %s8720 [#allocation6]
          %8722 = vst.msk [vmem:[%s8721] ss:$8 sm:$0xf] %vm8706, %v8511
          %8723 = vst.msk [vmem:[%s8721] ss:$8 sm:$0xf0] %vm8706, %v8511
          %v8724 = vlaneseq
          %vm8725 = vcmp.ge.s32.totalorder %v8724, 0
          %vm8726 = vcmp.lt.s32.totalorder %v8724, 832
          %vm8727 = vmand %vm8725, %vm8726
          %vm8728 = vmand %vm8727, %vm8707
          %s8729 = sadd.s32 %s8712, 16
          %s8730 = smul.u32 %s8729, 8
          %s8731 = sadd.s32 %s8730, %s8711
          %s8732 = scalar_lea.vmem %s56, %s8731 [#allocation6]
          %8733 = vst.msk [vmem:[%s8732] ss:$8 sm:$0xf] %vm8728, %v8511
          %8734 = vst.msk [vmem:[%s8732] ss:$8 sm:$0x70] %vm8728, %v8511
        $region124: #{tpu_custom_call.1} parent=11 // pred_fallthru
          _
        %s8735 = sld [smem:[#allocation3 + $0x1c]]
        %s8736 = sld [smem:[#allocation4 + $0x1c]]
        %s8737 = sld [smem:[#allocation5 + $0x1c]]
        %p8738 = scmp.ge.s32.totalorder %s8735, %s63
        %p8739 = scmp.lt.s32.totalorder %s8735, %s2186
        %p8740 = pnand %p8738, %p8739
        %p8741 = pneg %p8740
        // Predicated region
        $region125: #{tpu_custom_call.1} parent=11 // pred_check
          _
        $region126: #{tpu_custom_call.1} parent=11 // pred_check_branch
          %8743 = sbr.rel (%p8740) target = $region128
        $region127: #{tpu_custom_call.1} parent=11 // pred_region
          %s8744 = ssub.s32 %s8735, %s63
          %v8745 = vstv %s8737
          %v8746 = vstv %s8736
          %vm8747 = vcmp.eq.s32.totalorder %v2159, %v8746
          %vm8748 = vcmp.eq.s32.totalorder %v2160, %v8746
          %vm8749 = vcmp.eq.s32.totalorder %v2161, %v8746
          %vm8750 = vcmp.eq.s32.totalorder %v2162, %v8746
          %vm8751 = vcmp.eq.s32.totalorder %v2163, %v8746
          %vm8752 = vcmp.eq.s32.totalorder %v2164, %v8746
          %vm8753 = vcmp.eq.s32.totalorder %v2165, %v8746
          %vm8754 = vcmp.eq.s32.totalorder %v2166, %v8746
          %vm8755 = vcmp.eq.s32.totalorder %v2167, %v8746
          %vm8756 = vcmp.eq.s32.totalorder %v2168, %v8746
          %vm8757 = vcmp.eq.s32.totalorder %v2169, %v8746
          %vm8758 = vcmp.eq.s32.totalorder %v2170, %v8746
          %vm8759 = vcmp.eq.s32.totalorder %v2171, %v8746
          %vm8760 = vcmp.eq.s32.totalorder %v2172, %v8746
          %vm8761 = vcmp.eq.s32.totalorder %v2173, %v8746
          %vm8762 = vcmp.eq.s32.totalorder %v2174, %v8746
          %vm8763 = vcmp.eq.s32.totalorder %v2175, %v8746
          %vm8764 = vcmp.eq.s32.totalorder %v2176, %v8746
          %vm8765 = vcmp.eq.s32.totalorder %v2177, %v8746
          %vm8766 = vcmp.eq.s32.totalorder %v2178, %v8746
          %vm8767 = vcmp.eq.s32.totalorder %v2179, %v8746
          %vm8768 = vcmp.eq.s32.totalorder %v2180, %v8746
          %vm8769 = vcmp.eq.s32.totalorder %v2181, %v8746
          %v8770 = vsel %vm8747, 1, 0
          %v8771 = vsel %vm8748, 1, 0
          %v8772 = vsel %vm8749, 1, 0
          %v8773 = vsel %vm8750, 1, 0
          %v8774 = vsel %vm8751, 1, 0
          %v8775 = vsel %vm8752, 1, 0
          %v8776 = vsel %vm8753, 1, 0
          %v8777 = vsel %vm8754, 1, 0
          %v8778 = vsel %vm8755, 1, 0
          %v8779 = vsel %vm8756, 1, 0
          %v8780 = vsel %vm8757, 1, 0
          %v8781 = vsel %vm8758, 1, 0
          %v8782 = vsel %vm8759, 1, 0
          %v8783 = vsel %vm8760, 1, 0
          %v8784 = vsel %vm8761, 1, 0
          %v8785 = vsel %vm8762, 1, 0
          %v8786 = vsel %vm8763, 1, 0
          %v8787 = vsel %vm8764, 1, 0
          %v8788 = vsel %vm8765, 1, 0
          %v8789 = vsel %vm8766, 1, 0
          %v8790 = vsel %vm8767, 1, 0
          %v8791 = vsel %vm8768, 1, 0
          %v8792 = vsel %vm8769, 1, 0
          %v8793 = vcombine.low %v8770, %v8771
          %v8794 = vcombine.low %v8772, %v8773
          %v8795 = vcombine.low %v8774, %v8775
          %v8796 = vcombine.low %v8776, %v8777
          %v8798 = vunpack.c.l.s4 1966171168
          %v8799 = vunpack.c.0.s8 %v8798
          %v8800 = vlaneseq
          %v8801 = vshrl.u32 %v8800, 7
          %v8802 = vsub.s32 %v8799, %v8801
          %v8803 = vrot.slane %v8793, %v8802
          %v8805 = vunpack.c.l.s4 1966171168
          %v8806 = vunpack.c.0.s8 %v8805
          %v8807 = vlaneseq
          %v8808 = vshrl.u32 %v8807, 7
          %v8809 = vsub.s32 %v8806, %v8808
          %v8810 = vrot.slane %v8794, %v8809
          %v8812 = vunpack.c.l.s4 1966171168
          %v8813 = vunpack.c.0.s8 %v8812
          %v8814 = vlaneseq
          %v8815 = vshrl.u32 %v8814, 7
          %v8816 = vsub.s32 %v8813, %v8815
          %v8817 = vrot.slane %v8795, %v8816
          %v8819 = vunpack.c.l.s4 1966171168
          %v8820 = vunpack.c.0.s8 %v8819
          %v8821 = vlaneseq
          %v8822 = vshrl.u32 %v8821, 7
          %v8823 = vsub.s32 %v8820, %v8822
          %v8824 = vrot.slane %v8796, %v8823
          %v8825 = vcombine.low %v8803, %v8810
          %v8826 = vcombine.low %v8817, %v8824
          %v8828 = vunpack.c.l.s4 1966171168
          %v8829 = vunpack.c.0.s8 %v8828
          %v8830 = vlaneseq
          %v8831 = vshrl.u32 %v8830, 7
          %v8832 = vsub.s32 %v8829, %v8831
          %v8833 = vrot.slane %v8825, %v8832
          %v8835 = vunpack.c.l.s4 1966171168
          %v8836 = vunpack.c.0.s8 %v8835
          %v8837 = vlaneseq
          %v8838 = vshrl.u32 %v8837, 7
          %v8839 = vsub.s32 %v8836, %v8838
          %v8840 = vrot.slane %v8826, %v8839
          %v8841 = vcombine.low %v8833, %v8840
          %v8842 = vcombine.low %v8778, %v8779
          %v8843 = vcombine.low %v8780, %v8781
          %v8844 = vcombine.low %v8782, %v8783
          %v8845 = vcombine.low %v8784, %v8785
          %v8847 = vunpack.c.l.s4 1966171168
          %v8848 = vunpack.c.0.s8 %v8847
          %v8849 = vlaneseq
          %v8850 = vshrl.u32 %v8849, 7
          %v8851 = vsub.s32 %v8848, %v8850
          %v8852 = vrot.slane %v8842, %v8851
          %v8854 = vunpack.c.l.s4 1966171168
          %v8855 = vunpack.c.0.s8 %v8854
          %v8856 = vlaneseq
          %v8857 = vshrl.u32 %v8856, 7
          %v8858 = vsub.s32 %v8855, %v8857
          %v8859 = vrot.slane %v8843, %v8858
          %v8861 = vunpack.c.l.s4 1966171168
          %v8862 = vunpack.c.0.s8 %v8861
          %v8863 = vlaneseq
          %v8864 = vshrl.u32 %v8863, 7
          %v8865 = vsub.s32 %v8862, %v8864
          %v8866 = vrot.slane %v8844, %v8865
          %v8868 = vunpack.c.l.s4 1966171168
          %v8869 = vunpack.c.0.s8 %v8868
          %v8870 = vlaneseq
          %v8871 = vshrl.u32 %v8870, 7
          %v8872 = vsub.s32 %v8869, %v8871
          %v8873 = vrot.slane %v8845, %v8872
          %v8874 = vcombine.low %v8852, %v8859
          %v8875 = vcombine.low %v8866, %v8873
          %v8877 = vunpack.c.l.s4 1966171168
          %v8878 = vunpack.c.0.s8 %v8877
          %v8879 = vlaneseq
          %v8880 = vshrl.u32 %v8879, 7
          %v8881 = vsub.s32 %v8878, %v8880
          %v8882 = vrot.slane %v8874, %v8881
          %v8884 = vunpack.c.l.s4 1966171168
          %v8885 = vunpack.c.0.s8 %v8884
          %v8886 = vlaneseq
          %v8887 = vshrl.u32 %v8886, 7
          %v8888 = vsub.s32 %v8885, %v8887
          %v8889 = vrot.slane %v8875, %v8888
          %v8890 = vcombine.low %v8882, %v8889
          %v8891 = vcombine.low %v8786, %v8787
          %v8892 = vcombine.low %v8788, %v8789
          %v8893 = vcombine.low %v8790, %v8791
          %v8895 = vunpack.c.l.s4 1966171168
          %v8896 = vunpack.c.0.s8 %v8895
          %v8897 = vlaneseq
          %v8898 = vshrl.u32 %v8897, 7
          %v8899 = vsub.s32 %v8896, %v8898
          %v8900 = vrot.slane %v8891, %v8899
          %v8902 = vunpack.c.l.s4 1966171168
          %v8903 = vunpack.c.0.s8 %v8902
          %v8904 = vlaneseq
          %v8905 = vshrl.u32 %v8904, 7
          %v8906 = vsub.s32 %v8903, %v8905
          %v8907 = vrot.slane %v8892, %v8906
          %v8909 = vunpack.c.l.s4 1966171168
          %v8910 = vunpack.c.0.s8 %v8909
          %v8911 = vlaneseq
          %v8912 = vshrl.u32 %v8911, 7
          %v8913 = vsub.s32 %v8910, %v8912
          %v8914 = vrot.slane %v8893, %v8913
          %v8916 = vunpack.c.l.s4 1966171168
          %v8917 = vunpack.c.0.s8 %v8916
          %v8918 = vlaneseq
          %v8919 = vshrl.u32 %v8918, 7
          %v8920 = vsub.s32 %v8917, %v8919
          %v8921 = vrot.slane %v8792, %v8920
          %v8922 = vcombine.low %v8900, %v8907
          %v8923 = vcombine.low %v8914, %v8921
          %v8925 = vunpack.c.l.s4 1966171168
          %v8926 = vunpack.c.0.s8 %v8925
          %v8927 = vlaneseq
          %v8928 = vshrl.u32 %v8927, 7
          %v8929 = vsub.s32 %v8926, %v8928
          %v8930 = vrot.slane %v8922, %v8929
          %v8932 = vunpack.c.l.s4 1966171168
          %v8933 = vunpack.c.0.s8 %v8932
          %v8934 = vlaneseq
          %v8935 = vshrl.u32 %v8934, 7
          %v8936 = vsub.s32 %v8933, %v8935
          %v8937 = vrot.slane %v8923, %v8936
          %v8938 = vcombine.low %v8930, %v8937
          %vm8939 = vcmp.ne.s32.totalorder %v8841, 0
          %vm8940 = vcmp.ne.s32.totalorder %v8890, 0
          %vm8941 = vcmp.ne.s32.totalorder %v8938, 0
          %s8942 = sshra.s32 %s8744, 3
          %s8943 = sand.u32 %s8744, 7
          %s8944 = sshra.s32 %s8744, 3
          %s8945 = sand.u32 %s8744, 7
          %s8946 = smul.u32 %s8942, 23
          %s8947 = smul.u32 %s8946, 8
          %s8948 = sadd.s32 %s8947, %s8945
          %s8949 = scalar_lea.vmem %s56, %s8948 [#allocation6]
          %8950 = vst.msk [vmem:[%s8949] ss:$8 sm:$0xf] %vm8939, %v8745
          %8951 = vst.msk [vmem:[%s8949] ss:$8 sm:$0xf0] %vm8939, %v8745
          %s8952 = sadd.s32 %s8946, 8
          %s8953 = smul.u32 %s8952, 8
          %s8954 = sadd.s32 %s8953, %s8945
          %s8955 = scalar_lea.vmem %s56, %s8954 [#allocation6]
          %8956 = vst.msk [vmem:[%s8955] ss:$8 sm:$0xf] %vm8940, %v8745
          %8957 = vst.msk [vmem:[%s8955] ss:$8 sm:$0xf0] %vm8940, %v8745
          %v8958 = vlaneseq
          %vm8959 = vcmp.ge.s32.totalorder %v8958, 0
          %vm8960 = vcmp.lt.s32.totalorder %v8958, 832
          %vm8961 = vmand %vm8959, %vm8960
          %vm8962 = vmand %vm8961, %vm8941
          %s8963 = sadd.s32 %s8946, 16
          %s8964 = smul.u32 %s8963, 8
          %s8965 = sadd.s32 %s8964, %s8945
          %s8966 = scalar_lea.vmem %s56, %s8965 [#allocation6]
          %8967 = vst.msk [vmem:[%s8966] ss:$8 sm:$0xf] %vm8962, %v8745
          %8968 = vst.msk [vmem:[%s8966] ss:$8 sm:$0x70] %vm8962, %v8745
        $region128: #{tpu_custom_call.1} parent=11 // pred_fallthru
          _
        %s8969 = sld [smem:[#allocation3 + $0x1d]]
        %s8970 = sld [smem:[#allocation4 + $0x1d]]
        %s8971 = sld [smem:[#allocation5 + $0x1d]]
        %p8972 = scmp.ge.s32.totalorder %s8969, %s63
        %p8973 = scmp.lt.s32.totalorder %s8969, %s2186
        %p8974 = pnand %p8972, %p8973
        %p8975 = pneg %p8974
        // Predicated region
        $region129: #{tpu_custom_call.1} parent=11 // pred_check
          _
        $region130: #{tpu_custom_call.1} parent=11 // pred_check_branch
          %8977 = sbr.rel (%p8974) target = $region132
        $region131: #{tpu_custom_call.1} parent=11 // pred_region
          %s8978 = ssub.s32 %s8969, %s63
          %v8979 = vstv %s8971
          %v8980 = vstv %s8970
          %vm8981 = vcmp.eq.s32.totalorder %v2159, %v8980
          %vm8982 = vcmp.eq.s32.totalorder %v2160, %v8980
          %vm8983 = vcmp.eq.s32.totalorder %v2161, %v8980
          %vm8984 = vcmp.eq.s32.totalorder %v2162, %v8980
          %vm8985 = vcmp.eq.s32.totalorder %v2163, %v8980
          %vm8986 = vcmp.eq.s32.totalorder %v2164, %v8980
          %vm8987 = vcmp.eq.s32.totalorder %v2165, %v8980
          %vm8988 = vcmp.eq.s32.totalorder %v2166, %v8980
          %vm8989 = vcmp.eq.s32.totalorder %v2167, %v8980
          %vm8990 = vcmp.eq.s32.totalorder %v2168, %v8980
          %vm8991 = vcmp.eq.s32.totalorder %v2169, %v8980
          %vm8992 = vcmp.eq.s32.totalorder %v2170, %v8980
          %vm8993 = vcmp.eq.s32.totalorder %v2171, %v8980
          %vm8994 = vcmp.eq.s32.totalorder %v2172, %v8980
          %vm8995 = vcmp.eq.s32.totalorder %v2173, %v8980
          %vm8996 = vcmp.eq.s32.totalorder %v2174, %v8980
          %vm8997 = vcmp.eq.s32.totalorder %v2175, %v8980
          %vm8998 = vcmp.eq.s32.totalorder %v2176, %v8980
          %vm8999 = vcmp.eq.s32.totalorder %v2177, %v8980
          %vm9000 = vcmp.eq.s32.totalorder %v2178, %v8980
          %vm9001 = vcmp.eq.s32.totalorder %v2179, %v8980
          %vm9002 = vcmp.eq.s32.totalorder %v2180, %v8980
          %vm9003 = vcmp.eq.s32.totalorder %v2181, %v8980
          %v9004 = vsel %vm8981, 1, 0
          %v9005 = vsel %vm8982, 1, 0
          %v9006 = vsel %vm8983, 1, 0
          %v9007 = vsel %vm8984, 1, 0
          %v9008 = vsel %vm8985, 1, 0
          %v9009 = vsel %vm8986, 1, 0
          %v9010 = vsel %vm8987, 1, 0
          %v9011 = vsel %vm8988, 1, 0
          %v9012 = vsel %vm8989, 1, 0
          %v9013 = vsel %vm8990, 1, 0
          %v9014 = vsel %vm8991, 1, 0
          %v9015 = vsel %vm8992, 1, 0
          %v9016 = vsel %vm8993, 1, 0
          %v9017 = vsel %vm8994, 1, 0
          %v9018 = vsel %vm8995, 1, 0
          %v9019 = vsel %vm8996, 1, 0
          %v9020 = vsel %vm8997, 1, 0
          %v9021 = vsel %vm8998, 1, 0
          %v9022 = vsel %vm8999, 1, 0
          %v9023 = vsel %vm9000, 1, 0
          %v9024 = vsel %vm9001, 1, 0
          %v9025 = vsel %vm9002, 1, 0
          %v9026 = vsel %vm9003, 1, 0
          %v9027 = vcombine.low %v9004, %v9005
          %v9028 = vcombine.low %v9006, %v9007
          %v9029 = vcombine.low %v9008, %v9009
          %v9030 = vcombine.low %v9010, %v9011
          %v9032 = vunpack.c.l.s4 1966171168
          %v9033 = vunpack.c.0.s8 %v9032
          %v9034 = vlaneseq
          %v9035 = vshrl.u32 %v9034, 7
          %v9036 = vsub.s32 %v9033, %v9035
          %v9037 = vrot.slane %v9027, %v9036
          %v9039 = vunpack.c.l.s4 1966171168
          %v9040 = vunpack.c.0.s8 %v9039
          %v9041 = vlaneseq
          %v9042 = vshrl.u32 %v9041, 7
          %v9043 = vsub.s32 %v9040, %v9042
          %v9044 = vrot.slane %v9028, %v9043
          %v9046 = vunpack.c.l.s4 1966171168
          %v9047 = vunpack.c.0.s8 %v9046
          %v9048 = vlaneseq
          %v9049 = vshrl.u32 %v9048, 7
          %v9050 = vsub.s32 %v9047, %v9049
          %v9051 = vrot.slane %v9029, %v9050
          %v9053 = vunpack.c.l.s4 1966171168
          %v9054 = vunpack.c.0.s8 %v9053
          %v9055 = vlaneseq
          %v9056 = vshrl.u32 %v9055, 7
          %v9057 = vsub.s32 %v9054, %v9056
          %v9058 = vrot.slane %v9030, %v9057
          %v9059 = vcombine.low %v9037, %v9044
          %v9060 = vcombine.low %v9051, %v9058
          %v9062 = vunpack.c.l.s4 1966171168
          %v9063 = vunpack.c.0.s8 %v9062
          %v9064 = vlaneseq
          %v9065 = vshrl.u32 %v9064, 7
          %v9066 = vsub.s32 %v9063, %v9065
          %v9067 = vrot.slane %v9059, %v9066
          %v9069 = vunpack.c.l.s4 1966171168
          %v9070 = vunpack.c.0.s8 %v9069
          %v9071 = vlaneseq
          %v9072 = vshrl.u32 %v9071, 7
          %v9073 = vsub.s32 %v9070, %v9072
          %v9074 = vrot.slane %v9060, %v9073
          %v9075 = vcombine.low %v9067, %v9074
          %v9076 = vcombine.low %v9012, %v9013
          %v9077 = vcombine.low %v9014, %v9015
          %v9078 = vcombine.low %v9016, %v9017
          %v9079 = vcombine.low %v9018, %v9019
          %v9081 = vunpack.c.l.s4 1966171168
          %v9082 = vunpack.c.0.s8 %v9081
          %v9083 = vlaneseq
          %v9084 = vshrl.u32 %v9083, 7
          %v9085 = vsub.s32 %v9082, %v9084
          %v9086 = vrot.slane %v9076, %v9085
          %v9088 = vunpack.c.l.s4 1966171168
          %v9089 = vunpack.c.0.s8 %v9088
          %v9090 = vlaneseq
          %v9091 = vshrl.u32 %v9090, 7
          %v9092 = vsub.s32 %v9089, %v9091
          %v9093 = vrot.slane %v9077, %v9092
          %v9095 = vunpack.c.l.s4 1966171168
          %v9096 = vunpack.c.0.s8 %v9095
          %v9097 = vlaneseq
          %v9098 = vshrl.u32 %v9097, 7
          %v9099 = vsub.s32 %v9096, %v9098
          %v9100 = vrot.slane %v9078, %v9099
          %v9102 = vunpack.c.l.s4 1966171168
          %v9103 = vunpack.c.0.s8 %v9102
          %v9104 = vlaneseq
          %v9105 = vshrl.u32 %v9104, 7
          %v9106 = vsub.s32 %v9103, %v9105
          %v9107 = vrot.slane %v9079, %v9106
          %v9108 = vcombine.low %v9086, %v9093
          %v9109 = vcombine.low %v9100, %v9107
          %v9111 = vunpack.c.l.s4 1966171168
          %v9112 = vunpack.c.0.s8 %v9111
          %v9113 = vlaneseq
          %v9114 = vshrl.u32 %v9113, 7
          %v9115 = vsub.s32 %v9112, %v9114
          %v9116 = vrot.slane %v9108, %v9115
          %v9118 = vunpack.c.l.s4 1966171168
          %v9119 = vunpack.c.0.s8 %v9118
          %v9120 = vlaneseq
          %v9121 = vshrl.u32 %v9120, 7
          %v9122 = vsub.s32 %v9119, %v9121
          %v9123 = vrot.slane %v9109, %v9122
          %v9124 = vcombine.low %v9116, %v9123
          %v9125 = vcombine.low %v9020, %v9021
          %v9126 = vcombine.low %v9022, %v9023
          %v9127 = vcombine.low %v9024, %v9025
          %v9129 = vunpack.c.l.s4 1966171168
          %v9130 = vunpack.c.0.s8 %v9129
          %v9131 = vlaneseq
          %v9132 = vshrl.u32 %v9131, 7
          %v9133 = vsub.s32 %v9130, %v9132
          %v9134 = vrot.slane %v9125, %v9133
          %v9136 = vunpack.c.l.s4 1966171168
          %v9137 = vunpack.c.0.s8 %v9136
          %v9138 = vlaneseq
          %v9139 = vshrl.u32 %v9138, 7
          %v9140 = vsub.s32 %v9137, %v9139
          %v9141 = vrot.slane %v9126, %v9140
          %v9143 = vunpack.c.l.s4 1966171168
          %v9144 = vunpack.c.0.s8 %v9143
          %v9145 = vlaneseq
          %v9146 = vshrl.u32 %v9145, 7
          %v9147 = vsub.s32 %v9144, %v9146
          %v9148 = vrot.slane %v9127, %v9147
          %v9150 = vunpack.c.l.s4 1966171168
          %v9151 = vunpack.c.0.s8 %v9150
          %v9152 = vlaneseq
          %v9153 = vshrl.u32 %v9152, 7
          %v9154 = vsub.s32 %v9151, %v9153
          %v9155 = vrot.slane %v9026, %v9154
          %v9156 = vcombine.low %v9134, %v9141
          %v9157 = vcombine.low %v9148, %v9155
          %v9159 = vunpack.c.l.s4 1966171168
          %v9160 = vunpack.c.0.s8 %v9159
          %v9161 = vlaneseq
          %v9162 = vshrl.u32 %v9161, 7
          %v9163 = vsub.s32 %v9160, %v9162
          %v9164 = vrot.slane %v9156, %v9163
          %v9166 = vunpack.c.l.s4 1966171168
          %v9167 = vunpack.c.0.s8 %v9166
          %v9168 = vlaneseq
          %v9169 = vshrl.u32 %v9168, 7
          %v9170 = vsub.s32 %v9167, %v9169
          %v9171 = vrot.slane %v9157, %v9170
          %v9172 = vcombine.low %v9164, %v9171
          %vm9173 = vcmp.ne.s32.totalorder %v9075, 0
          %vm9174 = vcmp.ne.s32.totalorder %v9124, 0
          %vm9175 = vcmp.ne.s32.totalorder %v9172, 0
          %s9176 = sshra.s32 %s8978, 3
          %s9177 = sand.u32 %s8978, 7
          %s9178 = sshra.s32 %s8978, 3
          %s9179 = sand.u32 %s8978, 7
          %s9180 = smul.u32 %s9176, 23
          %s9181 = smul.u32 %s9180, 8
          %s9182 = sadd.s32 %s9181, %s9179
          %s9183 = scalar_lea.vmem %s56, %s9182 [#allocation6]
          %9184 = vst.msk [vmem:[%s9183] ss:$8 sm:$0xf] %vm9173, %v8979
          %9185 = vst.msk [vmem:[%s9183] ss:$8 sm:$0xf0] %vm9173, %v8979
          %s9186 = sadd.s32 %s9180, 8
          %s9187 = smul.u32 %s9186, 8
          %s9188 = sadd.s32 %s9187, %s9179
          %s9189 = scalar_lea.vmem %s56, %s9188 [#allocation6]
          %9190 = vst.msk [vmem:[%s9189] ss:$8 sm:$0xf] %vm9174, %v8979
          %9191 = vst.msk [vmem:[%s9189] ss:$8 sm:$0xf0] %vm9174, %v8979
          %v9192 = vlaneseq
          %vm9193 = vcmp.ge.s32.totalorder %v9192, 0
          %vm9194 = vcmp.lt.s32.totalorder %v9192, 832
          %vm9195 = vmand %vm9193, %vm9194
          %vm9196 = vmand %vm9195, %vm9175
          %s9197 = sadd.s32 %s9180, 16
          %s9198 = smul.u32 %s9197, 8
          %s9199 = sadd.s32 %s9198, %s9179
          %s9200 = scalar_lea.vmem %s56, %s9199 [#allocation6]
          %9201 = vst.msk [vmem:[%s9200] ss:$8 sm:$0xf] %vm9196, %v8979
          %9202 = vst.msk [vmem:[%s9200] ss:$8 sm:$0x70] %vm9196, %v8979
        $region132: #{tpu_custom_call.1} parent=11 // pred_fallthru
          _
        %s9203 = sld [smem:[#allocation3 + $0x1e]]
        %s9204 = sld [smem:[#allocation4 + $0x1e]]
        %s9205 = sld [smem:[#allocation5 + $0x1e]]
        %p9206 = scmp.ge.s32.totalorder %s9203, %s63
        %p9207 = scmp.lt.s32.totalorder %s9203, %s2186
        %p9208 = pnand %p9206, %p9207
        %p9209 = pneg %p9208
        // Predicated region
        $region133: #{tpu_custom_call.1} parent=11 // pred_check
          _
        $region134: #{tpu_custom_call.1} parent=11 // pred_check_branch
          %9211 = sbr.rel (%p9208) target = $region136
        $region135: #{tpu_custom_call.1} parent=11 // pred_region
          %s9212 = ssub.s32 %s9203, %s63
          %v9213 = vstv %s9205
          %v9214 = vstv %s9204
          %vm9215 = vcmp.eq.s32.totalorder %v2159, %v9214
          %vm9216 = vcmp.eq.s32.totalorder %v2160, %v9214
          %vm9217 = vcmp.eq.s32.totalorder %v2161, %v9214
          %vm9218 = vcmp.eq.s32.totalorder %v2162, %v9214
          %vm9219 = vcmp.eq.s32.totalorder %v2163, %v9214
          %vm9220 = vcmp.eq.s32.totalorder %v2164, %v9214
          %vm9221 = vcmp.eq.s32.totalorder %v2165, %v9214
          %vm9222 = vcmp.eq.s32.totalorder %v2166, %v9214
          %vm9223 = vcmp.eq.s32.totalorder %v2167, %v9214
          %vm9224 = vcmp.eq.s32.totalorder %v2168, %v9214
          %vm9225 = vcmp.eq.s32.totalorder %v2169, %v9214
          %vm9226 = vcmp.eq.s32.totalorder %v2170, %v9214
          %vm9227 = vcmp.eq.s32.totalorder %v2171, %v9214
          %vm9228 = vcmp.eq.s32.totalorder %v2172, %v9214
          %vm9229 = vcmp.eq.s32.totalorder %v2173, %v9214
          %vm9230 = vcmp.eq.s32.totalorder %v2174, %v9214
          %vm9231 = vcmp.eq.s32.totalorder %v2175, %v9214
          %vm9232 = vcmp.eq.s32.totalorder %v2176, %v9214
          %vm9233 = vcmp.eq.s32.totalorder %v2177, %v9214
          %vm9234 = vcmp.eq.s32.totalorder %v2178, %v9214
          %vm9235 = vcmp.eq.s32.totalorder %v2179, %v9214
          %vm9236 = vcmp.eq.s32.totalorder %v2180, %v9214
          %vm9237 = vcmp.eq.s32.totalorder %v2181, %v9214
          %v9238 = vsel %vm9215, 1, 0
          %v9239 = vsel %vm9216, 1, 0
          %v9240 = vsel %vm9217, 1, 0
          %v9241 = vsel %vm9218, 1, 0
          %v9242 = vsel %vm9219, 1, 0
          %v9243 = vsel %vm9220, 1, 0
          %v9244 = vsel %vm9221, 1, 0
          %v9245 = vsel %vm9222, 1, 0
          %v9246 = vsel %vm9223, 1, 0
          %v9247 = vsel %vm9224, 1, 0
          %v9248 = vsel %vm9225, 1, 0
          %v9249 = vsel %vm9226, 1, 0
          %v9250 = vsel %vm9227, 1, 0
          %v9251 = vsel %vm9228, 1, 0
          %v9252 = vsel %vm9229, 1, 0
          %v9253 = vsel %vm9230, 1, 0
          %v9254 = vsel %vm9231, 1, 0
          %v9255 = vsel %vm9232, 1, 0
          %v9256 = vsel %vm9233, 1, 0
          %v9257 = vsel %vm9234, 1, 0
          %v9258 = vsel %vm9235, 1, 0
          %v9259 = vsel %vm9236, 1, 0
          %v9260 = vsel %vm9237, 1, 0
          %v9261 = vcombine.low %v9238, %v9239
          %v9262 = vcombine.low %v9240, %v9241
          %v9263 = vcombine.low %v9242, %v9243
          %v9264 = vcombine.low %v9244, %v9245
          %v9266 = vunpack.c.l.s4 1966171168
          %v9267 = vunpack.c.0.s8 %v9266
          %v9268 = vlaneseq
          %v9269 = vshrl.u32 %v9268, 7
          %v9270 = vsub.s32 %v9267, %v9269
          %v9271 = vrot.slane %v9261, %v9270
          %v9273 = vunpack.c.l.s4 1966171168
          %v9274 = vunpack.c.0.s8 %v9273
          %v9275 = vlaneseq
          %v9276 = vshrl.u32 %v9275, 7
          %v9277 = vsub.s32 %v9274, %v9276
          %v9278 = vrot.slane %v9262, %v9277
          %v9280 = vunpack.c.l.s4 1966171168
          %v9281 = vunpack.c.0.s8 %v9280
          %v9282 = vlaneseq
          %v9283 = vshrl.u32 %v9282, 7
          %v9284 = vsub.s32 %v9281, %v9283
          %v9285 = vrot.slane %v9263, %v9284
          %v9287 = vunpack.c.l.s4 1966171168
          %v9288 = vunpack.c.0.s8 %v9287
          %v9289 = vlaneseq
          %v9290 = vshrl.u32 %v9289, 7
          %v9291 = vsub.s32 %v9288, %v9290
          %v9292 = vrot.slane %v9264, %v9291
          %v9293 = vcombine.low %v9271, %v9278
          %v9294 = vcombine.low %v9285, %v9292
          %v9296 = vunpack.c.l.s4 1966171168
          %v9297 = vunpack.c.0.s8 %v9296
          %v9298 = vlaneseq
          %v9299 = vshrl.u32 %v9298, 7
          %v9300 = vsub.s32 %v9297, %v9299
          %v9301 = vrot.slane %v9293, %v9300
          %v9303 = vunpack.c.l.s4 1966171168
          %v9304 = vunpack.c.0.s8 %v9303
          %v9305 = vlaneseq
          %v9306 = vshrl.u32 %v9305, 7
          %v9307 = vsub.s32 %v9304, %v9306
          %v9308 = vrot.slane %v9294, %v9307
          %v9309 = vcombine.low %v9301, %v9308
          %v9310 = vcombine.low %v9246, %v9247
          %v9311 = vcombine.low %v9248, %v9249
          %v9312 = vcombine.low %v9250, %v9251
          %v9313 = vcombine.low %v9252, %v9253
          %v9315 = vunpack.c.l.s4 1966171168
          %v9316 = vunpack.c.0.s8 %v9315
          %v9317 = vlaneseq
          %v9318 = vshrl.u32 %v9317, 7
          %v9319 = vsub.s32 %v9316, %v9318
          %v9320 = vrot.slane %v9310, %v9319
          %v9322 = vunpack.c.l.s4 1966171168
          %v9323 = vunpack.c.0.s8 %v9322
          %v9324 = vlaneseq
          %v9325 = vshrl.u32 %v9324, 7
          %v9326 = vsub.s32 %v9323, %v9325
          %v9327 = vrot.slane %v9311, %v9326
          %v9329 = vunpack.c.l.s4 1966171168
          %v9330 = vunpack.c.0.s8 %v9329
          %v9331 = vlaneseq
          %v9332 = vshrl.u32 %v9331, 7
          %v9333 = vsub.s32 %v9330, %v9332
          %v9334 = vrot.slane %v9312, %v9333
          %v9336 = vunpack.c.l.s4 1966171168
          %v9337 = vunpack.c.0.s8 %v9336
          %v9338 = vlaneseq
          %v9339 = vshrl.u32 %v9338, 7
          %v9340 = vsub.s32 %v9337, %v9339
          %v9341 = vrot.slane %v9313, %v9340
          %v9342 = vcombine.low %v9320, %v9327
          %v9343 = vcombine.low %v9334, %v9341
          %v9345 = vunpack.c.l.s4 1966171168
          %v9346 = vunpack.c.0.s8 %v9345
          %v9347 = vlaneseq
          %v9348 = vshrl.u32 %v9347, 7
          %v9349 = vsub.s32 %v9346, %v9348
          %v9350 = vrot.slane %v9342, %v9349
          %v9352 = vunpack.c.l.s4 1966171168
          %v9353 = vunpack.c.0.s8 %v9352
          %v9354 = vlaneseq
          %v9355 = vshrl.u32 %v9354, 7
          %v9356 = vsub.s32 %v9353, %v9355
          %v9357 = vrot.slane %v9343, %v9356
          %v9358 = vcombine.low %v9350, %v9357
          %v9359 = vcombine.low %v9254, %v9255
          %v9360 = vcombine.low %v9256, %v9257
          %v9361 = vcombine.low %v9258, %v9259
          %v9363 = vunpack.c.l.s4 1966171168
          %v9364 = vunpack.c.0.s8 %v9363
          %v9365 = vlaneseq
          %v9366 = vshrl.u32 %v9365, 7
          %v9367 = vsub.s32 %v9364, %v9366
          %v9368 = vrot.slane %v9359, %v9367
          %v9370 = vunpack.c.l.s4 1966171168
          %v9371 = vunpack.c.0.s8 %v9370
          %v9372 = vlaneseq
          %v9373 = vshrl.u32 %v9372, 7
          %v9374 = vsub.s32 %v9371, %v9373
          %v9375 = vrot.slane %v9360, %v9374
          %v9377 = vunpack.c.l.s4 1966171168
          %v9378 = vunpack.c.0.s8 %v9377
          %v9379 = vlaneseq
          %v9380 = vshrl.u32 %v9379, 7
          %v9381 = vsub.s32 %v9378, %v9380
          %v9382 = vrot.slane %v9361, %v9381
          %v9384 = vunpack.c.l.s4 1966171168
          %v9385 = vunpack.c.0.s8 %v9384
          %v9386 = vlaneseq
          %v9387 = vshrl.u32 %v9386, 7
          %v9388 = vsub.s32 %v9385, %v9387
          %v9389 = vrot.slane %v9260, %v9388
          %v9390 = vcombine.low %v9368, %v9375
          %v9391 = vcombine.low %v9382, %v9389
          %v9393 = vunpack.c.l.s4 1966171168
          %v9394 = vunpack.c.0.s8 %v9393
          %v9395 = vlaneseq
          %v9396 = vshrl.u32 %v9395, 7
          %v9397 = vsub.s32 %v9394, %v9396
          %v9398 = vrot.slane %v9390, %v9397
          %v9400 = vunpack.c.l.s4 1966171168
          %v9401 = vunpack.c.0.s8 %v9400
          %v9402 = vlaneseq
          %v9403 = vshrl.u32 %v9402, 7
          %v9404 = vsub.s32 %v9401, %v9403
          %v9405 = vrot.slane %v9391, %v9404
          %v9406 = vcombine.low %v9398, %v9405
          %vm9407 = vcmp.ne.s32.totalorder %v9309, 0
          %vm9408 = vcmp.ne.s32.totalorder %v9358, 0
          %vm9409 = vcmp.ne.s32.totalorder %v9406, 0
          %s9410 = sshra.s32 %s9212, 3
          %s9411 = sand.u32 %s9212, 7
          %s9412 = sshra.s32 %s9212, 3
          %s9413 = sand.u32 %s9212, 7
          %s9414 = smul.u32 %s9410, 23
          %s9415 = smul.u32 %s9414, 8
          %s9416 = sadd.s32 %s9415, %s9413
          %s9417 = scalar_lea.vmem %s56, %s9416 [#allocation6]
          %9418 = vst.msk [vmem:[%s9417] ss:$8 sm:$0xf] %vm9407, %v9213
          %9419 = vst.msk [vmem:[%s9417] ss:$8 sm:$0xf0] %vm9407, %v9213
          %s9420 = sadd.s32 %s9414, 8
          %s9421 = smul.u32 %s9420, 8
          %s9422 = sadd.s32 %s9421, %s9413
          %s9423 = scalar_lea.vmem %s56, %s9422 [#allocation6]
          %9424 = vst.msk [vmem:[%s9423] ss:$8 sm:$0xf] %vm9408, %v9213
          %9425 = vst.msk [vmem:[%s9423] ss:$8 sm:$0xf0] %vm9408, %v9213
          %v9426 = vlaneseq
          %vm9427 = vcmp.ge.s32.totalorder %v9426, 0
          %vm9428 = vcmp.lt.s32.totalorder %v9426, 832
          %vm9429 = vmand %vm9427, %vm9428
          %vm9430 = vmand %vm9429, %vm9409
          %s9431 = sadd.s32 %s9414, 16
          %s9432 = smul.u32 %s9431, 8
          %s9433 = sadd.s32 %s9432, %s9413
          %s9434 = scalar_lea.vmem %s56, %s9433 [#allocation6]
          %9435 = vst.msk [vmem:[%s9434] ss:$8 sm:$0xf] %vm9430, %v9213
          %9436 = vst.msk [vmem:[%s9434] ss:$8 sm:$0x70] %vm9430, %v9213
        $region136: #{tpu_custom_call.1} parent=11 // pred_fallthru
          _
        %s9437 = sld [smem:[#allocation3 + $0x1f]]
        %s9438 = sld [smem:[#allocation4 + $0x1f]]
        %s9439 = sld [smem:[#allocation5 + $0x1f]]
        %p9440 = scmp.ge.s32.totalorder %s9437, %s63
        %p9441 = scmp.lt.s32.totalorder %s9437, %s2186
        %p9442 = pnand %p9440, %p9441
        %p9443 = pneg %p9442
        // Predicated region
        $region137: #{tpu_custom_call.1} parent=11 // pred_check
          _
        $region138: #{tpu_custom_call.1} parent=11 // pred_check_branch
          %9445 = sbr.rel (%p9442) target = $region140
        $region139: #{tpu_custom_call.1} parent=11 // pred_region
          %s9446 = ssub.s32 %s9437, %s63
          %v9447 = vstv %s9439
          %v9448 = vstv %s9438
          %vm9449 = vcmp.eq.s32.totalorder %v2159, %v9448
          %vm9450 = vcmp.eq.s32.totalorder %v2160, %v9448
          %vm9451 = vcmp.eq.s32.totalorder %v2161, %v9448
          %vm9452 = vcmp.eq.s32.totalorder %v2162, %v9448
          %vm9453 = vcmp.eq.s32.totalorder %v2163, %v9448
          %vm9454 = vcmp.eq.s32.totalorder %v2164, %v9448
          %vm9455 = vcmp.eq.s32.totalorder %v2165, %v9448
          %vm9456 = vcmp.eq.s32.totalorder %v2166, %v9448
          %vm9457 = vcmp.eq.s32.totalorder %v2167, %v9448
          %vm9458 = vcmp.eq.s32.totalorder %v2168, %v9448
          %vm9459 = vcmp.eq.s32.totalorder %v2169, %v9448
          %vm9460 = vcmp.eq.s32.totalorder %v2170, %v9448
          %vm9461 = vcmp.eq.s32.totalorder %v2171, %v9448
          %vm9462 = vcmp.eq.s32.totalorder %v2172, %v9448
          %vm9463 = vcmp.eq.s32.totalorder %v2173, %v9448
          %vm9464 = vcmp.eq.s32.totalorder %v2174, %v9448
          %vm9465 = vcmp.eq.s32.totalorder %v2175, %v9448
          %vm9466 = vcmp.eq.s32.totalorder %v2176, %v9448
          %vm9467 = vcmp.eq.s32.totalorder %v2177, %v9448
          %vm9468 = vcmp.eq.s32.totalorder %v2178, %v9448
          %vm9469 = vcmp.eq.s32.totalorder %v2179, %v9448
          %vm9470 = vcmp.eq.s32.totalorder %v2180, %v9448
          %vm9471 = vcmp.eq.s32.totalorder %v2181, %v9448
          %v9472 = vsel %vm9449, 1, 0
          %v9473 = vsel %vm9450, 1, 0
          %v9474 = vsel %vm9451, 1, 0
          %v9475 = vsel %vm9452, 1, 0
          %v9476 = vsel %vm9453, 1, 0
          %v9477 = vsel %vm9454, 1, 0
          %v9478 = vsel %vm9455, 1, 0
          %v9479 = vsel %vm9456, 1, 0
          %v9480 = vsel %vm9457, 1, 0
          %v9481 = vsel %vm9458, 1, 0
          %v9482 = vsel %vm9459, 1, 0
          %v9483 = vsel %vm9460, 1, 0
          %v9484 = vsel %vm9461, 1, 0
          %v9485 = vsel %vm9462, 1, 0
          %v9486 = vsel %vm9463, 1, 0
          %v9487 = vsel %vm9464, 1, 0
          %v9488 = vsel %vm9465, 1, 0
          %v9489 = vsel %vm9466, 1, 0
          %v9490 = vsel %vm9467, 1, 0
          %v9491 = vsel %vm9468, 1, 0
          %v9492 = vsel %vm9469, 1, 0
          %v9493 = vsel %vm9470, 1, 0
          %v9494 = vsel %vm9471, 1, 0
          %v9495 = vcombine.low %v9472, %v9473
          %v9496 = vcombine.low %v9474, %v9475
          %v9497 = vcombine.low %v9476, %v9477
          %v9498 = vcombine.low %v9478, %v9479
          %v9500 = vunpack.c.l.s4 1966171168
          %v9501 = vunpack.c.0.s8 %v9500
          %v9502 = vlaneseq
          %v9503 = vshrl.u32 %v9502, 7
          %v9504 = vsub.s32 %v9501, %v9503
          %v9505 = vrot.slane %v9495, %v9504
          %v9507 = vunpack.c.l.s4 1966171168
          %v9508 = vunpack.c.0.s8 %v9507
          %v9509 = vlaneseq
          %v9510 = vshrl.u32 %v9509, 7
          %v9511 = vsub.s32 %v9508, %v9510
          %v9512 = vrot.slane %v9496, %v9511
          %v9514 = vunpack.c.l.s4 1966171168
          %v9515 = vunpack.c.0.s8 %v9514
          %v9516 = vlaneseq
          %v9517 = vshrl.u32 %v9516, 7
          %v9518 = vsub.s32 %v9515, %v9517
          %v9519 = vrot.slane %v9497, %v9518
          %v9521 = vunpack.c.l.s4 1966171168
          %v9522 = vunpack.c.0.s8 %v9521
          %v9523 = vlaneseq
          %v9524 = vshrl.u32 %v9523, 7
          %v9525 = vsub.s32 %v9522, %v9524
          %v9526 = vrot.slane %v9498, %v9525
          %v9527 = vcombine.low %v9505, %v9512
          %v9528 = vcombine.low %v9519, %v9526
          %v9530 = vunpack.c.l.s4 1966171168
          %v9531 = vunpack.c.0.s8 %v9530
          %v9532 = vlaneseq
          %v9533 = vshrl.u32 %v9532, 7
          %v9534 = vsub.s32 %v9531, %v9533
          %v9535 = vrot.slane %v9527, %v9534
          %v9537 = vunpack.c.l.s4 1966171168
          %v9538 = vunpack.c.0.s8 %v9537
          %v9539 = vlaneseq
          %v9540 = vshrl.u32 %v9539, 7
          %v9541 = vsub.s32 %v9538, %v9540
          %v9542 = vrot.slane %v9528, %v9541
          %v9543 = vcombine.low %v9535, %v9542
          %v9544 = vcombine.low %v9480, %v9481
          %v9545 = vcombine.low %v9482, %v9483
          %v9546 = vcombine.low %v9484, %v9485
          %v9547 = vcombine.low %v9486, %v9487
          %v9549 = vunpack.c.l.s4 1966171168
          %v9550 = vunpack.c.0.s8 %v9549
          %v9551 = vlaneseq
          %v9552 = vshrl.u32 %v9551, 7
          %v9553 = vsub.s32 %v9550, %v9552
          %v9554 = vrot.slane %v9544, %v9553
          %v9556 = vunpack.c.l.s4 1966171168
          %v9557 = vunpack.c.0.s8 %v9556
          %v9558 = vlaneseq
          %v9559 = vshrl.u32 %v9558, 7
          %v9560 = vsub.s32 %v9557, %v9559
          %v9561 = vrot.slane %v9545, %v9560
          %v9563 = vunpack.c.l.s4 1966171168
          %v9564 = vunpack.c.0.s8 %v9563
          %v9565 = vlaneseq
          %v9566 = vshrl.u32 %v9565, 7
          %v9567 = vsub.s32 %v9564, %v9566
          %v9568 = vrot.slane %v9546, %v9567
          %v9570 = vunpack.c.l.s4 1966171168
          %v9571 = vunpack.c.0.s8 %v9570
          %v9572 = vlaneseq
          %v9573 = vshrl.u32 %v9572, 7
          %v9574 = vsub.s32 %v9571, %v9573
          %v9575 = vrot.slane %v9547, %v9574
          %v9576 = vcombine.low %v9554, %v9561
          %v9577 = vcombine.low %v9568, %v9575
          %v9579 = vunpack.c.l.s4 1966171168
          %v9580 = vunpack.c.0.s8 %v9579
          %v9581 = vlaneseq
          %v9582 = vshrl.u32 %v9581, 7
          %v9583 = vsub.s32 %v9580, %v9582
          %v9584 = vrot.slane %v9576, %v9583
          %v9586 = vunpack.c.l.s4 1966171168
          %v9587 = vunpack.c.0.s8 %v9586
          %v9588 = vlaneseq
          %v9589 = vshrl.u32 %v9588, 7
          %v9590 = vsub.s32 %v9587, %v9589
          %v9591 = vrot.slane %v9577, %v9590
          %v9592 = vcombine.low %v9584, %v9591
          %v9593 = vcombine.low %v9488, %v9489
          %v9594 = vcombine.low %v9490, %v9491
          %v9595 = vcombine.low %v9492, %v9493
          %v9597 = vunpack.c.l.s4 1966171168
          %v9598 = vunpack.c.0.s8 %v9597
          %v9599 = vlaneseq
          %v9600 = vshrl.u32 %v9599, 7
          %v9601 = vsub.s32 %v9598, %v9600
          %v9602 = vrot.slane %v9593, %v9601
          %v9604 = vunpack.c.l.s4 1966171168
          %v9605 = vunpack.c.0.s8 %v9604
          %v9606 = vlaneseq
          %v9607 = vshrl.u32 %v9606, 7
          %v9608 = vsub.s32 %v9605, %v9607
          %v9609 = vrot.slane %v9594, %v9608
          %v9611 = vunpack.c.l.s4 1966171168
          %v9612 = vunpack.c.0.s8 %v9611
          %v9613 = vlaneseq
          %v9614 = vshrl.u32 %v9613, 7
          %v9615 = vsub.s32 %v9612, %v9614
          %v9616 = vrot.slane %v9595, %v9615
          %v9618 = vunpack.c.l.s4 1966171168
          %v9619 = vunpack.c.0.s8 %v9618
          %v9620 = vlaneseq
          %v9621 = vshrl.u32 %v9620, 7
          %v9622 = vsub.s32 %v9619, %v9621
          %v9623 = vrot.slane %v9494, %v9622
          %v9624 = vcombine.low %v9602, %v9609
          %v9625 = vcombine.low %v9616, %v9623
          %v9627 = vunpack.c.l.s4 1966171168
          %v9628 = vunpack.c.0.s8 %v9627
          %v9629 = vlaneseq
          %v9630 = vshrl.u32 %v9629, 7
          %v9631 = vsub.s32 %v9628, %v9630
          %v9632 = vrot.slane %v9624, %v9631
          %v9634 = vunpack.c.l.s4 1966171168
          %v9635 = vunpack.c.0.s8 %v9634
          %v9636 = vlaneseq
          %v9637 = vshrl.u32 %v9636, 7
          %v9638 = vsub.s32 %v9635, %v9637
          %v9639 = vrot.slane %v9625, %v9638
          %v9640 = vcombine.low %v9632, %v9639
          %vm9641 = vcmp.ne.s32.totalorder %v9543, 0
          %vm9642 = vcmp.ne.s32.totalorder %v9592, 0
          %vm9643 = vcmp.ne.s32.totalorder %v9640, 0
          %s9644 = sshra.s32 %s9446, 3
          %s9645 = sand.u32 %s9446, 7
          %s9646 = sshra.s32 %s9446, 3
          %s9647 = sand.u32 %s9446, 7
          %s9648 = smul.u32 %s9644, 23
          %s9649 = smul.u32 %s9648, 8
          %s9650 = sadd.s32 %s9649, %s9647
          %s9651 = scalar_lea.vmem %s56, %s9650 [#allocation6]
          %9652 = vst.msk [vmem:[%s9651] ss:$8 sm:$0xf] %vm9641, %v9447
          %9653 = vst.msk [vmem:[%s9651] ss:$8 sm:$0xf0] %vm9641, %v9447
          %s9654 = sadd.s32 %s9648, 8
          %s9655 = smul.u32 %s9654, 8
          %s9656 = sadd.s32 %s9655, %s9647
          %s9657 = scalar_lea.vmem %s56, %s9656 [#allocation6]
          %9658 = vst.msk [vmem:[%s9657] ss:$8 sm:$0xf] %vm9642, %v9447
          %9659 = vst.msk [vmem:[%s9657] ss:$8 sm:$0xf0] %vm9642, %v9447
          %v9660 = vlaneseq
          %vm9661 = vcmp.ge.s32.totalorder %v9660, 0
          %vm9662 = vcmp.lt.s32.totalorder %v9660, 832
          %vm9663 = vmand %vm9661, %vm9662
          %vm9664 = vmand %vm9663, %vm9643
          %s9665 = sadd.s32 %s9648, 16
          %s9666 = smul.u32 %s9665, 8
          %s9667 = sadd.s32 %s9666, %s9647
          %s9668 = scalar_lea.vmem %s56, %s9667 [#allocation6]
          %9669 = vst.msk [vmem:[%s9668] ss:$8 sm:$0xf] %vm9664, %v9447
          %9670 = vst.msk [vmem:[%s9668] ss:$8 sm:$0x70] %vm9664, %v9447
        $region140: #{tpu_custom_call.1} parent=11 // pred_fallthru
          _
        %s9671 = sand.u32 %s29, 1
        %s9672 = scalar_lea.sflag [#allocation7], %s9671
        %s9673 = sand.u32 %s29, 1
        %s9674 = smul.addr %s9673, 16744
        %s9675 = scalar_lea.vmem [#allocation6], %s9674
        // Predicated region
        $region141: #{tpu_custom_call.1} parent=11 // pred_check
          %p9676 = pneg %p35
        $region142: #{tpu_custom_call.1} parent=11 // pred_check_branch
          %9678 = sbr.rel (%p9676) target = $region144
        $region143: #{tpu_custom_call.1} parent=11 // pred_region
          %s9679 = smul.u32 91, %s20
          %s9680 = ssub.s32 181, %s9679
          %p9681 = scmp.lt.s32.totalorder %s9680, 91
          %s9682 = scalar_select %p9681, %s9680, 91
          %s9683 = smul.u32 128, %s9682
          %s9684 = smul.u32 %s9683, 23
          %s9686 = ssub.s32 267904, %s9684
          %9687 = vsyncadd %s9672, %s9686
          %p9688 = scmp.ne.s32.totalorder 0, %s9684
          %s9689 = smul.addr %s9679, 23
          %s9690 = smul.addr %s9689, 128
          %s9691 = scalar_lea.hbm %s3, %s9690
          %s9692 = smul.u32 184, %s9682
          %s9693 = sshll.u32 %s9675, 4
          %s9694 = int_to_ptr.vmem [resolvable:$true] %s9693
          %s9695 = sshll.u32 %s9692, 4
          %9699 = dma.vmem_to_hbm [thread:$0]  (%p9688), %s9694, %s9695, %s9691, %s9672, 2944, 2944, 184
        $region144: #{tpu_custom_call.1} parent=11 // pred_fallthru
          _
      $region12: #{tpu_custom_call.1} parent=5 // pred_fallthru
        _
      %p9700 = scmp.le.s32.totalorder 1, %s20
      // Predicated region
      $region145: #{tpu_custom_call.1} parent=5 // pred_check
        %p9701 = pneg %p9700
      $region146: #{tpu_custom_call.1} parent=5 // pred_check_branch
        %9703 = sbr.rel (%p9701) target = $region148
      $region147: #{tpu_custom_call.1} parent=5 // pred_region
        %s9704 = ssub.s32 %s20, 1
        // Predicated region
        $region149: #{tpu_custom_call.1} parent=147 // pred_check
          %p9705 = pneg %p41
        $region150: #{tpu_custom_call.1} parent=147 // pred_check_branch
          %9707 = sbr.rel (%p9705) target = $region152
        $region151: #{tpu_custom_call.1} parent=147 // pred_region
          %s9708 = sand.u32 %s32, 1
          %s9709 = scalar_lea.sflag [#allocation7], %s9708
          %s9710 = sand.u32 %s32, 1
          %s9711 = smul.addr %s9710, 16744
          %s9712 = scalar_lea.vmem [#allocation6], %s9711
          %9713 = dma.done %s9709, 267904
        $region152: #{tpu_custom_call.1} parent=147 // pred_fallthru
          _
      $region148: #{tpu_custom_call.1} parent=5 // pred_fallthru
        _
    $region6: #{tpu_custom_call.1} parent=1 // loop_footer
      %s24 = sadd.s32 1, %s20
    $region7: #{tpu_custom_call.1} parent=1 // loop_footer_branch
      %19 = sbr.rel target = $region3
    $region8: #{tpu_custom_call.1} parent=1 // loop_exit
      _
    %9714 = vsyncpa [#allocation7], 1
    %s9715 = scalar_lea.sflag [#allocation7], 1
    %9716 = vsyncpa %s9715, 1

</llo_original>
